<compile_context>
chip_gen: v6e
topology: v6e:2x2x1
jax: 0.10.0
libtpu: 0.0.40
codegen_flags: <defaults>
</compile_context>

<pallas_src>
import functools
import math

import numpy as np
import jax
import jax.numpy as jnp
from jax.experimental import pallas as pl
from jax.experimental.pallas import tpu as pltpu


_VMEM_LIMIT = 64 * 1024 * 1024      # explicit scoped-VMEM budget per kernel
_COL_TILES = (512, 256, 128)


# ----------------------------- tiling helpers ------------------------------ #

def _round_up(x, m):
    return ((x + m - 1) // m) * m


def _pick_row_tile(m):
    """Largest useful row tile: full dim for small M (single block, no per-step
    overhead on single-TC v5e/v6e); otherwise the largest of 512/256/128 that
    divides (callers pad M to a multiple of 128 when it is large)."""
    if m <= 256:
        return m
    for c in (512, 256, 128):
        if m % c == 0:
            return c
    return m


def _pick_col_tile(dim):
    for c in _COL_TILES:
        if dim % c == 0:
            return c
    return dim          # full dim is always a legal block shape


# --------------------------- in-kernel math helpers ------------------------- #

def _erf(x):
    # Abramowitz & Stegun 7.1.26 rational approximation (|err| < 1.5e-7) --
    # uses only exp / mul / add / div so the exact (erf) GELU fuses into the
    # matmul epilogue.
    a1, a2, a3, a4, a5 = (0.254829592, -0.284496736, 1.421413741,
                          -1.453152027, 1.061405429)
    pp = 0.3275911
    ax = jnp.abs(x)
    t = 1.0 / (1.0 + pp * ax)
    poly = ((((a5 * t + a4) * t + a3) * t + a2) * t + a1) * t
    y = 1.0 - poly * jnp.exp(-ax * ax)
    return jnp.where(x >= 0, y, -y)


def _gelu(x):
    # matches torch.nn.functional.gelu (exact / erf formulation)
    return 0.5 * x * (1.0 + _erf(x * 0.7071067811865476))


# ------------------- fused tiled matmul (+bias/GELU/res/LN) ----------------- #

def _mm_kernel(*refs, act, has_res, has_ln):
    x_ref, w_ref, b_ref = refs[:3]
    idx = 3
    res_ref = None
    g_ref = beta_ref = None
    if has_res:
        res_ref = refs[idx]
        idx += 1
    if has_ln:
        g_ref, beta_ref = refs[idx], refs[idx + 1]
        idx += 2
    o_ref, acc_ref = refs[idx], refs[idx + 1]

    @pl.when(pl.program_id(2) == 0)
    def _():
        acc_ref[...] = jnp.zeros_like(acc_ref)

    acc_ref[...] += jnp.dot(x_ref[...], w_ref[...],
                            preferred_element_type=jnp.float32)

    @pl.when(pl.program_id(2) == pl.num_programs(2) - 1)
    def _():
        r = acc_ref[...] + b_ref[...]
        if act == "gelu":
            r = _gelu(r)
        if has_res:
            r = r + res_ref[...].astype(jnp.float32)
        if has_ln:
            # LayerNorm over the full output row (tn == N is enforced by the
            # wrapper) -- torch eps=1e-5, biased variance.
            mean = jnp.mean(r, axis=-1, keepdims=True)
            var = jnp.mean((r - mean) ** 2, axis=-1, keepdims=True)
            r = (r - mean) * jax.lax.rsqrt(var + 1e-5) * g_ref[...] + beta_ref[...]
        o_ref[...] = r.astype(o_ref.dtype)


def matmul_fused(x, w, b, *, act=None, residual=None, ln=None,
                 out_dtype=jnp.bfloat16):
    """(M,K)@(K,N)+b with optional exact-GELU, residual add and LayerNorm all
    fused into the epilogue.  bf16 MXU operands, f32 accumulation/epilogue."""
    M, K = x.shape
    N = w.shape[1]
    has_res = residual is not None
    has_ln = ln is not None

    tm = _pick_row_tile(M)
    tn = N if has_ln else _pick_col_tile(N)    # LN needs the whole row in-tile
    tk = _pick_col_tile(K)
    grid = (M // tm, N // tn, K // tk)

    in_specs = [pl.BlockSpec((tm, tk), lambda i, j, k: (i, k)),
                pl.BlockSpec((tk, tn), lambda i, j, k: (k, j)),
                pl.BlockSpec((1, tn), lambda i, j, k: (0, j))]
    args = [x.astype(jnp.bfloat16), w.astype(jnp.bfloat16),
            b.reshape(1, N).astype(jnp.float32)]

    if has_res:
        in_specs.append(pl.BlockSpec((tm, tn), lambda i, j, k: (i, j)))
        args.append(residual.reshape(M, N).astype(jnp.bfloat16))
    if has_ln:
        g, beta = ln
        in_specs.append(pl.BlockSpec((1, tn), lambda i, j, k: (0, j)))
        in_specs.append(pl.BlockSpec((1, tn), lambda i, j, k: (0, j)))
        args.append(g.reshape(1, N).astype(jnp.float32))
        args.append(beta.reshape(1, N).astype(jnp.float32))

    kern = functools.partial(_mm_kernel, act=act, has_res=has_res,
                             has_ln=has_ln)
    return pl.pallas_call(
        kern,
        out_shape=jax.ShapeDtypeStruct((M, N), out_dtype),
        grid=grid,
        in_specs=in_specs,
        out_specs=pl.BlockSpec((tm, tn), lambda i, j, k: (i, j)),
        scratch_shapes=[pltpu.VMEM((tm, tn), jnp.float32)],
        compiler_params=pltpu.CompilerParams(
            dimension_semantics=("parallel", "parallel", "arbitrary"),
            vmem_limit_bytes=_VMEM_LIMIT),
    )(*args)


def linear(x, w, b, *, act=None, residual=None, ln=None,
           out_dtype=jnp.bfloat16):
    shp = x.shape
    N = w.shape[1]
    x2 = x.reshape(-1, shp[-1])
    r2 = None if residual is None else residual.reshape(-1, N)
    M = x2.shape[0]

    # Pad large-but-unaligned row counts so the MXU M dim never degenerates to
    # a 16/32-row tile (review item); padded rows are zeros and get sliced off.
    Mp = M
    if M > 256 and M % 128 != 0:
        Mp = _round_up(M, 128)
        x2 = jnp.pad(x2, ((0, Mp - M), (0, 0)))
        if r2 is not None:
            r2 = jnp.pad(r2, ((0, Mp - M), (0, 0)))

    out = matmul_fused(x2, w, b, act=act, residual=r2, ln=ln,
                       out_dtype=out_dtype)
    if Mp != M:
        out = out[:M]
    return out.reshape(shp[:-1] + (N,))


# ------------------------------ LayerNorm kernel ---------------------------- #
# (only used where a LN is NOT preceded by a matmul: encoder/decoder final norm)

def _layernorm_kernel(x_ref, g_ref, b_ref, o_ref):
    x = x_ref[...].astype(jnp.float32)
    mean = jnp.mean(x, axis=-1, keepdims=True)
    var = jnp.mean((x - mean) ** 2, axis=-1, keepdims=True)
    inv = jax.lax.rsqrt(var + 1e-5)
    o_ref[...] = ((x - mean) * inv * g_ref[...] + b_ref[...]).astype(o_ref.dtype)


def layer_norm(x, g, b, out_dtype=jnp.bfloat16):
    shp = x.shape
    D = shp[-1]
    x2 = x.reshape(-1, D)
    M = x2.shape[0]
    tm = _pick_row_tile(M)
    out = pl.pallas_call(
        _layernorm_kernel,
        out_shape=jax.ShapeDtypeStruct((M, D), out_dtype),
        grid=(M // tm,),
        in_specs=[pl.BlockSpec((tm, D), lambda i: (i, 0)),
                  pl.BlockSpec((1, D), lambda i: (0, 0)),
                  pl.BlockSpec((1, D), lambda i: (0, 0))],
        out_specs=pl.BlockSpec((tm, D), lambda i: (i, 0)),
        compiler_params=pltpu.CompilerParams(
            dimension_semantics=("parallel",),
            vmem_limit_bytes=_VMEM_LIMIT),
    )(x2, g.reshape(1, D).astype(jnp.float32),
      b.reshape(1, D).astype(jnp.float32))
    return out.reshape(shp)


# ------------------------------ attention kernels --------------------------- #

def _mha_core(q, k, v, o_ref, *, n_heads, causal):
    """q/k/v: (L, dm) bf16 slabs, heads in column order, Q pre-scaled by
    1/sqrt(dh) (folded into the projection weights).  Builds the full
    head-concatenated (Lq, dm) result and issues one lane-dense store."""
    Lq, dm = q.shape
    Lk = k.shape[0]
    dh = dm // n_heads
    if causal:
        # TriangularCausalMask; hoisted out of the head loop.  masked_fill(-inf)
        # commutes with the (positive) scale already folded into Q.
        row = jax.lax.broadcasted_iota(jnp.int32, (Lq, Lk), 0)
        col = jax.lax.broadcasted_iota(jnp.int32, (Lq, Lk), 1)
        neg = jnp.where(col > row, jnp.float32(-jnp.inf), jnp.float32(0.0))
    contract = (((1,), (1,)), ((), ()))
    outs = []
    # TODO(synk): per-head column slices below sit at dh-lane offsets (in-VMEM
    # relayout); a head-major layout or kv-tiled flash variant would remove it
    # at the cost of extra HBM transposes -- not worth it at these sizes.
    for h in range(n_heads):
        sl = slice(h * dh, (h + 1) * dh)
        s = jax.lax.dot_general(q[:, sl], k[:, sl], contract,
                                preferred_element_type=jnp.float32)
        if causal:
            s = s + neg
        m = jnp.max(s, axis=-1, keepdims=True)
        p = jnp.exp(s - m)
        denom = jnp.sum(p, axis=-1, keepdims=True)
        a = p * pl.reciprocal(denom, approx=True)
        out_h = jnp.dot(a.astype(jnp.bfloat16), v[:, sl],
                        preferred_element_type=jnp.float32)
        outs.append(out_h.astype(jnp.bfloat16))
    # single full-width (lane-dense) store of the whole batch-row result
    o_ref[0] = jnp.concatenate(outs, axis=1)


def _self_attn_kernel(qkv_ref, o_ref, *, n_heads, causal):
    qkv = qkv_ref[0]                       # (L, 3*dm) packed Q|K|V
    dm = qkv.shape[1] // 3
    _mha_core(qkv[:, :dm], qkv[:, dm:2 * dm], qkv[:, 2 * dm:], o_ref,
              n_heads=n_heads, causal=causal)


def _cross_attn_kernel(q_ref, kv_ref, o_ref, *, n_heads):
    q = q_ref[0]                           # (Lq, dm)
    kv = kv_ref[0]                         # (Lk, 2*dm) packed K|V
    dm = q.shape[1]
    _mha_core(q, kv[:, :dm], kv[:, dm:], o_ref, n_heads=n_heads, causal=False)


def self_attention(qkv, *, n_heads, causal):
    """qkv: (B, L, 3*dm) bf16 packed Q|K|V -> (B, L, dm) bf16."""
    B, L, dm3 = qkv.shape
    dm = dm3 // 3
    kern = functools.partial(_self_attn_kernel, n_heads=n_heads, causal=causal)
    return pl.pallas_call(
        kern,
        out_shape=jax.ShapeDtypeStruct((B, L, dm), jnp.bfloat16),
        grid=(B,),
        in_specs=[pl.BlockSpec((1, L, dm3), lambda b: (b, 0, 0))],
        out_specs=pl.BlockSpec((1, L, dm), lambda b: (b, 0, 0)),
        compiler_params=pltpu.CompilerParams(
            dimension_semantics=("parallel",),
            vmem_limit_bytes=_VMEM_LIMIT),
    )(qkv.astype(jnp.bfloat16))


def cross_attention(q, kv, *, n_heads):
    """q: (B, Lq, dm); kv: (B, Lk, 2*dm) packed K|V -> (B, Lq, dm) bf16."""
    B, Lq, dm = q.shape
    Lk = kv.shape[1]
    kern = functools.partial(_cross_attn_kernel, n_heads=n_heads)
    return pl.pallas_call(
        kern,
        out_shape=jax.ShapeDtypeStruct((B, Lq, dm), jnp.bfloat16),
        grid=(B,),
        in_specs=[pl.BlockSpec((1, Lq, dm), lambda b: (b, 0, 0)),
                  pl.BlockSpec((1, Lk, 2 * dm), lambda b: (b, 0, 0))],
        out_specs=pl.BlockSpec((1, Lq, dm), lambda b: (b, 0, 0)),
        compiler_params=pltpu.CompilerParams(
            dimension_semantics=("parallel",),
            vmem_limit_bytes=_VMEM_LIMIT),
    )(q.astype(jnp.bfloat16), kv.astype(jnp.bfloat16))


# ------------------------ circular Conv1d (k=3, pad=1) ----------------------- #

def _cconv_kernel(x_ref, w_ref, b_ref, o_ref):
    x = x_ref[0]                  # (L, Cin) bf16, un-shifted / un-padded
    L = x.shape[0]
    # lane-dense matmuls on the un-shifted slab, then cheap XLU rolls of the
    # f32 results (replaces the host-side circular pad + sublane-offset slices)
    y_prev = jnp.dot(x, w_ref[0], preferred_element_type=jnp.float32)
    y_mid = jnp.dot(x, w_ref[1], preferred_element_type=jnp.float32)
    y_next = jnp.dot(x, w_ref[2], preferred_element_type=jnp.float32)
    acc = (pltpu.roll(y_prev, 1, axis=0)        # contributes x[(l-1) mod L] @ w0
           + y_mid                              # x[l] @ w1
           + pltpu.roll(y_next, L - 1, axis=0)) # x[(l+1) mod L] @ w2
    o_ref[0] = (acc + b_ref[...]).astype(o_ref.dtype)


def circular_conv1d(x, w3, b, *, out_dtype=jnp.float32):
    """Conv1d(kernel=3, padding=1, padding_mode='circular'), channels-last.
    x: (B, L, Cin); w3: (3, Cin, Cout) with w3[k, c, o] == torch_weight[o, c, k]."""
    B, L, C = x.shape
    Cout = w3.shape[2]
    return pl.pallas_call(
        _cconv_kernel,
        out_shape=jax.ShapeDtypeStruct((B, L, Cout), out_dtype),
        grid=(B,),
        in_specs=[pl.BlockSpec((1, L, C), lambda i: (i, 0, 0)),
                  pl.BlockSpec((3, C, Cout), lambda i: (0, 0, 0)),
                  pl.BlockSpec((1, Cout), lambda i: (0, 0))],
        out_specs=pl.BlockSpec((1, L, Cout), lambda i: (i, 0, 0)),
        compiler_params=pltpu.CompilerParams(
            dimension_semantics=("parallel",),
            vmem_limit_bytes=_VMEM_LIMIT),
    )(x.astype(jnp.bfloat16), w3.astype(jnp.bfloat16),
      b.reshape(1, Cout).astype(jnp.float32))


# ------------------------------- JAX glue ----------------------------------- #

def sinusoid_table(n_pos, d_model):
    pos = np.arange(n_pos, dtype=np.float32)[:, None]
    div = np.exp(np.arange(0, d_model, 2, dtype=np.float32)
                 * -(math.log(10000.0) / d_model))
    tab = np.zeros((n_pos, d_model), dtype=np.float32)
    tab[:, 0::2] = np.sin(pos * div)
    tab[:, 1::2] = np.cos(pos * div)
    return jnp.asarray(tab)


def data_embedding(x, x_mark, p):
    """DataEmbedding: TokenEmbedding (circular conv) + PositionalEmbedding
    + TemporalEmbedding(embed='fixed', freq='h').  x_mark = [month,day,weekday,hour]."""
    B, L, _ = x.shape
    val = circular_conv1d(x, p['tok_w'], p['tok_b'])
    pos = p['pos_tab'][:L][None, :, :]
    temporal = (p['hour_tab'][x_mark[:, :, 3]]
                + p['weekday_tab'][x_mark[:, :, 2]]
                + p['day_tab'][x_mark[:, :, 1]]
                + p['month_tab'][x_mark[:, :, 0]])
    return (val + pos + temporal).astype(jnp.bfloat16)


def attention_block(xq, xkv, p, n_heads, *, causal, mix, is_self, ln):
    """AttentionLayer + residual + following LayerNorm.  The residual add and
    the LayerNorm are both fused into the output-projection matmul epilogue.
    Returns LN(xq + attn(xq, xkv, xkv))."""
    B, Lq, dm = xq.shape
    if is_self:
        qkv = linear(xq, p['wqkv'], p['bqkv'])                 # (B,Lq,3dm) bf16
        out = self_attention(qkv, n_heads=n_heads, causal=causal)
    else:
        q = linear(xq, p['wq'], p['bq'])
        kv = linear(xkv, p['wkv'], p['bkv'])                   # (B,Lk,2dm) bf16
        out = cross_attention(q, kv, n_heads=n_heads)
    if mix:
        # AttentionLayer mix=True: (B,L,H,D).transpose(2,1).contiguous().view(B,L,-1)
        # -- intentionally interleaves (head, position); faithful to Informer.
        dh = dm // n_heads
        out = out.reshape(B, Lq, n_heads, dh).transpose(0, 2, 1, 3)
        out = out.reshape(B, Lq, dm)
    return linear(out, p['wo'], p['bo'], residual=xq, ln=ln)


def encoder_layer(x, p, n_heads):
    x = attention_block(x, x, p['attn'], n_heads, causal=False, mix=False,
                        is_self=True, ln=(p['n1_g'], p['n1_b']))
    y = linear(x, p['w1'], p['b1'], act='gelu')
    return linear(y, p['w2'], p['b2'], residual=x, ln=(p['n2_g'], p['n2_b']))


def decoder_layer(x, cross, p, n_heads):
    x = attention_block(x, x, p['self_attn'], n_heads, causal=True, mix=True,
                        is_self=True, ln=(p['n1_g'], p['n1_b']))
    x = attention_block(x, cross, p['cross_attn'], n_heads, causal=False,
                        mix=False, is_self=False, ln=(p['n2_g'], p['n2_b']))
    y = linear(x, p['w1'], p['b1'], act='gelu')
    return linear(y, p['w2'], p['b2'], residual=x, ln=(p['n3_g'], p['n3_b']))


def batch_norm_train(x, gamma, beta, eps=1e-5):
    """BatchNorm1d in training mode: per-channel stats over (B, L)."""
    mean = jnp.mean(x, axis=(0, 1), keepdims=True)
    var = jnp.mean((x - mean) ** 2, axis=(0, 1), keepdims=True)
    return (x - mean) * jax.lax.rsqrt(var + eps) * gamma + beta


def max_pool1d_k3s2p1(x):
    B, L, C = x.shape
    xp = jnp.pad(x, ((0, 0), (1, 1), (0, 0)), constant_values=-jnp.inf)
    lout = (L + 2 - 3) // 2 + 1
    idx = jnp.arange(lout) * 2
    win = jnp.stack([xp[:, idx + k, :] for k in range(3)], axis=0)
    return jnp.max(win, axis=0)


def distil_conv_layer(x, p):
    # TODO(synk): BatchNorm needs global (B,L) statistics, so BN/ELU/maxpool are
    # left as cheap XLA elementwise/window ops; the conv itself is a Pallas kernel.
    x = circular_conv1d(x, p['w'], p['b'], out_dtype=jnp.float32)
    x = batch_norm_train(x, p['bn_g'], p['bn_b'])
    x = jax.nn.elu(x)
    return max_pool1d_k3s2p1(x).astype(jnp.bfloat16)


def informer_forward(params, x_enc, x_mark_enc, x_dec, x_mark_dec, *,
                     n_heads, pred_len):
    # TODO(synk): CarAttention's source is not provided with the reference
    # module; its additive branch `x_enc1` is omitted (zero contribution).
    enc_out = data_embedding(x_enc, x_mark_enc, params['enc_emb'])

    # Encoder (distil=True): attn -> ConvLayer -> ... -> last attn -> LayerNorm
    x = enc_out
    for lp, cp in zip(params['enc_layers'][:-1], params['conv_layers']):
        x = encoder_layer(x, lp, n_heads)
        x = distil_conv_layer(x, cp)
    x = encoder_layer(x, params['enc_layers'][-1], n_heads)
    enc_out = layer_norm(x, params['enc_norm_g'], params['enc_norm_b'])

    dec_out = data_embedding(x_dec, x_mark_dec, params['dec_emb'])
    for lp in params['dec_layers']:
        dec_out = decoder_layer(dec_out, enc_out, lp, n_heads)
    dec_out = layer_norm(dec_out, params['dec_norm_g'], params['dec_norm_b'])
    dec_out = linear(dec_out, params['proj_w'], params['proj_b'],
                     out_dtype=jnp.float32)
    return dec_out[:, -pred_len:, :]


# ---------------------------- parameter init -------------------------------- #

def init_params(key, *, enc_in, dec_in, c_out, d_model, n_heads, d_ff,
                e_layers, d_layers, max_len):
    keys = iter(jax.random.split(key, 256))

    def w(shape, scale=0.05):
        return scale * jax.random.normal(next(keys), shape, jnp.float32)

    def zeros(shape):
        return jnp.zeros(shape, jnp.float32)

    def ones(shape):
        return jnp.ones(shape, jnp.float32)

    bf = jnp.bfloat16
    dh = d_model // n_heads
    scale = 1.0 / math.sqrt(dh)

    def attn_params():
        # 1/sqrt(dh) folded into the Q projection; Wq|Wk|Wv and Wk|Wv
        # pre-concatenated (and pre-cast to bf16) at init.
        wq, bq = w((d_model, d_model)), zeros((d_model,))
        wk, bk = w((d_model, d_model)), zeros((d_model,))
        wv, bv = w((d_model, d_model)), zeros((d_model,))
        wo, bo = w((d_model, d_model)), zeros((d_model,))
        return dict(
            wqkv=jnp.concatenate([wq * scale, wk, wv], axis=1).astype(bf),
            bqkv=jnp.concatenate([bq * scale, bk, bv]),
            wq=(wq * scale).astype(bf), bq=bq * scale,
            wkv=jnp.concatenate([wk, wv], axis=1).astype(bf),
            bkv=jnp.concatenate([bk, bv]),
            wo=wo.astype(bf), bo=bo)

    def emb_params(c_in):
        return dict(tok_w=w((3, c_in, d_model)).astype(bf),
                    tok_b=zeros((d_model,)),
                    pos_tab=sinusoid_table(max_len, d_model),
                    month_tab=sinusoid_table(13, d_model),
                    day_tab=sinusoid_table(32, d_model),
                    weekday_tab=sinusoid_table(7, d_model),
                    hour_tab=sinusoid_table(24, d_model))

    def enc_layer_params():
        return dict(attn=attn_params(),
                    w1=w((d_model, d_ff)).astype(bf), b1=zeros((d_ff,)),
                    w2=w((d_ff, d_model)).astype(bf), b2=zeros((d_model,)),
                    n1_g=ones((d_model,)), n1_b=zeros((d_model,)),
                    n2_g=ones((d_model,)), n2_b=zeros((d_model,)))

    def dec_layer_params():
        return dict(self_attn=attn_params(), cross_attn=attn_params(),
                    w1=w((d_model, d_ff)).astype(bf), b1=zeros((d_ff,)),
                    w2=w((d_ff, d_model)).astype(bf), b2=zeros((d_model,)),
                    n1_g=ones((d_model,)), n1_b=zeros((d_model,)),
                    n2_g=ones((d_model,)), n2_b=zeros((d_model,)),
                    n3_g=ones((d_model,)), n3_b=zeros((d_model,)))

    def conv_layer_params():
        return dict(w=w((3, d_model, d_model)).astype(bf), b=zeros((d_model,)),
                    bn_g=ones((d_model,)), bn_b=zeros((d_model,)))

    return dict(
        enc_emb=emb_params(enc_in),
        dec_emb=emb_params(dec_in),
        enc_layers=[enc_layer_params() for _ in range(e_layers)],
        conv_layers=[conv_layer_params() for _ in range(e_layers - 1)],
        enc_norm_g=ones((d_model,)), enc_norm_b=zeros((d_model,)),
        dec_layers=[dec_layer_params() for _ in range(d_layers)],
        dec_norm_g=ones((d_model,)), dec_norm_b=zeros((d_model,)),
        proj_w=w((d_model, c_out)).astype(bf), proj_b=zeros((c_out,)),
    )


# --------------------------------- main ------------------------------------ #

if __name__ == "__main__":
    B = 2
    enc_in = dec_in = c_out = 8
    seq_len = 16
    label_len = 8
    pred_len = 8          # out_len
    d_model = 32
    n_heads = 4
    d_ff = 32
    e_layers = 2          # distil=True -> 1 ConvLayer
    d_layers = 1

    key = jax.random.PRNGKey(0)
    kp, k1, k2, k3, k4 = jax.random.split(key, 5)
    params = init_params(kp, enc_in=enc_in, dec_in=dec_in, c_out=c_out,
                         d_model=d_model, n_heads=n_heads, d_ff=d_ff,
                         e_layers=e_layers, d_layers=d_layers,
                         max_len=seq_len + label_len + pred_len)

    x_enc = jax.random.normal(k1, (B, seq_len, enc_in), jnp.float32)
    x_dec = jax.random.normal(k2, (B, label_len + pred_len, dec_in), jnp.float32)

    def make_marks(k, L):
        km, kd, kw, kh = jax.random.split(k, 4)
        month = jax.random.randint(km, (B, L, 1), 0, 13)
        day = jax.random.randint(kd, (B, L, 1), 0, 32)
        weekday = jax.random.randint(kw, (B, L, 1), 0, 7)
        hour = jax.random.randint(kh, (B, L, 1), 0, 24)
        return jnp.concatenate([month, day, weekday, hour], axis=-1)

    x_mark_enc = make_marks(k3, seq_len)
    x_mark_dec = make_marks(k4, label_len + pred_len)

    fwd = jax.jit(functools.partial(informer_forward, n_heads=n_heads,
                                    pred_len=pred_len))
    out = fwd(params, x_enc, x_mark_enc, x_dec, x_mark_dec)
    out = jax.block_until_ready(out)

    assert out.shape == (B, pred_len, c_out), out.shape
    assert bool(jnp.all(jnp.isfinite(out)))
    print("KERNEL_OK")
</pallas_src>

<mosaic_0001>
module attributes {stable_mosaic.version = 11 : i64} {
  func.func @_cconv_kernel(%arg0: i32, %arg1: memref<1x16x8xbf16, #tpu.memory_space<vmem>>, %arg2: memref<3x8x32xbf16, #tpu.memory_space<vmem>>, %arg3: memref<1x32xf32, #tpu.memory_space<vmem>>, %arg4: memref<1x16x32xf32, #tpu.memory_space<vmem>>) attributes {dimension_semantics = [#tpu.dimension_semantics<parallel>], iteration_bounds = array<i64: 2>, scalar_prefetch = 0 : i64, scratch_operands = 0 : i64, tpu.core_type = #tpu.core_type<tc>, window_params = [{transform_indices = @transform_0, window_bounds = array<i64: 1, 16, 8>}, {pipeline_mode = #tpu.pipeline_mode<synchronous>, transform_indices = @transform_1, window_bounds = array<i64: 3, 8, 32>}, {pipeline_mode = #tpu.pipeline_mode<synchronous>, transform_indices = @transform_2, window_bounds = array<i64: 1, 32>}, {transform_indices = @transform_3, window_bounds = array<i64: 1, 16, 32>}]} {
    %c0 = arith.constant 0 : index
    %c0_0 = arith.constant 0 : index
    %c0_1 = arith.constant 0 : index
    %0 = vector.load %arg1[%c0, %c0_0, %c0_1] : memref<1x16x8xbf16, #tpu.memory_space<vmem>>, vector<1x16x8xbf16>
    %1 = vector.shape_cast %0 : vector<1x16x8xbf16> to vector<16x8xbf16>
    %c0_2 = arith.constant 0 : index
    %c0_3 = arith.constant 0 : index
    %c0_4 = arith.constant 0 : index
    %2 = vector.load %arg2[%c0_2, %c0_3, %c0_4] : memref<3x8x32xbf16, #tpu.memory_space<vmem>>, vector<1x8x32xbf16>
    %3 = vector.shape_cast %2 : vector<1x8x32xbf16> to vector<8x32xbf16>
    %cst = arith.constant dense<0.000000e+00> : vector<16x32xf32>
    %4 = tpu.matmul %1, %3, %cst {dimension_numbers = #tpu.dot_dimension_numbers<[1], [0], [0], [1], [0, 0, 1, 1], [], []>} : vector<16x8xbf16>, vector<8x32xbf16>, vector<16x32xf32> -> vector<16x32xf32>
    %c1 = arith.constant 1 : index
    %c0_5 = arith.constant 0 : index
    %c0_6 = arith.constant 0 : index
    %5 = vector.load %arg2[%c1, %c0_5, %c0_6] : memref<3x8x32xbf16, #tpu.memory_space<vmem>>, vector<1x8x32xbf16>
    %6 = vector.shape_cast %5 : vector<1x8x32xbf16> to vector<8x32xbf16>
    %cst_7 = arith.constant dense<0.000000e+00> : vector<16x32xf32>
    %7 = tpu.matmul %1, %6, %cst_7 {dimension_numbers = #tpu.dot_dimension_numbers<[1], [0], [0], [1], [0, 0, 1, 1], [], []>} : vector<16x8xbf16>, vector<8x32xbf16>, vector<16x32xf32> -> vector<16x32xf32>
    %c2 = arith.constant 2 : index
    %c0_8 = arith.constant 0 : index
    %c0_9 = arith.constant 0 : index
    %8 = vector.load %arg2[%c2, %c0_8, %c0_9] : memref<3x8x32xbf16, #tpu.memory_space<vmem>>, vector<1x8x32xbf16>
    %9 = vector.shape_cast %8 : vector<1x8x32xbf16> to vector<8x32xbf16>
    %cst_10 = arith.constant dense<0.000000e+00> : vector<16x32xf32>
    %10 = tpu.matmul %1, %9, %cst_10 {dimension_numbers = #tpu.dot_dimension_numbers<[1], [0], [0], [1], [0, 0, 1, 1], [], []>} : vector<16x8xbf16>, vector<8x32xbf16>, vector<16x32xf32> -> vector<16x32xf32>
    %c1_i32 = arith.constant 1 : i32
    %11 = tpu.dynamic_rotate %4 by %c1_i32 dim 0 : vector<16x32xf32>, i32 -> vector<16x32xf32>
    %12 = arith.addf %11, %7 : vector<16x32xf32>
    %c15_i32 = arith.constant 15 : i32
    %13 = tpu.dynamic_rotate %10 by %c15_i32 dim 0 : vector<16x32xf32>, i32 -> vector<16x32xf32>
    %14 = arith.addf %12, %13 : vector<16x32xf32>
    %c0_11 = arith.constant 0 : index
    %c0_12 = arith.constant 0 : index
    %15 = vector.load %arg3[%c0_11, %c0_12] : memref<1x32xf32, #tpu.memory_space<vmem>>, vector<1x32xf32>
    %16 = vector.broadcast %15 : vector<1x32xf32> to vector<16x32xf32>
    %17 = arith.addf %14, %16 : vector<16x32xf32>
    %c0_13 = arith.constant 0 : index
    %c0_14 = arith.constant 0 : index
    %c0_15 = arith.constant 0 : index
    %18 = vector.load %arg4[%c0_13, %c0_14, %c0_15] : memref<1x16x32xf32, #tpu.memory_space<vmem>>, vector<1x16x32xf32>
    %19 = vector.shape_cast %18 : vector<1x16x32xf32> to vector<16x32xf32>
    %20 = vector.shape_cast %17 : vector<16x32xf32> to vector<1x16x32xf32>
    tpu.vector_store %arg4[%c0_13, %c0_14, %c0_15], %20 {strides = array<i32>} : memref<1x16x32xf32, #tpu.memory_space<vmem>>, vector<1x16x32xf32>,
    return
  }
  func.func @transform_0(%arg0: i32) -> (i32, i32, i32) {
    %c0_i32 = arith.constant 0 : i32
    %c0_i32_0 = arith.constant 0 : i32
    %c0_i32_1 = arith.constant 0 : i32
    return %arg0, %c0_i32, %c0_i32_0 : i32, i32, i32
  }
  func.func @transform_1(%arg0: i32) -> (i32, i32, i32) {
    %c0_i32 = arith.constant 0 : i32
    %c0_i32_0 = arith.constant 0 : i32
    %c0_i32_1 = arith.constant 0 : i32
    %c0_i32_2 = arith.constant 0 : i32
    return %c0_i32, %c0_i32_0, %c0_i32_1 : i32, i32, i32
  }
  func.func @transform_2(%arg0: i32) -> (i32, i32) {
    %c0_i32 = arith.constant 0 : i32
    %c0_i32_0 = arith.constant 0 : i32
    %c0_i32_1 = arith.constant 0 : i32
    return %c0_i32, %c0_i32_0 : i32, i32
  }
  func.func @transform_3(%arg0: i32) -> (i32, i32, i32) {
    %c0_i32 = arith.constant 0 : i32
    %c0_i32_0 = arith.constant 0 : i32
    %c0_i32_1 = arith.constant 0 : i32
    return %arg0, %c0_i32, %c0_i32_0 : i32, i32, i32
  }
}

module attributes {stable_mosaic.version = 11 : i64} {
  func.func @_self_attn_kernel(%arg0: i32, %arg1: memref<1x16x96xbf16, #tpu.memory_space<vmem>>, %arg2: memref<1x16x32xbf16, #tpu.memory_space<vmem>>) attributes {dimension_semantics = [#tpu.dimension_semantics<parallel>], iteration_bounds = array<i64: 2>, scalar_prefetch = 0 : i64, scratch_operands = 0 : i64, tpu.core_type = #tpu.core_type<tc>, window_params = [{transform_indices = @transform_0, window_bounds = array<i64: 1, 16, 96>}, {transform_indices = @transform_1, window_bounds = array<i64: 1, 16, 32>}]} {
    %c0 = arith.constant 0 : index
    %c0_0 = arith.constant 0 : index
    %c0_1 = arith.constant 0 : index
    %0 = vector.load %arg1[%c0, %c0_0, %c0_1] : memref<1x16x96xbf16, #tpu.memory_space<vmem>>, vector<1x16x96xbf16>
    %1 = vector.shape_cast %0 : vector<1x16x96xbf16> to vector<16x96xbf16>
    %2 = vector.extract_strided_slice %1 {offsets = [0, 0], sizes = [16, 32], strides = [1, 1]} : vector<16x96xbf16> to vector<16x32xbf16>
    %3 = vector.extract_strided_slice %1 {offsets = [0, 32], sizes = [16, 32], strides = [1, 1]} : vector<16x96xbf16> to vector<16x32xbf16>
    %4 = vector.extract_strided_slice %1 {offsets = [0, 64], sizes = [16, 32], strides = [1, 1]} : vector<16x96xbf16> to vector<16x32xbf16>
    %5 = vector.extract_strided_slice %2 {offsets = [0, 0], sizes = [16, 8], strides = [1, 1]} : vector<16x32xbf16> to vector<16x8xbf16>
    %6 = vector.extract_strided_slice %3 {offsets = [0, 0], sizes = [16, 8], strides = [1, 1]} : vector<16x32xbf16> to vector<16x8xbf16>
    %cst = arith.constant dense<0.000000e+00> : vector<16x16xf32>
    %7 = tpu.matmul %5, %6, %cst {dimension_numbers = #tpu.dot_dimension_numbers<[1], [1], [0], [0], [0, 0, 1, 0], [], []>} : vector<16x8xbf16>, vector<16x8xbf16>, vector<16x16xf32> -> vector<16x16xf32>
    %cst_2 = arith.constant dense<0xFF800000> : vector<16xf32>
    %8 = vector.multi_reduction <maximumf>, %7, %cst_2 [1] : vector<16x16xf32> to vector<16xf32>
    %9 = vector.shape_cast %8 : vector<16xf32> to vector<16x1xf32>
    %10 = vector.broadcast %9 : vector<16x1xf32> to vector<16x16xf32>
    %11 = arith.subf %7, %10 : vector<16x16xf32>
    %12 = math.exp %11 : vector<16x16xf32>
    %cst_3 = arith.constant dense<0.000000e+00> : vector<16xf32>
    %13 = vector.multi_reduction <add>, %12, %cst_3 [1] : vector<16x16xf32> to vector<16xf32>
    %14 = vector.shape_cast %13 : vector<16xf32> to vector<16x1xf32>
    %15 = tpu.reciprocal %14 {approx = true} : vector<16x1xf32> -> vector<16x1xf32>
    %16 = vector.broadcast %15 : vector<16x1xf32> to vector<16x16xf32>
    %17 = arith.mulf %12, %16 : vector<16x16xf32>
    %18 = arith.truncf %17 : vector<16x16xf32> to vector<16x16xbf16>
    %19 = vector.extract_strided_slice %4 {offsets = [0, 0], sizes = [16, 8], strides = [1, 1]} : vector<16x32xbf16> to vector<16x8xbf16>
    %cst_4 = arith.constant dense<0.000000e+00> : vector<16x8xf32>
    %20 = tpu.matmul %18, %19, %cst_4 {dimension_numbers = #tpu.dot_dimension_numbers<[1], [0], [0], [1], [0, 0, 1, 1], [], []>} : vector<16x16xbf16>, vector<16x8xbf16>, vector<16x8xf32> -> vector<16x8xf32>
    %21 = arith.truncf %20 : vector<16x8xf32> to vector<16x8xbf16>
    %22 = vector.extract_strided_slice %2 {offsets = [0, 8], sizes = [16, 8], strides = [1, 1]} : vector<16x32xbf16> to vector<16x8xbf16>
    %23 = vector.extract_strided_slice %3 {offsets = [0, 8], sizes = [16, 8], strides = [1, 1]} : vector<16x32xbf16> to vector<16x8xbf16>
    %cst_5 = arith.constant dense<0.000000e+00> : vector<16x16xf32>
    %24 = tpu.matmul %22, %23, %cst_5 {dimension_numbers = #tpu.dot_dimension_numbers<[1], [1], [0], [0], [0, 0, 1, 0], [], []>} : vector<16x8xbf16>, vector<16x8xbf16>, vector<16x16xf32> -> vector<16x16xf32>
    %cst_6 = arith.constant dense<0xFF800000> : vector<16xf32>
    %25 = vector.multi_reduction <maximumf>, %24, %cst_6 [1] : vector<16x16xf32> to vector<16xf32>
    %26 = vector.shape_cast %25 : vector<16xf32> to vector<16x1xf32>
    %27 = vector.broadcast %26 : vector<16x1xf32> to vector<16x16xf32>
    %28 = arith.subf %24, %27 : vector<16x16xf32>
    %29 = math.exp %28 : vector<16x16xf32>
    %cst_7 = arith.constant dense<0.000000e+00> : vector<16xf32>
    %30 = vector.multi_reduction <add>, %29, %cst_7 [1] : vector<16x16xf32> to vector<16xf32>
    %31 = vector.shape_cast %30 : vector<16xf32> to vector<16x1xf32>
    %32 = tpu.reciprocal %31 {approx = true} : vector<16x1xf32> -> vector<16x1xf32>
    %33 = vector.broadcast %32 : vector<16x1xf32> to vector<16x16xf32>
    %34 = arith.mulf %29, %33 : vector<16x16xf32>
    %35 = arith.truncf %34 : vector<16x16xf32> to vector<16x16xbf16>
    %36 = vector.extract_strided_slice %4 {offsets = [0, 8], sizes = [16, 8], strides = [1, 1]} : vector<16x32xbf16> to vector<16x8xbf16>
    %cst_8 = arith.constant dense<0.000000e+00> : vector<16x8xf32>
    %37 = tpu.matmul %35, %36, %cst_8 {dimension_numbers = #tpu.dot_dimension_numbers<[1], [0], [0], [1], [0, 0, 1, 1], [], []>} : vector<16x16xbf16>, vector<16x8xbf16>, vector<16x8xf32> -> vector<16x8xf32>
    %38 = arith.truncf %37 : vector<16x8xf32> to vector<16x8xbf16>
    %39 = vector.extract_strided_slice %2 {offsets = [0, 16], sizes = [16, 8], strides = [1, 1]} : vector<16x32xbf16> to vector<16x8xbf16>
    %40 = vector.extract_strided_slice %3 {offsets = [0, 16], sizes = [16, 8], strides = [1, 1]} : vector<16x32xbf16> to vector<16x8xbf16>
    %cst_9 = arith.constant dense<0.000000e+00> : vector<16x16xf32>
    %41 = tpu.matmul %39, %40, %cst_9 {dimension_numbers = #tpu.dot_dimension_numbers<[1], [1], [0], [0], [0, 0, 1, 0], [], []>} : vector<16x8xbf16>, vector<16x8xbf16>, vector<16x16xf32> -> vector<16x16xf32>
    %cst_10 = arith.constant dense<0xFF800000> : vector<16xf32>
    %42 = vector.multi_reduction <maximumf>, %41, %cst_10 [1] : vector<16x16xf32> to vector<16xf32>
    %43 = vector.shape_cast %42 : vector<16xf32> to vector<16x1xf32>
    %44 = vector.broadcast %43 : vector<16x1xf32> to vector<16x16xf32>
    %45 = arith.subf %41, %44 : vector<16x16xf32>
    %46 = math.exp %45 : vector<16x16xf32>
    %cst_11 = arith.constant dense<0.000000e+00> : vector<16xf32>
    %47 = vector.multi_reduction <add>, %46, %cst_11 [1] : vector<16x16xf32> to vector<16xf32>
    %48 = vector.shape_cast %47 : vector<16xf32> to vector<16x1xf32>
    %49 = tpu.reciprocal %48 {approx = true} : vector<16x1xf32> -> vector<16x1xf32>
    %50 = vector.broadcast %49 : vector<16x1xf32> to vector<16x16xf32>
    %51 = arith.mulf %46, %50 : vector<16x16xf32>
    %52 = arith.truncf %51 : vector<16x16xf32> to vector<16x16xbf16>
    %53 = vector.extract_strided_slice %4 {offsets = [0, 16], sizes = [16, 8], strides = [1, 1]} : vector<16x32xbf16> to vector<16x8xbf16>
    %cst_12 = arith.constant dense<0.000000e+00> : vector<16x8xf32>
    %54 = tpu.matmul %52, %53, %cst_12 {dimension_numbers = #tpu.dot_dimension_numbers<[1], [0], [0], [1], [0, 0, 1, 1], [], []>} : vector<16x16xbf16>, vector<16x8xbf16>, vector<16x8xf32> -> vector<16x8xf32>
    %55 = arith.truncf %54 : vector<16x8xf32> to vector<16x8xbf16>
    %56 = vector.extract_strided_slice %2 {offsets = [0, 24], sizes = [16, 8], strides = [1, 1]} : vector<16x32xbf16> to vector<16x8xbf16>
    %57 = vector.extract_strided_slice %3 {offsets = [0, 24], sizes = [16, 8], strides = [1, 1]} : vector<16x32xbf16> to vector<16x8xbf16>
    %cst_13 = arith.constant dense<0.000000e+00> : vector<16x16xf32>
    %58 = tpu.matmul %56, %57, %cst_13 {dimension_numbers = #tpu.dot_dimension_numbers<[1], [1], [0], [0], [0, 0, 1, 0], [], []>} : vector<16x8xbf16>, vector<16x8xbf16>, vector<16x16xf32> -> vector<16x16xf32>
    %cst_14 = arith.constant dense<0xFF800000> : vector<16xf32>
    %59 = vector.multi_reduction <maximumf>, %58, %cst_14 [1] : vector<16x16xf32> to vector<16xf32>
    %60 = vector.shape_cast %59 : vector<16xf32> to vector<16x1xf32>
    %61 = vector.broadcast %60 : vector<16x1xf32> to vector<16x16xf32>
    %62 = arith.subf %58, %61 : vector<16x16xf32>
    %63 = math.exp %62 : vector<16x16xf32>
    %cst_15 = arith.constant dense<0.000000e+00> : vector<16xf32>
    %64 = vector.multi_reduction <add>, %63, %cst_15 [1] : vector<16x16xf32> to vector<16xf32>
    %65 = vector.shape_cast %64 : vector<16xf32> to vector<16x1xf32>
    %66 = tpu.reciprocal %65 {approx = true} : vector<16x1xf32> -> vector<16x1xf32>
    %67 = vector.broadcast %66 : vector<16x1xf32> to vector<16x16xf32>
    %68 = arith.mulf %63, %67 : vector<16x16xf32>
    %69 = arith.truncf %68 : vector<16x16xf32> to vector<16x16xbf16>
    %70 = vector.extract_strided_slice %4 {offsets = [0, 24], sizes = [16, 8], strides = [1, 1]} : vector<16x32xbf16> to vector<16x8xbf16>
    %cst_16 = arith.constant dense<0.000000e+00> : vector<16x8xf32>
    %71 = tpu.matmul %69, %70, %cst_16 {dimension_numbers = #tpu.dot_dimension_numbers<[1], [0], [0], [1], [0, 0, 1, 1], [], []>} : vector<16x16xbf16>, vector<16x8xbf16>, vector<16x8xf32> -> vector<16x8xf32>
    %72 = arith.truncf %71 : vector<16x8xf32> to vector<16x8xbf16>
    %73 = tpu.concatenate %21, %38, %55, %72 in 1 : vector<16x8xbf16>, vector<16x8xbf16>, vector<16x8xbf16>, vector<16x8xbf16> -> vector<16x32xbf16>
    %c0_17 = arith.constant 0 : index
    %c0_18 = arith.constant 0 : index
    %c0_19 = arith.constant 0 : index
    %74 = vector.load %arg2[%c0_17, %c0_18, %c0_19] : memref<1x16x32xbf16, #tpu.memory_space<vmem>>, vector<1x16x32xbf16>
    %75 = vector.shape_cast %74 : vector<1x16x32xbf16> to vector<16x32xbf16>
    %76 = vector.shape_cast %73 : vector<16x32xbf16> to vector<1x16x32xbf16>
    tpu.vector_store %arg2[%c0_17, %c0_18, %c0_19], %76 {strides = array<i32>} : memref<1x16x32xbf16, #tpu.memory_space<vmem>>, vector<1x16x32xbf16>,
    return
  }
  func.func @transform_0(%arg0: i32) -> (i32, i32, i32) {
    %c0_i32 = arith.constant 0 : i32
    %c0_i32_0 = arith.constant 0 : i32
    %c0_i32_1 = arith.constant 0 : i32
    return %arg0, %c0_i32, %c0_i32_0 : i32, i32, i32
  }
  func.func @transform_1(%arg0: i32) -> (i32, i32, i32) {
    %c0_i32 = arith.constant 0 : i32
    %c0_i32_0 = arith.constant 0 : i32
    %c0_i32_1 = arith.constant 0 : i32
    return %arg0, %c0_i32, %c0_i32_0 : i32, i32, i32
  }
}

module attributes {stable_mosaic.version = 11 : i64} {
  func.func @_mm_kernel(%arg0: i32, %arg1: i32, %arg2: i32, %arg3: memref<32x32xbf16, #tpu.memory_space<vmem>>, %arg4: memref<32x96xbf16, #tpu.memory_space<vmem>>, %arg5: memref<1x96xf32, #tpu.memory_space<vmem>>, %arg6: memref<32x96xbf16, #tpu.memory_space<vmem>>, %arg7: memref<32x96xf32, #tpu.memory_space<vmem>>) attributes {dimension_semantics = [#tpu.dimension_semantics<parallel>, #tpu.dimension_semantics<parallel>, #tpu.dimension_semantics<arbitrary>], iteration_bounds = array<i64: 1, 1, 1>, scalar_prefetch = 0 : i64, scratch_operands = 1 : i64, tpu.core_type = #tpu.core_type<tc>, window_params = [{transform_indices = @transform_0, window_bounds = array<i64: 32, 32>}, {transform_indices = @transform_1, window_bounds = array<i64: 32, 96>}, {transform_indices = @transform_2, window_bounds = array<i64: 1, 96>}, {transform_indices = @transform_3, window_bounds = array<i64: 32, 96>}]} {
    %c0_i32 = arith.constant 0 : i32
    %0 = arith.cmpi eq, %arg2, %c0_i32 : i32
    %1 = arith.extui %0 : i1 to i32
    %c0_i32_0 = arith.constant 0 : i32
    %2 = arith.cmpi ne, %1, %c0_i32_0 : i32
    scf.if %2 {
      %cst_10 = arith.constant 0.000000e+00 : f32
      %12 = vector.broadcast %cst_10 : f32 to vector<32x96xf32>
      %c0_11 = arith.constant 0 : index
      %c0_12 = arith.constant 0 : index
      %13 = vector.load %arg7[%c0_11, %c0_12] : memref<32x96xf32, #tpu.memory_space<vmem>>, vector<32x96xf32>
      tpu.vector_store %arg7[%c0_11, %c0_12], %12 {strides = array<i32>} : memref<32x96xf32, #tpu.memory_space<vmem>>, vector<32x96xf32>,
    } else {
    }
    %c0 = arith.constant 0 : index
    %c0_1 = arith.constant 0 : index
    %3 = vector.load %arg7[%c0, %c0_1] : memref<32x96xf32, #tpu.memory_space<vmem>>, vector<32x96xf32>
    %c0_2 = arith.constant 0 : index
    %c0_3 = arith.constant 0 : index
    %4 = vector.load %arg3[%c0_2, %c0_3] : memref<32x32xbf16, #tpu.memory_space<vmem>>, vector<32x32xbf16>
    %c0_4 = arith.constant 0 : index
    %c0_5 = arith.constant 0 : index
    %5 = vector.load %arg4[%c0_4, %c0_5] : memref<32x96xbf16, #tpu.memory_space<vmem>>, vector<32x96xbf16>
    %cst = arith.constant dense<0.000000e+00> : vector<32x96xf32>
    %6 = tpu.matmul %4, %5, %cst {dimension_numbers = #tpu.dot_dimension_numbers<[1], [0], [0], [1], [0, 0, 1, 1], [], []>} : vector<32x32xbf16>, vector<32x96xbf16>, vector<32x96xf32> -> vector<32x96xf32>
    %7 = arith.addf %3, %6 : vector<32x96xf32>
    %c0_6 = arith.constant 0 : index
    %c0_7 = arith.constant 0 : index
    %8 = vector.load %arg7[%c0_6, %c0_7] : memref<32x96xf32, #tpu.memory_space<vmem>>, vector<32x96xf32>
    tpu.vector_store %arg7[%c0_6, %c0_7], %7 {strides = array<i32>} : memref<32x96xf32, #tpu.memory_space<vmem>>, vector<32x96xf32>,
    %c0_i32_8 = arith.constant 0 : i32
    %9 = arith.cmpi eq, %arg2, %c0_i32_8 : i32
    %10 = arith.extui %9 : i1 to i32
    %c0_i32_9 = arith.constant 0 : i32
    %11 = arith.cmpi ne, %10, %c0_i32_9 : i32
    scf.if %11 {
      %c0_10 = arith.constant 0 : index
      %c0_11 = arith.constant 0 : index
      %12 = vector.load %arg7[%c0_10, %c0_11] : memref<32x96xf32, #tpu.memory_space<vmem>>, vector<32x96xf32>
      %c0_12 = arith.constant 0 : index
      %c0_13 = arith.constant 0 : index
      %13 = vector.load %arg5[%c0_12, %c0_13] : memref<1x96xf32, #tpu.memory_space<vmem>>, vector<1x96xf32>
      %14 = vector.broadcast %13 : vector<1x96xf32> to vector<32x96xf32>
      %15 = arith.addf %12, %14 : vector<32x96xf32>
      %16 = arith.truncf %15 : vector<32x96xf32> to vector<32x96xbf16>
      %c0_14 = arith.constant 0 : index
      %c0_15 = arith.constant 0 : index
      %17 = vector.load %arg6[%c0_14, %c0_15] : memref<32x96xbf16, #tpu.memory_space<vmem>>, vector<32x96xbf16>
      tpu.vector_store %arg6[%c0_14, %c0_15], %16 {strides = array<i32>} : memref<32x96xbf16, #tpu.memory_space<vmem>>, vector<32x96xbf16>,
    } else {
    }
    return
  }
  func.func @transform_0(%arg0: i32, %arg1: i32, %arg2: i32) -> (i32, i32) {
    %c0_i32 = arith.constant 0 : i32
    return %arg0, %arg2 : i32, i32
  }
  func.func @transform_1(%arg0: i32, %arg1: i32, %arg2: i32) -> (i32, i32) {
    %c0_i32 = arith.constant 0 : i32
    return %arg2, %arg1 : i32, i32
  }
  func.func @transform_2(%arg0: i32, %arg1: i32, %arg2: i32) -> (i32, i32) {
    %c0_i32 = arith.constant 0 : i32
    %c0_i32_0 = arith.constant 0 : i32
    return %c0_i32, %arg1 : i32, i32
  }
  func.func @transform_3(%arg0: i32, %arg1: i32, %arg2: i32) -> (i32, i32) {
    %c0_i32 = arith.constant 0 : i32
    return %arg0, %arg1 : i32, i32
  }
}

module attributes {stable_mosaic.version = 11 : i64} {
  func.func @_mm_kernel(%arg0: i32, %arg1: i32, %arg2: i32, %arg3: memref<32x32xbf16, #tpu.memory_space<vmem>>, %arg4: memref<32x32xbf16, #tpu.memory_space<vmem>>, %arg5: memref<1x32xf32, #tpu.memory_space<vmem>>, %arg6: memref<32x32xbf16, #tpu.memory_space<vmem>>, %arg7: memref<1x32xf32, #tpu.memory_space<vmem>>, %arg8: memref<1x32xf32, #tpu.memory_space<vmem>>, %arg9: memref<32x32xbf16, #tpu.memory_space<vmem>>, %arg10: memref<32x32xf32, #tpu.memory_space<vmem>>) attributes {dimension_semantics = [#tpu.dimension_semantics<parallel>, #tpu.dimension_semantics<parallel>, #tpu.dimension_semantics<arbitrary>], iteration_bounds = array<i64: 1, 1, 1>, scalar_prefetch = 0 : i64, scratch_operands = 1 : i64, tpu.core_type = #tpu.core_type<tc>, window_params = [{transform_indices = @transform_0, window_bounds = array<i64: 32, 32>}, {transform_indices = @transform_1, window_bounds = array<i64: 32, 32>}, {transform_indices = @transform_2, window_bounds = array<i64: 1, 32>}, {transform_indices = @transform_3, window_bounds = array<i64: 32, 32>}, {transform_indices = @transform_4, window_bounds = array<i64: 1, 32>}, {transform_indices = @transform_5, window_bounds = array<i64: 1, 32>}, {transform_indices = @transform_6, window_bounds = array<i64: 32, 32>}]} {
    %c0_i32 = arith.constant 0 : i32
    %0 = arith.cmpi eq, %arg2, %c0_i32 : i32
    %1 = arith.extui %0 : i1 to i32
    %c0_i32_0 = arith.constant 0 : i32
    %2 = arith.cmpi ne, %1, %c0_i32_0 : i32
    scf.if %2 {
      %cst_10 = arith.constant 0.000000e+00 : f32
      %12 = vector.broadcast %cst_10 : f32 to vector<32x32xf32>
      %c0_11 = arith.constant 0 : index
      %c0_12 = arith.constant 0 : index
      %13 = vector.load %arg10[%c0_11, %c0_12] : memref<32x32xf32, #tpu.memory_space<vmem>>, vector<32x32xf32>
      tpu.vector_store %arg10[%c0_11, %c0_12], %12 {strides = array<i32>} : memref<32x32xf32, #tpu.memory_space<vmem>>, vector<32x32xf32>,
    } else {
    }
    %c0 = arith.constant 0 : index
    %c0_1 = arith.constant 0 : index
    %3 = vector.load %arg10[%c0, %c0_1] : memref<32x32xf32, #tpu.memory_space<vmem>>, vector<32x32xf32>
    %c0_2 = arith.constant 0 : index
    %c0_3 = arith.constant 0 : index
    %4 = vector.load %arg3[%c0_2, %c0_3] : memref<32x32xbf16, #tpu.memory_space<vmem>>, vector<32x32xbf16>
    %c0_4 = arith.constant 0 : index
    %c0_5 = arith.constant 0 : index
    %5 = vector.load %arg4[%c0_4, %c0_5] : memref<32x32xbf16, #tpu.memory_space<vmem>>, vector<32x32xbf16>
    %cst = arith.constant dense<0.000000e+00> : vector<32x32xf32>
    %6 = tpu.matmul %4, %5, %cst {dimension_numbers = #tpu.dot_dimension_numbers<[1], [0], [0], [1], [0, 0, 1, 1], [], []>} : vector<32x32xbf16>, vector<32x32xbf16>, vector<32x32xf32> -> vector<32x32xf32>
    %7 = arith.addf %3, %6 : vector<32x32xf32>
    %c0_6 = arith.constant 0 : index
    %c0_7 = arith.constant 0 : index
    %8 = vector.load %arg10[%c0_6, %c0_7] : memref<32x32xf32, #tpu.memory_space<vmem>>, vector<32x32xf32>
    tpu.vector_store %arg10[%c0_6, %c0_7], %7 {strides = array<i32>} : memref<32x32xf32, #tpu.memory_space<vmem>>, vector<32x32xf32>,
    %c0_i32_8 = arith.constant 0 : i32
    %9 = arith.cmpi eq, %arg2, %c0_i32_8 : i32
    %10 = arith.extui %9 : i1 to i32
    %c0_i32_9 = arith.constant 0 : i32
    %11 = arith.cmpi ne, %10, %c0_i32_9 : i32
    scf.if %11 {
      %c0_10 = arith.constant 0 : index
      %c0_11 = arith.constant 0 : index
      %12 = vector.load %arg10[%c0_10, %c0_11] : memref<32x32xf32, #tpu.memory_space<vmem>>, vector<32x32xf32>
      %c0_12 = arith.constant 0 : index
      %c0_13 = arith.constant 0 : index
      %13 = vector.load %arg5[%c0_12, %c0_13] : memref<1x32xf32, #tpu.memory_space<vmem>>, vector<1x32xf32>
      %14 = vector.broadcast %13 : vector<1x32xf32> to vector<32x32xf32>
      %15 = arith.addf %12, %14 : vector<32x32xf32>
      %c0_14 = arith.constant 0 : index
      %c0_15 = arith.constant 0 : index
      %16 = vector.load %arg6[%c0_14, %c0_15] : memref<32x32xbf16, #tpu.memory_space<vmem>>, vector<32x32xbf16>
      %17 = arith.extf %16 : vector<32x32xbf16> to vector<32x32xf32>
      %18 = arith.addf %15, %17 : vector<32x32xf32>
      %cst_16 = arith.constant dense<0.000000e+00> : vector<32xf32>
      %19 = vector.multi_reduction <add>, %18, %cst_16 [1] : vector<32x32xf32> to vector<32xf32>
      %20 = vector.shape_cast %19 : vector<32xf32> to vector<32x1xf32>
      %cst_17 = arith.constant 3.200000e+01 : f32
      %21 = vector.broadcast %cst_17 : f32 to vector<32x1xf32>
      %22 = arith.divf %20, %21 : vector<32x1xf32>
      %23 = vector.broadcast %22 : vector<32x1xf32> to vector<32x32xf32>
      %24 = arith.subf %18, %23 : vector<32x32xf32>
      %25 = arith.mulf %24, %24 : vector<32x32xf32>
      %cst_18 = arith.constant dense<0.000000e+00> : vector<32xf32>
      %26 = vector.multi_reduction <add>, %25, %cst_18 [1] : vector<32x32xf32> to vector<32xf32>
      %27 = vector.shape_cast %26 : vector<32xf32> to vector<32x1xf32>
      %cst_19 = arith.constant 3.200000e+01 : f32
      %28 = vector.broadcast %cst_19 : f32 to vector<32x1xf32>
      %29 = arith.divf %27, %28 : vector<32x1xf32>
      %30 = vector.broadcast %22 : vector<32x1xf32> to vector<32x32xf32>
      %31 = arith.subf %18, %30 : vector<32x32xf32>
      %cst_20 = arith.constant 9.99999974E-6 : f32
      %32 = vector.broadcast %cst_20 : f32 to vector<32x1xf32>
      %33 = arith.addf %29, %32 : vector<32x1xf32>
      %34 = math.rsqrt %33 : vector<32x1xf32>
      %35 = vector.broadcast %34 : vector<32x1xf32> to vector<32x32xf32>
      %36 = arith.mulf %31, %35 : vector<32x32xf32>
      %c0_21 = arith.constant 0 : index
      %c0_22 = arith.constant 0 : index
      %37 = vector.load %arg7[%c0_21, %c0_22] : memref<1x32xf32, #tpu.memory_space<vmem>>, vector<1x32xf32>
      %38 = vector.broadcast %37 : vector<1x32xf32> to vector<32x32xf32>
      %39 = arith.mulf %36, %38 : vector<32x32xf32>
      %c0_23 = arith.constant 0 : index
      %c0_24 = arith.constant 0 : index
      %40 = vector.load %arg8[%c0_23, %c0_24] : memref<1x32xf32, #tpu.memory_space<vmem>>, vector<1x32xf32>
      %41 = vector.broadcast %40 : vector<1x32xf32> to vector<32x32xf32>
      %42 = arith.addf %39, %41 : vector<32x32xf32>
      %43 = arith.truncf %42 : vector<32x32xf32> to vector<32x32xbf16>
      %c0_25 = arith.constant 0 : index
      %c0_26 = arith.constant 0 : index
      %44 = vector.load %arg9[%c0_25, %c0_26] : memref<32x32xbf16, #tpu.memory_space<vmem>>, vector<32x32xbf16>
      tpu.vector_store %arg9[%c0_25, %c0_26], %43 {strides = array<i32>} : memref<32x32xbf16, #tpu.memory_space<vmem>>, vector<32x32xbf16>,
    } else {
    }
    return
  }
  func.func @transform_0(%arg0: i32, %arg1: i32, %arg2: i32) -> (i32, i32) {
    %c0_i32 = arith.constant 0 : i32
    return %arg0, %arg2 : i32, i32
  }
  func.func @transform_1(%arg0: i32, %arg1: i32, %arg2: i32) -> (i32, i32) {
    %c0_i32 = arith.constant 0 : i32
    return %arg2, %arg1 : i32, i32
  }
  func.func @transform_2(%arg0: i32, %arg1: i32, %arg2: i32) -> (i32, i32) {
    %c0_i32 = arith.constant 0 : i32
    %c0_i32_0 = arith.constant 0 : i32
    return %c0_i32, %arg1 : i32, i32
  }
  func.func @transform_3(%arg0: i32, %arg1: i32, %arg2: i32) -> (i32, i32) {
    %c0_i32 = arith.constant 0 : i32
    return %arg0, %arg1 : i32, i32
  }
  func.func @transform_4(%arg0: i32, %arg1: i32, %arg2: i32) -> (i32, i32) {
    %c0_i32 = arith.constant 0 : i32
    %c0_i32_0 = arith.constant 0 : i32
    return %c0_i32, %arg1 : i32, i32
  }
  func.func @transform_5(%arg0: i32, %arg1: i32, %arg2: i32) -> (i32, i32) {
    %c0_i32 = arith.constant 0 : i32
    %c0_i32_0 = arith.constant 0 : i32
    return %c0_i32, %arg1 : i32, i32
  }
  func.func @transform_6(%arg0: i32, %arg1: i32, %arg2: i32) -> (i32, i32) {
    %c0_i32 = arith.constant 0 : i32
    return %arg0, %arg1 : i32, i32
  }
}

module attributes {stable_mosaic.version = 11 : i64} {
  func.func @_cconv_kernel(%arg0: i32, %arg1: memref<1x16x32xbf16, #tpu.memory_space<vmem>>, %arg2: memref<3x32x32xbf16, #tpu.memory_space<vmem>>, %arg3: memref<1x32xf32, #tpu.memory_space<vmem>>, %arg4: memref<1x16x32xf32, #tpu.memory_space<vmem>>) attributes {dimension_semantics = [#tpu.dimension_semantics<parallel>], iteration_bounds = array<i64: 2>, scalar_prefetch = 0 : i64, scratch_operands = 0 : i64, tpu.core_type = #tpu.core_type<tc>, window_params = [{transform_indices = @transform_0, window_bounds = array<i64: 1, 16, 32>}, {pipeline_mode = #tpu.pipeline_mode<synchronous>, transform_indices = @transform_1, window_bounds = array<i64: 3, 32, 32>}, {pipeline_mode = #tpu.pipeline_mode<synchronous>, transform_indices = @transform_2, window_bounds = array<i64: 1, 32>}, {transform_indices = @transform_3, window_bounds = array<i64: 1, 16, 32>}]} {
    %c0 = arith.constant 0 : index
    %c0_0 = arith.constant 0 : index
    %c0_1 = arith.constant 0 : index
    %0 = vector.load %arg1[%c0, %c0_0, %c0_1] : memref<1x16x32xbf16, #tpu.memory_space<vmem>>, vector<1x16x32xbf16>
    %1 = vector.shape_cast %0 : vector<1x16x32xbf16> to vector<16x32xbf16>
    %c0_2 = arith.constant 0 : index
    %c0_3 = arith.constant 0 : index
    %c0_4 = arith.constant 0 : index
    %2 = vector.load %arg2[%c0_2, %c0_3, %c0_4] : memref<3x32x32xbf16, #tpu.memory_space<vmem>>, vector<1x32x32xbf16>
    %3 = vector.shape_cast %2 : vector<1x32x32xbf16> to vector<32x32xbf16>
    %cst = arith.constant dense<0.000000e+00> : vector<16x32xf32>
    %4 = tpu.matmul %1, %3, %cst {dimension_numbers = #tpu.dot_dimension_numbers<[1], [0], [0], [1], [0, 0, 1, 1], [], []>} : vector<16x32xbf16>, vector<32x32xbf16>, vector<16x32xf32> -> vector<16x32xf32>
    %c1 = arith.constant 1 : index
    %c0_5 = arith.constant 0 : index
    %c0_6 = arith.constant 0 : index
    %5 = vector.load %arg2[%c1, %c0_5, %c0_6] : memref<3x32x32xbf16, #tpu.memory_space<vmem>>, vector<1x32x32xbf16>
    %6 = vector.shape_cast %5 : vector<1x32x32xbf16> to vector<32x32xbf16>
    %cst_7 = arith.constant dense<0.000000e+00> : vector<16x32xf32>
    %7 = tpu.matmul %1, %6, %cst_7 {dimension_numbers = #tpu.dot_dimension_numbers<[1], [0], [0], [1], [0, 0, 1, 1], [], []>} : vector<16x32xbf16>, vector<32x32xbf16>, vector<16x32xf32> -> vector<16x32xf32>
    %c2 = arith.constant 2 : index
    %c0_8 = arith.constant 0 : index
    %c0_9 = arith.constant 0 : index
    %8 = vector.load %arg2[%c2, %c0_8, %c0_9] : memref<3x32x32xbf16, #tpu.memory_space<vmem>>, vector<1x32x32xbf16>
    %9 = vector.shape_cast %8 : vector<1x32x32xbf16> to vector<32x32xbf16>
    %cst_10 = arith.constant dense<0.000000e+00> : vector<16x32xf32>
    %10 = tpu.matmul %1, %9, %cst_10 {dimension_numbers = #tpu.dot_dimension_numbers<[1], [0], [0], [1], [0, 0, 1, 1], [], []>} : vector<16x32xbf16>, vector<32x32xbf16>, vector<16x32xf32> -> vector<16x32xf32>
    %c1_i32 = arith.constant 1 : i32
    %11 = tpu.dynamic_rotate %4 by %c1_i32 dim 0 : vector<16x32xf32>, i32 -> vector<16x32xf32>
    %12 = arith.addf %11, %7 : vector<16x32xf32>
    %c15_i32 = arith.constant 15 : i32
    %13 = tpu.dynamic_rotate %10 by %c15_i32 dim 0 : vector<16x32xf32>, i32 -> vector<16x32xf32>
    %14 = arith.addf %12, %13 : vector<16x32xf32>
    %c0_11 = arith.constant 0 : index
    %c0_12 = arith.constant 0 : index
    %15 = vector.load %arg3[%c0_11, %c0_12] : memref<1x32xf32, #tpu.memory_space<vmem>>, vector<1x32xf32>
    %16 = vector.broadcast %15 : vector<1x32xf32> to vector<16x32xf32>
    %17 = arith.addf %14, %16 : vector<16x32xf32>
    %c0_13 = arith.constant 0 : index
    %c0_14 = arith.constant 0 : index
    %c0_15 = arith.constant 0 : index
    %18 = vector.load %arg4[%c0_13, %c0_14, %c0_15] : memref<1x16x32xf32, #tpu.memory_space<vmem>>, vector<1x16x32xf32>
    %19 = vector.shape_cast %18 : vector<1x16x32xf32> to vector<16x32xf32>
    %20 = vector.shape_cast %17 : vector<16x32xf32> to vector<1x16x32xf32>
    tpu.vector_store %arg4[%c0_13, %c0_14, %c0_15], %20 {strides = array<i32>} : memref<1x16x32xf32, #tpu.memory_space<vmem>>, vector<1x16x32xf32>,
    return
  }
  func.func @transform_0(%arg0: i32) -> (i32, i32, i32) {
    %c0_i32 = arith.constant 0 : i32
    %c0_i32_0 = arith.constant 0 : i32
    %c0_i32_1 = arith.constant 0 : i32
    return %arg0, %c0_i32, %c0_i32_0 : i32, i32, i32
  }
  func.func @transform_1(%arg0: i32) -> (i32, i32, i32) {
    %c0_i32 = arith.constant 0 : i32
    %c0_i32_0 = arith.constant 0 : i32
    %c0_i32_1 = arith.constant 0 : i32
    %c0_i32_2 = arith.constant 0 : i32
    return %c0_i32, %c0_i32_0, %c0_i32_1 : i32, i32, i32
  }
  func.func @transform_2(%arg0: i32) -> (i32, i32) {
    %c0_i32 = arith.constant 0 : i32
    %c0_i32_0 = arith.constant 0 : i32
    %c0_i32_1 = arith.constant 0 : i32
    return %c0_i32, %c0_i32_0 : i32, i32
  }
  func.func @transform_3(%arg0: i32) -> (i32, i32, i32) {
    %c0_i32 = arith.constant 0 : i32
    %c0_i32_0 = arith.constant 0 : i32
    %c0_i32_1 = arith.constant 0 : i32
    return %arg0, %c0_i32, %c0_i32_0 : i32, i32, i32
  }
}

module attributes {stable_mosaic.version = 11 : i64} {
  func.func @_mm_kernel(%arg0: i32, %arg1: i32, %arg2: i32, %arg3: memref<32x32xbf16, #tpu.memory_space<vmem>>, %arg4: memref<32x32xbf16, #tpu.memory_space<vmem>>, %arg5: memref<1x32xf32, #tpu.memory_space<vmem>>, %arg6: memref<32x32xbf16, #tpu.memory_space<vmem>>, %arg7: memref<32x32xf32, #tpu.memory_space<vmem>>) attributes {dimension_semantics = [#tpu.dimension_semantics<parallel>, #tpu.dimension_semantics<parallel>, #tpu.dimension_semantics<arbitrary>], iteration_bounds = array<i64: 1, 1, 1>, scalar_prefetch = 0 : i64, scratch_operands = 1 : i64, tpu.core_type = #tpu.core_type<tc>, window_params = [{transform_indices = @transform_0, window_bounds = array<i64: 32, 32>}, {transform_indices = @transform_1, window_bounds = array<i64: 32, 32>}, {transform_indices = @transform_2, window_bounds = array<i64: 1, 32>}, {transform_indices = @transform_3, window_bounds = array<i64: 32, 32>}]} {
    %c0_i32 = arith.constant 0 : i32
    %0 = arith.cmpi eq, %arg2, %c0_i32 : i32
    %1 = arith.extui %0 : i1 to i32
    %c0_i32_0 = arith.constant 0 : i32
    %2 = arith.cmpi ne, %1, %c0_i32_0 : i32
    scf.if %2 {
      %cst_10 = arith.constant 0.000000e+00 : f32
      %12 = vector.broadcast %cst_10 : f32 to vector<32x32xf32>
      %c0_11 = arith.constant 0 : index
      %c0_12 = arith.constant 0 : index
      %13 = vector.load %arg7[%c0_11, %c0_12] : memref<32x32xf32, #tpu.memory_space<vmem>>, vector<32x32xf32>
      tpu.vector_store %arg7[%c0_11, %c0_12], %12 {strides = array<i32>} : memref<32x32xf32, #tpu.memory_space<vmem>>, vector<32x32xf32>,
    } else {
    }
    %c0 = arith.constant 0 : index
    %c0_1 = arith.constant 0 : index
    %3 = vector.load %arg7[%c0, %c0_1] : memref<32x32xf32, #tpu.memory_space<vmem>>, vector<32x32xf32>
    %c0_2 = arith.constant 0 : index
    %c0_3 = arith.constant 0 : index
    %4 = vector.load %arg3[%c0_2, %c0_3] : memref<32x32xbf16, #tpu.memory_space<vmem>>, vector<32x32xbf16>
    %c0_4 = arith.constant 0 : index
    %c0_5 = arith.constant 0 : index
    %5 = vector.load %arg4[%c0_4, %c0_5] : memref<32x32xbf16, #tpu.memory_space<vmem>>, vector<32x32xbf16>
    %cst = arith.constant dense<0.000000e+00> : vector<32x32xf32>
    %6 = tpu.matmul %4, %5, %cst {dimension_numbers = #tpu.dot_dimension_numbers<[1], [0], [0], [1], [0, 0, 1, 1], [], []>} : vector<32x32xbf16>, vector<32x32xbf16>, vector<32x32xf32> -> vector<32x32xf32>
    %7 = arith.addf %3, %6 : vector<32x32xf32>
    %c0_6 = arith.constant 0 : index
    %c0_7 = arith.constant 0 : index
    %8 = vector.load %arg7[%c0_6, %c0_7] : memref<32x32xf32, #tpu.memory_space<vmem>>, vector<32x32xf32>
    tpu.vector_store %arg7[%c0_6, %c0_7], %7 {strides = array<i32>} : memref<32x32xf32, #tpu.memory_space<vmem>>, vector<32x32xf32>,
    %c0_i32_8 = arith.constant 0 : i32
    %9 = arith.cmpi eq, %arg2, %c0_i32_8 : i32
    %10 = arith.extui %9 : i1 to i32
    %c0_i32_9 = arith.constant 0 : i32
    %11 = arith.cmpi ne, %10, %c0_i32_9 : i32
    scf.if %11 {
      %c0_10 = arith.constant 0 : index
      %c0_11 = arith.constant 0 : index
      %12 = vector.load %arg7[%c0_10, %c0_11] : memref<32x32xf32, #tpu.memory_space<vmem>>, vector<32x32xf32>
      %c0_12 = arith.constant 0 : index
      %c0_13 = arith.constant 0 : index
      %13 = vector.load %arg5[%c0_12, %c0_13] : memref<1x32xf32, #tpu.memory_space<vmem>>, vector<1x32xf32>
      %14 = vector.broadcast %13 : vector<1x32xf32> to vector<32x32xf32>
      %15 = arith.addf %12, %14 : vector<32x32xf32>
      %cst_14 = arith.constant 5.000000e-01 : f32
      %16 = vector.broadcast %cst_14 : f32 to vector<32x32xf32>
      %17 = arith.mulf %16, %15 : vector<32x32xf32>
      %cst_15 = arith.constant 0.707106769 : f32
      %18 = vector.broadcast %cst_15 : f32 to vector<32x32xf32>
      %19 = arith.mulf %15, %18 : vector<32x32xf32>
      %20 = math.absf %19 : vector<32x32xf32>
      %cst_16 = arith.constant 0.327591091 : f32
      %21 = vector.broadcast %cst_16 : f32 to vector<32x32xf32>
      %22 = arith.mulf %21, %20 : vector<32x32xf32>
      %cst_17 = arith.constant 1.000000e+00 : f32
      %23 = vector.broadcast %cst_17 : f32 to vector<32x32xf32>
      %24 = arith.addf %23, %22 : vector<32x32xf32>
      %cst_18 = arith.constant 1.000000e+00 : f32
      %25 = vector.broadcast %cst_18 : f32 to vector<32x32xf32>
      %26 = arith.divf %25, %24 : vector<32x32xf32>
      %cst_19 = arith.constant 1.06140542 : f32
      %27 = vector.broadcast %cst_19 : f32 to vector<32x32xf32>
      %28 = arith.mulf %27, %26 : vector<32x32xf32>
      %cst_20 = arith.constant -1.45315206 : f32
      %29 = vector.broadcast %cst_20 : f32 to vector<32x32xf32>
      %30 = arith.addf %28, %29 : vector<32x32xf32>
      %31 = arith.mulf %30, %26 : vector<32x32xf32>
      %cst_21 = arith.constant 1.42141378 : f32
      %32 = vector.broadcast %cst_21 : f32 to vector<32x32xf32>
      %33 = arith.addf %31, %32 : vector<32x32xf32>
      %34 = arith.mulf %33, %26 : vector<32x32xf32>
      %cst_22 = arith.constant -0.284496725 : f32
      %35 = vector.broadcast %cst_22 : f32 to vector<32x32xf32>
      %36 = arith.addf %34, %35 : vector<32x32xf32>
      %37 = arith.mulf %36, %26 : vector<32x32xf32>
      %cst_23 = arith.constant 0.254829586 : f32
      %38 = vector.broadcast %cst_23 : f32 to vector<32x32xf32>
      %39 = arith.addf %37, %38 : vector<32x32xf32>
      %40 = arith.mulf %39, %26 : vector<32x32xf32>
      %cst_24 = arith.constant 0.000000e+00 : f32
      %41 = vector.broadcast %cst_24 : f32 to vector<32x32xf32>
      %42 = arith.subf %41, %20 : vector<32x32xf32>
      %43 = arith.mulf %42, %20 : vector<32x32xf32>
      %44 = math.exp %43 : vector<32x32xf32>
      %45 = arith.mulf %40, %44 : vector<32x32xf32>
      %cst_25 = arith.constant 1.000000e+00 : f32
      %46 = vector.broadcast %cst_25 : f32 to vector<32x32xf32>
      %47 = arith.subf %46, %45 : vector<32x32xf32>
      %cst_26 = arith.constant 0.000000e+00 : f32
      %48 = vector.broadcast %cst_26 : f32 to vector<32x32xf32>
      %49 = arith.cmpf oge, %19, %48 : vector<32x32xf32>
      %cst_27 = arith.constant 0.000000e+00 : f32
      %50 = vector.broadcast %cst_27 : f32 to vector<32x32xf32>
      %51 = arith.subf %50, %47 : vector<32x32xf32>
      %52 = arith.select %49, %47, %51 : vector<32x32xi1>, vector<32x32xf32>
      %cst_28 = arith.constant 1.000000e+00 : f32
      %53 = vector.broadcast %cst_28 : f32 to vector<32x32xf32>
      %54 = arith.addf %53, %52 : vector<32x32xf32>
      %55 = arith.mulf %17, %54 : vector<32x32xf32>
      %56 = arith.truncf %55 : vector<32x32xf32> to vector<32x32xbf16>
      %c0_29 = arith.constant 0 : index
      %c0_30 = arith.constant 0 : index
      %57 = vector.load %arg6[%c0_29, %c0_30] : memref<32x32xbf16, #tpu.memory_space<vmem>>, vector<32x32xbf16>
      tpu.vector_store %arg6[%c0_29, %c0_30], %56 {strides = array<i32>} : memref<32x32xbf16, #tpu.memory_space<vmem>>, vector<32x32xbf16>,
    } else {
    }
    return
  }
  func.func @transform_0(%arg0: i32, %arg1: i32, %arg2: i32) -> (i32, i32) {
    %c0_i32 = arith.constant 0 : i32
    return %arg0, %arg2 : i32, i32
  }
  func.func @transform_1(%arg0: i32, %arg1: i32, %arg2: i32) -> (i32, i32) {
    %c0_i32 = arith.constant 0 : i32
    return %arg2, %arg1 : i32, i32
  }
  func.func @transform_2(%arg0: i32, %arg1: i32, %arg2: i32) -> (i32, i32) {
    %c0_i32 = arith.constant 0 : i32
    %c0_i32_0 = arith.constant 0 : i32
    return %c0_i32, %arg1 : i32, i32
  }
  func.func @transform_3(%arg0: i32, %arg1: i32, %arg2: i32) -> (i32, i32) {
    %c0_i32 = arith.constant 0 : i32
    return %arg0, %arg1 : i32, i32
  }
}

module attributes {stable_mosaic.version = 11 : i64} {
  func.func @_mm_kernel(%arg0: i32, %arg1: i32, %arg2: i32, %arg3: memref<16x32xbf16, #tpu.memory_space<vmem>>, %arg4: memref<32x96xbf16, #tpu.memory_space<vmem>>, %arg5: memref<1x96xf32, #tpu.memory_space<vmem>>, %arg6: memref<16x96xbf16, #tpu.memory_space<vmem>>, %arg7: memref<16x96xf32, #tpu.memory_space<vmem>>) attributes {dimension_semantics = [#tpu.dimension_semantics<parallel>, #tpu.dimension_semantics<parallel>, #tpu.dimension_semantics<arbitrary>], iteration_bounds = array<i64: 1, 1, 1>, scalar_prefetch = 0 : i64, scratch_operands = 1 : i64, tpu.core_type = #tpu.core_type<tc>, window_params = [{transform_indices = @transform_0, window_bounds = array<i64: 16, 32>}, {transform_indices = @transform_1, window_bounds = array<i64: 32, 96>}, {transform_indices = @transform_2, window_bounds = array<i64: 1, 96>}, {transform_indices = @transform_3, window_bounds = array<i64: 16, 96>}]} {
    %c0_i32 = arith.constant 0 : i32
    %0 = arith.cmpi eq, %arg2, %c0_i32 : i32
    %1 = arith.extui %0 : i1 to i32
    %c0_i32_0 = arith.constant 0 : i32
    %2 = arith.cmpi ne, %1, %c0_i32_0 : i32
    scf.if %2 {
      %cst_10 = arith.constant 0.000000e+00 : f32
      %12 = vector.broadcast %cst_10 : f32 to vector<16x96xf32>
      %c0_11 = arith.constant 0 : index
      %c0_12 = arith.constant 0 : index
      %13 = vector.load %arg7[%c0_11, %c0_12] : memref<16x96xf32, #tpu.memory_space<vmem>>, vector<16x96xf32>
      tpu.vector_store %arg7[%c0_11, %c0_12], %12 {strides = array<i32>} : memref<16x96xf32, #tpu.memory_space<vmem>>, vector<16x96xf32>,
    } else {
    }
    %c0 = arith.constant 0 : index
    %c0_1 = arith.constant 0 : index
    %3 = vector.load %arg7[%c0, %c0_1] : memref<16x96xf32, #tpu.memory_space<vmem>>, vector<16x96xf32>
    %c0_2 = arith.constant 0 : index
    %c0_3 = arith.constant 0 : index
    %4 = vector.load %arg3[%c0_2, %c0_3] : memref<16x32xbf16, #tpu.memory_space<vmem>>, vector<16x32xbf16>
    %c0_4 = arith.constant 0 : index
    %c0_5 = arith.constant 0 : index
    %5 = vector.load %arg4[%c0_4, %c0_5] : memref<32x96xbf16, #tpu.memory_space<vmem>>, vector<32x96xbf16>
    %cst = arith.constant dense<0.000000e+00> : vector<16x96xf32>
    %6 = tpu.matmul %4, %5, %cst {dimension_numbers = #tpu.dot_dimension_numbers<[1], [0], [0], [1], [0, 0, 1, 1], [], []>} : vector<16x32xbf16>, vector<32x96xbf16>, vector<16x96xf32> -> vector<16x96xf32>
    %7 = arith.addf %3, %6 : vector<16x96xf32>
    %c0_6 = arith.constant 0 : index
    %c0_7 = arith.constant 0 : index
    %8 = vector.load %arg7[%c0_6, %c0_7] : memref<16x96xf32, #tpu.memory_space<vmem>>, vector<16x96xf32>
    tpu.vector_store %arg7[%c0_6, %c0_7], %7 {strides = array<i32>} : memref<16x96xf32, #tpu.memory_space<vmem>>, vector<16x96xf32>,
    %c0_i32_8 = arith.constant 0 : i32
    %9 = arith.cmpi eq, %arg2, %c0_i32_8 : i32
    %10 = arith.extui %9 : i1 to i32
    %c0_i32_9 = arith.constant 0 : i32
    %11 = arith.cmpi ne, %10, %c0_i32_9 : i32
    scf.if %11 {
      %c0_10 = arith.constant 0 : index
      %c0_11 = arith.constant 0 : index
      %12 = vector.load %arg7[%c0_10, %c0_11] : memref<16x96xf32, #tpu.memory_space<vmem>>, vector<16x96xf32>
      %c0_12 = arith.constant 0 : index
      %c0_13 = arith.constant 0 : index
      %13 = vector.load %arg5[%c0_12, %c0_13] : memref<1x96xf32, #tpu.memory_space<vmem>>, vector<1x96xf32>
      %14 = vector.broadcast %13 : vector<1x96xf32> to vector<16x96xf32>
      %15 = arith.addf %12, %14 : vector<16x96xf32>
      %16 = arith.truncf %15 : vector<16x96xf32> to vector<16x96xbf16>
      %c0_14 = arith.constant 0 : index
      %c0_15 = arith.constant 0 : index
      %17 = vector.load %arg6[%c0_14, %c0_15] : memref<16x96xbf16, #tpu.memory_space<vmem>>, vector<16x96xbf16>
      tpu.vector_store %arg6[%c0_14, %c0_15], %16 {strides = array<i32>} : memref<16x96xbf16, #tpu.memory_space<vmem>>, vector<16x96xbf16>,
    } else {
    }
    return
  }
  func.func @transform_0(%arg0: i32, %arg1: i32, %arg2: i32) -> (i32, i32) {
    %c0_i32 = arith.constant 0 : i32
    return %arg0, %arg2 : i32, i32
  }
  func.func @transform_1(%arg0: i32, %arg1: i32, %arg2: i32) -> (i32, i32) {
    %c0_i32 = arith.constant 0 : i32
    return %arg2, %arg1 : i32, i32
  }
  func.func @transform_2(%arg0: i32, %arg1: i32, %arg2: i32) -> (i32, i32) {
    %c0_i32 = arith.constant 0 : i32
    %c0_i32_0 = arith.constant 0 : i32
    return %c0_i32, %arg1 : i32, i32
  }
  func.func @transform_3(%arg0: i32, %arg1: i32, %arg2: i32) -> (i32, i32) {
    %c0_i32 = arith.constant 0 : i32
    return %arg0, %arg1 : i32, i32
  }
}

module attributes {stable_mosaic.version = 11 : i64} {
  func.func @_self_attn_kernel(%arg0: i32, %arg1: memref<1x8x96xbf16, #tpu.memory_space<vmem>>, %arg2: memref<1x8x32xbf16, #tpu.memory_space<vmem>>) attributes {dimension_semantics = [#tpu.dimension_semantics<parallel>], iteration_bounds = array<i64: 2>, scalar_prefetch = 0 : i64, scratch_operands = 0 : i64, tpu.core_type = #tpu.core_type<tc>, window_params = [{transform_indices = @transform_0, window_bounds = array<i64: 1, 8, 96>}, {transform_indices = @transform_1, window_bounds = array<i64: 1, 8, 32>}]} {
    %c0 = arith.constant 0 : index
    %c0_0 = arith.constant 0 : index
    %c0_1 = arith.constant 0 : index
    %0 = vector.load %arg1[%c0, %c0_0, %c0_1] : memref<1x8x96xbf16, #tpu.memory_space<vmem>>, vector<1x8x96xbf16>
    %1 = vector.shape_cast %0 : vector<1x8x96xbf16> to vector<8x96xbf16>
    %2 = vector.extract_strided_slice %1 {offsets = [0, 0], sizes = [8, 32], strides = [1, 1]} : vector<8x96xbf16> to vector<8x32xbf16>
    %3 = vector.extract_strided_slice %1 {offsets = [0, 32], sizes = [8, 32], strides = [1, 1]} : vector<8x96xbf16> to vector<8x32xbf16>
    %4 = vector.extract_strided_slice %1 {offsets = [0, 64], sizes = [8, 32], strides = [1, 1]} : vector<8x96xbf16> to vector<8x32xbf16>
    %5 = vector.extract_strided_slice %2 {offsets = [0, 0], sizes = [8, 8], strides = [1, 1]} : vector<8x32xbf16> to vector<8x8xbf16>
    %6 = vector.extract_strided_slice %3 {offsets = [0, 0], sizes = [8, 8], strides = [1, 1]} : vector<8x32xbf16> to vector<8x8xbf16>
    %cst = arith.constant dense<0.000000e+00> : vector<8x8xf32>
    %7 = tpu.matmul %5, %6, %cst {dimension_numbers = #tpu.dot_dimension_numbers<[1], [1], [0], [0], [0, 0, 1, 0], [], []>} : vector<8x8xbf16>, vector<8x8xbf16>, vector<8x8xf32> -> vector<8x8xf32>
    %cst_2 = arith.constant dense<0xFF800000> : vector<8xf32>
    %8 = vector.multi_reduction <maximumf>, %7, %cst_2 [1] : vector<8x8xf32> to vector<8xf32>
    %9 = vector.shape_cast %8 : vector<8xf32> to vector<8x1xf32>
    %10 = vector.broadcast %9 : vector<8x1xf32> to vector<8x8xf32>
    %11 = arith.subf %7, %10 : vector<8x8xf32>
    %12 = math.exp %11 : vector<8x8xf32>
    %cst_3 = arith.constant dense<0.000000e+00> : vector<8xf32>
    %13 = vector.multi_reduction <add>, %12, %cst_3 [1] : vector<8x8xf32> to vector<8xf32>
    %14 = vector.shape_cast %13 : vector<8xf32> to vector<8x1xf32>
    %15 = tpu.reciprocal %14 {approx = true} : vector<8x1xf32> -> vector<8x1xf32>
    %16 = vector.broadcast %15 : vector<8x1xf32> to vector<8x8xf32>
    %17 = arith.mulf %12, %16 : vector<8x8xf32>
    %18 = arith.truncf %17 : vector<8x8xf32> to vector<8x8xbf16>
    %19 = vector.extract_strided_slice %4 {offsets = [0, 0], sizes = [8, 8], strides = [1, 1]} : vector<8x32xbf16> to vector<8x8xbf16>
    %cst_4 = arith.constant dense<0.000000e+00> : vector<8x8xf32>
    %20 = tpu.matmul %18, %19, %cst_4 {dimension_numbers = #tpu.dot_dimension_numbers<[1], [0], [0], [1], [0, 0, 1, 1], [], []>} : vector<8x8xbf16>, vector<8x8xbf16>, vector<8x8xf32> -> vector<8x8xf32>
    %21 = arith.truncf %20 : vector<8x8xf32> to vector<8x8xbf16>
    %22 = vector.extract_strided_slice %2 {offsets = [0, 8], sizes = [8, 8], strides = [1, 1]} : vector<8x32xbf16> to vector<8x8xbf16>
    %23 = vector.extract_strided_slice %3 {offsets = [0, 8], sizes = [8, 8], strides = [1, 1]} : vector<8x32xbf16> to vector<8x8xbf16>
    %cst_5 = arith.constant dense<0.000000e+00> : vector<8x8xf32>
    %24 = tpu.matmul %22, %23, %cst_5 {dimension_numbers = #tpu.dot_dimension_numbers<[1], [1], [0], [0], [0, 0, 1, 0], [], []>} : vector<8x8xbf16>, vector<8x8xbf16>, vector<8x8xf32> -> vector<8x8xf32>
    %cst_6 = arith.constant dense<0xFF800000> : vector<8xf32>
    %25 = vector.multi_reduction <maximumf>, %24, %cst_6 [1] : vector<8x8xf32> to vector<8xf32>
    %26 = vector.shape_cast %25 : vector<8xf32> to vector<8x1xf32>
    %27 = vector.broadcast %26 : vector<8x1xf32> to vector<8x8xf32>
    %28 = arith.subf %24, %27 : vector<8x8xf32>
    %29 = math.exp %28 : vector<8x8xf32>
    %cst_7 = arith.constant dense<0.000000e+00> : vector<8xf32>
    %30 = vector.multi_reduction <add>, %29, %cst_7 [1] : vector<8x8xf32> to vector<8xf32>
    %31 = vector.shape_cast %30 : vector<8xf32> to vector<8x1xf32>
    %32 = tpu.reciprocal %31 {approx = true} : vector<8x1xf32> -> vector<8x1xf32>
    %33 = vector.broadcast %32 : vector<8x1xf32> to vector<8x8xf32>
    %34 = arith.mulf %29, %33 : vector<8x8xf32>
    %35 = arith.truncf %34 : vector<8x8xf32> to vector<8x8xbf16>
    %36 = vector.extract_strided_slice %4 {offsets = [0, 8], sizes = [8, 8], strides = [1, 1]} : vector<8x32xbf16> to vector<8x8xbf16>
    %cst_8 = arith.constant dense<0.000000e+00> : vector<8x8xf32>
    %37 = tpu.matmul %35, %36, %cst_8 {dimension_numbers = #tpu.dot_dimension_numbers<[1], [0], [0], [1], [0, 0, 1, 1], [], []>} : vector<8x8xbf16>, vector<8x8xbf16>, vector<8x8xf32> -> vector<8x8xf32>
    %38 = arith.truncf %37 : vector<8x8xf32> to vector<8x8xbf16>
    %39 = vector.extract_strided_slice %2 {offsets = [0, 16], sizes = [8, 8], strides = [1, 1]} : vector<8x32xbf16> to vector<8x8xbf16>
    %40 = vector.extract_strided_slice %3 {offsets = [0, 16], sizes = [8, 8], strides = [1, 1]} : vector<8x32xbf16> to vector<8x8xbf16>
    %cst_9 = arith.constant dense<0.000000e+00> : vector<8x8xf32>
    %41 = tpu.matmul %39, %40, %cst_9 {dimension_numbers = #tpu.dot_dimension_numbers<[1], [1], [0], [0], [0, 0, 1, 0], [], []>} : vector<8x8xbf16>, vector<8x8xbf16>, vector<8x8xf32> -> vector<8x8xf32>
    %cst_10 = arith.constant dense<0xFF800000> : vector<8xf32>
    %42 = vector.multi_reduction <maximumf>, %41, %cst_10 [1] : vector<8x8xf32> to vector<8xf32>
    %43 = vector.shape_cast %42 : vector<8xf32> to vector<8x1xf32>
    %44 = vector.broadcast %43 : vector<8x1xf32> to vector<8x8xf32>
    %45 = arith.subf %41, %44 : vector<8x8xf32>
    %46 = math.exp %45 : vector<8x8xf32>
    %cst_11 = arith.constant dense<0.000000e+00> : vector<8xf32>
    %47 = vector.multi_reduction <add>, %46, %cst_11 [1] : vector<8x8xf32> to vector<8xf32>
    %48 = vector.shape_cast %47 : vector<8xf32> to vector<8x1xf32>
    %49 = tpu.reciprocal %48 {approx = true} : vector<8x1xf32> -> vector<8x1xf32>
    %50 = vector.broadcast %49 : vector<8x1xf32> to vector<8x8xf32>
    %51 = arith.mulf %46, %50 : vector<8x8xf32>
    %52 = arith.truncf %51 : vector<8x8xf32> to vector<8x8xbf16>
    %53 = vector.extract_strided_slice %4 {offsets = [0, 16], sizes = [8, 8], strides = [1, 1]} : vector<8x32xbf16> to vector<8x8xbf16>
    %cst_12 = arith.constant dense<0.000000e+00> : vector<8x8xf32>
    %54 = tpu.matmul %52, %53, %cst_12 {dimension_numbers = #tpu.dot_dimension_numbers<[1], [0], [0], [1], [0, 0, 1, 1], [], []>} : vector<8x8xbf16>, vector<8x8xbf16>, vector<8x8xf32> -> vector<8x8xf32>
    %55 = arith.truncf %54 : vector<8x8xf32> to vector<8x8xbf16>
    %56 = vector.extract_strided_slice %2 {offsets = [0, 24], sizes = [8, 8], strides = [1, 1]} : vector<8x32xbf16> to vector<8x8xbf16>
    %57 = vector.extract_strided_slice %3 {offsets = [0, 24], sizes = [8, 8], strides = [1, 1]} : vector<8x32xbf16> to vector<8x8xbf16>
    %cst_13 = arith.constant dense<0.000000e+00> : vector<8x8xf32>
    %58 = tpu.matmul %56, %57, %cst_13 {dimension_numbers = #tpu.dot_dimension_numbers<[1], [1], [0], [0], [0, 0, 1, 0], [], []>} : vector<8x8xbf16>, vector<8x8xbf16>, vector<8x8xf32> -> vector<8x8xf32>
    %cst_14 = arith.constant dense<0xFF800000> : vector<8xf32>
    %59 = vector.multi_reduction <maximumf>, %58, %cst_14 [1] : vector<8x8xf32> to vector<8xf32>
    %60 = vector.shape_cast %59 : vector<8xf32> to vector<8x1xf32>
    %61 = vector.broadcast %60 : vector<8x1xf32> to vector<8x8xf32>
    %62 = arith.subf %58, %61 : vector<8x8xf32>
    %63 = math.exp %62 : vector<8x8xf32>
    %cst_15 = arith.constant dense<0.000000e+00> : vector<8xf32>
    %64 = vector.multi_reduction <add>, %63, %cst_15 [1] : vector<8x8xf32> to vector<8xf32>
    %65 = vector.shape_cast %64 : vector<8xf32> to vector<8x1xf32>
    %66 = tpu.reciprocal %65 {approx = true} : vector<8x1xf32> -> vector<8x1xf32>
    %67 = vector.broadcast %66 : vector<8x1xf32> to vector<8x8xf32>
    %68 = arith.mulf %63, %67 : vector<8x8xf32>
    %69 = arith.truncf %68 : vector<8x8xf32> to vector<8x8xbf16>
    %70 = vector.extract_strided_slice %4 {offsets = [0, 24], sizes = [8, 8], strides = [1, 1]} : vector<8x32xbf16> to vector<8x8xbf16>
    %cst_16 = arith.constant dense<0.000000e+00> : vector<8x8xf32>
    %71 = tpu.matmul %69, %70, %cst_16 {dimension_numbers = #tpu.dot_dimension_numbers<[1], [0], [0], [1], [0, 0, 1, 1], [], []>} : vector<8x8xbf16>, vector<8x8xbf16>, vector<8x8xf32> -> vector<8x8xf32>
    %72 = arith.truncf %71 : vector<8x8xf32> to vector<8x8xbf16>
    %73 = tpu.concatenate %21, %38, %55, %72 in 1 : vector<8x8xbf16>, vector<8x8xbf16>, vector<8x8xbf16>, vector<8x8xbf16> -> vector<8x32xbf16>
    %c0_17 = arith.constant 0 : index
    %c0_18 = arith.constant 0 : index
    %c0_19 = arith.constant 0 : index
    %74 = vector.load %arg2[%c0_17, %c0_18, %c0_19] : memref<1x8x32xbf16, #tpu.memory_space<vmem>>, vector<1x8x32xbf16>
    %75 = vector.shape_cast %74 : vector<1x8x32xbf16> to vector<8x32xbf16>
    %76 = vector.shape_cast %73 : vector<8x32xbf16> to vector<1x8x32xbf16>
    tpu.vector_store %arg2[%c0_17, %c0_18, %c0_19], %76 {strides = array<i32>} : memref<1x8x32xbf16, #tpu.memory_space<vmem>>, vector<1x8x32xbf16>,
    return
  }
  func.func @transform_0(%arg0: i32) -> (i32, i32, i32) {
    %c0_i32 = arith.constant 0 : i32
    %c0_i32_0 = arith.constant 0 : i32
    %c0_i32_1 = arith.constant 0 : i32
    return %arg0, %c0_i32, %c0_i32_0 : i32, i32, i32
  }
  func.func @transform_1(%arg0: i32) -> (i32, i32, i32) {
    %c0_i32 = arith.constant 0 : i32
    %c0_i32_0 = arith.constant 0 : i32
    %c0_i32_1 = arith.constant 0 : i32
    return %arg0, %c0_i32, %c0_i32_0 : i32, i32, i32
  }
}

module attributes {stable_mosaic.version = 11 : i64} {
  func.func @_mm_kernel(%arg0: i32, %arg1: i32, %arg2: i32, %arg3: memref<16x32xbf16, #tpu.memory_space<vmem>>, %arg4: memref<32x32xbf16, #tpu.memory_space<vmem>>, %arg5: memref<1x32xf32, #tpu.memory_space<vmem>>, %arg6: memref<16x32xbf16, #tpu.memory_space<vmem>>, %arg7: memref<1x32xf32, #tpu.memory_space<vmem>>, %arg8: memref<1x32xf32, #tpu.memory_space<vmem>>, %arg9: memref<16x32xbf16, #tpu.memory_space<vmem>>, %arg10: memref<16x32xf32, #tpu.memory_space<vmem>>) attributes {dimension_semantics = [#tpu.dimension_semantics<parallel>, #tpu.dimension_semantics<parallel>, #tpu.dimension_semantics<arbitrary>], iteration_bounds = array<i64: 1, 1, 1>, scalar_prefetch = 0 : i64, scratch_operands = 1 : i64, tpu.core_type = #tpu.core_type<tc>, window_params = [{transform_indices = @transform_0, window_bounds = array<i64: 16, 32>}, {transform_indices = @transform_1, window_bounds = array<i64: 32, 32>}, {transform_indices = @transform_2, window_bounds = array<i64: 1, 32>}, {transform_indices = @transform_3, window_bounds = array<i64: 16, 32>}, {transform_indices = @transform_4, window_bounds = array<i64: 1, 32>}, {transform_indices = @transform_5, window_bounds = array<i64: 1, 32>}, {transform_indices = @transform_6, window_bounds = array<i64: 16, 32>}]} {
    %c0_i32 = arith.constant 0 : i32
    %0 = arith.cmpi eq, %arg2, %c0_i32 : i32
    %1 = arith.extui %0 : i1 to i32
    %c0_i32_0 = arith.constant 0 : i32
    %2 = arith.cmpi ne, %1, %c0_i32_0 : i32
    scf.if %2 {
      %cst_10 = arith.constant 0.000000e+00 : f32
      %12 = vector.broadcast %cst_10 : f32 to vector<16x32xf32>
      %c0_11 = arith.constant 0 : index
      %c0_12 = arith.constant 0 : index
      %13 = vector.load %arg10[%c0_11, %c0_12] : memref<16x32xf32, #tpu.memory_space<vmem>>, vector<16x32xf32>
      tpu.vector_store %arg10[%c0_11, %c0_12], %12 {strides = array<i32>} : memref<16x32xf32, #tpu.memory_space<vmem>>, vector<16x32xf32>,
    } else {
    }
    %c0 = arith.constant 0 : index
    %c0_1 = arith.constant 0 : index
    %3 = vector.load %arg10[%c0, %c0_1] : memref<16x32xf32, #tpu.memory_space<vmem>>, vector<16x32xf32>
    %c0_2 = arith.constant 0 : index
    %c0_3 = arith.constant 0 : index
    %4 = vector.load %arg3[%c0_2, %c0_3] : memref<16x32xbf16, #tpu.memory_space<vmem>>, vector<16x32xbf16>
    %c0_4 = arith.constant 0 : index
    %c0_5 = arith.constant 0 : index
    %5 = vector.load %arg4[%c0_4, %c0_5] : memref<32x32xbf16, #tpu.memory_space<vmem>>, vector<32x32xbf16>
    %cst = arith.constant dense<0.000000e+00> : vector<16x32xf32>
    %6 = tpu.matmul %4, %5, %cst {dimension_numbers = #tpu.dot_dimension_numbers<[1], [0], [0], [1], [0, 0, 1, 1], [], []>} : vector<16x32xbf16>, vector<32x32xbf16>, vector<16x32xf32> -> vector<16x32xf32>
    %7 = arith.addf %3, %6 : vector<16x32xf32>
    %c0_6 = arith.constant 0 : index
    %c0_7 = arith.constant 0 : index
    %8 = vector.load %arg10[%c0_6, %c0_7] : memref<16x32xf32, #tpu.memory_space<vmem>>, vector<16x32xf32>
    tpu.vector_store %arg10[%c0_6, %c0_7], %7 {strides = array<i32>} : memref<16x32xf32, #tpu.memory_space<vmem>>, vector<16x32xf32>,
    %c0_i32_8 = arith.constant 0 : i32
    %9 = arith.cmpi eq, %arg2, %c0_i32_8 : i32
    %10 = arith.extui %9 : i1 to i32
    %c0_i32_9 = arith.constant 0 : i32
    %11 = arith.cmpi ne, %10, %c0_i32_9 : i32
    scf.if %11 {
      %c0_10 = arith.constant 0 : index
      %c0_11 = arith.constant 0 : index
      %12 = vector.load %arg10[%c0_10, %c0_11] : memref<16x32xf32, #tpu.memory_space<vmem>>, vector<16x32xf32>
      %c0_12 = arith.constant 0 : index
      %c0_13 = arith.constant 0 : index
      %13 = vector.load %arg5[%c0_12, %c0_13] : memref<1x32xf32, #tpu.memory_space<vmem>>, vector<1x32xf32>
      %14 = vector.broadcast %13 : vector<1x32xf32> to vector<16x32xf32>
      %15 = arith.addf %12, %14 : vector<16x32xf32>
      %c0_14 = arith.constant 0 : index
      %c0_15 = arith.constant 0 : index
      %16 = vector.load %arg6[%c0_14, %c0_15] : memref<16x32xbf16, #tpu.memory_space<vmem>>, vector<16x32xbf16>
      %17 = arith.extf %16 : vector<16x32xbf16> to vector<16x32xf32>
      %18 = arith.addf %15, %17 : vector<16x32xf32>
      %cst_16 = arith.constant dense<0.000000e+00> : vector<16xf32>
      %19 = vector.multi_reduction <add>, %18, %cst_16 [1] : vector<16x32xf32> to vector<16xf32>
      %20 = vector.shape_cast %19 : vector<16xf32> to vector<16x1xf32>
      %cst_17 = arith.constant 3.200000e+01 : f32
      %21 = vector.broadcast %cst_17 : f32 to vector<16x1xf32>
      %22 = arith.divf %20, %21 : vector<16x1xf32>
      %23 = vector.broadcast %22 : vector<16x1xf32> to vector<16x32xf32>
      %24 = arith.subf %18, %23 : vector<16x32xf32>
      %25 = arith.mulf %24, %24 : vector<16x32xf32>
      %cst_18 = arith.constant dense<0.000000e+00> : vector<16xf32>
      %26 = vector.multi_reduction <add>, %25, %cst_18 [1] : vector<16x32xf32> to vector<16xf32>
      %27 = vector.shape_cast %26 : vector<16xf32> to vector<16x1xf32>
      %cst_19 = arith.constant 3.200000e+01 : f32
      %28 = vector.broadcast %cst_19 : f32 to vector<16x1xf32>
      %29 = arith.divf %27, %28 : vector<16x1xf32>
      %30 = vector.broadcast %22 : vector<16x1xf32> to vector<16x32xf32>
      %31 = arith.subf %18, %30 : vector<16x32xf32>
      %cst_20 = arith.constant 9.99999974E-6 : f32
      %32 = vector.broadcast %cst_20 : f32 to vector<16x1xf32>
      %33 = arith.addf %29, %32 : vector<16x1xf32>
      %34 = math.rsqrt %33 : vector<16x1xf32>
      %35 = vector.broadcast %34 : vector<16x1xf32> to vector<16x32xf32>
      %36 = arith.mulf %31, %35 : vector<16x32xf32>
      %c0_21 = arith.constant 0 : index
      %c0_22 = arith.constant 0 : index
      %37 = vector.load %arg7[%c0_21, %c0_22] : memref<1x32xf32, #tpu.memory_space<vmem>>, vector<1x32xf32>
      %38 = vector.broadcast %37 : vector<1x32xf32> to vector<16x32xf32>
      %39 = arith.mulf %36, %38 : vector<16x32xf32>
      %c0_23 = arith.constant 0 : index
      %c0_24 = arith.constant 0 : index
      %40 = vector.load %arg8[%c0_23, %c0_24] : memref<1x32xf32, #tpu.memory_space<vmem>>, vector<1x32xf32>
      %41 = vector.broadcast %40 : vector<1x32xf32> to vector<16x32xf32>
      %42 = arith.addf %39, %41 : vector<16x32xf32>
      %43 = arith.truncf %42 : vector<16x32xf32> to vector<16x32xbf16>
      %c0_25 = arith.constant 0 : index
      %c0_26 = arith.constant 0 : index
      %44 = vector.load %arg9[%c0_25, %c0_26] : memref<16x32xbf16, #tpu.memory_space<vmem>>, vector<16x32xbf16>
      tpu.vector_store %arg9[%c0_25, %c0_26], %43 {strides = array<i32>} : memref<16x32xbf16, #tpu.memory_space<vmem>>, vector<16x32xbf16>,
    } else {
    }
    return
  }
  func.func @transform_0(%arg0: i32, %arg1: i32, %arg2: i32) -> (i32, i32) {
    %c0_i32 = arith.constant 0 : i32
    return %arg0, %arg2 : i32, i32
  }
  func.func @transform_1(%arg0: i32, %arg1: i32, %arg2: i32) -> (i32, i32) {
    %c0_i32 = arith.constant 0 : i32
    return %arg2, %arg1 : i32, i32
  }
  func.func @transform_2(%arg0: i32, %arg1: i32, %arg2: i32) -> (i32, i32) {
    %c0_i32 = arith.constant 0 : i32
    %c0_i32_0 = arith.constant 0 : i32
    return %c0_i32, %arg1 : i32, i32
  }
  func.func @transform_3(%arg0: i32, %arg1: i32, %arg2: i32) -> (i32, i32) {
    %c0_i32 = arith.constant 0 : i32
    return %arg0, %arg1 : i32, i32
  }
  func.func @transform_4(%arg0: i32, %arg1: i32, %arg2: i32) -> (i32, i32) {
    %c0_i32 = arith.constant 0 : i32
    %c0_i32_0 = arith.constant 0 : i32
    return %c0_i32, %arg1 : i32, i32
  }
  func.func @transform_5(%arg0: i32, %arg1: i32, %arg2: i32) -> (i32, i32) {
    %c0_i32 = arith.constant 0 : i32
    %c0_i32_0 = arith.constant 0 : i32
    return %c0_i32, %arg1 : i32, i32
  }
  func.func @transform_6(%arg0: i32, %arg1: i32, %arg2: i32) -> (i32, i32) {
    %c0_i32 = arith.constant 0 : i32
    return %arg0, %arg1 : i32, i32
  }
}

module attributes {stable_mosaic.version = 11 : i64} {
  func.func @_mm_kernel(%arg0: i32, %arg1: i32, %arg2: i32, %arg3: memref<16x32xbf16, #tpu.memory_space<vmem>>, %arg4: memref<32x32xbf16, #tpu.memory_space<vmem>>, %arg5: memref<1x32xf32, #tpu.memory_space<vmem>>, %arg6: memref<16x32xbf16, #tpu.memory_space<vmem>>, %arg7: memref<16x32xf32, #tpu.memory_space<vmem>>) attributes {dimension_semantics = [#tpu.dimension_semantics<parallel>, #tpu.dimension_semantics<parallel>, #tpu.dimension_semantics<arbitrary>], iteration_bounds = array<i64: 1, 1, 1>, scalar_prefetch = 0 : i64, scratch_operands = 1 : i64, tpu.core_type = #tpu.core_type<tc>, window_params = [{transform_indices = @transform_0, window_bounds = array<i64: 16, 32>}, {transform_indices = @transform_1, window_bounds = array<i64: 32, 32>}, {transform_indices = @transform_2, window_bounds = array<i64: 1, 32>}, {transform_indices = @transform_3, window_bounds = array<i64: 16, 32>}]} {
    %c0_i32 = arith.constant 0 : i32
    %0 = arith.cmpi eq, %arg2, %c0_i32 : i32
    %1 = arith.extui %0 : i1 to i32
    %c0_i32_0 = arith.constant 0 : i32
    %2 = arith.cmpi ne, %1, %c0_i32_0 : i32
    scf.if %2 {
      %cst_10 = arith.constant 0.000000e+00 : f32
      %12 = vector.broadcast %cst_10 : f32 to vector<16x32xf32>
      %c0_11 = arith.constant 0 : index
      %c0_12 = arith.constant 0 : index
      %13 = vector.load %arg7[%c0_11, %c0_12] : memref<16x32xf32, #tpu.memory_space<vmem>>, vector<16x32xf32>
      tpu.vector_store %arg7[%c0_11, %c0_12], %12 {strides = array<i32>} : memref<16x32xf32, #tpu.memory_space<vmem>>, vector<16x32xf32>,
    } else {
    }
    %c0 = arith.constant 0 : index
    %c0_1 = arith.constant 0 : index
    %3 = vector.load %arg7[%c0, %c0_1] : memref<16x32xf32, #tpu.memory_space<vmem>>, vector<16x32xf32>
    %c0_2 = arith.constant 0 : index
    %c0_3 = arith.constant 0 : index
    %4 = vector.load %arg3[%c0_2, %c0_3] : memref<16x32xbf16, #tpu.memory_space<vmem>>, vector<16x32xbf16>
    %c0_4 = arith.constant 0 : index
    %c0_5 = arith.constant 0 : index
    %5 = vector.load %arg4[%c0_4, %c0_5] : memref<32x32xbf16, #tpu.memory_space<vmem>>, vector<32x32xbf16>
    %cst = arith.constant dense<0.000000e+00> : vector<16x32xf32>
    %6 = tpu.matmul %4, %5, %cst {dimension_numbers = #tpu.dot_dimension_numbers<[1], [0], [0], [1], [0, 0, 1, 1], [], []>} : vector<16x32xbf16>, vector<32x32xbf16>, vector<16x32xf32> -> vector<16x32xf32>
    %7 = arith.addf %3, %6 : vector<16x32xf32>
    %c0_6 = arith.constant 0 : index
    %c0_7 = arith.constant 0 : index
    %8 = vector.load %arg7[%c0_6, %c0_7] : memref<16x32xf32, #tpu.memory_space<vmem>>, vector<16x32xf32>
    tpu.vector_store %arg7[%c0_6, %c0_7], %7 {strides = array<i32>} : memref<16x32xf32, #tpu.memory_space<vmem>>, vector<16x32xf32>,
    %c0_i32_8 = arith.constant 0 : i32
    %9 = arith.cmpi eq, %arg2, %c0_i32_8 : i32
    %10 = arith.extui %9 : i1 to i32
    %c0_i32_9 = arith.constant 0 : i32
    %11 = arith.cmpi ne, %10, %c0_i32_9 : i32
    scf.if %11 {
      %c0_10 = arith.constant 0 : index
      %c0_11 = arith.constant 0 : index
      %12 = vector.load %arg7[%c0_10, %c0_11] : memref<16x32xf32, #tpu.memory_space<vmem>>, vector<16x32xf32>
      %c0_12 = arith.constant 0 : index
      %c0_13 = arith.constant 0 : index
      %13 = vector.load %arg5[%c0_12, %c0_13] : memref<1x32xf32, #tpu.memory_space<vmem>>, vector<1x32xf32>
      %14 = vector.broadcast %13 : vector<1x32xf32> to vector<16x32xf32>
      %15 = arith.addf %12, %14 : vector<16x32xf32>
      %cst_14 = arith.constant 5.000000e-01 : f32
      %16 = vector.broadcast %cst_14 : f32 to vector<16x32xf32>
      %17 = arith.mulf %16, %15 : vector<16x32xf32>
      %cst_15 = arith.constant 0.707106769 : f32
      %18 = vector.broadcast %cst_15 : f32 to vector<16x32xf32>
      %19 = arith.mulf %15, %18 : vector<16x32xf32>
      %20 = math.absf %19 : vector<16x32xf32>
      %cst_16 = arith.constant 0.327591091 : f32
      %21 = vector.broadcast %cst_16 : f32 to vector<16x32xf32>
      %22 = arith.mulf %21, %20 : vector<16x32xf32>
      %cst_17 = arith.constant 1.000000e+00 : f32
      %23 = vector.broadcast %cst_17 : f32 to vector<16x32xf32>
      %24 = arith.addf %23, %22 : vector<16x32xf32>
      %cst_18 = arith.constant 1.000000e+00 : f32
      %25 = vector.broadcast %cst_18 : f32 to vector<16x32xf32>
      %26 = arith.divf %25, %24 : vector<16x32xf32>
      %cst_19 = arith.constant 1.06140542 : f32
      %27 = vector.broadcast %cst_19 : f32 to vector<16x32xf32>
      %28 = arith.mulf %27, %26 : vector<16x32xf32>
      %cst_20 = arith.constant -1.45315206 : f32
      %29 = vector.broadcast %cst_20 : f32 to vector<16x32xf32>
      %30 = arith.addf %28, %29 : vector<16x32xf32>
      %31 = arith.mulf %30, %26 : vector<16x32xf32>
      %cst_21 = arith.constant 1.42141378 : f32
      %32 = vector.broadcast %cst_21 : f32 to vector<16x32xf32>
      %33 = arith.addf %31, %32 : vector<16x32xf32>
      %34 = arith.mulf %33, %26 : vector<16x32xf32>
      %cst_22 = arith.constant -0.284496725 : f32
      %35 = vector.broadcast %cst_22 : f32 to vector<16x32xf32>
      %36 = arith.addf %34, %35 : vector<16x32xf32>
      %37 = arith.mulf %36, %26 : vector<16x32xf32>
      %cst_23 = arith.constant 0.254829586 : f32
      %38 = vector.broadcast %cst_23 : f32 to vector<16x32xf32>
      %39 = arith.addf %37, %38 : vector<16x32xf32>
      %40 = arith.mulf %39, %26 : vector<16x32xf32>
      %cst_24 = arith.constant 0.000000e+00 : f32
      %41 = vector.broadcast %cst_24 : f32 to vector<16x32xf32>
      %42 = arith.subf %41, %20 : vector<16x32xf32>
      %43 = arith.mulf %42, %20 : vector<16x32xf32>
      %44 = math.exp %43 : vector<16x32xf32>
      %45 = arith.mulf %40, %44 : vector<16x32xf32>
      %cst_25 = arith.constant 1.000000e+00 : f32
      %46 = vector.broadcast %cst_25 : f32 to vector<16x32xf32>
      %47 = arith.subf %46, %45 : vector<16x32xf32>
      %cst_26 = arith.constant 0.000000e+00 : f32
      %48 = vector.broadcast %cst_26 : f32 to vector<16x32xf32>
      %49 = arith.cmpf oge, %19, %48 : vector<16x32xf32>
      %cst_27 = arith.constant 0.000000e+00 : f32
      %50 = vector.broadcast %cst_27 : f32 to vector<16x32xf32>
      %51 = arith.subf %50, %47 : vector<16x32xf32>
      %52 = arith.select %49, %47, %51 : vector<16x32xi1>, vector<16x32xf32>
      %cst_28 = arith.constant 1.000000e+00 : f32
      %53 = vector.broadcast %cst_28 : f32 to vector<16x32xf32>
      %54 = arith.addf %53, %52 : vector<16x32xf32>
      %55 = arith.mulf %17, %54 : vector<16x32xf32>
      %56 = arith.truncf %55 : vector<16x32xf32> to vector<16x32xbf16>
      %c0_29 = arith.constant 0 : index
      %c0_30 = arith.constant 0 : index
      %57 = vector.load %arg6[%c0_29, %c0_30] : memref<16x32xbf16, #tpu.memory_space<vmem>>, vector<16x32xbf16>
      tpu.vector_store %arg6[%c0_29, %c0_30], %56 {strides = array<i32>} : memref<16x32xbf16, #tpu.memory_space<vmem>>, vector<16x32xbf16>,
    } else {
    }
    return
  }
  func.func @transform_0(%arg0: i32, %arg1: i32, %arg2: i32) -> (i32, i32) {
    %c0_i32 = arith.constant 0 : i32
    return %arg0, %arg2 : i32, i32
  }
  func.func @transform_1(%arg0: i32, %arg1: i32, %arg2: i32) -> (i32, i32) {
    %c0_i32 = arith.constant 0 : i32
    return %arg2, %arg1 : i32, i32
  }
  func.func @transform_2(%arg0: i32, %arg1: i32, %arg2: i32) -> (i32, i32) {
    %c0_i32 = arith.constant 0 : i32
    %c0_i32_0 = arith.constant 0 : i32
    return %c0_i32, %arg1 : i32, i32
  }
  func.func @transform_3(%arg0: i32, %arg1: i32, %arg2: i32) -> (i32, i32) {
    %c0_i32 = arith.constant 0 : i32
    return %arg0, %arg1 : i32, i32
  }
}

module attributes {stable_mosaic.version = 11 : i64} {
  func.func @_layernorm_kernel(%arg0: i32, %arg1: memref<16x32xbf16, #tpu.memory_space<vmem>>, %arg2: memref<1x32xf32, #tpu.memory_space<vmem>>, %arg3: memref<1x32xf32, #tpu.memory_space<vmem>>, %arg4: memref<16x32xbf16, #tpu.memory_space<vmem>>) attributes {dimension_semantics = [#tpu.dimension_semantics<parallel>], iteration_bounds = array<i64: 1>, scalar_prefetch = 0 : i64, scratch_operands = 0 : i64, tpu.core_type = #tpu.core_type<tc>, window_params = [{transform_indices = @transform_0, window_bounds = array<i64: 16, 32>}, {pipeline_mode = #tpu.pipeline_mode<synchronous>, transform_indices = @transform_1, window_bounds = array<i64: 1, 32>}, {pipeline_mode = #tpu.pipeline_mode<synchronous>, transform_indices = @transform_2, window_bounds = array<i64: 1, 32>}, {transform_indices = @transform_3, window_bounds = array<i64: 16, 32>}]} {
    %c0 = arith.constant 0 : index
    %c0_0 = arith.constant 0 : index
    %0 = vector.load %arg1[%c0, %c0_0] : memref<16x32xbf16, #tpu.memory_space<vmem>>, vector<16x32xbf16>
    %1 = arith.extf %0 : vector<16x32xbf16> to vector<16x32xf32>
    %cst = arith.constant dense<0.000000e+00> : vector<16xf32>
    %2 = vector.multi_reduction <add>, %1, %cst [1] : vector<16x32xf32> to vector<16xf32>
    %3 = vector.shape_cast %2 : vector<16xf32> to vector<16x1xf32>
    %cst_1 = arith.constant 3.200000e+01 : f32
    %4 = vector.broadcast %cst_1 : f32 to vector<16x1xf32>
    %5 = arith.divf %3, %4 : vector<16x1xf32>
    %6 = vector.broadcast %5 : vector<16x1xf32> to vector<16x32xf32>
    %7 = arith.subf %1, %6 : vector<16x32xf32>
    %8 = arith.mulf %7, %7 : vector<16x32xf32>
    %cst_2 = arith.constant dense<0.000000e+00> : vector<16xf32>
    %9 = vector.multi_reduction <add>, %8, %cst_2 [1] : vector<16x32xf32> to vector<16xf32>
    %10 = vector.shape_cast %9 : vector<16xf32> to vector<16x1xf32>
    %cst_3 = arith.constant 3.200000e+01 : f32
    %11 = vector.broadcast %cst_3 : f32 to vector<16x1xf32>
    %12 = arith.divf %10, %11 : vector<16x1xf32>
    %cst_4 = arith.constant 9.99999974E-6 : f32
    %13 = vector.broadcast %cst_4 : f32 to vector<16x1xf32>
    %14 = arith.addf %12, %13 : vector<16x1xf32>
    %15 = math.rsqrt %14 : vector<16x1xf32>
    %16 = vector.broadcast %5 : vector<16x1xf32> to vector<16x32xf32>
    %17 = arith.subf %1, %16 : vector<16x32xf32>
    %18 = vector.broadcast %15 : vector<16x1xf32> to vector<16x32xf32>
    %19 = arith.mulf %17, %18 : vector<16x32xf32>
    %c0_5 = arith.constant 0 : index
    %c0_6 = arith.constant 0 : index
    %20 = vector.load %arg2[%c0_5, %c0_6] : memref<1x32xf32, #tpu.memory_space<vmem>>, vector<1x32xf32>
    %21 = vector.broadcast %20 : vector<1x32xf32> to vector<16x32xf32>
    %22 = arith.mulf %19, %21 : vector<16x32xf32>
    %c0_7 = arith.constant 0 : index
    %c0_8 = arith.constant 0 : index
    %23 = vector.load %arg3[%c0_7, %c0_8] : memref<1x32xf32, #tpu.memory_space<vmem>>, vector<1x32xf32>
    %24 = vector.broadcast %23 : vector<1x32xf32> to vector<16x32xf32>
    %25 = arith.addf %22, %24 : vector<16x32xf32>
    %26 = arith.truncf %25 : vector<16x32xf32> to vector<16x32xbf16>
    %c0_9 = arith.constant 0 : index
    %c0_10 = arith.constant 0 : index
    %27 = vector.load %arg4[%c0_9, %c0_10] : memref<16x32xbf16, #tpu.memory_space<vmem>>, vector<16x32xbf16>
    tpu.vector_store %arg4[%c0_9, %c0_10], %26 {strides = array<i32>} : memref<16x32xbf16, #tpu.memory_space<vmem>>, vector<16x32xbf16>,
    return
  }
  func.func @transform_0(%arg0: i32) -> (i32, i32) {
    %c0_i32 = arith.constant 0 : i32
    %c0_i32_0 = arith.constant 0 : i32
    return %arg0, %c0_i32 : i32, i32
  }
  func.func @transform_1(%arg0: i32) -> (i32, i32) {
    %c0_i32 = arith.constant 0 : i32
    %c0_i32_0 = arith.constant 0 : i32
    %c0_i32_1 = arith.constant 0 : i32
    return %c0_i32, %c0_i32_0 : i32, i32
  }
  func.func @transform_2(%arg0: i32) -> (i32, i32) {
    %c0_i32 = arith.constant 0 : i32
    %c0_i32_0 = arith.constant 0 : i32
    %c0_i32_1 = arith.constant 0 : i32
    return %c0_i32, %c0_i32_0 : i32, i32
  }
  func.func @transform_3(%arg0: i32) -> (i32, i32) {
    %c0_i32 = arith.constant 0 : i32
    %c0_i32_0 = arith.constant 0 : i32
    return %arg0, %c0_i32 : i32, i32
  }
}

module attributes {stable_mosaic.version = 11 : i64} {
  func.func @_mm_kernel(%arg0: i32, %arg1: i32, %arg2: i32, %arg3: memref<16x32xbf16, #tpu.memory_space<vmem>>, %arg4: memref<32x64xbf16, #tpu.memory_space<vmem>>, %arg5: memref<1x64xf32, #tpu.memory_space<vmem>>, %arg6: memref<16x64xbf16, #tpu.memory_space<vmem>>, %arg7: memref<16x64xf32, #tpu.memory_space<vmem>>) attributes {dimension_semantics = [#tpu.dimension_semantics<parallel>, #tpu.dimension_semantics<parallel>, #tpu.dimension_semantics<arbitrary>], iteration_bounds = array<i64: 1, 1, 1>, scalar_prefetch = 0 : i64, scratch_operands = 1 : i64, tpu.core_type = #tpu.core_type<tc>, window_params = [{transform_indices = @transform_0, window_bounds = array<i64: 16, 32>}, {transform_indices = @transform_1, window_bounds = array<i64: 32, 64>}, {transform_indices = @transform_2, window_bounds = array<i64: 1, 64>}, {transform_indices = @transform_3, window_bounds = array<i64: 16, 64>}]} {
    %c0_i32 = arith.constant 0 : i32
    %0 = arith.cmpi eq, %arg2, %c0_i32 : i32
    %1 = arith.extui %0 : i1 to i32
    %c0_i32_0 = arith.constant 0 : i32
    %2 = arith.cmpi ne, %1, %c0_i32_0 : i32
    scf.if %2 {
      %cst_10 = arith.constant 0.000000e+00 : f32
      %12 = vector.broadcast %cst_10 : f32 to vector<16x64xf32>
      %c0_11 = arith.constant 0 : index
      %c0_12 = arith.constant 0 : index
      %13 = vector.load %arg7[%c0_11, %c0_12] : memref<16x64xf32, #tpu.memory_space<vmem>>, vector<16x64xf32>
      tpu.vector_store %arg7[%c0_11, %c0_12], %12 {strides = array<i32>} : memref<16x64xf32, #tpu.memory_space<vmem>>, vector<16x64xf32>,
    } else {
    }
    %c0 = arith.constant 0 : index
    %c0_1 = arith.constant 0 : index
    %3 = vector.load %arg7[%c0, %c0_1] : memref<16x64xf32, #tpu.memory_space<vmem>>, vector<16x64xf32>
    %c0_2 = arith.constant 0 : index
    %c0_3 = arith.constant 0 : index
    %4 = vector.load %arg3[%c0_2, %c0_3] : memref<16x32xbf16, #tpu.memory_space<vmem>>, vector<16x32xbf16>
    %c0_4 = arith.constant 0 : index
    %c0_5 = arith.constant 0 : index
    %5 = vector.load %arg4[%c0_4, %c0_5] : memref<32x64xbf16, #tpu.memory_space<vmem>>, vector<32x64xbf16>
    %cst = arith.constant dense<0.000000e+00> : vector<16x64xf32>
    %6 = tpu.matmul %4, %5, %cst {dimension_numbers = #tpu.dot_dimension_numbers<[1], [0], [0], [1], [0, 0, 1, 1], [], []>} : vector<16x32xbf16>, vector<32x64xbf16>, vector<16x64xf32> -> vector<16x64xf32>
    %7 = arith.addf %3, %6 : vector<16x64xf32>
    %c0_6 = arith.constant 0 : index
    %c0_7 = arith.constant 0 : index
    %8 = vector.load %arg7[%c0_6, %c0_7] : memref<16x64xf32, #tpu.memory_space<vmem>>, vector<16x64xf32>
    tpu.vector_store %arg7[%c0_6, %c0_7], %7 {strides = array<i32>} : memref<16x64xf32, #tpu.memory_space<vmem>>, vector<16x64xf32>,
    %c0_i32_8 = arith.constant 0 : i32
    %9 = arith.cmpi eq, %arg2, %c0_i32_8 : i32
    %10 = arith.extui %9 : i1 to i32
    %c0_i32_9 = arith.constant 0 : i32
    %11 = arith.cmpi ne, %10, %c0_i32_9 : i32
    scf.if %11 {
      %c0_10 = arith.constant 0 : index
      %c0_11 = arith.constant 0 : index
      %12 = vector.load %arg7[%c0_10, %c0_11] : memref<16x64xf32, #tpu.memory_space<vmem>>, vector<16x64xf32>
      %c0_12 = arith.constant 0 : index
      %c0_13 = arith.constant 0 : index
      %13 = vector.load %arg5[%c0_12, %c0_13] : memref<1x64xf32, #tpu.memory_space<vmem>>, vector<1x64xf32>
      %14 = vector.broadcast %13 : vector<1x64xf32> to vector<16x64xf32>
      %15 = arith.addf %12, %14 : vector<16x64xf32>
      %16 = arith.truncf %15 : vector<16x64xf32> to vector<16x64xbf16>
      %c0_14 = arith.constant 0 : index
      %c0_15 = arith.constant 0 : index
      %17 = vector.load %arg6[%c0_14, %c0_15] : memref<16x64xbf16, #tpu.memory_space<vmem>>, vector<16x64xbf16>
      tpu.vector_store %arg6[%c0_14, %c0_15], %16 {strides = array<i32>} : memref<16x64xbf16, #tpu.memory_space<vmem>>, vector<16x64xbf16>,
    } else {
    }
    return
  }
  func.func @transform_0(%arg0: i32, %arg1: i32, %arg2: i32) -> (i32, i32) {
    %c0_i32 = arith.constant 0 : i32
    return %arg0, %arg2 : i32, i32
  }
  func.func @transform_1(%arg0: i32, %arg1: i32, %arg2: i32) -> (i32, i32) {
    %c0_i32 = arith.constant 0 : i32
    return %arg2, %arg1 : i32, i32
  }
  func.func @transform_2(%arg0: i32, %arg1: i32, %arg2: i32) -> (i32, i32) {
    %c0_i32 = arith.constant 0 : i32
    %c0_i32_0 = arith.constant 0 : i32
    return %c0_i32, %arg1 : i32, i32
  }
  func.func @transform_3(%arg0: i32, %arg1: i32, %arg2: i32) -> (i32, i32) {
    %c0_i32 = arith.constant 0 : i32
    return %arg0, %arg1 : i32, i32
  }
}

module attributes {stable_mosaic.version = 11 : i64} {
  func.func @_mm_kernel(%arg0: i32, %arg1: i32, %arg2: i32, %arg3: memref<32x32xbf16, #tpu.memory_space<vmem>>, %arg4: memref<32x32xbf16, #tpu.memory_space<vmem>>, %arg5: memref<1x32xf32, #tpu.memory_space<vmem>>, %arg6: memref<32x32xbf16, #tpu.memory_space<vmem>>, %arg7: memref<32x32xf32, #tpu.memory_space<vmem>>) attributes {dimension_semantics = [#tpu.dimension_semantics<parallel>, #tpu.dimension_semantics<parallel>, #tpu.dimension_semantics<arbitrary>], iteration_bounds = array<i64: 1, 1, 1>, scalar_prefetch = 0 : i64, scratch_operands = 1 : i64, tpu.core_type = #tpu.core_type<tc>, window_params = [{transform_indices = @transform_0, window_bounds = array<i64: 32, 32>}, {transform_indices = @transform_1, window_bounds = array<i64: 32, 32>}, {transform_indices = @transform_2, window_bounds = array<i64: 1, 32>}, {transform_indices = @transform_3, window_bounds = array<i64: 32, 32>}]} {
    %c0_i32 = arith.constant 0 : i32
    %0 = arith.cmpi eq, %arg2, %c0_i32 : i32
    %1 = arith.extui %0 : i1 to i32
    %c0_i32_0 = arith.constant 0 : i32
    %2 = arith.cmpi ne, %1, %c0_i32_0 : i32
    scf.if %2 {
      %cst_10 = arith.constant 0.000000e+00 : f32
      %12 = vector.broadcast %cst_10 : f32 to vector<32x32xf32>
      %c0_11 = arith.constant 0 : index
      %c0_12 = arith.constant 0 : index
      %13 = vector.load %arg7[%c0_11, %c0_12] : memref<32x32xf32, #tpu.memory_space<vmem>>, vector<32x32xf32>
      tpu.vector_store %arg7[%c0_11, %c0_12], %12 {strides = array<i32>} : memref<32x32xf32, #tpu.memory_space<vmem>>, vector<32x32xf32>,
    } else {
    }
    %c0 = arith.constant 0 : index
    %c0_1 = arith.constant 0 : index
    %3 = vector.load %arg7[%c0, %c0_1] : memref<32x32xf32, #tpu.memory_space<vmem>>, vector<32x32xf32>
    %c0_2 = arith.constant 0 : index
    %c0_3 = arith.constant 0 : index
    %4 = vector.load %arg3[%c0_2, %c0_3] : memref<32x32xbf16, #tpu.memory_space<vmem>>, vector<32x32xbf16>
    %c0_4 = arith.constant 0 : index
    %c0_5 = arith.constant 0 : index
    %5 = vector.load %arg4[%c0_4, %c0_5] : memref<32x32xbf16, #tpu.memory_space<vmem>>, vector<32x32xbf16>
    %cst = arith.constant dense<0.000000e+00> : vector<32x32xf32>
    %6 = tpu.matmul %4, %5, %cst {dimension_numbers = #tpu.dot_dimension_numbers<[1], [0], [0], [1], [0, 0, 1, 1], [], []>} : vector<32x32xbf16>, vector<32x32xbf16>, vector<32x32xf32> -> vector<32x32xf32>
    %7 = arith.addf %3, %6 : vector<32x32xf32>
    %c0_6 = arith.constant 0 : index
    %c0_7 = arith.constant 0 : index
    %8 = vector.load %arg7[%c0_6, %c0_7] : memref<32x32xf32, #tpu.memory_space<vmem>>, vector<32x32xf32>
    tpu.vector_store %arg7[%c0_6, %c0_7], %7 {strides = array<i32>} : memref<32x32xf32, #tpu.memory_space<vmem>>, vector<32x32xf32>,
    %c0_i32_8 = arith.constant 0 : i32
    %9 = arith.cmpi eq, %arg2, %c0_i32_8 : i32
    %10 = arith.extui %9 : i1 to i32
    %c0_i32_9 = arith.constant 0 : i32
    %11 = arith.cmpi ne, %10, %c0_i32_9 : i32
    scf.if %11 {
      %c0_10 = arith.constant 0 : index
      %c0_11 = arith.constant 0 : index
      %12 = vector.load %arg7[%c0_10, %c0_11] : memref<32x32xf32, #tpu.memory_space<vmem>>, vector<32x32xf32>
      %c0_12 = arith.constant 0 : index
      %c0_13 = arith.constant 0 : index
      %13 = vector.load %arg5[%c0_12, %c0_13] : memref<1x32xf32, #tpu.memory_space<vmem>>, vector<1x32xf32>
      %14 = vector.broadcast %13 : vector<1x32xf32> to vector<32x32xf32>
      %15 = arith.addf %12, %14 : vector<32x32xf32>
      %16 = arith.truncf %15 : vector<32x32xf32> to vector<32x32xbf16>
      %c0_14 = arith.constant 0 : index
      %c0_15 = arith.constant 0 : index
      %17 = vector.load %arg6[%c0_14, %c0_15] : memref<32x32xbf16, #tpu.memory_space<vmem>>, vector<32x32xbf16>
      tpu.vector_store %arg6[%c0_14, %c0_15], %16 {strides = array<i32>} : memref<32x32xbf16, #tpu.memory_space<vmem>>, vector<32x32xbf16>,
    } else {
    }
    return
  }
  func.func @transform_0(%arg0: i32, %arg1: i32, %arg2: i32) -> (i32, i32) {
    %c0_i32 = arith.constant 0 : i32
    return %arg0, %arg2 : i32, i32
  }
  func.func @transform_1(%arg0: i32, %arg1: i32, %arg2: i32) -> (i32, i32) {
    %c0_i32 = arith.constant 0 : i32
    return %arg2, %arg1 : i32, i32
  }
  func.func @transform_2(%arg0: i32, %arg1: i32, %arg2: i32) -> (i32, i32) {
    %c0_i32 = arith.constant 0 : i32
    %c0_i32_0 = arith.constant 0 : i32
    return %c0_i32, %arg1 : i32, i32
  }
  func.func @transform_3(%arg0: i32, %arg1: i32, %arg2: i32) -> (i32, i32) {
    %c0_i32 = arith.constant 0 : i32
    return %arg0, %arg1 : i32, i32
  }
}

module attributes {stable_mosaic.version = 11 : i64} {
  func.func @_self_attn_kernel(%arg0: i32, %arg1: memref<1x16x96xbf16, #tpu.memory_space<vmem>>, %arg2: memref<1x16x32xbf16, #tpu.memory_space<vmem>>) attributes {dimension_semantics = [#tpu.dimension_semantics<parallel>], iteration_bounds = array<i64: 2>, scalar_prefetch = 0 : i64, scratch_operands = 0 : i64, tpu.core_type = #tpu.core_type<tc>, window_params = [{transform_indices = @transform_0, window_bounds = array<i64: 1, 16, 96>}, {transform_indices = @transform_1, window_bounds = array<i64: 1, 16, 32>}]} {
    %c0 = arith.constant 0 : index
    %c0_0 = arith.constant 0 : index
    %c0_1 = arith.constant 0 : index
    %0 = vector.load %arg1[%c0, %c0_0, %c0_1] : memref<1x16x96xbf16, #tpu.memory_space<vmem>>, vector<1x16x96xbf16>
    %1 = vector.shape_cast %0 : vector<1x16x96xbf16> to vector<16x96xbf16>
    %2 = vector.extract_strided_slice %1 {offsets = [0, 0], sizes = [16, 32], strides = [1, 1]} : vector<16x96xbf16> to vector<16x32xbf16>
    %3 = vector.extract_strided_slice %1 {offsets = [0, 32], sizes = [16, 32], strides = [1, 1]} : vector<16x96xbf16> to vector<16x32xbf16>
    %4 = vector.extract_strided_slice %1 {offsets = [0, 64], sizes = [16, 32], strides = [1, 1]} : vector<16x96xbf16> to vector<16x32xbf16>
    %5 = tpu.iota {dimensions = array<i32: 0>} : vector<16x16xi32>
    %6 = tpu.iota {dimensions = array<i32: 1>} : vector<16x16xi32>
    %7 = arith.cmpi sgt, %6, %5 : vector<16x16xi32>
    %cst = arith.constant 0xFF800000 : f32
    %cst_2 = arith.constant 0.000000e+00 : f32
    %8 = vector.broadcast %cst : f32 to vector<16x16xf32>
    %9 = vector.broadcast %cst_2 : f32 to vector<16x16xf32>
    %10 = arith.select %7, %8, %9 : vector<16x16xi1>, vector<16x16xf32>
    %11 = vector.extract_strided_slice %2 {offsets = [0, 0], sizes = [16, 8], strides = [1, 1]} : vector<16x32xbf16> to vector<16x8xbf16>
    %12 = vector.extract_strided_slice %3 {offsets = [0, 0], sizes = [16, 8], strides = [1, 1]} : vector<16x32xbf16> to vector<16x8xbf16>
    %cst_3 = arith.constant dense<0.000000e+00> : vector<16x16xf32>
    %13 = tpu.matmul %11, %12, %cst_3 {dimension_numbers = #tpu.dot_dimension_numbers<[1], [1], [0], [0], [0, 0, 1, 0], [], []>} : vector<16x8xbf16>, vector<16x8xbf16>, vector<16x16xf32> -> vector<16x16xf32>
    %14 = arith.addf %13, %10 : vector<16x16xf32>
    %cst_4 = arith.constant dense<0xFF800000> : vector<16xf32>
    %15 = vector.multi_reduction <maximumf>, %14, %cst_4 [1] : vector<16x16xf32> to vector<16xf32>
    %16 = vector.shape_cast %15 : vector<16xf32> to vector<16x1xf32>
    %17 = vector.broadcast %16 : vector<16x1xf32> to vector<16x16xf32>
    %18 = arith.subf %14, %17 : vector<16x16xf32>
    %19 = math.exp %18 : vector<16x16xf32>
    %cst_5 = arith.constant dense<0.000000e+00> : vector<16xf32>
    %20 = vector.multi_reduction <add>, %19, %cst_5 [1] : vector<16x16xf32> to vector<16xf32>
    %21 = vector.shape_cast %20 : vector<16xf32> to vector<16x1xf32>
    %22 = tpu.reciprocal %21 {approx = true} : vector<16x1xf32> -> vector<16x1xf32>
    %23 = vector.broadcast %22 : vector<16x1xf32> to vector<16x16xf32>
    %24 = arith.mulf %19, %23 : vector<16x16xf32>
    %25 = arith.truncf %24 : vector<16x16xf32> to vector<16x16xbf16>
    %26 = vector.extract_strided_slice %4 {offsets = [0, 0], sizes = [16, 8], strides = [1, 1]} : vector<16x32xbf16> to vector<16x8xbf16>
    %cst_6 = arith.constant dense<0.000000e+00> : vector<16x8xf32>
    %27 = tpu.matmul %25, %26, %cst_6 {dimension_numbers = #tpu.dot_dimension_numbers<[1], [0], [0], [1], [0, 0, 1, 1], [], []>} : vector<16x16xbf16>, vector<16x8xbf16>, vector<16x8xf32> -> vector<16x8xf32>
    %28 = arith.truncf %27 : vector<16x8xf32> to vector<16x8xbf16>
    %29 = vector.extract_strided_slice %2 {offsets = [0, 8], sizes = [16, 8], strides = [1, 1]} : vector<16x32xbf16> to vector<16x8xbf16>
    %30 = vector.extract_strided_slice %3 {offsets = [0, 8], sizes = [16, 8], strides = [1, 1]} : vector<16x32xbf16> to vector<16x8xbf16>
    %cst_7 = arith.constant dense<0.000000e+00> : vector<16x16xf32>
    %31 = tpu.matmul %29, %30, %cst_7 {dimension_numbers = #tpu.dot_dimension_numbers<[1], [1], [0], [0], [0, 0, 1, 0], [], []>} : vector<16x8xbf16>, vector<16x8xbf16>, vector<16x16xf32> -> vector<16x16xf32>
    %32 = arith.addf %31, %10 : vector<16x16xf32>
    %cst_8 = arith.constant dense<0xFF800000> : vector<16xf32>
    %33 = vector.multi_reduction <maximumf>, %32, %cst_8 [1] : vector<16x16xf32> to vector<16xf32>
    %34 = vector.shape_cast %33 : vector<16xf32> to vector<16x1xf32>
    %35 = vector.broadcast %34 : vector<16x1xf32> to vector<16x16xf32>
    %36 = arith.subf %32, %35 : vector<16x16xf32>
    %37 = math.exp %36 : vector<16x16xf32>
    %cst_9 = arith.constant dense<0.000000e+00> : vector<16xf32>
    %38 = vector.multi_reduction <add>, %37, %cst_9 [1] : vector<16x16xf32> to vector<16xf32>
    %39 = vector.shape_cast %38 : vector<16xf32> to vector<16x1xf32>
    %40 = tpu.reciprocal %39 {approx = true} : vector<16x1xf32> -> vector<16x1xf32>
    %41 = vector.broadcast %40 : vector<16x1xf32> to vector<16x16xf32>
    %42 = arith.mulf %37, %41 : vector<16x16xf32>
    %43 = arith.truncf %42 : vector<16x16xf32> to vector<16x16xbf16>
    %44 = vector.extract_strided_slice %4 {offsets = [0, 8], sizes = [16, 8], strides = [1, 1]} : vector<16x32xbf16> to vector<16x8xbf16>
    %cst_10 = arith.constant dense<0.000000e+00> : vector<16x8xf32>
    %45 = tpu.matmul %43, %44, %cst_10 {dimension_numbers = #tpu.dot_dimension_numbers<[1], [0], [0], [1], [0, 0, 1, 1], [], []>} : vector<16x16xbf16>, vector<16x8xbf16>, vector<16x8xf32> -> vector<16x8xf32>
    %46 = arith.truncf %45 : vector<16x8xf32> to vector<16x8xbf16>
    %47 = vector.extract_strided_slice %2 {offsets = [0, 16], sizes = [16, 8], strides = [1, 1]} : vector<16x32xbf16> to vector<16x8xbf16>
    %48 = vector.extract_strided_slice %3 {offsets = [0, 16], sizes = [16, 8], strides = [1, 1]} : vector<16x32xbf16> to vector<16x8xbf16>
    %cst_11 = arith.constant dense<0.000000e+00> : vector<16x16xf32>
    %49 = tpu.matmul %47, %48, %cst_11 {dimension_numbers = #tpu.dot_dimension_numbers<[1], [1], [0], [0], [0, 0, 1, 0], [], []>} : vector<16x8xbf16>, vector<16x8xbf16>, vector<16x16xf32> -> vector<16x16xf32>
    %50 = arith.addf %49, %10 : vector<16x16xf32>
    %cst_12 = arith.constant dense<0xFF800000> : vector<16xf32>
    %51 = vector.multi_reduction <maximumf>, %50, %cst_12 [1] : vector<16x16xf32> to vector<16xf32>
    %52 = vector.shape_cast %51 : vector<16xf32> to vector<16x1xf32>
    %53 = vector.broadcast %52 : vector<16x1xf32> to vector<16x16xf32>
    %54 = arith.subf %50, %53 : vector<16x16xf32>
    %55 = math.exp %54 : vector<16x16xf32>
    %cst_13 = arith.constant dense<0.000000e+00> : vector<16xf32>
    %56 = vector.multi_reduction <add>, %55, %cst_13 [1] : vector<16x16xf32> to vector<16xf32>
    %57 = vector.shape_cast %56 : vector<16xf32> to vector<16x1xf32>
    %58 = tpu.reciprocal %57 {approx = true} : vector<16x1xf32> -> vector<16x1xf32>
    %59 = vector.broadcast %58 : vector<16x1xf32> to vector<16x16xf32>
    %60 = arith.mulf %55, %59 : vector<16x16xf32>
    %61 = arith.truncf %60 : vector<16x16xf32> to vector<16x16xbf16>
    %62 = vector.extract_strided_slice %4 {offsets = [0, 16], sizes = [16, 8], strides = [1, 1]} : vector<16x32xbf16> to vector<16x8xbf16>
    %cst_14 = arith.constant dense<0.000000e+00> : vector<16x8xf32>
    %63 = tpu.matmul %61, %62, %cst_14 {dimension_numbers = #tpu.dot_dimension_numbers<[1], [0], [0], [1], [0, 0, 1, 1], [], []>} : vector<16x16xbf16>, vector<16x8xbf16>, vector<16x8xf32> -> vector<16x8xf32>
    %64 = arith.truncf %63 : vector<16x8xf32> to vector<16x8xbf16>
    %65 = vector.extract_strided_slice %2 {offsets = [0, 24], sizes = [16, 8], strides = [1, 1]} : vector<16x32xbf16> to vector<16x8xbf16>
    %66 = vector.extract_strided_slice %3 {offsets = [0, 24], sizes = [16, 8], strides = [1, 1]} : vector<16x32xbf16> to vector<16x8xbf16>
    %cst_15 = arith.constant dense<0.000000e+00> : vector<16x16xf32>
    %67 = tpu.matmul %65, %66, %cst_15 {dimension_numbers = #tpu.dot_dimension_numbers<[1], [1], [0], [0], [0, 0, 1, 0], [], []>} : vector<16x8xbf16>, vector<16x8xbf16>, vector<16x16xf32> -> vector<16x16xf32>
    %68 = arith.addf %67, %10 : vector<16x16xf32>
    %cst_16 = arith.constant dense<0xFF800000> : vector<16xf32>
    %69 = vector.multi_reduction <maximumf>, %68, %cst_16 [1] : vector<16x16xf32> to vector<16xf32>
    %70 = vector.shape_cast %69 : vector<16xf32> to vector<16x1xf32>
    %71 = vector.broadcast %70 : vector<16x1xf32> to vector<16x16xf32>
    %72 = arith.subf %68, %71 : vector<16x16xf32>
    %73 = math.exp %72 : vector<16x16xf32>
    %cst_17 = arith.constant dense<0.000000e+00> : vector<16xf32>
    %74 = vector.multi_reduction <add>, %73, %cst_17 [1] : vector<16x16xf32> to vector<16xf32>
    %75 = vector.shape_cast %74 : vector<16xf32> to vector<16x1xf32>
    %76 = tpu.reciprocal %75 {approx = true} : vector<16x1xf32> -> vector<16x1xf32>
    %77 = vector.broadcast %76 : vector<16x1xf32> to vector<16x16xf32>
    %78 = arith.mulf %73, %77 : vector<16x16xf32>
    %79 = arith.truncf %78 : vector<16x16xf32> to vector<16x16xbf16>
    %80 = vector.extract_strided_slice %4 {offsets = [0, 24], sizes = [16, 8], strides = [1, 1]} : vector<16x32xbf16> to vector<16x8xbf16>
    %cst_18 = arith.constant dense<0.000000e+00> : vector<16x8xf32>
    %81 = tpu.matmul %79, %80, %cst_18 {dimension_numbers = #tpu.dot_dimension_numbers<[1], [0], [0], [1], [0, 0, 1, 1], [], []>} : vector<16x16xbf16>, vector<16x8xbf16>, vector<16x8xf32> -> vector<16x8xf32>
    %82 = arith.truncf %81 : vector<16x8xf32> to vector<16x8xbf16>
    %83 = tpu.concatenate %28, %46, %64, %82 in 1 : vector<16x8xbf16>, vector<16x8xbf16>, vector<16x8xbf16>, vector<16x8xbf16> -> vector<16x32xbf16>
    %c0_19 = arith.constant 0 : index
    %c0_20 = arith.constant 0 : index
    %c0_21 = arith.constant 0 : index
    %84 = vector.load %arg2[%c0_19, %c0_20, %c0_21] : memref<1x16x32xbf16, #tpu.memory_space<vmem>>, vector<1x16x32xbf16>
    %85 = vector.shape_cast %84 : vector<1x16x32xbf16> to vector<16x32xbf16>
    %86 = vector.shape_cast %83 : vector<16x32xbf16> to vector<1x16x32xbf16>
    tpu.vector_store %arg2[%c0_19, %c0_20, %c0_21], %86 {strides = array<i32>} : memref<1x16x32xbf16, #tpu.memory_space<vmem>>, vector<1x16x32xbf16>,
    return
  }
  func.func @transform_0(%arg0: i32) -> (i32, i32, i32) {
    %c0_i32 = arith.constant 0 : i32
    %c0_i32_0 = arith.constant 0 : i32
    %c0_i32_1 = arith.constant 0 : i32
    return %arg0, %c0_i32, %c0_i32_0 : i32, i32, i32
  }
  func.func @transform_1(%arg0: i32) -> (i32, i32, i32) {
    %c0_i32 = arith.constant 0 : i32
    %c0_i32_0 = arith.constant 0 : i32
    %c0_i32_1 = arith.constant 0 : i32
    return %arg0, %c0_i32, %c0_i32_0 : i32, i32, i32
  }
}

module attributes {stable_mosaic.version = 11 : i64} {
  func.func @_cross_attn_kernel(%arg0: i32, %arg1: memref<1x16x32xbf16, #tpu.memory_space<vmem>>, %arg2: memref<1x8x64xbf16, #tpu.memory_space<vmem>>, %arg3: memref<1x16x32xbf16, #tpu.memory_space<vmem>>) attributes {dimension_semantics = [#tpu.dimension_semantics<parallel>], iteration_bounds = array<i64: 2>, scalar_prefetch = 0 : i64, scratch_operands = 0 : i64, tpu.core_type = #tpu.core_type<tc>, window_params = [{transform_indices = @transform_0, window_bounds = array<i64: 1, 16, 32>}, {transform_indices = @transform_1, window_bounds = array<i64: 1, 8, 64>}, {transform_indices = @transform_2, window_bounds = array<i64: 1, 16, 32>}]} {
    %c0 = arith.constant 0 : index
    %c0_0 = arith.constant 0 : index
    %c0_1 = arith.constant 0 : index
    %0 = vector.load %arg1[%c0, %c0_0, %c0_1] : memref<1x16x32xbf16, #tpu.memory_space<vmem>>, vector<1x16x32xbf16>
    %1 = vector.shape_cast %0 : vector<1x16x32xbf16> to vector<16x32xbf16>
    %c0_2 = arith.constant 0 : index
    %c0_3 = arith.constant 0 : index
    %c0_4 = arith.constant 0 : index
    %2 = vector.load %arg2[%c0_2, %c0_3, %c0_4] : memref<1x8x64xbf16, #tpu.memory_space<vmem>>, vector<1x8x64xbf16>
    %3 = vector.shape_cast %2 : vector<1x8x64xbf16> to vector<8x64xbf16>
    %4 = vector.extract_strided_slice %3 {offsets = [0, 0], sizes = [8, 32], strides = [1, 1]} : vector<8x64xbf16> to vector<8x32xbf16>
    %5 = vector.extract_strided_slice %3 {offsets = [0, 32], sizes = [8, 32], strides = [1, 1]} : vector<8x64xbf16> to vector<8x32xbf16>
    %6 = vector.extract_strided_slice %1 {offsets = [0, 0], sizes = [16, 8], strides = [1, 1]} : vector<16x32xbf16> to vector<16x8xbf16>
    %7 = vector.extract_strided_slice %4 {offsets = [0, 0], sizes = [8, 8], strides = [1, 1]} : vector<8x32xbf16> to vector<8x8xbf16>
    %cst = arith.constant dense<0.000000e+00> : vector<16x8xf32>
    %8 = tpu.matmul %6, %7, %cst {dimension_numbers = #tpu.dot_dimension_numbers<[1], [1], [0], [0], [0, 0, 1, 0], [], []>} : vector<16x8xbf16>, vector<8x8xbf16>, vector<16x8xf32> -> vector<16x8xf32>
    %cst_5 = arith.constant dense<0xFF800000> : vector<16xf32>
    %9 = vector.multi_reduction <maximumf>, %8, %cst_5 [1] : vector<16x8xf32> to vector<16xf32>
    %10 = vector.shape_cast %9 : vector<16xf32> to vector<16x1xf32>
    %11 = vector.broadcast %10 : vector<16x1xf32> to vector<16x8xf32>
    %12 = arith.subf %8, %11 : vector<16x8xf32>
    %13 = math.exp %12 : vector<16x8xf32>
    %cst_6 = arith.constant dense<0.000000e+00> : vector<16xf32>
    %14 = vector.multi_reduction <add>, %13, %cst_6 [1] : vector<16x8xf32> to vector<16xf32>
    %15 = vector.shape_cast %14 : vector<16xf32> to vector<16x1xf32>
    %16 = tpu.reciprocal %15 {approx = true} : vector<16x1xf32> -> vector<16x1xf32>
    %17 = vector.broadcast %16 : vector<16x1xf32> to vector<16x8xf32>
    %18 = arith.mulf %13, %17 : vector<16x8xf32>
    %19 = arith.truncf %18 : vector<16x8xf32> to vector<16x8xbf16>
    %20 = vector.extract_strided_slice %5 {offsets = [0, 0], sizes = [8, 8], strides = [1, 1]} : vector<8x32xbf16> to vector<8x8xbf16>
    %cst_7 = arith.constant dense<0.000000e+00> : vector<16x8xf32>
    %21 = tpu.matmul %19, %20, %cst_7 {dimension_numbers = #tpu.dot_dimension_numbers<[1], [0], [0], [1], [0, 0, 1, 1], [], []>} : vector<16x8xbf16>, vector<8x8xbf16>, vector<16x8xf32> -> vector<16x8xf32>
    %22 = arith.truncf %21 : vector<16x8xf32> to vector<16x8xbf16>
    %23 = vector.extract_strided_slice %1 {offsets = [0, 8], sizes = [16, 8], strides = [1, 1]} : vector<16x32xbf16> to vector<16x8xbf16>
    %24 = vector.extract_strided_slice %4 {offsets = [0, 8], sizes = [8, 8], strides = [1, 1]} : vector<8x32xbf16> to vector<8x8xbf16>
    %cst_8 = arith.constant dense<0.000000e+00> : vector<16x8xf32>
    %25 = tpu.matmul %23, %24, %cst_8 {dimension_numbers = #tpu.dot_dimension_numbers<[1], [1], [0], [0], [0, 0, 1, 0], [], []>} : vector<16x8xbf16>, vector<8x8xbf16>, vector<16x8xf32> -> vector<16x8xf32>
    %cst_9 = arith.constant dense<0xFF800000> : vector<16xf32>
    %26 = vector.multi_reduction <maximumf>, %25, %cst_9 [1] : vector<16x8xf32> to vector<16xf32>
    %27 = vector.shape_cast %26 : vector<16xf32> to vector<16x1xf32>
    %28 = vector.broadcast %27 : vector<16x1xf32> to vector<16x8xf32>
    %29 = arith.subf %25, %28 : vector<16x8xf32>
    %30 = math.exp %29 : vector<16x8xf32>
    %cst_10 = arith.constant dense<0.000000e+00> : vector<16xf32>
    %31 = vector.multi_reduction <add>, %30, %cst_10 [1] : vector<16x8xf32> to vector<16xf32>
    %32 = vector.shape_cast %31 : vector<16xf32> to vector<16x1xf32>
    %33 = tpu.reciprocal %32 {approx = true} : vector<16x1xf32> -> vector<16x1xf32>
    %34 = vector.broadcast %33 : vector<16x1xf32> to vector<16x8xf32>
    %35 = arith.mulf %30, %34 : vector<16x8xf32>
    %36 = arith.truncf %35 : vector<16x8xf32> to vector<16x8xbf16>
    %37 = vector.extract_strided_slice %5 {offsets = [0, 8], sizes = [8, 8], strides = [1, 1]} : vector<8x32xbf16> to vector<8x8xbf16>
    %cst_11 = arith.constant dense<0.000000e+00> : vector<16x8xf32>
    %38 = tpu.matmul %36, %37, %cst_11 {dimension_numbers = #tpu.dot_dimension_numbers<[1], [0], [0], [1], [0, 0, 1, 1], [], []>} : vector<16x8xbf16>, vector<8x8xbf16>, vector<16x8xf32> -> vector<16x8xf32>
    %39 = arith.truncf %38 : vector<16x8xf32> to vector<16x8xbf16>
    %40 = vector.extract_strided_slice %1 {offsets = [0, 16], sizes = [16, 8], strides = [1, 1]} : vector<16x32xbf16> to vector<16x8xbf16>
    %41 = vector.extract_strided_slice %4 {offsets = [0, 16], sizes = [8, 8], strides = [1, 1]} : vector<8x32xbf16> to vector<8x8xbf16>
    %cst_12 = arith.constant dense<0.000000e+00> : vector<16x8xf32>
    %42 = tpu.matmul %40, %41, %cst_12 {dimension_numbers = #tpu.dot_dimension_numbers<[1], [1], [0], [0], [0, 0, 1, 0], [], []>} : vector<16x8xbf16>, vector<8x8xbf16>, vector<16x8xf32> -> vector<16x8xf32>
    %cst_13 = arith.constant dense<0xFF800000> : vector<16xf32>
    %43 = vector.multi_reduction <maximumf>, %42, %cst_13 [1] : vector<16x8xf32> to vector<16xf32>
    %44 = vector.shape_cast %43 : vector<16xf32> to vector<16x1xf32>
    %45 = vector.broadcast %44 : vector<16x1xf32> to vector<16x8xf32>
    %46 = arith.subf %42, %45 : vector<16x8xf32>
    %47 = math.exp %46 : vector<16x8xf32>
    %cst_14 = arith.constant dense<0.000000e+00> : vector<16xf32>
    %48 = vector.multi_reduction <add>, %47, %cst_14 [1] : vector<16x8xf32> to vector<16xf32>
    %49 = vector.shape_cast %48 : vector<16xf32> to vector<16x1xf32>
    %50 = tpu.reciprocal %49 {approx = true} : vector<16x1xf32> -> vector<16x1xf32>
    %51 = vector.broadcast %50 : vector<16x1xf32> to vector<16x8xf32>
    %52 = arith.mulf %47, %51 : vector<16x8xf32>
    %53 = arith.truncf %52 : vector<16x8xf32> to vector<16x8xbf16>
    %54 = vector.extract_strided_slice %5 {offsets = [0, 16], sizes = [8, 8], strides = [1, 1]} : vector<8x32xbf16> to vector<8x8xbf16>
    %cst_15 = arith.constant dense<0.000000e+00> : vector<16x8xf32>
    %55 = tpu.matmul %53, %54, %cst_15 {dimension_numbers = #tpu.dot_dimension_numbers<[1], [0], [0], [1], [0, 0, 1, 1], [], []>} : vector<16x8xbf16>, vector<8x8xbf16>, vector<16x8xf32> -> vector<16x8xf32>
    %56 = arith.truncf %55 : vector<16x8xf32> to vector<16x8xbf16>
    %57 = vector.extract_strided_slice %1 {offsets = [0, 24], sizes = [16, 8], strides = [1, 1]} : vector<16x32xbf16> to vector<16x8xbf16>
    %58 = vector.extract_strided_slice %4 {offsets = [0, 24], sizes = [8, 8], strides = [1, 1]} : vector<8x32xbf16> to vector<8x8xbf16>
    %cst_16 = arith.constant dense<0.000000e+00> : vector<16x8xf32>
    %59 = tpu.matmul %57, %58, %cst_16 {dimension_numbers = #tpu.dot_dimension_numbers<[1], [1], [0], [0], [0, 0, 1, 0], [], []>} : vector<16x8xbf16>, vector<8x8xbf16>, vector<16x8xf32> -> vector<16x8xf32>
    %cst_17 = arith.constant dense<0xFF800000> : vector<16xf32>
    %60 = vector.multi_reduction <maximumf>, %59, %cst_17 [1] : vector<16x8xf32> to vector<16xf32>
    %61 = vector.shape_cast %60 : vector<16xf32> to vector<16x1xf32>
    %62 = vector.broadcast %61 : vector<16x1xf32> to vector<16x8xf32>
    %63 = arith.subf %59, %62 : vector<16x8xf32>
    %64 = math.exp %63 : vector<16x8xf32>
    %cst_18 = arith.constant dense<0.000000e+00> : vector<16xf32>
    %65 = vector.multi_reduction <add>, %64, %cst_18 [1] : vector<16x8xf32> to vector<16xf32>
    %66 = vector.shape_cast %65 : vector<16xf32> to vector<16x1xf32>
    %67 = tpu.reciprocal %66 {approx = true} : vector<16x1xf32> -> vector<16x1xf32>
    %68 = vector.broadcast %67 : vector<16x1xf32> to vector<16x8xf32>
    %69 = arith.mulf %64, %68 : vector<16x8xf32>
    %70 = arith.truncf %69 : vector<16x8xf32> to vector<16x8xbf16>
    %71 = vector.extract_strided_slice %5 {offsets = [0, 24], sizes = [8, 8], strides = [1, 1]} : vector<8x32xbf16> to vector<8x8xbf16>
    %cst_19 = arith.constant dense<0.000000e+00> : vector<16x8xf32>
    %72 = tpu.matmul %70, %71, %cst_19 {dimension_numbers = #tpu.dot_dimension_numbers<[1], [0], [0], [1], [0, 0, 1, 1], [], []>} : vector<16x8xbf16>, vector<8x8xbf16>, vector<16x8xf32> -> vector<16x8xf32>
    %73 = arith.truncf %72 : vector<16x8xf32> to vector<16x8xbf16>
    %74 = tpu.concatenate %22, %39, %56, %73 in 1 : vector<16x8xbf16>, vector<16x8xbf16>, vector<16x8xbf16>, vector<16x8xbf16> -> vector<16x32xbf16>
    %c0_20 = arith.constant 0 : index
    %c0_21 = arith.constant 0 : index
    %c0_22 = arith.constant 0 : index
    %75 = vector.load %arg3[%c0_20, %c0_21, %c0_22] : memref<1x16x32xbf16, #tpu.memory_space<vmem>>, vector<1x16x32xbf16>
    %76 = vector.shape_cast %75 : vector<1x16x32xbf16> to vector<16x32xbf16>
    %77 = vector.shape_cast %74 : vector<16x32xbf16> to vector<1x16x32xbf16>
    tpu.vector_store %arg3[%c0_20, %c0_21, %c0_22], %77 {strides = array<i32>} : memref<1x16x32xbf16, #tpu.memory_space<vmem>>, vector<1x16x32xbf16>,
    return
  }
  func.func @transform_0(%arg0: i32) -> (i32, i32, i32) {
    %c0_i32 = arith.constant 0 : i32
    %c0_i32_0 = arith.constant 0 : i32
    %c0_i32_1 = arith.constant 0 : i32
    return %arg0, %c0_i32, %c0_i32_0 : i32, i32, i32
  }
  func.func @transform_1(%arg0: i32) -> (i32, i32, i32) {
    %c0_i32 = arith.constant 0 : i32
    %c0_i32_0 = arith.constant 0 : i32
    %c0_i32_1 = arith.constant 0 : i32
    return %arg0, %c0_i32, %c0_i32_0 : i32, i32, i32
  }
  func.func @transform_2(%arg0: i32) -> (i32, i32, i32) {
    %c0_i32 = arith.constant 0 : i32
    %c0_i32_0 = arith.constant 0 : i32
    %c0_i32_1 = arith.constant 0 : i32
    return %arg0, %c0_i32, %c0_i32_0 : i32, i32, i32
  }
}

module attributes {stable_mosaic.version = 11 : i64} {
  func.func @_layernorm_kernel(%arg0: i32, %arg1: memref<32x32xbf16, #tpu.memory_space<vmem>>, %arg2: memref<1x32xf32, #tpu.memory_space<vmem>>, %arg3: memref<1x32xf32, #tpu.memory_space<vmem>>, %arg4: memref<32x32xbf16, #tpu.memory_space<vmem>>) attributes {dimension_semantics = [#tpu.dimension_semantics<parallel>], iteration_bounds = array<i64: 1>, scalar_prefetch = 0 : i64, scratch_operands = 0 : i64, tpu.core_type = #tpu.core_type<tc>, window_params = [{transform_indices = @transform_0, window_bounds = array<i64: 32, 32>}, {pipeline_mode = #tpu.pipeline_mode<synchronous>, transform_indices = @transform_1, window_bounds = array<i64: 1, 32>}, {pipeline_mode = #tpu.pipeline_mode<synchronous>, transform_indices = @transform_2, window_bounds = array<i64: 1, 32>}, {transform_indices = @transform_3, window_bounds = array<i64: 32, 32>}]} {
    %c0 = arith.constant 0 : index
    %c0_0 = arith.constant 0 : index
    %0 = vector.load %arg1[%c0, %c0_0] : memref<32x32xbf16, #tpu.memory_space<vmem>>, vector<32x32xbf16>
    %1 = arith.extf %0 : vector<32x32xbf16> to vector<32x32xf32>
    %cst = arith.constant dense<0.000000e+00> : vector<32xf32>
    %2 = vector.multi_reduction <add>, %1, %cst [1] : vector<32x32xf32> to vector<32xf32>
    %3 = vector.shape_cast %2 : vector<32xf32> to vector<32x1xf32>
    %cst_1 = arith.constant 3.200000e+01 : f32
    %4 = vector.broadcast %cst_1 : f32 to vector<32x1xf32>
    %5 = arith.divf %3, %4 : vector<32x1xf32>
    %6 = vector.broadcast %5 : vector<32x1xf32> to vector<32x32xf32>
    %7 = arith.subf %1, %6 : vector<32x32xf32>
    %8 = arith.mulf %7, %7 : vector<32x32xf32>
    %cst_2 = arith.constant dense<0.000000e+00> : vector<32xf32>
    %9 = vector.multi_reduction <add>, %8, %cst_2 [1] : vector<32x32xf32> to vector<32xf32>
    %10 = vector.shape_cast %9 : vector<32xf32> to vector<32x1xf32>
    %cst_3 = arith.constant 3.200000e+01 : f32
    %11 = vector.broadcast %cst_3 : f32 to vector<32x1xf32>
    %12 = arith.divf %10, %11 : vector<32x1xf32>
    %cst_4 = arith.constant 9.99999974E-6 : f32
    %13 = vector.broadcast %cst_4 : f32 to vector<32x1xf32>
    %14 = arith.addf %12, %13 : vector<32x1xf32>
    %15 = math.rsqrt %14 : vector<32x1xf32>
    %16 = vector.broadcast %5 : vector<32x1xf32> to vector<32x32xf32>
    %17 = arith.subf %1, %16 : vector<32x32xf32>
    %18 = vector.broadcast %15 : vector<32x1xf32> to vector<32x32xf32>
    %19 = arith.mulf %17, %18 : vector<32x32xf32>
    %c0_5 = arith.constant 0 : index
    %c0_6 = arith.constant 0 : index
    %20 = vector.load %arg2[%c0_5, %c0_6] : memref<1x32xf32, #tpu.memory_space<vmem>>, vector<1x32xf32>
    %21 = vector.broadcast %20 : vector<1x32xf32> to vector<32x32xf32>
    %22 = arith.mulf %19, %21 : vector<32x32xf32>
    %c0_7 = arith.constant 0 : index
    %c0_8 = arith.constant 0 : index
    %23 = vector.load %arg3[%c0_7, %c0_8] : memref<1x32xf32, #tpu.memory_space<vmem>>, vector<1x32xf32>
    %24 = vector.broadcast %23 : vector<1x32xf32> to vector<32x32xf32>
    %25 = arith.addf %22, %24 : vector<32x32xf32>
    %26 = arith.truncf %25 : vector<32x32xf32> to vector<32x32xbf16>
    %c0_9 = arith.constant 0 : index
    %c0_10 = arith.constant 0 : index
    %27 = vector.load %arg4[%c0_9, %c0_10] : memref<32x32xbf16, #tpu.memory_space<vmem>>, vector<32x32xbf16>
    tpu.vector_store %arg4[%c0_9, %c0_10], %26 {strides = array<i32>} : memref<32x32xbf16, #tpu.memory_space<vmem>>, vector<32x32xbf16>,
    return
  }
  func.func @transform_0(%arg0: i32) -> (i32, i32) {
    %c0_i32 = arith.constant 0 : i32
    %c0_i32_0 = arith.constant 0 : i32
    return %arg0, %c0_i32 : i32, i32
  }
  func.func @transform_1(%arg0: i32) -> (i32, i32) {
    %c0_i32 = arith.constant 0 : i32
    %c0_i32_0 = arith.constant 0 : i32
    %c0_i32_1 = arith.constant 0 : i32
    return %c0_i32, %c0_i32_0 : i32, i32
  }
  func.func @transform_2(%arg0: i32) -> (i32, i32) {
    %c0_i32 = arith.constant 0 : i32
    %c0_i32_0 = arith.constant 0 : i32
    %c0_i32_1 = arith.constant 0 : i32
    return %c0_i32, %c0_i32_0 : i32, i32
  }
  func.func @transform_3(%arg0: i32) -> (i32, i32) {
    %c0_i32 = arith.constant 0 : i32
    %c0_i32_0 = arith.constant 0 : i32
    return %arg0, %c0_i32 : i32, i32
  }
}

module attributes {stable_mosaic.version = 11 : i64} {
  func.func @_mm_kernel(%arg0: i32, %arg1: i32, %arg2: i32, %arg3: memref<32x32xbf16, #tpu.memory_space<vmem>>, %arg4: memref<32x8xbf16, #tpu.memory_space<vmem>>, %arg5: memref<1x8xf32, #tpu.memory_space<vmem>>, %arg6: memref<32x8xf32, #tpu.memory_space<vmem>>, %arg7: memref<32x8xf32, #tpu.memory_space<vmem>>) attributes {dimension_semantics = [#tpu.dimension_semantics<parallel>, #tpu.dimension_semantics<parallel>, #tpu.dimension_semantics<arbitrary>], iteration_bounds = array<i64: 1, 1, 1>, scalar_prefetch = 0 : i64, scratch_operands = 1 : i64, tpu.core_type = #tpu.core_type<tc>, window_params = [{transform_indices = @transform_0, window_bounds = array<i64: 32, 32>}, {transform_indices = @transform_1, window_bounds = array<i64: 32, 8>}, {transform_indices = @transform_2, window_bounds = array<i64: 1, 8>}, {transform_indices = @transform_3, window_bounds = array<i64: 32, 8>}]} {
    %c0_i32 = arith.constant 0 : i32
    %0 = arith.cmpi eq, %arg2, %c0_i32 : i32
    %1 = arith.extui %0 : i1 to i32
    %c0_i32_0 = arith.constant 0 : i32
    %2 = arith.cmpi ne, %1, %c0_i32_0 : i32
    scf.if %2 {
      %cst_10 = arith.constant 0.000000e+00 : f32
      %12 = vector.broadcast %cst_10 : f32 to vector<32x8xf32>
      %c0_11 = arith.constant 0 : index
      %c0_12 = arith.constant 0 : index
      %13 = vector.load %arg7[%c0_11, %c0_12] : memref<32x8xf32, #tpu.memory_space<vmem>>, vector<32x8xf32>
      tpu.vector_store %arg7[%c0_11, %c0_12], %12 {strides = array<i32>} : memref<32x8xf32, #tpu.memory_space<vmem>>, vector<32x8xf32>,
    } else {
    }
    %c0 = arith.constant 0 : index
    %c0_1 = arith.constant 0 : index
    %3 = vector.load %arg7[%c0, %c0_1] : memref<32x8xf32, #tpu.memory_space<vmem>>, vector<32x8xf32>
    %c0_2 = arith.constant 0 : index
    %c0_3 = arith.constant 0 : index
    %4 = vector.load %arg3[%c0_2, %c0_3] : memref<32x32xbf16, #tpu.memory_space<vmem>>, vector<32x32xbf16>
    %c0_4 = arith.constant 0 : index
    %c0_5 = arith.constant 0 : index
    %5 = vector.load %arg4[%c0_4, %c0_5] : memref<32x8xbf16, #tpu.memory_space<vmem>>, vector<32x8xbf16>
    %cst = arith.constant dense<0.000000e+00> : vector<32x8xf32>
    %6 = tpu.matmul %4, %5, %cst {dimension_numbers = #tpu.dot_dimension_numbers<[1], [0], [0], [1], [0, 0, 1, 1], [], []>} : vector<32x32xbf16>, vector<32x8xbf16>, vector<32x8xf32> -> vector<32x8xf32>
    %7 = arith.addf %3, %6 : vector<32x8xf32>
    %c0_6 = arith.constant 0 : index
    %c0_7 = arith.constant 0 : index
    %8 = vector.load %arg7[%c0_6, %c0_7] : memref<32x8xf32, #tpu.memory_space<vmem>>, vector<32x8xf32>
    tpu.vector_store %arg7[%c0_6, %c0_7], %7 {strides = array<i32>} : memref<32x8xf32, #tpu.memory_space<vmem>>, vector<32x8xf32>,
    %c0_i32_8 = arith.constant 0 : i32
    %9 = arith.cmpi eq, %arg2, %c0_i32_8 : i32
    %10 = arith.extui %9 : i1 to i32
    %c0_i32_9 = arith.constant 0 : i32
    %11 = arith.cmpi ne, %10, %c0_i32_9 : i32
    scf.if %11 {
      %c0_10 = arith.constant 0 : index
      %c0_11 = arith.constant 0 : index
      %12 = vector.load %arg7[%c0_10, %c0_11] : memref<32x8xf32, #tpu.memory_space<vmem>>, vector<32x8xf32>
      %c0_12 = arith.constant 0 : index
      %c0_13 = arith.constant 0 : index
      %13 = vector.load %arg5[%c0_12, %c0_13] : memref<1x8xf32, #tpu.memory_space<vmem>>, vector<1x8xf32>
      %14 = vector.broadcast %13 : vector<1x8xf32> to vector<32x8xf32>
      %15 = arith.addf %12, %14 : vector<32x8xf32>
      %c0_14 = arith.constant 0 : index
      %c0_15 = arith.constant 0 : index
      %16 = vector.load %arg6[%c0_14, %c0_15] : memref<32x8xf32, #tpu.memory_space<vmem>>, vector<32x8xf32>
      tpu.vector_store %arg6[%c0_14, %c0_15], %15 {strides = array<i32>} : memref<32x8xf32, #tpu.memory_space<vmem>>, vector<32x8xf32>,
    } else {
    }
    return
  }
  func.func @transform_0(%arg0: i32, %arg1: i32, %arg2: i32) -> (i32, i32) {
    %c0_i32 = arith.constant 0 : i32
    return %arg0, %arg2 : i32, i32
  }
  func.func @transform_1(%arg0: i32, %arg1: i32, %arg2: i32) -> (i32, i32) {
    %c0_i32 = arith.constant 0 : i32
    return %arg2, %arg1 : i32, i32
  }
  func.func @transform_2(%arg0: i32, %arg1: i32, %arg2: i32) -> (i32, i32) {
    %c0_i32 = arith.constant 0 : i32
    %c0_i32_0 = arith.constant 0 : i32
    return %c0_i32, %arg1 : i32, i32
  }
  func.func @transform_3(%arg0: i32, %arg1: i32, %arg2: i32) -> (i32, i32) {
    %c0_i32 = arith.constant 0 : i32
    return %arg0, %arg1 : i32, i32
  }
}

</mosaic_0001>

<llo_original>
// kernel: informer_forward.25
$region0: #{informer_forward.25}
  #allocation0 [shape = 'u32[]', space=smem, size = 0x4, offset = 0x4, fixed_abs, tag = 'smem constant byte address 0x4 - core index']
  #allocation1 [shape = 'u32[144,128]{1,0:T(1,128)}', space=vmem, size = 0x12000, scoped, tag = 'internal scratch']
  %s0 = inlined_call_operand.vmem [shape: bf16[2,16,8], index: 0, kind: input, shape index: {}]
  %s1 = inlined_call_operand.vmem [shape: bf16[3,8,32], index: 1, kind: input, shape index: {}]
  %s2 = inlined_call_operand.vmem [shape: f32[1,32], index: 2, kind: input, shape index: {}]
  %s3 = inlined_call_operand.vmem [shape: f32[2,16,32], index: 3, kind: output, shape index: {}]
  %s4 = sld [smem:[#allocation0]]
  $region45: #{informer_forward.25} parent=0
    _
  %s6 = ssub.s32 1, %s4
  %s7 = scalar_select 0, %s6, %s4
  loop: start=0, step=1, limit=4
  $region2: #{informer_forward.25} parent=0 // loop_pre_header
    _
  $region3: #{informer_forward.25} parent=0 // loop_header
    %s9 = sphi 0, %s13
    %p10 = scmp.ge.s32.totalorder %s9, 4
    %s19 = sphi 0, %s21
    %s22 = sphi 0, %s19
    %s23 = sphi 0, %s22
    %s39 = sphi 0, %s23
    %s43 = sphi 0, %s43
    %s45 = sphi 0, %s43
    %s46 = sphi 0, %s45
    %s60 = sphi 0, %s46
    %s64 = sphi 0, %s64
    %s66 = sphi 0, %s64
    %s67 = sphi 0, %s66
    %s81 = sphi 0, %s67
    %s87 = sphi 0, %s89
    %s90 = sphi 0, %s87
    %s91 = sphi 0, %s90
    %s107 = sphi 0, %s91
  $region4: #{informer_forward.25} parent=0 // loop_header_branch
    %12 = sbr.rel (%p10) target = $region8
  $region5: #{informer_forward.25} parent=0 // loop_body
    %s14 = ssub.s32 %s9, 1
    %s15 = ssub.s32 %s9, 2
    %s16 = sadd.s32 %s9, 1
    %s17 = ssub.s32 %s9, %s16
    %p18 = scmp.eq.s32.totalorder %s17, 0
    %s20 = sadd.s32 %s19, 1
    %s21 = scalar_select %p18, %s19, %s20
    %p24 = pneg %p18
    %p25 = scmp.eq.s32.totalorder %s9, 1
    %p26 = por %p24, %p25
    %p27 = scmp.ne.s32.totalorder %s19, %s22
    %p28 = scmp.eq.s32.totalorder %s9, 0
    %p29 = por %p27, %p28
    %p30 = scmp.ne.s32.totalorder %s19, %s22
    %p31 = scmp.eq.s32.totalorder %s14, 1
    %p32 = por %p30, %p31
    %p33 = scmp.ne.s32.totalorder %s22, %s23
    %p34 = scmp.eq.s32.totalorder %s14, 0
    %p35 = por %p33, %p34
    %p36 = scmp.ne.s32.totalorder %s22, %s23
    %p37 = scmp.eq.s32.totalorder %s15, 1
    %p38 = por %p36, %p37
    %p40 = scmp.ne.s32.totalorder %s23, %s39
    %p41 = scmp.eq.s32.totalorder %s15, 0
    %p42 = por %p40, %p41
    %s44 = sadd.s32 %s43, 1
    %p47 = scmp.eq.s32.totalorder %s9, 1
    %p48 = scmp.ne.s32.totalorder %s43, %s45
    %p49 = scmp.eq.s32.totalorder %s9, 0
    %p50 = por %p48, %p49
    %p51 = scmp.ne.s32.totalorder %s43, %s45
    %p52 = scmp.eq.s32.totalorder %s14, 1
    %p53 = por %p51, %p52
    %p54 = scmp.ne.s32.totalorder %s45, %s46
    %p55 = scmp.eq.s32.totalorder %s14, 0
    %p56 = por %p54, %p55
    %p57 = scmp.ne.s32.totalorder %s45, %s46
    %p58 = scmp.eq.s32.totalorder %s15, 1
    %p59 = por %p57, %p58
    %p61 = scmp.ne.s32.totalorder %s46, %s60
    %p62 = scmp.eq.s32.totalorder %s15, 0
    %p63 = por %p61, %p62
    %s65 = sadd.s32 %s64, 1
    %p68 = scmp.eq.s32.totalorder %s9, 1
    %p69 = scmp.ne.s32.totalorder %s64, %s66
    %p70 = scmp.eq.s32.totalorder %s9, 0
    %p71 = por %p69, %p70
    %p72 = scmp.ne.s32.totalorder %s64, %s66
    %p73 = scmp.eq.s32.totalorder %s14, 1
    %p74 = por %p72, %p73
    %p75 = scmp.ne.s32.totalorder %s66, %s67
    %p76 = scmp.eq.s32.totalorder %s14, 0
    %p77 = por %p75, %p76
    %p78 = scmp.ne.s32.totalorder %s66, %s67
    %p79 = scmp.eq.s32.totalorder %s15, 1
    %p80 = por %p78, %p79
    %p82 = scmp.ne.s32.totalorder %s67, %s81
    %p83 = scmp.eq.s32.totalorder %s15, 0
    %p84 = por %p82, %p83
    %s85 = ssub.s32 %s9, %s16
    %p86 = scmp.eq.s32.totalorder %s85, 0
    %s88 = sadd.s32 %s87, 1
    %s89 = scalar_select %p86, %s87, %s88
    %p92 = pneg %p86
    %p93 = scmp.eq.s32.totalorder %s9, 1
    %p94 = por %p92, %p93
    %p95 = scmp.ne.s32.totalorder %s87, %s90
    %p96 = scmp.eq.s32.totalorder %s9, 0
    %p97 = por %p95, %p96
    %p98 = scmp.ne.s32.totalorder %s87, %s90
    %p99 = scmp.eq.s32.totalorder %s14, 1
    %p100 = por %p98, %p99
    %p101 = scmp.ne.s32.totalorder %s90, %s91
    %p102 = scmp.eq.s32.totalorder %s14, 0
    %p103 = por %p101, %p102
    %p104 = scmp.ne.s32.totalorder %s90, %s91
    %p105 = scmp.eq.s32.totalorder %s15, 1
    %p106 = por %p104, %p105
    %p108 = scmp.ne.s32.totalorder %s91, %s107
    %p109 = scmp.eq.s32.totalorder %s15, 0
    %p110 = por %p108, %p109
    %p111 = scmp.le.s32.totalorder 1, %s9
    %p112 = scmp.lt.s32.totalorder %s9, 3
    %p113 = pnand %p111, %p112
    %p114 = pneg %p113
    // Predicated region
    $region9: #{informer_forward.25} parent=5 // pred_check
      _
    $region10: #{informer_forward.25} parent=5 // pred_check_branch
      %116 = sbr.rel (%p113) target = $region12
    $region11: #{informer_forward.25} parent=5 // pred_region
      %s117 = ssub.s32 %s9, 1
      // Predicated region
      $region13: #{informer_forward.25} parent=11 // pred_check
        %p118 = pneg %p56
      $region14: #{informer_forward.25} parent=11 // pred_check_branch
        %120 = sbr.rel (%p118) target = $region16
      $region15: #{informer_forward.25} parent=11 // pred_region
        _
      $region16: #{informer_forward.25} parent=11 // pred_fallthru
        _
      // Predicated region
      $region17: #{informer_forward.25} parent=11 // pred_check
        %p121 = pneg %p77
      $region18: #{informer_forward.25} parent=11 // pred_check_branch
        %123 = sbr.rel (%p121) target = $region20
      $region19: #{informer_forward.25} parent=11 // pred_region
        _
      $region20: #{informer_forward.25} parent=11 // pred_fallthru
        _
    $region12: #{informer_forward.25} parent=5 // pred_fallthru
      _
    %p124 = scmp.lt.s32.totalorder %s9, 2
    // Predicated region
    $region21: #{informer_forward.25} parent=5 // pred_check
      %p125 = pneg %p124
    $region22: #{informer_forward.25} parent=5 // pred_check_branch
      %127 = sbr.rel (%p125) target = $region24
    $region23: #{informer_forward.25} parent=5 // pred_region
      // Predicated region
      $region25: #{informer_forward.25} parent=23 // pred_check
        %p128 = pneg %p29
      $region26: #{informer_forward.25} parent=23 // pred_check_branch
        %130 = sbr.rel (%p128) target = $region28
      $region27: #{informer_forward.25} parent=23 // pred_region
        %p131 = scmp.lt.s32.totalorder %s9, 1
        %s132 = scalar_select %p131, %s9, 1
        %s133 = smul.addr %s132, 2
        %s134 = smul.addr %s133, 4
        %s135 = scalar_lea.vmem %s0, %s134
      $region28: #{informer_forward.25} parent=23 // pred_fallthru
        _
    $region24: #{informer_forward.25} parent=5 // pred_fallthru
      _
    %p136 = scmp.le.s32.totalorder 1, %s9
    %p137 = scmp.lt.s32.totalorder %s9, 3
    %p138 = pnand %p136, %p137
    %p139 = pneg %p138
    // Predicated region
    $region29: #{informer_forward.25} parent=5 // pred_check
      _
    $region30: #{informer_forward.25} parent=5 // pred_check_branch
      %141 = sbr.rel (%p138) target = $region32
    $region31: #{informer_forward.25} parent=5 // pred_region
      %s142 = ssub.s32 %s9, 1
      %p143 = scmp.lt.s32.totalorder %s14, 1
      %s144 = scalar_select %p143, %s14, 1
      %s145 = smul.addr %s144, 2
      %s146 = smul.addr %s145, 4
      %s147 = scalar_lea.vmem %s0, %s146
      %p148 = pneg %p35
      %p149 = pneg %p32
      %p150 = pneg %p56
      %p151 = pneg %p53
      %p152 = pneg %p77
      %p153 = pneg %p74
      %p154 = pneg %p103
      %p155 = pneg %p100
      %p156 = scmp.lt.s32.totalorder %s14, 1
      %s157 = scalar_select %p156, %s14, 1
      %s158 = smul.addr %s157, 2
      %s159 = smul.addr %s158, 8
      %s160 = scalar_lea.vmem %s3, %s159
      %p161 = scmp.lt.s32.totalorder %s14, 1
      %s162 = scalar_select %p161, %s14, 1
      %s163 = smul.addr %s162, 2
      %s164 = smul.addr %s163, 4
      %s165 = scalar_lea.vmem %s0, %s164
      %p166 = scmp.lt.s32.totalorder %s14, 1
      %s167 = scalar_select %p166, %s14, 1
      %s168 = smul.addr %s167, 2
      %s169 = smul.addr %s168, 8
      %s170 = scalar_lea.vmem %s3, %s169
      %v172 = vld [vmem:[%s165] sm:$0xf]
      %v173 = vld [vmem:[%s165 + $0x4] sm:$0xf]
      %v174 = vld [vmem:[%s1] sm:$0xf]
      %v177 = vunpack.c.l.b16 %v172
      %v178 = vunpack.c.l.b16 %v173
      %v179 = vpack.c.b16 %v178, %v177
      %vm180 = vcmask 64512
      %v182 = vsel %vm180, %v179, 0
      %vm184 = vcmask 1043456
      %v186 = vsel %vm184, %v174, 0
      %188 = vmatprep.subr.bf16.mxu0 0
      %189 = vmatpush1.bf16.msra.mxu0 0
      %190 = vmatprep.subr.bf16.mxu0 0
      %191 = vmatpush1.bf16.msra.mxu0 0
      %192 = vmatprep.subr.bf16.mxu0 0
      %193 = vmatpush1.bf16.msra.mxu0 0
      %194 = vmatprep.subr.bf16.mxu0 0
      %195 = vmatpush1.bf16.msra.mxu0 0
      %196 = vmatprep.subr.bf16.mxu0 0
      %197 = vmatpush1.bf16.msra.mxu0 0
      %198 = vmatprep.subr.bf16.mxu0 0
      %199 = vmatpush1.bf16.msra.mxu0 0
      %200 = vmatprep.subr.bf16.mxu0 0
      %201 = vmatpush1.bf16.msra.mxu0 0
      %202 = vmatprep.subr.bf16.mxu0 0
      %203 = vmatpush1.bf16.msra.mxu0 %v186
      %204 = vmatprep.subr.bf16.mxu0 0
      %205 = vmatpush2.bf16.msra.mxu0 0
      %206 = vmatprep.subr.bf16.mxu0 0
      %207 = vmatpush2.bf16.msra.mxu0 0
      %208 = vmatprep.subr.bf16.mxu0 0
      %209 = vmatpush2.bf16.msra.mxu0 0
      %210 = vmatprep.subr.bf16.mxu0 0
      %211 = vmatpush2.bf16.msra.mxu0 0
      %212 = vmatprep.subr.bf16.mxu0 0
      %213 = vmatpush2.bf16.msra.mxu0 0
      %214 = vmatprep.subr.bf16.mxu0 0
      %215 = vmatpush2.bf16.msra.mxu0 0
      %216 = vmatprep.subr.bf16.mxu0 0
      %217 = vmatpush2.bf16.msra.mxu0 0
      %218 = vmatprep.subr.bf16.mxu0 0
      %219 = vmatpush2.bf16.msra.mxu0 0
      %220 = vmatprep.mubr.bf16.mxu0 0
      %221 = vmatmul.mubr.bf16.gmra.mxu0 %v182
      %v222 = vpop.f32.mrf.mxu0
      %v223 = vadd.f32 0.0, %v222
      %v224 = vpop.f32.mrf.mxu0
      %v225 = vpop.f32.mrf.mxu0
      %v226 = vadd.f32 0.0, %v225
      %v227 = vpop.f32.mrf.mxu0
      %228 = vdwg.mxu0
      %s229 = scalar_lea.vmem %s1, 4
      %v230 = vld [vmem:[%s229] sm:$0xf]
      %v232 = vsel %vm184, %v230, 0
      %234 = vmatprep.subr.bf16.mxu0 0
      %235 = vmatpush1.bf16.msra.mxu0 0
      %236 = vmatprep.subr.bf16.mxu0 0
      %237 = vmatpush1.bf16.msra.mxu0 0
      %238 = vmatprep.subr.bf16.mxu0 0
      %239 = vmatpush1.bf16.msra.mxu0 0
      %240 = vmatprep.subr.bf16.mxu0 0
      %241 = vmatpush1.bf16.msra.mxu0 0
      %242 = vmatprep.subr.bf16.mxu0 0
      %243 = vmatpush1.bf16.msra.mxu0 0
      %244 = vmatprep.subr.bf16.mxu0 0
      %245 = vmatpush1.bf16.msra.mxu0 0
      %246 = vmatprep.subr.bf16.mxu0 0
      %247 = vmatpush1.bf16.msra.mxu0 0
      %248 = vmatprep.subr.bf16.mxu0 0
      %249 = vmatpush1.bf16.msra.mxu0 %v232
      %250 = vmatprep.subr.bf16.mxu0 0
      %251 = vmatpush2.bf16.msra.mxu0 0
      %252 = vmatprep.subr.bf16.mxu0 0
      %253 = vmatpush2.bf16.msra.mxu0 0
      %254 = vmatprep.subr.bf16.mxu0 0
      %255 = vmatpush2.bf16.msra.mxu0 0
      %256 = vmatprep.subr.bf16.mxu0 0
      %257 = vmatpush2.bf16.msra.mxu0 0
      %258 = vmatprep.subr.bf16.mxu0 0
      %259 = vmatpush2.bf16.msra.mxu0 0
      %260 = vmatprep.subr.bf16.mxu0 0
      %261 = vmatpush2.bf16.msra.mxu0 0
      %262 = vmatprep.subr.bf16.mxu0 0
      %263 = vmatpush2.bf16.msra.mxu0 0
      %264 = vmatprep.subr.bf16.mxu0 0
      %265 = vmatpush2.bf16.msra.mxu0 0
      %266 = vmatprep.mubr.bf16.mxu0 0
      %267 = vmatmul.mubr.bf16.gmra.mxu0 %v182
      %v268 = vpop.f32.mrf.mxu0
      %v269 = vadd.f32 0.0, %v268
      %v270 = vpop.f32.mrf.mxu0
      %v271 = vpop.f32.mrf.mxu0
      %v272 = vadd.f32 0.0, %v271
      %v273 = vpop.f32.mrf.mxu0
      %274 = vdwg.mxu0
      %s275 = scalar_lea.vmem %s1, 8
      %v276 = vld [vmem:[%s275] sm:$0xf]
      %v278 = vsel %vm184, %v276, 0
      %280 = vmatprep.subr.bf16.mxu0 0
      %281 = vmatpush1.bf16.msra.mxu0 0
      %282 = vmatprep.subr.bf16.mxu0 0
      %283 = vmatpush1.bf16.msra.mxu0 0
      %284 = vmatprep.subr.bf16.mxu0 0
      %285 = vmatpush1.bf16.msra.mxu0 0
      %286 = vmatprep.subr.bf16.mxu0 0
      %287 = vmatpush1.bf16.msra.mxu0 0
      %288 = vmatprep.subr.bf16.mxu0 0
      %289 = vmatpush1.bf16.msra.mxu0 0
      %290 = vmatprep.subr.bf16.mxu0 0
      %291 = vmatpush1.bf16.msra.mxu0 0
      %292 = vmatprep.subr.bf16.mxu0 0
      %293 = vmatpush1.bf16.msra.mxu0 0
      %294 = vmatprep.subr.bf16.mxu0 0
      %295 = vmatpush1.bf16.msra.mxu0 %v278
      %296 = vmatprep.subr.bf16.mxu0 0
      %297 = vmatpush2.bf16.msra.mxu0 0
      %298 = vmatprep.subr.bf16.mxu0 0
      %299 = vmatpush2.bf16.msra.mxu0 0
      %300 = vmatprep.subr.bf16.mxu0 0
      %301 = vmatpush2.bf16.msra.mxu0 0
      %302 = vmatprep.subr.bf16.mxu0 0
      %303 = vmatpush2.bf16.msra.mxu0 0
      %304 = vmatprep.subr.bf16.mxu0 0
      %305 = vmatpush2.bf16.msra.mxu0 0
      %306 = vmatprep.subr.bf16.mxu0 0
      %307 = vmatpush2.bf16.msra.mxu0 0
      %308 = vmatprep.subr.bf16.mxu0 0
      %309 = vmatpush2.bf16.msra.mxu0 0
      %310 = vmatprep.subr.bf16.mxu0 0
      %311 = vmatpush2.bf16.msra.mxu0 0
      %312 = vmatprep.mubr.bf16.mxu0 0
      %313 = vmatmul.mubr.bf16.gmra.mxu0 %v182
      %v314 = vpop.f32.mrf.mxu0
      %v315 = vadd.f32 0.0, %v314
      %v316 = vpop.f32.mrf.mxu0
      %v317 = vpop.f32.mrf.mxu0
      %v318 = vadd.f32 0.0, %v317
      %v319 = vpop.f32.mrf.mxu0
      %320 = vdwg.mxu0
      %v321 = vrot.slane %v223, 7
      %v322 = vrot.slane %v226, 7
      %v323 = vlaneseq
      %v324 = vshrl.u32 %v323, 7
      %vm325 = vcmp.lt.s32.totalorder %v324, 1
      %v326 = vsel %vm325, %v321, %v322
      %v327 = vsel %vm325, %v322, %v321
      %v328 = vadd.f32 %v327, %v269
      %v329 = vadd.f32 %v326, %v272
      %v330 = vrot.slane %v315, 1
      %v331 = vrot.slane %v318, 1
      %vm332 = vcmp.lt.s32.totalorder %v324, 7
      %v333 = vsel %vm332, %v330, %v331
      %v334 = vsel %vm332, %v331, %v330
      %v335 = vadd.f32 %v328, %v333
      %v336 = vadd.f32 %v329, %v334
      %v337 = vld [vmem:[%s2] sm:$0x1]
      %v339 = vlaneseq
      %v340 = vshrl.u32 %v339, 7
      %v341 = vsub.s32 0, %v340
      %v342 = vrot.slane %v337, %v341
      %v344 = vadd.f32 %v335, %v342
      %v345 = vadd.f32 %v336, %v342
      %vm346 = vcmask 261120
      %347 = vst.msk [vmem:[%s170] sm:$0xff] %vm346, %v344
      %348 = vst.msk [vmem:[%s170 + $0x8] sm:$0xff] %vm346, %v345
      %p349 = scmp.lt.s32.totalorder %s14, 1
      %s350 = scalar_select %p349, %s14, 1
      %s351 = smul.addr %s350, 2
      %s352 = smul.addr %s351, 8
      %s353 = scalar_lea.vmem %s3, %s352
      // Predicated region
      $region33: #{informer_forward.25} parent=31 // pred_check
        %p354 = pneg %p100
      $region34: #{informer_forward.25} parent=31 // pred_check_branch
        %356 = sbr.rel (%p354) target = $region36
      $region35: #{informer_forward.25} parent=31 // pred_region
        _
      $region36: #{informer_forward.25} parent=31 // pred_fallthru
        _
    $region32: #{informer_forward.25} parent=5 // pred_fallthru
      _
    %p357 = scmp.le.s32.totalorder 2, %s9
    // Predicated region
    $region37: #{informer_forward.25} parent=5 // pred_check
      %p358 = pneg %p357
    $region38: #{informer_forward.25} parent=5 // pred_check_branch
      %360 = sbr.rel (%p358) target = $region40
    $region39: #{informer_forward.25} parent=5 // pred_region
      %s361 = ssub.s32 %s9, 2
      // Predicated region
      $region41: #{informer_forward.25} parent=39 // pred_check
        %p362 = pneg %p106
      $region42: #{informer_forward.25} parent=39 // pred_check_branch
        %364 = sbr.rel (%p362) target = $region44
      $region43: #{informer_forward.25} parent=39 // pred_region
        %p365 = scmp.lt.s32.totalorder %s15, 1
        %s366 = scalar_select %p365, %s15, 1
        %s367 = smul.addr %s366, 2
        %s368 = smul.addr %s367, 8
        %s369 = scalar_lea.vmem %s3, %s368
      $region44: #{informer_forward.25} parent=39 // pred_fallthru
        _
    $region40: #{informer_forward.25} parent=5 // pred_fallthru
      _
  $region6: #{informer_forward.25} parent=0 // loop_footer
    %s13 = sadd.s32 1, %s9
  $region7: #{informer_forward.25} parent=0 // loop_footer_branch
    %8 = sbr.rel target = $region3
  $region8: #{informer_forward.25} parent=0 // loop_exit
    _

// kernel: informer_forward.28
$region0: #{informer_forward.28}
  #allocation0 [shape = 'u32[]', space=smem, size = 0x4, offset = 0x4, fixed_abs, tag = 'smem constant byte address 0x4 - core index']
  #allocation1 [shape = 'u32[144,128]{1,0:T(1,128)}', space=vmem, size = 0x12000, scoped, tag = 'internal scratch']
  #allocation2 [shape = 'f32[32,32]{1,0:T(8,128)}', space=vmem, size = 0x4000, scoped, tag = 'scratch operand']
  %s0 = inlined_call_operand.vmem [shape: bf16[32,32], index: 0, kind: input, shape index: {}]
  %s1 = inlined_call_operand.vmem [shape: bf16[32,32], index: 1, kind: input, shape index: {}]
  %s2 = inlined_call_operand.vmem [shape: f32[1,32], index: 2, kind: input, shape index: {}]
  %s3 = inlined_call_operand.vmem [shape: bf16[32,32], index: 3, kind: input, shape index: {}]
  %s4 = inlined_call_operand.vmem [shape: f32[1,32], index: 4, kind: input, shape index: {}]
  %s5 = inlined_call_operand.vmem [shape: f32[1,32], index: 5, kind: input, shape index: {}]
  %s6 = inlined_call_operand.vmem [shape: bf16[32,32], index: 6, kind: output, shape index: {}]
  %s7 = sld [smem:[#allocation0]]
  $region42: #{informer_forward.28} parent=0
    _
  %s9 = ssub.s32 1, %s7
  %s10 = scalar_select 0, %s9, %s7
  // Predicated region
  $region2: #{informer_forward.28} parent=0 // pred_check
    _
  $region3: #{informer_forward.28} parent=0 // pred_check_branch
    %12 = sbr.rel (0) target = $region5
  $region4: #{informer_forward.28} parent=0 // pred_region
    _
  $region5: #{informer_forward.28} parent=0 // pred_fallthru
    _
  // Predicated region
  $region6: #{informer_forward.28} parent=0 // pred_check
    _
  $region7: #{informer_forward.28} parent=0 // pred_check_branch
    %14 = sbr.rel (0) target = $region9
  $region8: #{informer_forward.28} parent=0 // pred_region
    _
  $region9: #{informer_forward.28} parent=0 // pred_fallthru
    _
  // Predicated region
  $region10: #{informer_forward.28} parent=0 // pred_check
    _
  $region11: #{informer_forward.28} parent=0 // pred_check_branch
    %16 = sbr.rel (0) target = $region13
  $region12: #{informer_forward.28} parent=0 // pred_region
    _
  $region13: #{informer_forward.28} parent=0 // pred_fallthru
    _
  // Predicated region
  $region14: #{informer_forward.28} parent=0 // pred_check
    _
  $region15: #{informer_forward.28} parent=0 // pred_check_branch
    %18 = sbr.rel (0) target = $region17
  $region16: #{informer_forward.28} parent=0 // pred_region
    _
  $region17: #{informer_forward.28} parent=0 // pred_fallthru
    _
  // Predicated region
  $region18: #{informer_forward.28} parent=0 // pred_check
    _
  $region19: #{informer_forward.28} parent=0 // pred_check_branch
    %20 = sbr.rel (0) target = $region21
  $region20: #{informer_forward.28} parent=0 // pred_region
    _
  $region21: #{informer_forward.28} parent=0 // pred_fallthru
    _
  // Predicated region
  $region22: #{informer_forward.28} parent=0 // pred_check
    _
  $region23: #{informer_forward.28} parent=0 // pred_check_branch
    %22 = sbr.rel (0) target = $region25
  $region24: #{informer_forward.28} parent=0 // pred_region
    _
  $region25: #{informer_forward.28} parent=0 // pred_fallthru
    _
  %p24 = scmp.eq.s32.totalorder 0, 0
  // Predicated region
  $region26: #{informer_forward.28} parent=0 // pred_check
    %p25 = pneg %p24
  $region27: #{informer_forward.28} parent=0 // pred_check_branch
    %27 = sbr.rel (%p25) target = $region29
  $region28: #{informer_forward.28} parent=0 // pred_region
    %vm28 = vcmask 261120
    %29 = vst.msk [vmem:[#allocation2] sm:$0xff] %vm28, 0.0
    %30 = vst.msk [vmem:[#allocation2 + $0x8] sm:$0xff] %vm28, 0.0
    %31 = vst.msk [vmem:[#allocation2 + $0x10] sm:$0xff] %vm28, 0.0
    %32 = vst.msk [vmem:[#allocation2 + $0x18] sm:$0xff] %vm28, 0.0
  $region29: #{informer_forward.28} parent=0 // pred_fallthru
    _
  %v33 = vld [vmem:[#allocation2] sm:$0xff]
  %v34 = vld [vmem:[#allocation2 + $0x8] sm:$0xff]
  %v35 = vld [vmem:[#allocation2 + $0x10] sm:$0xff]
  %v36 = vld [vmem:[#allocation2 + $0x18] sm:$0xff]
  %v37 = vld [vmem:[%s0] sm:$0xf]
  %v38 = vld [vmem:[%s0 + $0x4] sm:$0xf]
  %v39 = vld [vmem:[%s0 + $0x8] sm:$0xf]
  %v40 = vld [vmem:[%s0 + $0xc] sm:$0xf]
  %v41 = vld [vmem:[%s1] sm:$0xf]
  %v42 = vld [vmem:[%s1 + $0x4] sm:$0xf]
  %v43 = vld [vmem:[%s1 + $0x8] sm:$0xf]
  %v44 = vld [vmem:[%s1 + $0xc] sm:$0xf]
  %v49 = vunpack.c.l.b16 %v37
  %v50 = vunpack.c.l.b16 %v38
  %v51 = vunpack.c.l.b16 %v39
  %v52 = vunpack.c.l.b16 %v40
  %v53 = vpack.c.b16 %v50, %v49
  %v54 = vpack.c.b16 %v52, %v51
  %v59 = vunpack.c.l.b16 %v41
  %v60 = vunpack.c.l.b16 %v42
  %v61 = vunpack.c.l.b16 %v43
  %v62 = vunpack.c.l.b16 %v44
  %v63 = vpack.c.b16 %v60, %v59
  %v64 = vpack.c.b16 %v62, %v61
  %vm67 = vcmask 261120
  %v69 = vsel %vm67, %v53, 0
  %v72 = vsel %vm67, %v54, 0
  %74 = vmatprep.subr.bf16.mxu0 0
  %75 = vmatpush1.bf16.msra.mxu0 0
  %76 = vmatprep.subr.bf16.mxu0 0
  %77 = vmatpush1.bf16.msra.mxu0 0
  %78 = vmatprep.subr.bf16.mxu0 0
  %79 = vmatpush1.bf16.msra.mxu0 0
  %80 = vmatprep.subr.bf16.mxu0 0
  %81 = vmatpush1.bf16.msra.mxu0 0
  %82 = vmatprep.subr.bf16.mxu0 0
  %83 = vmatpush1.bf16.msra.mxu0 0
  %84 = vmatprep.subr.bf16.mxu0 0
  %85 = vmatpush1.bf16.msra.mxu0 0
  %86 = vmatprep.subr.bf16.mxu0 0
  %87 = vmatpush1.bf16.msra.mxu0 %v64
  %88 = vmatprep.subr.bf16.mxu0 0
  %89 = vmatpush1.bf16.msra.mxu0 %v63
  %90 = vmatprep.subr.bf16.mxu0 0
  %91 = vmatpush2.bf16.msra.mxu0 0
  %92 = vmatprep.subr.bf16.mxu0 0
  %93 = vmatpush2.bf16.msra.mxu0 0
  %94 = vmatprep.subr.bf16.mxu0 0
  %95 = vmatpush2.bf16.msra.mxu0 0
  %96 = vmatprep.subr.bf16.mxu0 0
  %97 = vmatpush2.bf16.msra.mxu0 0
  %98 = vmatprep.subr.bf16.mxu0 0
  %99 = vmatpush2.bf16.msra.mxu0 0
  %100 = vmatprep.subr.bf16.mxu0 0
  %101 = vmatpush2.bf16.msra.mxu0 0
  %102 = vmatprep.subr.bf16.mxu0 0
  %103 = vmatpush2.bf16.msra.mxu0 0
  %104 = vmatprep.subr.bf16.mxu0 0
  %105 = vmatpush2.bf16.msra.mxu0 0
  %106 = vmatprep.mubr.bf16.mxu0 0
  %107 = vmatmul.mubr.bf16.gmra.mxu0 %v69
  %v108 = vpop.f32.mrf.mxu0
  %v109 = vadd.f32 0.0, %v108
  %v110 = vpop.f32.mrf.mxu0
  %v111 = vpop.f32.mrf.mxu0
  %v112 = vadd.f32 0.0, %v111
  %v113 = vpop.f32.mrf.mxu0
  %114 = vmatprep.mubr.bf16.mxu0 0
  %115 = vmatmul.mubr.bf16.gmra.mxu0 %v72
  %v116 = vpop.f32.mrf.mxu0
  %v117 = vadd.f32 0.0, %v116
  %v118 = vpop.f32.mrf.mxu0
  %v119 = vpop.f32.mrf.mxu0
  %v120 = vadd.f32 0.0, %v119
  %v121 = vpop.f32.mrf.mxu0
  %122 = vdwg.mxu0
  %v123 = vadd.f32 %v33, %v109
  %v124 = vadd.f32 %v34, %v112
  %v125 = vadd.f32 %v35, %v117
  %v126 = vadd.f32 %v36, %v120
  %127 = vst.msk [vmem:[#allocation2] sm:$0xff] %vm67, %v123
  %128 = vst.msk [vmem:[#allocation2 + $0x8] sm:$0xff] %vm67, %v124
  %129 = vst.msk [vmem:[#allocation2 + $0x10] sm:$0xff] %vm67, %v125
  %130 = vst.msk [vmem:[#allocation2 + $0x18] sm:$0xff] %vm67, %v126
  // Predicated region
  $region30: #{informer_forward.28} parent=0 // pred_check
    %p131 = pneg %p24
  $region31: #{informer_forward.28} parent=0 // pred_check_branch
    %133 = sbr.rel (%p131) target = $region33
  $region32: #{informer_forward.28} parent=0 // pred_region
    %v134 = vld [vmem:[#allocation2] sm:$0xff]
    %v135 = vld [vmem:[#allocation2 + $0x8] sm:$0xff]
    %v136 = vld [vmem:[#allocation2 + $0x10] sm:$0xff]
    %v137 = vld [vmem:[#allocation2 + $0x18] sm:$0xff]
    %v138 = vld [vmem:[%s2] sm:$0x1]
    %v140 = vlaneseq
    %v141 = vshrl.u32 %v140, 7
    %v142 = vsub.s32 0, %v141
    %v143 = vrot.slane %v138, %v142
    %v145 = vadd.f32 %v134, %v143
    %v146 = vadd.f32 %v135, %v143
    %v147 = vadd.f32 %v136, %v143
    %v148 = vadd.f32 %v137, %v143
    %v149 = vld [vmem:[%s3] sm:$0xf]
    %v150 = vld [vmem:[%s3 + $0x4] sm:$0xf]
    %v151 = vld [vmem:[%s3 + $0x8] sm:$0xf]
    %v152 = vld [vmem:[%s3 + $0xc] sm:$0xf]
    %v153 = vunpack.c.l.bf16 %v149
    %v154 = vunpack.c.l.bf16 %v150
    %v155 = vunpack.c.l.bf16 %v151
    %v156 = vunpack.c.l.bf16 %v152
    %v157 = vadd.f32 %v145, %v153
    %v158 = vadd.f32 %v146, %v154
    %v159 = vadd.f32 %v147, %v155
    %v160 = vadd.f32 %v148, %v156
    %v161 = vsel %vm67, %v157, 0.0
    %162 = vadd.xlane.f32.xlu0 %v161
    %v163 = vpop.xlane.xlu0 %162
    %v164 = vsel %vm67, %v158, 0.0
    %165 = vadd.xlane.f32.xlu0 %v164
    %v166 = vpop.xlane.xlu0 %165
    %v167 = vsel %vm67, %v159, 0.0
    %168 = vadd.xlane.f32.xlu0 %v167
    %v169 = vpop.xlane.xlu0 %168
    %v170 = vsel %vm67, %v160, 0.0
    %171 = vadd.xlane.f32.xlu0 %v170
    %v172 = vpop.xlane.xlu0 %171
    %v173 = vrcp.pop 32.0
    %v174 = vmul.f32 %v163, %v173
    %v175 = vmul.f32 %v166, %v173
    %v176 = vmul.f32 %v169, %v173
    %v177 = vmul.f32 %v172, %v173
    %v178 = vsub.f32 %v157, %v174
    %v179 = vsub.f32 %v158, %v175
    %v180 = vsub.f32 %v159, %v176
    %v181 = vsub.f32 %v160, %v177
    %v182 = vmul.f32 %v178, %v178
    %v183 = vmul.f32 %v179, %v179
    %v184 = vmul.f32 %v180, %v180
    %v185 = vmul.f32 %v181, %v181
    %v186 = vsel %vm67, %v182, 0.0
    %187 = vadd.xlane.f32.xlu0 %v186
    %v188 = vpop.xlane.xlu0 %187
    %v189 = vsel %vm67, %v183, 0.0
    %190 = vadd.xlane.f32.xlu0 %v189
    %v191 = vpop.xlane.xlu0 %190
    %v192 = vsel %vm67, %v184, 0.0
    %193 = vadd.xlane.f32.xlu0 %v192
    %v194 = vpop.xlane.xlu0 %193
    %v195 = vsel %vm67, %v185, 0.0
    %196 = vadd.xlane.f32.xlu0 %v195
    %v197 = vpop.xlane.xlu0 %196
    %v198 = vmul.f32 %v188, %v173
    %v199 = vmul.f32 %v191, %v173
    %v200 = vmul.f32 %v194, %v173
    %v201 = vmul.f32 %v197, %v173
    %v202 = vadd.f32 %v198, 1e-05
    %v203 = vadd.f32 %v199, 1e-05
    %v204 = vadd.f32 %v200, 1e-05
    %v205 = vadd.f32 %v201, 1e-05
    %v206 = vrsqrt.pop %v202
    %v207 = vrsqrt.pop %v203
    %v208 = vrsqrt.pop %v204
    %v209 = vrsqrt.pop %v205
    %v210 = vmul.f32 %v178, %v206
    %v211 = vmul.f32 %v179, %v207
    %v212 = vmul.f32 %v180, %v208
    %v213 = vmul.f32 %v181, %v209
    %v214 = vld [vmem:[%s4] sm:$0x1]
    %v216 = vlaneseq
    %v217 = vshrl.u32 %v216, 7
    %v218 = vsub.s32 0, %v217
    %v219 = vrot.slane %v214, %v218
    %v221 = vmul.f32 %v210, %v219
    %v222 = vmul.f32 %v211, %v219
    %v223 = vmul.f32 %v212, %v219
    %v224 = vmul.f32 %v213, %v219
    %v225 = vld [vmem:[%s5] sm:$0x1]
    %v227 = vlaneseq
    %v228 = vshrl.u32 %v227, 7
    %v229 = vsub.s32 0, %v228
    %v230 = vrot.slane %v225, %v229
    %v232 = vadd.f32 %v221, %v230
    %v233 = vadd.f32 %v222, %v230
    %v234 = vadd.f32 %v223, %v230
    %v235 = vadd.f32 %v224, %v230
    %v236 = vpack.c.bf16 %v233, %v232
    %v237 = vpack.c.bf16 %v235, %v234
    %v240 = vunpack.c.l.b16 %v236
    %v241 = vunpack.c.h.b16 %v236
    %v242 = vunpack.c.l.b16 %v237
    %v243 = vunpack.c.h.b16 %v237
    %v244 = vpack.c.b16 %v240, %v240
    %v245 = vpack.c.b16 %v241, %v241
    %v246 = vpack.c.b16 %v242, %v242
    %v247 = vpack.c.b16 %v243, %v243
    %vm252 = vcmask 257024
    %253 = vst.msk [vmem:[%s6] sm:$0xf] %vm252, %v244
    %254 = vst.msk [vmem:[%s6 + $0x4] sm:$0xf] %vm252, %v245
    %255 = vst.msk [vmem:[%s6 + $0x8] sm:$0xf] %vm252, %v246
    %256 = vst.msk [vmem:[%s6 + $0xc] sm:$0xf] %vm252, %v247
  $region33: #{informer_forward.28} parent=0 // pred_fallthru
    _
  // Predicated region
  $region34: #{informer_forward.28} parent=0 // pred_check
    _
  $region35: #{informer_forward.28} parent=0 // pred_check_branch
    %258 = sbr.rel (0) target = $region37
  $region36: #{informer_forward.28} parent=0 // pred_region
    _
  $region37: #{informer_forward.28} parent=0 // pred_fallthru
    _
  // Predicated region
  $region38: #{informer_forward.28} parent=0 // pred_check
    _
  $region39: #{informer_forward.28} parent=0 // pred_check_branch
    %260 = sbr.rel (0) target = $region41
  $region40: #{informer_forward.28} parent=0 // pred_region
    _
  $region41: #{informer_forward.28} parent=0 // pred_fallthru
    _

// kernel: informer_forward.26
$region0: #{informer_forward.26}
  #allocation0 [shape = 'u32[]', space=smem, size = 0x4, offset = 0x4, fixed_abs, tag = 'smem constant byte address 0x4 - core index']
  #allocation1 [shape = 'u32[144,128]{1,0:T(1,128)}', space=vmem, size = 0x12000, scoped, tag = 'internal scratch']
  #allocation2 [shape = 'f32[32,96]{1,0:T(8,128)}', space=vmem, size = 0x4000, scoped, tag = 'scratch operand']
  %s0 = inlined_call_operand.vmem [shape: bf16[32,32], index: 0, kind: input, shape index: {}]
  %s1 = inlined_call_operand.vmem [shape: bf16[32,96], index: 1, kind: input, shape index: {}]
  %s2 = inlined_call_operand.vmem [shape: f32[1,96], index: 2, kind: input, shape index: {}]
  %s3 = inlined_call_operand.vmem [shape: bf16[32,96], index: 3, kind: output, shape index: {}]
  %s4 = sld [smem:[#allocation0]]
  $region30: #{informer_forward.26} parent=0
    _
  %s6 = ssub.s32 1, %s4
  %s7 = scalar_select 0, %s6, %s4
  // Predicated region
  $region2: #{informer_forward.26} parent=0 // pred_check
    _
  $region3: #{informer_forward.26} parent=0 // pred_check_branch
    %9 = sbr.rel (0) target = $region5
  $region4: #{informer_forward.26} parent=0 // pred_region
    _
  $region5: #{informer_forward.26} parent=0 // pred_fallthru
    _
  // Predicated region
  $region6: #{informer_forward.26} parent=0 // pred_check
    _
  $region7: #{informer_forward.26} parent=0 // pred_check_branch
    %11 = sbr.rel (0) target = $region9
  $region8: #{informer_forward.26} parent=0 // pred_region
    _
  $region9: #{informer_forward.26} parent=0 // pred_fallthru
    _
  // Predicated region
  $region10: #{informer_forward.26} parent=0 // pred_check
    _
  $region11: #{informer_forward.26} parent=0 // pred_check_branch
    %13 = sbr.rel (0) target = $region13
  $region12: #{informer_forward.26} parent=0 // pred_region
    _
  $region13: #{informer_forward.26} parent=0 // pred_fallthru
    _
  %p15 = scmp.eq.s32.totalorder 0, 0
  // Predicated region
  $region14: #{informer_forward.26} parent=0 // pred_check
    %p16 = pneg %p15
  $region15: #{informer_forward.26} parent=0 // pred_check_branch
    %18 = sbr.rel (%p16) target = $region17
  $region16: #{informer_forward.26} parent=0 // pred_region
    %vm19 = vcmask 785408
    %20 = vst.msk [vmem:[#allocation2] sm:$0xff] %vm19, 0.0
    %21 = vst.msk [vmem:[#allocation2 + $0x8] sm:$0xff] %vm19, 0.0
    %22 = vst.msk [vmem:[#allocation2 + $0x10] sm:$0xff] %vm19, 0.0
    %23 = vst.msk [vmem:[#allocation2 + $0x18] sm:$0xff] %vm19, 0.0
  $region17: #{informer_forward.26} parent=0 // pred_fallthru
    _
  %v24 = vld [vmem:[#allocation2] sm:$0xff]
  %v25 = vld [vmem:[#allocation2 + $0x8] sm:$0xff]
  %v26 = vld [vmem:[#allocation2 + $0x10] sm:$0xff]
  %v27 = vld [vmem:[#allocation2 + $0x18] sm:$0xff]
  %v28 = vld [vmem:[%s0] sm:$0xf]
  %v29 = vld [vmem:[%s0 + $0x4] sm:$0xf]
  %v30 = vld [vmem:[%s0 + $0x8] sm:$0xf]
  %v31 = vld [vmem:[%s0 + $0xc] sm:$0xf]
  %v32 = vld [vmem:[%s1] sm:$0xf]
  %v33 = vld [vmem:[%s1 + $0x4] sm:$0xf]
  %v34 = vld [vmem:[%s1 + $0x8] sm:$0xf]
  %v35 = vld [vmem:[%s1 + $0xc] sm:$0xf]
  %v40 = vunpack.c.l.b16 %v28
  %v41 = vunpack.c.l.b16 %v29
  %v42 = vunpack.c.l.b16 %v30
  %v43 = vunpack.c.l.b16 %v31
  %v44 = vpack.c.b16 %v41, %v40
  %v45 = vpack.c.b16 %v43, %v42
  %v50 = vunpack.c.l.b16 %v32
  %v51 = vunpack.c.l.b16 %v33
  %v52 = vunpack.c.l.b16 %v34
  %v53 = vunpack.c.l.b16 %v35
  %v54 = vpack.c.b16 %v51, %v50
  %v55 = vpack.c.b16 %v53, %v52
  %vm58 = vcmask 261120
  %v60 = vsel %vm58, %v44, 0
  %v63 = vsel %vm58, %v45, 0
  %65 = vmatprep.subr.bf16.mxu0 0
  %66 = vmatpush1.bf16.msra.mxu0 0
  %67 = vmatprep.subr.bf16.mxu0 0
  %68 = vmatpush1.bf16.msra.mxu0 0
  %69 = vmatprep.subr.bf16.mxu0 0
  %70 = vmatpush1.bf16.msra.mxu0 0
  %71 = vmatprep.subr.bf16.mxu0 0
  %72 = vmatpush1.bf16.msra.mxu0 0
  %73 = vmatprep.subr.bf16.mxu0 0
  %74 = vmatpush1.bf16.msra.mxu0 0
  %75 = vmatprep.subr.bf16.mxu0 0
  %76 = vmatpush1.bf16.msra.mxu0 0
  %77 = vmatprep.subr.bf16.mxu0 0
  %78 = vmatpush1.bf16.msra.mxu0 %v55
  %79 = vmatprep.subr.bf16.mxu0 0
  %80 = vmatpush1.bf16.msra.mxu0 %v54
  %81 = vmatprep.subr.bf16.mxu0 0
  %82 = vmatpush2.bf16.msra.mxu0 0
  %83 = vmatprep.subr.bf16.mxu0 0
  %84 = vmatpush2.bf16.msra.mxu0 0
  %85 = vmatprep.subr.bf16.mxu0 0
  %86 = vmatpush2.bf16.msra.mxu0 0
  %87 = vmatprep.subr.bf16.mxu0 0
  %88 = vmatpush2.bf16.msra.mxu0 0
  %89 = vmatprep.subr.bf16.mxu0 0
  %90 = vmatpush2.bf16.msra.mxu0 0
  %91 = vmatprep.subr.bf16.mxu0 0
  %92 = vmatpush2.bf16.msra.mxu0 0
  %93 = vmatprep.subr.bf16.mxu0 0
  %94 = vmatpush2.bf16.msra.mxu0 0
  %95 = vmatprep.subr.bf16.mxu0 0
  %96 = vmatpush2.bf16.msra.mxu0 0
  %97 = vmatprep.mubr.bf16.mxu0 0
  %98 = vmatmul.mubr.bf16.gmra.mxu0 %v60
  %v99 = vpop.f32.mrf.mxu0
  %v100 = vadd.f32 0.0, %v99
  %v101 = vpop.f32.mrf.mxu0
  %v102 = vpop.f32.mrf.mxu0
  %v103 = vadd.f32 0.0, %v102
  %v104 = vpop.f32.mrf.mxu0
  %105 = vmatprep.mubr.bf16.mxu0 0
  %106 = vmatmul.mubr.bf16.gmra.mxu0 %v63
  %v107 = vpop.f32.mrf.mxu0
  %v108 = vadd.f32 0.0, %v107
  %v109 = vpop.f32.mrf.mxu0
  %v110 = vpop.f32.mrf.mxu0
  %v111 = vadd.f32 0.0, %v110
  %v112 = vpop.f32.mrf.mxu0
  %113 = vdwg.mxu0
  %v114 = vadd.f32 %v24, %v100
  %v115 = vadd.f32 %v25, %v103
  %v116 = vadd.f32 %v26, %v108
  %v117 = vadd.f32 %v27, %v111
  %vm118 = vcmask 785408
  %119 = vst.msk [vmem:[#allocation2] sm:$0xff] %vm118, %v114
  %120 = vst.msk [vmem:[#allocation2 + $0x8] sm:$0xff] %vm118, %v115
  %121 = vst.msk [vmem:[#allocation2 + $0x10] sm:$0xff] %vm118, %v116
  %122 = vst.msk [vmem:[#allocation2 + $0x18] sm:$0xff] %vm118, %v117
  // Predicated region
  $region18: #{informer_forward.26} parent=0 // pred_check
    %p123 = pneg %p15
  $region19: #{informer_forward.26} parent=0 // pred_check_branch
    %125 = sbr.rel (%p123) target = $region21
  $region20: #{informer_forward.26} parent=0 // pred_region
    %v126 = vld [vmem:[#allocation2] sm:$0xff]
    %v127 = vld [vmem:[#allocation2 + $0x8] sm:$0xff]
    %v128 = vld [vmem:[#allocation2 + $0x10] sm:$0xff]
    %v129 = vld [vmem:[#allocation2 + $0x18] sm:$0xff]
    %v130 = vld [vmem:[%s2] sm:$0x1]
    %v132 = vlaneseq
    %v133 = vshrl.u32 %v132, 7
    %v134 = vsub.s32 0, %v133
    %v135 = vrot.slane %v130, %v134
    %v137 = vadd.f32 %v126, %v135
    %v138 = vadd.f32 %v127, %v135
    %v139 = vadd.f32 %v128, %v135
    %v140 = vadd.f32 %v129, %v135
    %v141 = vpack.c.bf16 %v138, %v137
    %v142 = vpack.c.bf16 %v140, %v139
    %v145 = vunpack.c.l.b16 %v141
    %v146 = vunpack.c.h.b16 %v141
    %v147 = vunpack.c.l.b16 %v142
    %v148 = vunpack.c.h.b16 %v142
    %v149 = vpack.c.b16 %v145, %v145
    %v150 = vpack.c.b16 %v146, %v146
    %v151 = vpack.c.b16 %v147, %v147
    %v152 = vpack.c.b16 %v148, %v148
    %vm157 = vcmask 781312
    %158 = vst.msk [vmem:[%s3] sm:$0xf] %vm157, %v149
    %159 = vst.msk [vmem:[%s3 + $0x4] sm:$0xf] %vm157, %v150
    %160 = vst.msk [vmem:[%s3 + $0x8] sm:$0xf] %vm157, %v151
    %161 = vst.msk [vmem:[%s3 + $0xc] sm:$0xf] %vm157, %v152
  $region21: #{informer_forward.26} parent=0 // pred_fallthru
    _
  // Predicated region
  $region22: #{informer_forward.26} parent=0 // pred_check
    _
  $region23: #{informer_forward.26} parent=0 // pred_check_branch
    %163 = sbr.rel (0) target = $region25
  $region24: #{informer_forward.26} parent=0 // pred_region
    _
  $region25: #{informer_forward.26} parent=0 // pred_fallthru
    _
  // Predicated region
  $region26: #{informer_forward.26} parent=0 // pred_check
    _
  $region27: #{informer_forward.26} parent=0 // pred_check_branch
    %165 = sbr.rel (0) target = $region29
  $region28: #{informer_forward.26} parent=0 // pred_region
    _
  $region29: #{informer_forward.26} parent=0 // pred_fallthru
    _

// kernel: informer_forward.27
$region0: #{informer_forward.27}
  #allocation0 [shape = 'u32[]', space=smem, size = 0x4, offset = 0x4, fixed_abs, tag = 'smem constant byte address 0x4 - core index']
  #allocation1 [shape = 'u32[144,128]{1,0:T(1,128)}', space=vmem, size = 0x12000, scoped, tag = 'internal scratch']
  %s0 = inlined_call_operand.vmem [shape: bf16[2,16,96], index: 0, kind: input, shape index: {}]
  %s1 = inlined_call_operand.vmem [shape: bf16[2,16,32], index: 1, kind: output, shape index: {}]
  %s2 = sld [smem:[#allocation0]]
  $region37: #{informer_forward.27} parent=0
    _
  %s4 = ssub.s32 1, %s2
  %s5 = scalar_select 0, %s4, %s2
  loop: start=0, step=1, limit=4
  $region2: #{informer_forward.27} parent=0 // loop_pre_header
    _
  $region3: #{informer_forward.27} parent=0 // loop_header
    %s7 = sphi 0, %s11
    %p8 = scmp.ge.s32.totalorder %s7, 4
    %s17 = sphi 0, %s19
    %s20 = sphi 0, %s17
    %s21 = sphi 0, %s20
    %s37 = sphi 0, %s21
    %s43 = sphi 0, %s45
    %s46 = sphi 0, %s43
    %s47 = sphi 0, %s46
    %s63 = sphi 0, %s47
  $region4: #{informer_forward.27} parent=0 // loop_header_branch
    %10 = sbr.rel (%p8) target = $region8
  $region5: #{informer_forward.27} parent=0 // loop_body
    %s12 = ssub.s32 %s7, 1
    %s13 = ssub.s32 %s7, 2
    %s14 = sadd.s32 %s7, 1
    %s15 = ssub.s32 %s7, %s14
    %p16 = scmp.eq.s32.totalorder %s15, 0
    %s18 = sadd.s32 %s17, 1
    %s19 = scalar_select %p16, %s17, %s18
    %p22 = pneg %p16
    %p23 = scmp.eq.s32.totalorder %s7, 1
    %p24 = por %p22, %p23
    %p25 = scmp.ne.s32.totalorder %s17, %s20
    %p26 = scmp.eq.s32.totalorder %s7, 0
    %p27 = por %p25, %p26
    %p28 = scmp.ne.s32.totalorder %s17, %s20
    %p29 = scmp.eq.s32.totalorder %s12, 1
    %p30 = por %p28, %p29
    %p31 = scmp.ne.s32.totalorder %s20, %s21
    %p32 = scmp.eq.s32.totalorder %s12, 0
    %p33 = por %p31, %p32
    %p34 = scmp.ne.s32.totalorder %s20, %s21
    %p35 = scmp.eq.s32.totalorder %s13, 1
    %p36 = por %p34, %p35
    %p38 = scmp.ne.s32.totalorder %s21, %s37
    %p39 = scmp.eq.s32.totalorder %s13, 0
    %p40 = por %p38, %p39
    %s41 = ssub.s32 %s7, %s14
    %p42 = scmp.eq.s32.totalorder %s41, 0
    %s44 = sadd.s32 %s43, 1
    %s45 = scalar_select %p42, %s43, %s44
    %p48 = pneg %p42
    %p49 = scmp.eq.s32.totalorder %s7, 1
    %p50 = por %p48, %p49
    %p51 = scmp.ne.s32.totalorder %s43, %s46
    %p52 = scmp.eq.s32.totalorder %s7, 0
    %p53 = por %p51, %p52
    %p54 = scmp.ne.s32.totalorder %s43, %s46
    %p55 = scmp.eq.s32.totalorder %s12, 1
    %p56 = por %p54, %p55
    %p57 = scmp.ne.s32.totalorder %s46, %s47
    %p58 = scmp.eq.s32.totalorder %s12, 0
    %p59 = por %p57, %p58
    %p60 = scmp.ne.s32.totalorder %s46, %s47
    %p61 = scmp.eq.s32.totalorder %s13, 1
    %p62 = por %p60, %p61
    %p64 = scmp.ne.s32.totalorder %s47, %s63
    %p65 = scmp.eq.s32.totalorder %s13, 0
    %p66 = por %p64, %p65
    %p67 = scmp.le.s32.totalorder 1, %s7
    %p68 = scmp.lt.s32.totalorder %s7, 3
    %p69 = pnand %p67, %p68
    %p70 = pneg %p69
    // Predicated region
    $region9: #{informer_forward.27} parent=5 // pred_check
      _
    $region10: #{informer_forward.27} parent=5 // pred_check_branch
      %72 = sbr.rel (%p69) target = $region12
    $region11: #{informer_forward.27} parent=5 // pred_region
      %s73 = ssub.s32 %s7, 1
    $region12: #{informer_forward.27} parent=5 // pred_fallthru
      _
    %p74 = scmp.lt.s32.totalorder %s7, 2
    // Predicated region
    $region13: #{informer_forward.27} parent=5 // pred_check
      %p75 = pneg %p74
    $region14: #{informer_forward.27} parent=5 // pred_check_branch
      %77 = sbr.rel (%p75) target = $region16
    $region15: #{informer_forward.27} parent=5 // pred_region
      // Predicated region
      $region17: #{informer_forward.27} parent=15 // pred_check
        %p78 = pneg %p27
      $region18: #{informer_forward.27} parent=15 // pred_check_branch
        %80 = sbr.rel (%p78) target = $region20
      $region19: #{informer_forward.27} parent=15 // pred_region
        %p81 = scmp.lt.s32.totalorder %s7, 1
        %s82 = scalar_select %p81, %s7, 1
        %s83 = smul.addr %s82, 2
        %s84 = smul.addr %s83, 4
        %s85 = scalar_lea.vmem %s0, %s84
      $region20: #{informer_forward.27} parent=15 // pred_fallthru
        _
    $region16: #{informer_forward.27} parent=5 // pred_fallthru
      _
    %p86 = scmp.le.s32.totalorder 1, %s7
    %p87 = scmp.lt.s32.totalorder %s7, 3
    %p88 = pnand %p86, %p87
    %p89 = pneg %p88
    // Predicated region
    $region21: #{informer_forward.27} parent=5 // pred_check
      _
    $region22: #{informer_forward.27} parent=5 // pred_check_branch
      %91 = sbr.rel (%p88) target = $region24
    $region23: #{informer_forward.27} parent=5 // pred_region
      %s92 = ssub.s32 %s7, 1
      %p93 = scmp.lt.s32.totalorder %s12, 1
      %s94 = scalar_select %p93, %s12, 1
      %s95 = smul.addr %s94, 2
      %s96 = smul.addr %s95, 4
      %s97 = scalar_lea.vmem %s0, %s96
      %p98 = pneg %p33
      %p99 = pneg %p30
      %p100 = pneg %p59
      %p101 = pneg %p56
      %p102 = scmp.lt.s32.totalorder %s12, 1
      %s103 = scalar_select %p102, %s12, 1
      %s104 = smul.addr %s103, 2
      %s105 = smul.addr %s104, 4
      %s106 = scalar_lea.vmem %s1, %s105
      %p107 = scmp.lt.s32.totalorder %s12, 1
      %s108 = scalar_select %p107, %s12, 1
      %s109 = smul.addr %s108, 2
      %s110 = smul.addr %s109, 4
      %s111 = scalar_lea.vmem %s0, %s110
      %p112 = scmp.lt.s32.totalorder %s12, 1
      %s113 = scalar_select %p112, %s12, 1
      %s114 = smul.addr %s113, 2
      %s115 = smul.addr %s114, 4
      %s116 = scalar_lea.vmem %s1, %s115
      %v118 = vld [vmem:[%s111] sm:$0xf]
      %v119 = vld [vmem:[%s111 + $0x4] sm:$0xf]
      %v122 = vunpack.c.l.b16 %v118
      %v123 = vunpack.c.l.b16 %v119
      %v124 = vpack.c.b16 %v123, %v122
      %125 = vrot.lane.b32.xlu0 %v124, 96
      %v126 = vpop.permute.xlu0 %125
      %vm127 = vcmask 64512
      %v129 = vsel %vm127, %v124, 0
      %v132 = vsel %vm127, %v126, 0
      %134 = vmatprep.subr.bf16.mxu0 0
      %135 = vmatpush1.bf16.xpose.msra.mxu0 0
      %136 = vmatprep.subr.bf16.mxu0 0
      %137 = vmatpush1.bf16.xpose.msra.mxu0 0
      %138 = vmatprep.subr.bf16.mxu0 0
      %139 = vmatpush1.bf16.xpose.msra.mxu0 0
      %140 = vmatprep.subr.bf16.mxu0 0
      %141 = vmatpush1.bf16.xpose.msra.mxu0 0
      %142 = vmatprep.subr.bf16.mxu0 0
      %143 = vmatpush1.bf16.xpose.msra.mxu0 0
      %144 = vmatprep.subr.bf16.mxu0 0
      %145 = vmatpush1.bf16.xpose.msra.mxu0 0
      %146 = vmatprep.subr.bf16.mxu0 0
      %147 = vmatpush1.bf16.xpose.msra.mxu0 0
      %148 = vmatprep.subr.bf16.mxu0 0
      %149 = vmatpush1.bf16.xpose.msra.mxu0 %v132
      %150 = vmatprep.subr.bf16.mxu0 0
      %151 = vmatpush2.bf16.xpose.msra.mxu0 0
      %152 = vmatprep.subr.bf16.mxu0 0
      %153 = vmatpush2.bf16.xpose.msra.mxu0 0
      %154 = vmatprep.subr.bf16.mxu0 0
      %155 = vmatpush2.bf16.xpose.msra.mxu0 0
      %156 = vmatprep.subr.bf16.mxu0 0
      %157 = vmatpush2.bf16.xpose.msra.mxu0 0
      %158 = vmatprep.subr.bf16.mxu0 0
      %159 = vmatpush2.bf16.xpose.msra.mxu0 0
      %160 = vmatprep.subr.bf16.mxu0 0
      %161 = vmatpush2.bf16.xpose.msra.mxu0 0
      %162 = vmatprep.subr.bf16.mxu0 0
      %163 = vmatpush2.bf16.xpose.msra.mxu0 0
      %164 = vmatprep.subr.bf16.mxu0 0
      %165 = vmatpush2.bf16.xpose.msra.mxu0 0
      %166 = vmatprep.mubr.bf16.mxu0 0
      %167 = vmatmul.mubr.bf16.gmra.mxu0 %v129
      %v168 = vpop.f32.mrf.mxu0
      %v169 = vadd.f32 0.0, %v168
      %v170 = vpop.f32.mrf.mxu0
      %v171 = vpop.f32.mrf.mxu0
      %v172 = vadd.f32 0.0, %v171
      %v173 = vpop.f32.mrf.mxu0
      %174 = vdwg.mxu0
      %vm175 = vcmask 130048
      %v176 = vsel %vm175, %v169, -inf
      %177 = vmax.xlane.f32.xlu0 %v176
      %v178 = vpop.xlane.xlu0 %177
      %v179 = vsel %vm175, %v172, -inf
      %180 = vmax.xlane.f32.xlu0 %v179
      %v181 = vpop.xlane.xlu0 %180
      %v182 = vsub.f32 %v169, %v178
      %v183 = vsub.f32 %v172, %v181
      %v184 = vmul.f32 %v182, 1.442695
      %v185 = vpow.pop %v184
      %v186 = vmul.f32 %v183, 1.442695
      %v187 = vpow.pop %v186
      %v188 = vsel %vm175, %v185, 0.0
      %189 = vadd.xlane.f32.xlu0 %v188
      %v190 = vpop.xlane.xlu0 %189
      %v191 = vsel %vm175, %v187, 0.0
      %192 = vadd.xlane.f32.xlu0 %v191
      %v193 = vpop.xlane.xlu0 %192
      %v194 = vrcp.pop %v190
      %v195 = vrcp.pop %v193
      %v196 = vmul.f32 %v185, %v194
      %v197 = vmul.f32 %v187, %v195
      %v198 = vpack.c.bf16 %v197, %v196
      %199 = vrot.lane.b32.xlu0 %v124, 64
      %v200 = vpop.permute.xlu0 %199
      %v203 = vsel %vm175, %v198, 0
      %205 = vmatprep.subr.bf16.mxu0 0
      %206 = vmatpush1.bf16.msra.mxu0 0
      %207 = vmatprep.subr.bf16.mxu0 0
      %208 = vmatpush1.bf16.msra.mxu0 0
      %209 = vmatprep.subr.bf16.mxu0 0
      %210 = vmatpush1.bf16.msra.mxu0 0
      %211 = vmatprep.subr.bf16.mxu0 0
      %212 = vmatpush1.bf16.msra.mxu0 0
      %213 = vmatprep.subr.bf16.mxu0 0
      %214 = vmatpush1.bf16.msra.mxu0 0
      %215 = vmatprep.subr.bf16.mxu0 0
      %216 = vmatpush1.bf16.msra.mxu0 0
      %217 = vmatprep.subr.bf16.mxu0 0
      %218 = vmatpush1.bf16.msra.mxu0 0
      %219 = vmatprep.subr.bf16.mxu0 0
      %220 = vmatpush1.bf16.msra.mxu0 %v200
      %221 = vmatprep.subr.bf16.mxu0 0
      %222 = vmatpush2.bf16.msra.mxu0 0
      %223 = vmatprep.subr.bf16.mxu0 0
      %224 = vmatpush2.bf16.msra.mxu0 0
      %225 = vmatprep.subr.bf16.mxu0 0
      %226 = vmatpush2.bf16.msra.mxu0 0
      %227 = vmatprep.subr.bf16.mxu0 0
      %228 = vmatpush2.bf16.msra.mxu0 0
      %229 = vmatprep.subr.bf16.mxu0 0
      %230 = vmatpush2.bf16.msra.mxu0 0
      %231 = vmatprep.subr.bf16.mxu0 0
      %232 = vmatpush2.bf16.msra.mxu0 0
      %233 = vmatprep.subr.bf16.mxu0 0
      %234 = vmatpush2.bf16.msra.mxu0 0
      %235 = vmatprep.subr.bf16.mxu0 0
      %236 = vmatpush2.bf16.msra.mxu0 0
      %237 = vmatprep.mubr.bf16.mxu0 0
      %238 = vmatmul.mubr.bf16.gmra.mxu0 %v203
      %v239 = vpop.f32.mrf.mxu0
      %v240 = vadd.f32 0.0, %v239
      %v241 = vpop.f32.mrf.mxu0
      %v242 = vpop.f32.mrf.mxu0
      %v243 = vadd.f32 0.0, %v242
      %v244 = vpop.f32.mrf.mxu0
      %245 = vdwg.mxu0
      %v246 = vpack.c.bf16 %v243, %v240
      %247 = vrot.lane.b32.xlu0 %v124, 120
      %v248 = vpop.permute.xlu0 %247
      %249 = vrot.lane.b32.xlu0 %v124, 88
      %v250 = vpop.permute.xlu0 %249
      %v252 = vsel %vm127, %v248, 0
      %v255 = vsel %vm127, %v250, 0
      %257 = vmatprep.subr.bf16.mxu0 0
      %258 = vmatpush1.bf16.xpose.msra.mxu0 0
      %259 = vmatprep.subr.bf16.mxu0 0
      %260 = vmatpush1.bf16.xpose.msra.mxu0 0
      %261 = vmatprep.subr.bf16.mxu0 0
      %262 = vmatpush1.bf16.xpose.msra.mxu0 0
      %263 = vmatprep.subr.bf16.mxu0 0
      %264 = vmatpush1.bf16.xpose.msra.mxu0 0
      %265 = vmatprep.subr.bf16.mxu0 0
      %266 = vmatpush1.bf16.xpose.msra.mxu0 0
      %267 = vmatprep.subr.bf16.mxu0 0
      %268 = vmatpush1.bf16.xpose.msra.mxu0 0
      %269 = vmatprep.subr.bf16.mxu0 0
      %270 = vmatpush1.bf16.xpose.msra.mxu0 0
      %271 = vmatprep.subr.bf16.mxu0 0
      %272 = vmatpush1.bf16.xpose.msra.mxu0 %v255
      %273 = vmatprep.subr.bf16.mxu0 0
      %274 = vmatpush2.bf16.xpose.msra.mxu0 0
      %275 = vmatprep.subr.bf16.mxu0 0
      %276 = vmatpush2.bf16.xpose.msra.mxu0 0
      %277 = vmatprep.subr.bf16.mxu0 0
      %278 = vmatpush2.bf16.xpose.msra.mxu0 0
      %279 = vmatprep.subr.bf16.mxu0 0
      %280 = vmatpush2.bf16.xpose.msra.mxu0 0
      %281 = vmatprep.subr.bf16.mxu0 0
      %282 = vmatpush2.bf16.xpose.msra.mxu0 0
      %283 = vmatprep.subr.bf16.mxu0 0
      %284 = vmatpush2.bf16.xpose.msra.mxu0 0
      %285 = vmatprep.subr.bf16.mxu0 0
      %286 = vmatpush2.bf16.xpose.msra.mxu0 0
      %287 = vmatprep.subr.bf16.mxu0 0
      %288 = vmatpush2.bf16.xpose.msra.mxu0 0
      %289 = vmatprep.mubr.bf16.mxu0 0
      %290 = vmatmul.mubr.bf16.gmra.mxu0 %v252
      %v291 = vpop.f32.mrf.mxu0
      %v292 = vadd.f32 0.0, %v291
      %v293 = vpop.f32.mrf.mxu0
      %v294 = vpop.f32.mrf.mxu0
      %v295 = vadd.f32 0.0, %v294
      %v296 = vpop.f32.mrf.mxu0
      %297 = vdwg.mxu0
      %v298 = vsel %vm175, %v292, -inf
      %299 = vmax.xlane.f32.xlu0 %v298
      %v300 = vpop.xlane.xlu0 %299
      %v301 = vsel %vm175, %v295, -inf
      %302 = vmax.xlane.f32.xlu0 %v301
      %v303 = vpop.xlane.xlu0 %302
      %v304 = vsub.f32 %v292, %v300
      %v305 = vsub.f32 %v295, %v303
      %v306 = vmul.f32 %v304, 1.442695
      %v307 = vpow.pop %v306
      %v308 = vmul.f32 %v305, 1.442695
      %v309 = vpow.pop %v308
      %v310 = vsel %vm175, %v307, 0.0
      %311 = vadd.xlane.f32.xlu0 %v310
      %v312 = vpop.xlane.xlu0 %311
      %v313 = vsel %vm175, %v309, 0.0
      %314 = vadd.xlane.f32.xlu0 %v313
      %v315 = vpop.xlane.xlu0 %314
      %v316 = vrcp.pop %v312
      %v317 = vrcp.pop %v315
      %v318 = vmul.f32 %v307, %v316
      %v319 = vmul.f32 %v309, %v317
      %v320 = vpack.c.bf16 %v319, %v318
      %321 = vrot.lane.b32.xlu0 %v124, 56
      %v322 = vpop.permute.xlu0 %321
      %v325 = vsel %vm175, %v320, 0
      %327 = vmatprep.subr.bf16.mxu0 0
      %328 = vmatpush1.bf16.msra.mxu0 0
      %329 = vmatprep.subr.bf16.mxu0 0
      %330 = vmatpush1.bf16.msra.mxu0 0
      %331 = vmatprep.subr.bf16.mxu0 0
      %332 = vmatpush1.bf16.msra.mxu0 0
      %333 = vmatprep.subr.bf16.mxu0 0
      %334 = vmatpush1.bf16.msra.mxu0 0
      %335 = vmatprep.subr.bf16.mxu0 0
      %336 = vmatpush1.bf16.msra.mxu0 0
      %337 = vmatprep.subr.bf16.mxu0 0
      %338 = vmatpush1.bf16.msra.mxu0 0
      %339 = vmatprep.subr.bf16.mxu0 0
      %340 = vmatpush1.bf16.msra.mxu0 0
      %341 = vmatprep.subr.bf16.mxu0 0
      %342 = vmatpush1.bf16.msra.mxu0 %v322
      %343 = vmatprep.subr.bf16.mxu0 0
      %344 = vmatpush2.bf16.msra.mxu0 0
      %345 = vmatprep.subr.bf16.mxu0 0
      %346 = vmatpush2.bf16.msra.mxu0 0
      %347 = vmatprep.subr.bf16.mxu0 0
      %348 = vmatpush2.bf16.msra.mxu0 0
      %349 = vmatprep.subr.bf16.mxu0 0
      %350 = vmatpush2.bf16.msra.mxu0 0
      %351 = vmatprep.subr.bf16.mxu0 0
      %352 = vmatpush2.bf16.msra.mxu0 0
      %353 = vmatprep.subr.bf16.mxu0 0
      %354 = vmatpush2.bf16.msra.mxu0 0
      %355 = vmatprep.subr.bf16.mxu0 0
      %356 = vmatpush2.bf16.msra.mxu0 0
      %357 = vmatprep.subr.bf16.mxu0 0
      %358 = vmatpush2.bf16.msra.mxu0 0
      %359 = vmatprep.mubr.bf16.mxu0 0
      %360 = vmatmul.mubr.bf16.gmra.mxu0 %v325
      %v361 = vpop.f32.mrf.mxu0
      %v362 = vadd.f32 0.0, %v361
      %v363 = vpop.f32.mrf.mxu0
      %v364 = vpop.f32.mrf.mxu0
      %v365 = vadd.f32 0.0, %v364
      %v366 = vpop.f32.mrf.mxu0
      %367 = vdwg.mxu0
      %v368 = vpack.c.bf16 %v365, %v362
      %369 = vrot.lane.b32.xlu0 %v124, 112
      %v370 = vpop.permute.xlu0 %369
      %371 = vrot.lane.b32.xlu0 %v124, 80
      %v372 = vpop.permute.xlu0 %371
      %v374 = vsel %vm127, %v370, 0
      %v377 = vsel %vm127, %v372, 0
      %379 = vmatprep.subr.bf16.mxu0 0
      %380 = vmatpush1.bf16.xpose.msra.mxu0 0
      %381 = vmatprep.subr.bf16.mxu0 0
      %382 = vmatpush1.bf16.xpose.msra.mxu0 0
      %383 = vmatprep.subr.bf16.mxu0 0
      %384 = vmatpush1.bf16.xpose.msra.mxu0 0
      %385 = vmatprep.subr.bf16.mxu0 0
      %386 = vmatpush1.bf16.xpose.msra.mxu0 0
      %387 = vmatprep.subr.bf16.mxu0 0
      %388 = vmatpush1.bf16.xpose.msra.mxu0 0
      %389 = vmatprep.subr.bf16.mxu0 0
      %390 = vmatpush1.bf16.xpose.msra.mxu0 0
      %391 = vmatprep.subr.bf16.mxu0 0
      %392 = vmatpush1.bf16.xpose.msra.mxu0 0
      %393 = vmatprep.subr.bf16.mxu0 0
      %394 = vmatpush1.bf16.xpose.msra.mxu0 %v377
      %395 = vmatprep.subr.bf16.mxu0 0
      %396 = vmatpush2.bf16.xpose.msra.mxu0 0
      %397 = vmatprep.subr.bf16.mxu0 0
      %398 = vmatpush2.bf16.xpose.msra.mxu0 0
      %399 = vmatprep.subr.bf16.mxu0 0
      %400 = vmatpush2.bf16.xpose.msra.mxu0 0
      %401 = vmatprep.subr.bf16.mxu0 0
      %402 = vmatpush2.bf16.xpose.msra.mxu0 0
      %403 = vmatprep.subr.bf16.mxu0 0
      %404 = vmatpush2.bf16.xpose.msra.mxu0 0
      %405 = vmatprep.subr.bf16.mxu0 0
      %406 = vmatpush2.bf16.xpose.msra.mxu0 0
      %407 = vmatprep.subr.bf16.mxu0 0
      %408 = vmatpush2.bf16.xpose.msra.mxu0 0
      %409 = vmatprep.subr.bf16.mxu0 0
      %410 = vmatpush2.bf16.xpose.msra.mxu0 0
      %411 = vmatprep.mubr.bf16.mxu0 0
      %412 = vmatmul.mubr.bf16.gmra.mxu0 %v374
      %v413 = vpop.f32.mrf.mxu0
      %v414 = vadd.f32 0.0, %v413
      %v415 = vpop.f32.mrf.mxu0
      %v416 = vpop.f32.mrf.mxu0
      %v417 = vadd.f32 0.0, %v416
      %v418 = vpop.f32.mrf.mxu0
      %419 = vdwg.mxu0
      %v420 = vsel %vm175, %v414, -inf
      %421 = vmax.xlane.f32.xlu0 %v420
      %v422 = vpop.xlane.xlu0 %421
      %v423 = vsel %vm175, %v417, -inf
      %424 = vmax.xlane.f32.xlu0 %v423
      %v425 = vpop.xlane.xlu0 %424
      %v426 = vsub.f32 %v414, %v422
      %v427 = vsub.f32 %v417, %v425
      %v428 = vmul.f32 %v426, 1.442695
      %v429 = vpow.pop %v428
      %v430 = vmul.f32 %v427, 1.442695
      %v431 = vpow.pop %v430
      %v432 = vsel %vm175, %v429, 0.0
      %433 = vadd.xlane.f32.xlu0 %v432
      %v434 = vpop.xlane.xlu0 %433
      %v435 = vsel %vm175, %v431, 0.0
      %436 = vadd.xlane.f32.xlu0 %v435
      %v437 = vpop.xlane.xlu0 %436
      %v438 = vrcp.pop %v434
      %v439 = vrcp.pop %v437
      %v440 = vmul.f32 %v429, %v438
      %v441 = vmul.f32 %v431, %v439
      %v442 = vpack.c.bf16 %v441, %v440
      %443 = vrot.lane.b32.xlu0 %v124, 48
      %v444 = vpop.permute.xlu0 %443
      %v447 = vsel %vm175, %v442, 0
      %449 = vmatprep.subr.bf16.mxu0 0
      %450 = vmatpush1.bf16.msra.mxu0 0
      %451 = vmatprep.subr.bf16.mxu0 0
      %452 = vmatpush1.bf16.msra.mxu0 0
      %453 = vmatprep.subr.bf16.mxu0 0
      %454 = vmatpush1.bf16.msra.mxu0 0
      %455 = vmatprep.subr.bf16.mxu0 0
      %456 = vmatpush1.bf16.msra.mxu0 0
      %457 = vmatprep.subr.bf16.mxu0 0
      %458 = vmatpush1.bf16.msra.mxu0 0
      %459 = vmatprep.subr.bf16.mxu0 0
      %460 = vmatpush1.bf16.msra.mxu0 0
      %461 = vmatprep.subr.bf16.mxu0 0
      %462 = vmatpush1.bf16.msra.mxu0 0
      %463 = vmatprep.subr.bf16.mxu0 0
      %464 = vmatpush1.bf16.msra.mxu0 %v444
      %465 = vmatprep.subr.bf16.mxu0 0
      %466 = vmatpush2.bf16.msra.mxu0 0
      %467 = vmatprep.subr.bf16.mxu0 0
      %468 = vmatpush2.bf16.msra.mxu0 0
      %469 = vmatprep.subr.bf16.mxu0 0
      %470 = vmatpush2.bf16.msra.mxu0 0
      %471 = vmatprep.subr.bf16.mxu0 0
      %472 = vmatpush2.bf16.msra.mxu0 0
      %473 = vmatprep.subr.bf16.mxu0 0
      %474 = vmatpush2.bf16.msra.mxu0 0
      %475 = vmatprep.subr.bf16.mxu0 0
      %476 = vmatpush2.bf16.msra.mxu0 0
      %477 = vmatprep.subr.bf16.mxu0 0
      %478 = vmatpush2.bf16.msra.mxu0 0
      %479 = vmatprep.subr.bf16.mxu0 0
      %480 = vmatpush2.bf16.msra.mxu0 0
      %481 = vmatprep.mubr.bf16.mxu0 0
      %482 = vmatmul.mubr.bf16.gmra.mxu0 %v447
      %v483 = vpop.f32.mrf.mxu0
      %v484 = vadd.f32 0.0, %v483
      %v485 = vpop.f32.mrf.mxu0
      %v486 = vpop.f32.mrf.mxu0
      %v487 = vadd.f32 0.0, %v486
      %v488 = vpop.f32.mrf.mxu0
      %489 = vdwg.mxu0
      %v490 = vpack.c.bf16 %v487, %v484
      %491 = vrot.lane.b32.xlu0 %v124, 104
      %v492 = vpop.permute.xlu0 %491
      %493 = vrot.lane.b32.xlu0 %v124, 72
      %v494 = vpop.permute.xlu0 %493
      %v496 = vsel %vm127, %v492, 0
      %v499 = vsel %vm127, %v494, 0
      %501 = vmatprep.subr.bf16.mxu0 0
      %502 = vmatpush1.bf16.xpose.msra.mxu0 0
      %503 = vmatprep.subr.bf16.mxu0 0
      %504 = vmatpush1.bf16.xpose.msra.mxu0 0
      %505 = vmatprep.subr.bf16.mxu0 0
      %506 = vmatpush1.bf16.xpose.msra.mxu0 0
      %507 = vmatprep.subr.bf16.mxu0 0
      %508 = vmatpush1.bf16.xpose.msra.mxu0 0
      %509 = vmatprep.subr.bf16.mxu0 0
      %510 = vmatpush1.bf16.xpose.msra.mxu0 0
      %511 = vmatprep.subr.bf16.mxu0 0
      %512 = vmatpush1.bf16.xpose.msra.mxu0 0
      %513 = vmatprep.subr.bf16.mxu0 0
      %514 = vmatpush1.bf16.xpose.msra.mxu0 0
      %515 = vmatprep.subr.bf16.mxu0 0
      %516 = vmatpush1.bf16.xpose.msra.mxu0 %v499
      %517 = vmatprep.subr.bf16.mxu0 0
      %518 = vmatpush2.bf16.xpose.msra.mxu0 0
      %519 = vmatprep.subr.bf16.mxu0 0
      %520 = vmatpush2.bf16.xpose.msra.mxu0 0
      %521 = vmatprep.subr.bf16.mxu0 0
      %522 = vmatpush2.bf16.xpose.msra.mxu0 0
      %523 = vmatprep.subr.bf16.mxu0 0
      %524 = vmatpush2.bf16.xpose.msra.mxu0 0
      %525 = vmatprep.subr.bf16.mxu0 0
      %526 = vmatpush2.bf16.xpose.msra.mxu0 0
      %527 = vmatprep.subr.bf16.mxu0 0
      %528 = vmatpush2.bf16.xpose.msra.mxu0 0
      %529 = vmatprep.subr.bf16.mxu0 0
      %530 = vmatpush2.bf16.xpose.msra.mxu0 0
      %531 = vmatprep.subr.bf16.mxu0 0
      %532 = vmatpush2.bf16.xpose.msra.mxu0 0
      %533 = vmatprep.mubr.bf16.mxu0 0
      %534 = vmatmul.mubr.bf16.gmra.mxu0 %v496
      %v535 = vpop.f32.mrf.mxu0
      %v536 = vadd.f32 0.0, %v535
      %v537 = vpop.f32.mrf.mxu0
      %v538 = vpop.f32.mrf.mxu0
      %v539 = vadd.f32 0.0, %v538
      %v540 = vpop.f32.mrf.mxu0
      %541 = vdwg.mxu0
      %v542 = vsel %vm175, %v536, -inf
      %543 = vmax.xlane.f32.xlu0 %v542
      %v544 = vpop.xlane.xlu0 %543
      %v545 = vsel %vm175, %v539, -inf
      %546 = vmax.xlane.f32.xlu0 %v545
      %v547 = vpop.xlane.xlu0 %546
      %v548 = vsub.f32 %v536, %v544
      %v549 = vsub.f32 %v539, %v547
      %v550 = vmul.f32 %v548, 1.442695
      %v551 = vpow.pop %v550
      %v552 = vmul.f32 %v549, 1.442695
      %v553 = vpow.pop %v552
      %v554 = vsel %vm175, %v551, 0.0
      %555 = vadd.xlane.f32.xlu0 %v554
      %v556 = vpop.xlane.xlu0 %555
      %v557 = vsel %vm175, %v553, 0.0
      %558 = vadd.xlane.f32.xlu0 %v557
      %v559 = vpop.xlane.xlu0 %558
      %v560 = vrcp.pop %v556
      %v561 = vrcp.pop %v559
      %v562 = vmul.f32 %v551, %v560
      %v563 = vmul.f32 %v553, %v561
      %v564 = vpack.c.bf16 %v563, %v562
      %565 = vrot.lane.b32.xlu0 %v124, 40
      %v566 = vpop.permute.xlu0 %565
      %v569 = vsel %vm175, %v564, 0
      %571 = vmatprep.subr.bf16.mxu0 0
      %572 = vmatpush1.bf16.msra.mxu0 0
      %573 = vmatprep.subr.bf16.mxu0 0
      %574 = vmatpush1.bf16.msra.mxu0 0
      %575 = vmatprep.subr.bf16.mxu0 0
      %576 = vmatpush1.bf16.msra.mxu0 0
      %577 = vmatprep.subr.bf16.mxu0 0
      %578 = vmatpush1.bf16.msra.mxu0 0
      %579 = vmatprep.subr.bf16.mxu0 0
      %580 = vmatpush1.bf16.msra.mxu0 0
      %581 = vmatprep.subr.bf16.mxu0 0
      %582 = vmatpush1.bf16.msra.mxu0 0
      %583 = vmatprep.subr.bf16.mxu0 0
      %584 = vmatpush1.bf16.msra.mxu0 0
      %585 = vmatprep.subr.bf16.mxu0 0
      %586 = vmatpush1.bf16.msra.mxu0 %v566
      %587 = vmatprep.subr.bf16.mxu0 0
      %588 = vmatpush2.bf16.msra.mxu0 0
      %589 = vmatprep.subr.bf16.mxu0 0
      %590 = vmatpush2.bf16.msra.mxu0 0
      %591 = vmatprep.subr.bf16.mxu0 0
      %592 = vmatpush2.bf16.msra.mxu0 0
      %593 = vmatprep.subr.bf16.mxu0 0
      %594 = vmatpush2.bf16.msra.mxu0 0
      %595 = vmatprep.subr.bf16.mxu0 0
      %596 = vmatpush2.bf16.msra.mxu0 0
      %597 = vmatprep.subr.bf16.mxu0 0
      %598 = vmatpush2.bf16.msra.mxu0 0
      %599 = vmatprep.subr.bf16.mxu0 0
      %600 = vmatpush2.bf16.msra.mxu0 0
      %601 = vmatprep.subr.bf16.mxu0 0
      %602 = vmatpush2.bf16.msra.mxu0 0
      %603 = vmatprep.mubr.bf16.mxu0 0
      %604 = vmatmul.mubr.bf16.gmra.mxu0 %v569
      %v605 = vpop.f32.mrf.mxu0
      %v606 = vadd.f32 0.0, %v605
      %v607 = vpop.f32.mrf.mxu0
      %v608 = vpop.f32.mrf.mxu0
      %v609 = vadd.f32 0.0, %v608
      %v610 = vpop.f32.mrf.mxu0
      %611 = vdwg.mxu0
      %v612 = vpack.c.bf16 %v609, %v606
      %614 = vrot.lane.b32.xlu0 %v368, 8
      %v615 = vpop.permute.xlu0 %614
      %617 = vrot.lane.b32.xlu0 %v490, 16
      %v618 = vpop.permute.xlu0 %617
      %620 = vrot.lane.b32.xlu0 %v612, 24
      %v621 = vpop.permute.xlu0 %620
      %v624 = vsel %vm127, %v246, %v615
      %v626 = vsel %vm175, %v624, %v618
      %vm627 = vcmask 195584
      %v629 = vsel %vm627, %v626, %v621
      %v631 = vunpack.c.l.b16 %v629
      %v632 = vunpack.c.h.b16 %v629
      %v633 = vpack.c.b16 %v631, %v631
      %v634 = vpack.c.b16 %v632, %v632
      %vm637 = vcmask 257024
      %638 = vst.msk [vmem:[%s116] sm:$0xf] %vm637, %v633
      %639 = vst.msk [vmem:[%s116 + $0x4] sm:$0xf] %vm637, %v634
      %p640 = scmp.lt.s32.totalorder %s12, 1
      %s641 = scalar_select %p640, %s12, 1
      %s642 = smul.addr %s641, 2
      %s643 = smul.addr %s642, 4
      %s644 = scalar_lea.vmem %s1, %s643
      // Predicated region
      $region25: #{informer_forward.27} parent=23 // pred_check
        %p645 = pneg %p56
      $region26: #{informer_forward.27} parent=23 // pred_check_branch
        %647 = sbr.rel (%p645) target = $region28
      $region27: #{informer_forward.27} parent=23 // pred_region
        _
      $region28: #{informer_forward.27} parent=23 // pred_fallthru
        _
    $region24: #{informer_forward.27} parent=5 // pred_fallthru
      _
    %p648 = scmp.le.s32.totalorder 2, %s7
    // Predicated region
    $region29: #{informer_forward.27} parent=5 // pred_check
      %p649 = pneg %p648
    $region30: #{informer_forward.27} parent=5 // pred_check_branch
      %651 = sbr.rel (%p649) target = $region32
    $region31: #{informer_forward.27} parent=5 // pred_region
      %s652 = ssub.s32 %s7, 2
      // Predicated region
      $region33: #{informer_forward.27} parent=31 // pred_check
        %p653 = pneg %p62
      $region34: #{informer_forward.27} parent=31 // pred_check_branch
        %655 = sbr.rel (%p653) target = $region36
      $region35: #{informer_forward.27} parent=31 // pred_region
        %p656 = scmp.lt.s32.totalorder %s13, 1
        %s657 = scalar_select %p656, %s13, 1
        %s658 = smul.addr %s657, 2
        %s659 = smul.addr %s658, 4
        %s660 = scalar_lea.vmem %s1, %s659
      $region36: #{informer_forward.27} parent=31 // pred_fallthru
        _
    $region32: #{informer_forward.27} parent=5 // pred_fallthru
      _
  $region6: #{informer_forward.27} parent=0 // loop_footer
    %s11 = sadd.s32 1, %s7
  $region7: #{informer_forward.27} parent=0 // loop_footer_branch
    %6 = sbr.rel target = $region3
  $region8: #{informer_forward.27} parent=0 // loop_exit
    _

// kernel: informer_forward.31
$region0: #{informer_forward.31}
  #allocation0 [shape = 'u32[]', space=smem, size = 0x4, offset = 0x4, fixed_abs, tag = 'smem constant byte address 0x4 - core index']
  #allocation1 [shape = 'u32[144,128]{1,0:T(1,128)}', space=vmem, size = 0x12000, scoped, tag = 'internal scratch']
  %s0 = inlined_call_operand.vmem [shape: bf16[2,16,32], index: 0, kind: input, shape index: {}]
  %s1 = inlined_call_operand.vmem [shape: bf16[3,32,32], index: 1, kind: input, shape index: {}]
  %s2 = inlined_call_operand.vmem [shape: f32[1,32], index: 2, kind: input, shape index: {}]
  %s3 = inlined_call_operand.vmem [shape: f32[2,16,32], index: 3, kind: output, shape index: {}]
  %s4 = sld [smem:[#allocation0]]
  $region45: #{informer_forward.31} parent=0
    _
  %s6 = ssub.s32 1, %s4
  %s7 = scalar_select 0, %s6, %s4
  loop: start=0, step=1, limit=4
  $region2: #{informer_forward.31} parent=0 // loop_pre_header
    _
  $region3: #{informer_forward.31} parent=0 // loop_header
    %s9 = sphi 0, %s13
    %p10 = scmp.ge.s32.totalorder %s9, 4
    %s19 = sphi 0, %s21
    %s22 = sphi 0, %s19
    %s23 = sphi 0, %s22
    %s39 = sphi 0, %s23
    %s43 = sphi 0, %s43
    %s45 = sphi 0, %s43
    %s46 = sphi 0, %s45
    %s60 = sphi 0, %s46
    %s64 = sphi 0, %s64
    %s66 = sphi 0, %s64
    %s67 = sphi 0, %s66
    %s81 = sphi 0, %s67
    %s87 = sphi 0, %s89
    %s90 = sphi 0, %s87
    %s91 = sphi 0, %s90
    %s107 = sphi 0, %s91
  $region4: #{informer_forward.31} parent=0 // loop_header_branch
    %12 = sbr.rel (%p10) target = $region8
  $region5: #{informer_forward.31} parent=0 // loop_body
    %s14 = ssub.s32 %s9, 1
    %s15 = ssub.s32 %s9, 2
    %s16 = sadd.s32 %s9, 1
    %s17 = ssub.s32 %s9, %s16
    %p18 = scmp.eq.s32.totalorder %s17, 0
    %s20 = sadd.s32 %s19, 1
    %s21 = scalar_select %p18, %s19, %s20
    %p24 = pneg %p18
    %p25 = scmp.eq.s32.totalorder %s9, 1
    %p26 = por %p24, %p25
    %p27 = scmp.ne.s32.totalorder %s19, %s22
    %p28 = scmp.eq.s32.totalorder %s9, 0
    %p29 = por %p27, %p28
    %p30 = scmp.ne.s32.totalorder %s19, %s22
    %p31 = scmp.eq.s32.totalorder %s14, 1
    %p32 = por %p30, %p31
    %p33 = scmp.ne.s32.totalorder %s22, %s23
    %p34 = scmp.eq.s32.totalorder %s14, 0
    %p35 = por %p33, %p34
    %p36 = scmp.ne.s32.totalorder %s22, %s23
    %p37 = scmp.eq.s32.totalorder %s15, 1
    %p38 = por %p36, %p37
    %p40 = scmp.ne.s32.totalorder %s23, %s39
    %p41 = scmp.eq.s32.totalorder %s15, 0
    %p42 = por %p40, %p41
    %s44 = sadd.s32 %s43, 1
    %p47 = scmp.eq.s32.totalorder %s9, 1
    %p48 = scmp.ne.s32.totalorder %s43, %s45
    %p49 = scmp.eq.s32.totalorder %s9, 0
    %p50 = por %p48, %p49
    %p51 = scmp.ne.s32.totalorder %s43, %s45
    %p52 = scmp.eq.s32.totalorder %s14, 1
    %p53 = por %p51, %p52
    %p54 = scmp.ne.s32.totalorder %s45, %s46
    %p55 = scmp.eq.s32.totalorder %s14, 0
    %p56 = por %p54, %p55
    %p57 = scmp.ne.s32.totalorder %s45, %s46
    %p58 = scmp.eq.s32.totalorder %s15, 1
    %p59 = por %p57, %p58
    %p61 = scmp.ne.s32.totalorder %s46, %s60
    %p62 = scmp.eq.s32.totalorder %s15, 0
    %p63 = por %p61, %p62
    %s65 = sadd.s32 %s64, 1
    %p68 = scmp.eq.s32.totalorder %s9, 1
    %p69 = scmp.ne.s32.totalorder %s64, %s66
    %p70 = scmp.eq.s32.totalorder %s9, 0
    %p71 = por %p69, %p70
    %p72 = scmp.ne.s32.totalorder %s64, %s66
    %p73 = scmp.eq.s32.totalorder %s14, 1
    %p74 = por %p72, %p73
    %p75 = scmp.ne.s32.totalorder %s66, %s67
    %p76 = scmp.eq.s32.totalorder %s14, 0
    %p77 = por %p75, %p76
    %p78 = scmp.ne.s32.totalorder %s66, %s67
    %p79 = scmp.eq.s32.totalorder %s15, 1
    %p80 = por %p78, %p79
    %p82 = scmp.ne.s32.totalorder %s67, %s81
    %p83 = scmp.eq.s32.totalorder %s15, 0
    %p84 = por %p82, %p83
    %s85 = ssub.s32 %s9, %s16
    %p86 = scmp.eq.s32.totalorder %s85, 0
    %s88 = sadd.s32 %s87, 1
    %s89 = scalar_select %p86, %s87, %s88
    %p92 = pneg %p86
    %p93 = scmp.eq.s32.totalorder %s9, 1
    %p94 = por %p92, %p93
    %p95 = scmp.ne.s32.totalorder %s87, %s90
    %p96 = scmp.eq.s32.totalorder %s9, 0
    %p97 = por %p95, %p96
    %p98 = scmp.ne.s32.totalorder %s87, %s90
    %p99 = scmp.eq.s32.totalorder %s14, 1
    %p100 = por %p98, %p99
    %p101 = scmp.ne.s32.totalorder %s90, %s91
    %p102 = scmp.eq.s32.totalorder %s14, 0
    %p103 = por %p101, %p102
    %p104 = scmp.ne.s32.totalorder %s90, %s91
    %p105 = scmp.eq.s32.totalorder %s15, 1
    %p106 = por %p104, %p105
    %p108 = scmp.ne.s32.totalorder %s91, %s107
    %p109 = scmp.eq.s32.totalorder %s15, 0
    %p110 = por %p108, %p109
    %p111 = scmp.le.s32.totalorder 1, %s9
    %p112 = scmp.lt.s32.totalorder %s9, 3
    %p113 = pnand %p111, %p112
    %p114 = pneg %p113
    // Predicated region
    $region9: #{informer_forward.31} parent=5 // pred_check
      _
    $region10: #{informer_forward.31} parent=5 // pred_check_branch
      %116 = sbr.rel (%p113) target = $region12
    $region11: #{informer_forward.31} parent=5 // pred_region
      %s117 = ssub.s32 %s9, 1
      // Predicated region
      $region13: #{informer_forward.31} parent=11 // pred_check
        %p118 = pneg %p56
      $region14: #{informer_forward.31} parent=11 // pred_check_branch
        %120 = sbr.rel (%p118) target = $region16
      $region15: #{informer_forward.31} parent=11 // pred_region
        _
      $region16: #{informer_forward.31} parent=11 // pred_fallthru
        _
      // Predicated region
      $region17: #{informer_forward.31} parent=11 // pred_check
        %p121 = pneg %p77
      $region18: #{informer_forward.31} parent=11 // pred_check_branch
        %123 = sbr.rel (%p121) target = $region20
      $region19: #{informer_forward.31} parent=11 // pred_region
        _
      $region20: #{informer_forward.31} parent=11 // pred_fallthru
        _
    $region12: #{informer_forward.31} parent=5 // pred_fallthru
      _
    %p124 = scmp.lt.s32.totalorder %s9, 2
    // Predicated region
    $region21: #{informer_forward.31} parent=5 // pred_check
      %p125 = pneg %p124
    $region22: #{informer_forward.31} parent=5 // pred_check_branch
      %127 = sbr.rel (%p125) target = $region24
    $region23: #{informer_forward.31} parent=5 // pred_region
      // Predicated region
      $region25: #{informer_forward.31} parent=23 // pred_check
        %p128 = pneg %p29
      $region26: #{informer_forward.31} parent=23 // pred_check_branch
        %130 = sbr.rel (%p128) target = $region28
      $region27: #{informer_forward.31} parent=23 // pred_region
        %p131 = scmp.lt.s32.totalorder %s9, 1
        %s132 = scalar_select %p131, %s9, 1
        %s133 = smul.addr %s132, 2
        %s134 = smul.addr %s133, 4
        %s135 = scalar_lea.vmem %s0, %s134
      $region28: #{informer_forward.31} parent=23 // pred_fallthru
        _
    $region24: #{informer_forward.31} parent=5 // pred_fallthru
      _
    %p136 = scmp.le.s32.totalorder 1, %s9
    %p137 = scmp.lt.s32.totalorder %s9, 3
    %p138 = pnand %p136, %p137
    %p139 = pneg %p138
    // Predicated region
    $region29: #{informer_forward.31} parent=5 // pred_check
      _
    $region30: #{informer_forward.31} parent=5 // pred_check_branch
      %141 = sbr.rel (%p138) target = $region32
    $region31: #{informer_forward.31} parent=5 // pred_region
      %s142 = ssub.s32 %s9, 1
      %p143 = scmp.lt.s32.totalorder %s14, 1
      %s144 = scalar_select %p143, %s14, 1
      %s145 = smul.addr %s144, 2
      %s146 = smul.addr %s145, 4
      %s147 = scalar_lea.vmem %s0, %s146
      %p148 = pneg %p35
      %p149 = pneg %p32
      %p150 = pneg %p56
      %p151 = pneg %p53
      %p152 = pneg %p77
      %p153 = pneg %p74
      %p154 = pneg %p103
      %p155 = pneg %p100
      %p156 = scmp.lt.s32.totalorder %s14, 1
      %s157 = scalar_select %p156, %s14, 1
      %s158 = smul.addr %s157, 2
      %s159 = smul.addr %s158, 8
      %s160 = scalar_lea.vmem %s3, %s159
      %p161 = scmp.lt.s32.totalorder %s14, 1
      %s162 = scalar_select %p161, %s14, 1
      %s163 = smul.addr %s162, 2
      %s164 = smul.addr %s163, 4
      %s165 = scalar_lea.vmem %s0, %s164
      %p166 = scmp.lt.s32.totalorder %s14, 1
      %s167 = scalar_select %p166, %s14, 1
      %s168 = smul.addr %s167, 2
      %s169 = smul.addr %s168, 8
      %s170 = scalar_lea.vmem %s3, %s169
      %v172 = vld [vmem:[%s165] sm:$0xf]
      %v173 = vld [vmem:[%s165 + $0x4] sm:$0xf]
      %v174 = vld [vmem:[%s1] sm:$0xf]
      %v175 = vld [vmem:[%s1 + $0x4] sm:$0xf]
      %v176 = vld [vmem:[%s1 + $0x8] sm:$0xf]
      %v177 = vld [vmem:[%s1 + $0xc] sm:$0xf]
      %v180 = vunpack.c.l.b16 %v172
      %v181 = vunpack.c.l.b16 %v173
      %v182 = vpack.c.b16 %v181, %v180
      %v187 = vunpack.c.l.b16 %v174
      %v188 = vunpack.c.l.b16 %v175
      %v189 = vunpack.c.l.b16 %v176
      %v190 = vunpack.c.l.b16 %v177
      %v191 = vpack.c.b16 %v188, %v187
      %v192 = vpack.c.b16 %v190, %v189
      %vm195 = vcmask 261120
      %v197 = vsel %vm195, %v182, 0
      %199 = vmatprep.subr.bf16.mxu0 0
      %200 = vmatpush1.bf16.msra.mxu0 0
      %201 = vmatprep.subr.bf16.mxu0 0
      %202 = vmatpush1.bf16.msra.mxu0 0
      %203 = vmatprep.subr.bf16.mxu0 0
      %204 = vmatpush1.bf16.msra.mxu0 0
      %205 = vmatprep.subr.bf16.mxu0 0
      %206 = vmatpush1.bf16.msra.mxu0 0
      %207 = vmatprep.subr.bf16.mxu0 0
      %208 = vmatpush1.bf16.msra.mxu0 0
      %209 = vmatprep.subr.bf16.mxu0 0
      %210 = vmatpush1.bf16.msra.mxu0 0
      %211 = vmatprep.subr.bf16.mxu0 0
      %212 = vmatpush1.bf16.msra.mxu0 %v192
      %213 = vmatprep.subr.bf16.mxu0 0
      %214 = vmatpush1.bf16.msra.mxu0 %v191
      %215 = vmatprep.subr.bf16.mxu0 0
      %216 = vmatpush2.bf16.msra.mxu0 0
      %217 = vmatprep.subr.bf16.mxu0 0
      %218 = vmatpush2.bf16.msra.mxu0 0
      %219 = vmatprep.subr.bf16.mxu0 0
      %220 = vmatpush2.bf16.msra.mxu0 0
      %221 = vmatprep.subr.bf16.mxu0 0
      %222 = vmatpush2.bf16.msra.mxu0 0
      %223 = vmatprep.subr.bf16.mxu0 0
      %224 = vmatpush2.bf16.msra.mxu0 0
      %225 = vmatprep.subr.bf16.mxu0 0
      %226 = vmatpush2.bf16.msra.mxu0 0
      %227 = vmatprep.subr.bf16.mxu0 0
      %228 = vmatpush2.bf16.msra.mxu0 0
      %229 = vmatprep.subr.bf16.mxu0 0
      %230 = vmatpush2.bf16.msra.mxu0 0
      %231 = vmatprep.mubr.bf16.mxu0 0
      %232 = vmatmul.mubr.bf16.gmra.mxu0 %v197
      %v233 = vpop.f32.mrf.mxu0
      %v234 = vadd.f32 0.0, %v233
      %v235 = vpop.f32.mrf.mxu0
      %v236 = vpop.f32.mrf.mxu0
      %v237 = vadd.f32 0.0, %v236
      %v238 = vpop.f32.mrf.mxu0
      %239 = vdwg.mxu0
      %s240 = scalar_lea.vmem %s1, 16
      %v241 = vld [vmem:[%s240] sm:$0xf]
      %v242 = vld [vmem:[%s240 + $0x4] sm:$0xf]
      %v243 = vld [vmem:[%s240 + $0x8] sm:$0xf]
      %v244 = vld [vmem:[%s240 + $0xc] sm:$0xf]
      %v249 = vunpack.c.l.b16 %v241
      %v250 = vunpack.c.l.b16 %v242
      %v251 = vunpack.c.l.b16 %v243
      %v252 = vunpack.c.l.b16 %v244
      %v253 = vpack.c.b16 %v250, %v249
      %v254 = vpack.c.b16 %v252, %v251
      %257 = vmatprep.subr.bf16.mxu0 0
      %258 = vmatpush1.bf16.msra.mxu0 0
      %259 = vmatprep.subr.bf16.mxu0 0
      %260 = vmatpush1.bf16.msra.mxu0 0
      %261 = vmatprep.subr.bf16.mxu0 0
      %262 = vmatpush1.bf16.msra.mxu0 0
      %263 = vmatprep.subr.bf16.mxu0 0
      %264 = vmatpush1.bf16.msra.mxu0 0
      %265 = vmatprep.subr.bf16.mxu0 0
      %266 = vmatpush1.bf16.msra.mxu0 0
      %267 = vmatprep.subr.bf16.mxu0 0
      %268 = vmatpush1.bf16.msra.mxu0 0
      %269 = vmatprep.subr.bf16.mxu0 0
      %270 = vmatpush1.bf16.msra.mxu0 %v254
      %271 = vmatprep.subr.bf16.mxu0 0
      %272 = vmatpush1.bf16.msra.mxu0 %v253
      %273 = vmatprep.subr.bf16.mxu0 0
      %274 = vmatpush2.bf16.msra.mxu0 0
      %275 = vmatprep.subr.bf16.mxu0 0
      %276 = vmatpush2.bf16.msra.mxu0 0
      %277 = vmatprep.subr.bf16.mxu0 0
      %278 = vmatpush2.bf16.msra.mxu0 0
      %279 = vmatprep.subr.bf16.mxu0 0
      %280 = vmatpush2.bf16.msra.mxu0 0
      %281 = vmatprep.subr.bf16.mxu0 0
      %282 = vmatpush2.bf16.msra.mxu0 0
      %283 = vmatprep.subr.bf16.mxu0 0
      %284 = vmatpush2.bf16.msra.mxu0 0
      %285 = vmatprep.subr.bf16.mxu0 0
      %286 = vmatpush2.bf16.msra.mxu0 0
      %287 = vmatprep.subr.bf16.mxu0 0
      %288 = vmatpush2.bf16.msra.mxu0 0
      %289 = vmatprep.mubr.bf16.mxu0 0
      %290 = vmatmul.mubr.bf16.gmra.mxu0 %v197
      %v291 = vpop.f32.mrf.mxu0
      %v292 = vadd.f32 0.0, %v291
      %v293 = vpop.f32.mrf.mxu0
      %v294 = vpop.f32.mrf.mxu0
      %v295 = vadd.f32 0.0, %v294
      %v296 = vpop.f32.mrf.mxu0
      %297 = vdwg.mxu0
      %s298 = scalar_lea.vmem %s1, 32
      %v299 = vld [vmem:[%s298] sm:$0xf]
      %v300 = vld [vmem:[%s298 + $0x4] sm:$0xf]
      %v301 = vld [vmem:[%s298 + $0x8] sm:$0xf]
      %v302 = vld [vmem:[%s298 + $0xc] sm:$0xf]
      %v307 = vunpack.c.l.b16 %v299
      %v308 = vunpack.c.l.b16 %v300
      %v309 = vunpack.c.l.b16 %v301
      %v310 = vunpack.c.l.b16 %v302
      %v311 = vpack.c.b16 %v308, %v307
      %v312 = vpack.c.b16 %v310, %v309
      %315 = vmatprep.subr.bf16.mxu0 0
      %316 = vmatpush1.bf16.msra.mxu0 0
      %317 = vmatprep.subr.bf16.mxu0 0
      %318 = vmatpush1.bf16.msra.mxu0 0
      %319 = vmatprep.subr.bf16.mxu0 0
      %320 = vmatpush1.bf16.msra.mxu0 0
      %321 = vmatprep.subr.bf16.mxu0 0
      %322 = vmatpush1.bf16.msra.mxu0 0
      %323 = vmatprep.subr.bf16.mxu0 0
      %324 = vmatpush1.bf16.msra.mxu0 0
      %325 = vmatprep.subr.bf16.mxu0 0
      %326 = vmatpush1.bf16.msra.mxu0 0
      %327 = vmatprep.subr.bf16.mxu0 0
      %328 = vmatpush1.bf16.msra.mxu0 %v312
      %329 = vmatprep.subr.bf16.mxu0 0
      %330 = vmatpush1.bf16.msra.mxu0 %v311
      %331 = vmatprep.subr.bf16.mxu0 0
      %332 = vmatpush2.bf16.msra.mxu0 0
      %333 = vmatprep.subr.bf16.mxu0 0
      %334 = vmatpush2.bf16.msra.mxu0 0
      %335 = vmatprep.subr.bf16.mxu0 0
      %336 = vmatpush2.bf16.msra.mxu0 0
      %337 = vmatprep.subr.bf16.mxu0 0
      %338 = vmatpush2.bf16.msra.mxu0 0
      %339 = vmatprep.subr.bf16.mxu0 0
      %340 = vmatpush2.bf16.msra.mxu0 0
      %341 = vmatprep.subr.bf16.mxu0 0
      %342 = vmatpush2.bf16.msra.mxu0 0
      %343 = vmatprep.subr.bf16.mxu0 0
      %344 = vmatpush2.bf16.msra.mxu0 0
      %345 = vmatprep.subr.bf16.mxu0 0
      %346 = vmatpush2.bf16.msra.mxu0 0
      %347 = vmatprep.mubr.bf16.mxu0 0
      %348 = vmatmul.mubr.bf16.gmra.mxu0 %v197
      %v349 = vpop.f32.mrf.mxu0
      %v350 = vadd.f32 0.0, %v349
      %v351 = vpop.f32.mrf.mxu0
      %v352 = vpop.f32.mrf.mxu0
      %v353 = vadd.f32 0.0, %v352
      %v354 = vpop.f32.mrf.mxu0
      %355 = vdwg.mxu0
      %v356 = vrot.slane %v234, 7
      %v357 = vrot.slane %v237, 7
      %v358 = vlaneseq
      %v359 = vshrl.u32 %v358, 7
      %vm360 = vcmp.lt.s32.totalorder %v359, 1
      %v361 = vsel %vm360, %v356, %v357
      %v362 = vsel %vm360, %v357, %v356
      %v363 = vadd.f32 %v362, %v292
      %v364 = vadd.f32 %v361, %v295
      %v365 = vrot.slane %v350, 1
      %v366 = vrot.slane %v353, 1
      %vm367 = vcmp.lt.s32.totalorder %v359, 7
      %v368 = vsel %vm367, %v365, %v366
      %v369 = vsel %vm367, %v366, %v365
      %v370 = vadd.f32 %v363, %v368
      %v371 = vadd.f32 %v364, %v369
      %v372 = vld [vmem:[%s2] sm:$0x1]
      %v374 = vlaneseq
      %v375 = vshrl.u32 %v374, 7
      %v376 = vsub.s32 0, %v375
      %v377 = vrot.slane %v372, %v376
      %v379 = vadd.f32 %v370, %v377
      %v380 = vadd.f32 %v371, %v377
      %381 = vst.msk [vmem:[%s170] sm:$0xff] %vm195, %v379
      %382 = vst.msk [vmem:[%s170 + $0x8] sm:$0xff] %vm195, %v380
      %p383 = scmp.lt.s32.totalorder %s14, 1
      %s384 = scalar_select %p383, %s14, 1
      %s385 = smul.addr %s384, 2
      %s386 = smul.addr %s385, 8
      %s387 = scalar_lea.vmem %s3, %s386
      // Predicated region
      $region33: #{informer_forward.31} parent=31 // pred_check
        %p388 = pneg %p100
      $region34: #{informer_forward.31} parent=31 // pred_check_branch
        %390 = sbr.rel (%p388) target = $region36
      $region35: #{informer_forward.31} parent=31 // pred_region
        _
      $region36: #{informer_forward.31} parent=31 // pred_fallthru
        _
    $region32: #{informer_forward.31} parent=5 // pred_fallthru
      _
    %p391 = scmp.le.s32.totalorder 2, %s9
    // Predicated region
    $region37: #{informer_forward.31} parent=5 // pred_check
      %p392 = pneg %p391
    $region38: #{informer_forward.31} parent=5 // pred_check_branch
      %394 = sbr.rel (%p392) target = $region40
    $region39: #{informer_forward.31} parent=5 // pred_region
      %s395 = ssub.s32 %s9, 2
      // Predicated region
      $region41: #{informer_forward.31} parent=39 // pred_check
        %p396 = pneg %p106
      $region42: #{informer_forward.31} parent=39 // pred_check_branch
        %398 = sbr.rel (%p396) target = $region44
      $region43: #{informer_forward.31} parent=39 // pred_region
        %p399 = scmp.lt.s32.totalorder %s15, 1
        %s400 = scalar_select %p399, %s15, 1
        %s401 = smul.addr %s400, 2
        %s402 = smul.addr %s401, 8
        %s403 = scalar_lea.vmem %s3, %s402
      $region44: #{informer_forward.31} parent=39 // pred_fallthru
        _
    $region40: #{informer_forward.31} parent=5 // pred_fallthru
      _
  $region6: #{informer_forward.31} parent=0 // loop_footer
    %s13 = sadd.s32 1, %s9
  $region7: #{informer_forward.31} parent=0 // loop_footer_branch
    %8 = sbr.rel target = $region3
  $region8: #{informer_forward.31} parent=0 // loop_exit
    _

// kernel: informer_forward.29
$region0: #{informer_forward.29}
  #allocation0 [shape = 'u32[]', space=smem, size = 0x4, offset = 0x4, fixed_abs, tag = 'smem constant byte address 0x4 - core index']
  #allocation1 [shape = 'u32[144,128]{1,0:T(1,128)}', space=vmem, size = 0x12000, scoped, tag = 'internal scratch']
  #allocation2 [shape = 'f32[32,32]{1,0:T(8,128)}', space=vmem, size = 0x4000, scoped, tag = 'scratch operand']
  %s0 = inlined_call_operand.vmem [shape: bf16[32,32], index: 0, kind: input, shape index: {}]
  %s1 = inlined_call_operand.vmem [shape: bf16[32,32], index: 1, kind: input, shape index: {}]
  %s2 = inlined_call_operand.vmem [shape: f32[1,32], index: 2, kind: input, shape index: {}]
  %s3 = inlined_call_operand.vmem [shape: bf16[32,32], index: 3, kind: output, shape index: {}]
  %s4 = sld [smem:[#allocation0]]
  $region30: #{informer_forward.29} parent=0
    _
  %s6 = ssub.s32 1, %s4
  %s7 = scalar_select 0, %s6, %s4
  // Predicated region
  $region2: #{informer_forward.29} parent=0 // pred_check
    _
  $region3: #{informer_forward.29} parent=0 // pred_check_branch
    %9 = sbr.rel (0) target = $region5
  $region4: #{informer_forward.29} parent=0 // pred_region
    _
  $region5: #{informer_forward.29} parent=0 // pred_fallthru
    _
  // Predicated region
  $region6: #{informer_forward.29} parent=0 // pred_check
    _
  $region7: #{informer_forward.29} parent=0 // pred_check_branch
    %11 = sbr.rel (0) target = $region9
  $region8: #{informer_forward.29} parent=0 // pred_region
    _
  $region9: #{informer_forward.29} parent=0 // pred_fallthru
    _
  // Predicated region
  $region10: #{informer_forward.29} parent=0 // pred_check
    _
  $region11: #{informer_forward.29} parent=0 // pred_check_branch
    %13 = sbr.rel (0) target = $region13
  $region12: #{informer_forward.29} parent=0 // pred_region
    _
  $region13: #{informer_forward.29} parent=0 // pred_fallthru
    _
  %p15 = scmp.eq.s32.totalorder 0, 0
  // Predicated region
  $region14: #{informer_forward.29} parent=0 // pred_check
    %p16 = pneg %p15
  $region15: #{informer_forward.29} parent=0 // pred_check_branch
    %18 = sbr.rel (%p16) target = $region17
  $region16: #{informer_forward.29} parent=0 // pred_region
    %vm19 = vcmask 261120
    %20 = vst.msk [vmem:[#allocation2] sm:$0xff] %vm19, 0.0
    %21 = vst.msk [vmem:[#allocation2 + $0x8] sm:$0xff] %vm19, 0.0
    %22 = vst.msk [vmem:[#allocation2 + $0x10] sm:$0xff] %vm19, 0.0
    %23 = vst.msk [vmem:[#allocation2 + $0x18] sm:$0xff] %vm19, 0.0
  $region17: #{informer_forward.29} parent=0 // pred_fallthru
    _
  %v24 = vld [vmem:[#allocation2] sm:$0xff]
  %v25 = vld [vmem:[#allocation2 + $0x8] sm:$0xff]
  %v26 = vld [vmem:[#allocation2 + $0x10] sm:$0xff]
  %v27 = vld [vmem:[#allocation2 + $0x18] sm:$0xff]
  %v28 = vld [vmem:[%s0] sm:$0xf]
  %v29 = vld [vmem:[%s0 + $0x4] sm:$0xf]
  %v30 = vld [vmem:[%s0 + $0x8] sm:$0xf]
  %v31 = vld [vmem:[%s0 + $0xc] sm:$0xf]
  %v32 = vld [vmem:[%s1] sm:$0xf]
  %v33 = vld [vmem:[%s1 + $0x4] sm:$0xf]
  %v34 = vld [vmem:[%s1 + $0x8] sm:$0xf]
  %v35 = vld [vmem:[%s1 + $0xc] sm:$0xf]
  %v40 = vunpack.c.l.b16 %v28
  %v41 = vunpack.c.l.b16 %v29
  %v42 = vunpack.c.l.b16 %v30
  %v43 = vunpack.c.l.b16 %v31
  %v44 = vpack.c.b16 %v41, %v40
  %v45 = vpack.c.b16 %v43, %v42
  %v50 = vunpack.c.l.b16 %v32
  %v51 = vunpack.c.l.b16 %v33
  %v52 = vunpack.c.l.b16 %v34
  %v53 = vunpack.c.l.b16 %v35
  %v54 = vpack.c.b16 %v51, %v50
  %v55 = vpack.c.b16 %v53, %v52
  %vm58 = vcmask 261120
  %v60 = vsel %vm58, %v44, 0
  %v63 = vsel %vm58, %v45, 0
  %65 = vmatprep.subr.bf16.mxu0 0
  %66 = vmatpush1.bf16.msra.mxu0 0
  %67 = vmatprep.subr.bf16.mxu0 0
  %68 = vmatpush1.bf16.msra.mxu0 0
  %69 = vmatprep.subr.bf16.mxu0 0
  %70 = vmatpush1.bf16.msra.mxu0 0
  %71 = vmatprep.subr.bf16.mxu0 0
  %72 = vmatpush1.bf16.msra.mxu0 0
  %73 = vmatprep.subr.bf16.mxu0 0
  %74 = vmatpush1.bf16.msra.mxu0 0
  %75 = vmatprep.subr.bf16.mxu0 0
  %76 = vmatpush1.bf16.msra.mxu0 0
  %77 = vmatprep.subr.bf16.mxu0 0
  %78 = vmatpush1.bf16.msra.mxu0 %v55
  %79 = vmatprep.subr.bf16.mxu0 0
  %80 = vmatpush1.bf16.msra.mxu0 %v54
  %81 = vmatprep.subr.bf16.mxu0 0
  %82 = vmatpush2.bf16.msra.mxu0 0
  %83 = vmatprep.subr.bf16.mxu0 0
  %84 = vmatpush2.bf16.msra.mxu0 0
  %85 = vmatprep.subr.bf16.mxu0 0
  %86 = vmatpush2.bf16.msra.mxu0 0
  %87 = vmatprep.subr.bf16.mxu0 0
  %88 = vmatpush2.bf16.msra.mxu0 0
  %89 = vmatprep.subr.bf16.mxu0 0
  %90 = vmatpush2.bf16.msra.mxu0 0
  %91 = vmatprep.subr.bf16.mxu0 0
  %92 = vmatpush2.bf16.msra.mxu0 0
  %93 = vmatprep.subr.bf16.mxu0 0
  %94 = vmatpush2.bf16.msra.mxu0 0
  %95 = vmatprep.subr.bf16.mxu0 0
  %96 = vmatpush2.bf16.msra.mxu0 0
  %97 = vmatprep.mubr.bf16.mxu0 0
  %98 = vmatmul.mubr.bf16.gmra.mxu0 %v60
  %v99 = vpop.f32.mrf.mxu0
  %v100 = vadd.f32 0.0, %v99
  %v101 = vpop.f32.mrf.mxu0
  %v102 = vpop.f32.mrf.mxu0
  %v103 = vadd.f32 0.0, %v102
  %v104 = vpop.f32.mrf.mxu0
  %105 = vmatprep.mubr.bf16.mxu0 0
  %106 = vmatmul.mubr.bf16.gmra.mxu0 %v63
  %v107 = vpop.f32.mrf.mxu0
  %v108 = vadd.f32 0.0, %v107
  %v109 = vpop.f32.mrf.mxu0
  %v110 = vpop.f32.mrf.mxu0
  %v111 = vadd.f32 0.0, %v110
  %v112 = vpop.f32.mrf.mxu0
  %113 = vdwg.mxu0
  %v114 = vadd.f32 %v24, %v100
  %v115 = vadd.f32 %v25, %v103
  %v116 = vadd.f32 %v26, %v108
  %v117 = vadd.f32 %v27, %v111
  %118 = vst.msk [vmem:[#allocation2] sm:$0xff] %vm58, %v114
  %119 = vst.msk [vmem:[#allocation2 + $0x8] sm:$0xff] %vm58, %v115
  %120 = vst.msk [vmem:[#allocation2 + $0x10] sm:$0xff] %vm58, %v116
  %121 = vst.msk [vmem:[#allocation2 + $0x18] sm:$0xff] %vm58, %v117
  // Predicated region
  $region18: #{informer_forward.29} parent=0 // pred_check
    %p122 = pneg %p15
  $region19: #{informer_forward.29} parent=0 // pred_check_branch
    %124 = sbr.rel (%p122) target = $region21
  $region20: #{informer_forward.29} parent=0 // pred_region
    %v125 = vld [vmem:[#allocation2] sm:$0xff]
    %v126 = vld [vmem:[#allocation2 + $0x8] sm:$0xff]
    %v127 = vld [vmem:[#allocation2 + $0x10] sm:$0xff]
    %v128 = vld [vmem:[#allocation2 + $0x18] sm:$0xff]
    %v129 = vld [vmem:[%s2] sm:$0x1]
    %v131 = vlaneseq
    %v132 = vshrl.u32 %v131, 7
    %v133 = vsub.s32 0, %v132
    %v134 = vrot.slane %v129, %v133
    %v136 = vadd.f32 %v125, %v134
    %v137 = vadd.f32 %v126, %v134
    %v138 = vadd.f32 %v127, %v134
    %v139 = vadd.f32 %v128, %v134
    %v140 = vmul.f32 %v136, 0.5
    %v141 = vmul.f32 %v137, 0.5
    %v142 = vmul.f32 %v138, 0.5
    %v143 = vmul.f32 %v139, 0.5
    %v144 = vmul.f32 %v136, 0.70710677
    %v145 = vmul.f32 %v137, 0.70710677
    %v146 = vmul.f32 %v138, 0.70710677
    %v147 = vmul.f32 %v139, 0.70710677
    %v148 = vand.u32 2147483647, %v144
    %v149 = vand.u32 2147483647, %v145
    %v150 = vand.u32 2147483647, %v146
    %v151 = vand.u32 2147483647, %v147
    %v152 = vmul.f32 %v148, 0.3275911
    %v153 = vmul.f32 %v149, 0.3275911
    %v154 = vmul.f32 %v150, 0.3275911
    %v155 = vmul.f32 %v151, 0.3275911
    %v156 = vadd.f32 %v152, 1.0
    %v157 = vadd.f32 %v153, 1.0
    %v158 = vadd.f32 %v154, 1.0
    %v159 = vadd.f32 %v155, 1.0
    %v160 = vrcp.pop %v156
    %v161 = vmul.f32 1.0, %v160
    %v162 = vrcp.pop %v157
    %v163 = vmul.f32 1.0, %v162
    %v164 = vrcp.pop %v158
    %v165 = vmul.f32 1.0, %v164
    %v166 = vrcp.pop %v159
    %v167 = vmul.f32 1.0, %v166
    %v168 = vmul.f32 %v161, 1.0614054
    %v169 = vmul.f32 %v163, 1.0614054
    %v170 = vmul.f32 %v165, 1.0614054
    %v171 = vmul.f32 %v167, 1.0614054
    %v172 = vadd.f32 %v168, -1.4531521
    %v173 = vadd.f32 %v169, -1.4531521
    %v174 = vadd.f32 %v170, -1.4531521
    %v175 = vadd.f32 %v171, -1.4531521
    %v176 = vmul.f32 %v172, %v161
    %v177 = vmul.f32 %v173, %v163
    %v178 = vmul.f32 %v174, %v165
    %v179 = vmul.f32 %v175, %v167
    %v180 = vadd.f32 %v176, 1.4214138
    %v181 = vadd.f32 %v177, 1.4214138
    %v182 = vadd.f32 %v178, 1.4214138
    %v183 = vadd.f32 %v179, 1.4214138
    %v184 = vmul.f32 %v180, %v161
    %v185 = vmul.f32 %v181, %v163
    %v186 = vmul.f32 %v182, %v165
    %v187 = vmul.f32 %v183, %v167
    %v188 = vadd.f32 %v184, -0.28449672
    %v189 = vadd.f32 %v185, -0.28449672
    %v190 = vadd.f32 %v186, -0.28449672
    %v191 = vadd.f32 %v187, -0.28449672
    %v192 = vmul.f32 %v188, %v161
    %v193 = vmul.f32 %v189, %v163
    %v194 = vmul.f32 %v190, %v165
    %v195 = vmul.f32 %v191, %v167
    %v196 = vadd.f32 %v192, 0.2548296
    %v197 = vadd.f32 %v193, 0.2548296
    %v198 = vadd.f32 %v194, 0.2548296
    %v199 = vadd.f32 %v195, 0.2548296
    %v200 = vmul.f32 %v196, %v161
    %v201 = vmul.f32 %v197, %v163
    %v202 = vmul.f32 %v198, %v165
    %v203 = vmul.f32 %v199, %v167
    %v204 = vsub.f32 0.0, %v148
    %v205 = vsub.f32 0.0, %v149
    %v206 = vsub.f32 0.0, %v150
    %v207 = vsub.f32 0.0, %v151
    %v208 = vmul.f32 %v204, %v148
    %v209 = vmul.f32 %v205, %v149
    %v210 = vmul.f32 %v206, %v150
    %v211 = vmul.f32 %v207, %v151
    %v212 = vmul.f32 %v208, 1.442695
    %v213 = vpow.pop %v212
    %v214 = vmul.f32 %v209, 1.442695
    %v215 = vpow.pop %v214
    %v216 = vmul.f32 %v210, 1.442695
    %v217 = vpow.pop %v216
    %v218 = vmul.f32 %v211, 1.442695
    %v219 = vpow.pop %v218
    %v220 = vmul.f32 %v200, %v213
    %v221 = vmul.f32 %v201, %v215
    %v222 = vmul.f32 %v202, %v217
    %v223 = vmul.f32 %v203, %v219
    %v224 = vsub.f32 1.0, %v220
    %v225 = vsub.f32 1.0, %v221
    %v226 = vsub.f32 1.0, %v222
    %v227 = vsub.f32 1.0, %v223
    %vm228 = vcmp.ge.f32.partialorder %v144, 0.0
    %vm229 = vcmp.ge.f32.partialorder %v145, 0.0
    %vm230 = vcmp.ge.f32.partialorder %v146, 0.0
    %vm231 = vcmp.ge.f32.partialorder %v147, 0.0
    %v232 = vsub.f32 0.0, %v224
    %v233 = vsub.f32 0.0, %v225
    %v234 = vsub.f32 0.0, %v226
    %v235 = vsub.f32 0.0, %v227
    %v236 = vsel %vm228, %v224, %v232
    %v237 = vsel %vm229, %v225, %v233
    %v238 = vsel %vm230, %v226, %v234
    %v239 = vsel %vm231, %v227, %v235
    %v240 = vadd.f32 %v236, 1.0
    %v241 = vadd.f32 %v237, 1.0
    %v242 = vadd.f32 %v238, 1.0
    %v243 = vadd.f32 %v239, 1.0
    %v244 = vmul.f32 %v140, %v240
    %v245 = vmul.f32 %v141, %v241
    %v246 = vmul.f32 %v142, %v242
    %v247 = vmul.f32 %v143, %v243
    %v248 = vpack.c.bf16 %v245, %v244
    %v249 = vpack.c.bf16 %v247, %v246
    %v252 = vunpack.c.l.b16 %v248
    %v253 = vunpack.c.h.b16 %v248
    %v254 = vunpack.c.l.b16 %v249
    %v255 = vunpack.c.h.b16 %v249
    %v256 = vpack.c.b16 %v252, %v252
    %v257 = vpack.c.b16 %v253, %v253
    %v258 = vpack.c.b16 %v254, %v254
    %v259 = vpack.c.b16 %v255, %v255
    %vm264 = vcmask 257024
    %265 = vst.msk [vmem:[%s3] sm:$0xf] %vm264, %v256
    %266 = vst.msk [vmem:[%s3 + $0x4] sm:$0xf] %vm264, %v257
    %267 = vst.msk [vmem:[%s3 + $0x8] sm:$0xf] %vm264, %v258
    %268 = vst.msk [vmem:[%s3 + $0xc] sm:$0xf] %vm264, %v259
  $region21: #{informer_forward.29} parent=0 // pred_fallthru
    _
  // Predicated region
  $region22: #{informer_forward.29} parent=0 // pred_check
    _
  $region23: #{informer_forward.29} parent=0 // pred_check_branch
    %270 = sbr.rel (0) target = $region25
  $region24: #{informer_forward.29} parent=0 // pred_region
    _
  $region25: #{informer_forward.29} parent=0 // pred_fallthru
    _
  // Predicated region
  $region26: #{informer_forward.29} parent=0 // pred_check
    _
  $region27: #{informer_forward.29} parent=0 // pred_check_branch
    %272 = sbr.rel (0) target = $region29
  $region28: #{informer_forward.29} parent=0 // pred_region
    _
  $region29: #{informer_forward.29} parent=0 // pred_fallthru
    _

// kernel: informer_forward.32
$region0: #{informer_forward.32}
  #allocation0 [shape = 'u32[]', space=smem, size = 0x4, offset = 0x4, fixed_abs, tag = 'smem constant byte address 0x4 - core index']
  #allocation1 [shape = 'u32[144,128]{1,0:T(1,128)}', space=vmem, size = 0x12000, scoped, tag = 'internal scratch']
  #allocation2 [shape = 'f32[16,96]{1,0:T(8,128)}', space=vmem, size = 0x2000, scoped, tag = 'scratch operand']
  %s0 = inlined_call_operand.vmem [shape: bf16[16,32], index: 0, kind: input, shape index: {}]
  %s1 = inlined_call_operand.vmem [shape: bf16[32,96], index: 1, kind: input, shape index: {}]
  %s2 = inlined_call_operand.vmem [shape: f32[1,96], index: 2, kind: input, shape index: {}]
  %s3 = inlined_call_operand.vmem [shape: bf16[16,96], index: 3, kind: output, shape index: {}]
  %s4 = sld [smem:[#allocation0]]
  $region30: #{informer_forward.32} parent=0
    _
  %s6 = ssub.s32 1, %s4
  %s7 = scalar_select 0, %s6, %s4
  // Predicated region
  $region2: #{informer_forward.32} parent=0 // pred_check
    _
  $region3: #{informer_forward.32} parent=0 // pred_check_branch
    %9 = sbr.rel (0) target = $region5
  $region4: #{informer_forward.32} parent=0 // pred_region
    _
  $region5: #{informer_forward.32} parent=0 // pred_fallthru
    _
  // Predicated region
  $region6: #{informer_forward.32} parent=0 // pred_check
    _
  $region7: #{informer_forward.32} parent=0 // pred_check_branch
    %11 = sbr.rel (0) target = $region9
  $region8: #{informer_forward.32} parent=0 // pred_region
    _
  $region9: #{informer_forward.32} parent=0 // pred_fallthru
    _
  // Predicated region
  $region10: #{informer_forward.32} parent=0 // pred_check
    _
  $region11: #{informer_forward.32} parent=0 // pred_check_branch
    %13 = sbr.rel (0) target = $region13
  $region12: #{informer_forward.32} parent=0 // pred_region
    _
  $region13: #{informer_forward.32} parent=0 // pred_fallthru
    _
  %p15 = scmp.eq.s32.totalorder 0, 0
  // Predicated region
  $region14: #{informer_forward.32} parent=0 // pred_check
    %p16 = pneg %p15
  $region15: #{informer_forward.32} parent=0 // pred_check_branch
    %18 = sbr.rel (%p16) target = $region17
  $region16: #{informer_forward.32} parent=0 // pred_region
    %vm19 = vcmask 785408
    %20 = vst.msk [vmem:[#allocation2] sm:$0xff] %vm19, 0.0
    %21 = vst.msk [vmem:[#allocation2 + $0x8] sm:$0xff] %vm19, 0.0
  $region17: #{informer_forward.32} parent=0 // pred_fallthru
    _
  %v22 = vld [vmem:[#allocation2] sm:$0xff]
  %v23 = vld [vmem:[#allocation2 + $0x8] sm:$0xff]
  %v24 = vld [vmem:[%s0] sm:$0xf]
  %v25 = vld [vmem:[%s0 + $0x4] sm:$0xf]
  %v26 = vld [vmem:[%s1] sm:$0xf]
  %v27 = vld [vmem:[%s1 + $0x4] sm:$0xf]
  %v28 = vld [vmem:[%s1 + $0x8] sm:$0xf]
  %v29 = vld [vmem:[%s1 + $0xc] sm:$0xf]
  %v32 = vunpack.c.l.b16 %v24
  %v33 = vunpack.c.l.b16 %v25
  %v34 = vpack.c.b16 %v33, %v32
  %v39 = vunpack.c.l.b16 %v26
  %v40 = vunpack.c.l.b16 %v27
  %v41 = vunpack.c.l.b16 %v28
  %v42 = vunpack.c.l.b16 %v29
  %v43 = vpack.c.b16 %v40, %v39
  %v44 = vpack.c.b16 %v42, %v41
  %vm47 = vcmask 261120
  %v49 = vsel %vm47, %v34, 0
  %51 = vmatprep.subr.bf16.mxu0 0
  %52 = vmatpush1.bf16.msra.mxu0 0
  %53 = vmatprep.subr.bf16.mxu0 0
  %54 = vmatpush1.bf16.msra.mxu0 0
  %55 = vmatprep.subr.bf16.mxu0 0
  %56 = vmatpush1.bf16.msra.mxu0 0
  %57 = vmatprep.subr.bf16.mxu0 0
  %58 = vmatpush1.bf16.msra.mxu0 0
  %59 = vmatprep.subr.bf16.mxu0 0
  %60 = vmatpush1.bf16.msra.mxu0 0
  %61 = vmatprep.subr.bf16.mxu0 0
  %62 = vmatpush1.bf16.msra.mxu0 0
  %63 = vmatprep.subr.bf16.mxu0 0
  %64 = vmatpush1.bf16.msra.mxu0 %v44
  %65 = vmatprep.subr.bf16.mxu0 0
  %66 = vmatpush1.bf16.msra.mxu0 %v43
  %67 = vmatprep.subr.bf16.mxu0 0
  %68 = vmatpush2.bf16.msra.mxu0 0
  %69 = vmatprep.subr.bf16.mxu0 0
  %70 = vmatpush2.bf16.msra.mxu0 0
  %71 = vmatprep.subr.bf16.mxu0 0
  %72 = vmatpush2.bf16.msra.mxu0 0
  %73 = vmatprep.subr.bf16.mxu0 0
  %74 = vmatpush2.bf16.msra.mxu0 0
  %75 = vmatprep.subr.bf16.mxu0 0
  %76 = vmatpush2.bf16.msra.mxu0 0
  %77 = vmatprep.subr.bf16.mxu0 0
  %78 = vmatpush2.bf16.msra.mxu0 0
  %79 = vmatprep.subr.bf16.mxu0 0
  %80 = vmatpush2.bf16.msra.mxu0 0
  %81 = vmatprep.subr.bf16.mxu0 0
  %82 = vmatpush2.bf16.msra.mxu0 0
  %83 = vmatprep.mubr.bf16.mxu0 0
  %84 = vmatmul.mubr.bf16.gmra.mxu0 %v49
  %v85 = vpop.f32.mrf.mxu0
  %v86 = vadd.f32 0.0, %v85
  %v87 = vpop.f32.mrf.mxu0
  %v88 = vpop.f32.mrf.mxu0
  %v89 = vadd.f32 0.0, %v88
  %v90 = vpop.f32.mrf.mxu0
  %91 = vdwg.mxu0
  %v92 = vadd.f32 %v22, %v86
  %v93 = vadd.f32 %v23, %v89
  %vm94 = vcmask 785408
  %95 = vst.msk [vmem:[#allocation2] sm:$0xff] %vm94, %v92
  %96 = vst.msk [vmem:[#allocation2 + $0x8] sm:$0xff] %vm94, %v93
  // Predicated region
  $region18: #{informer_forward.32} parent=0 // pred_check
    %p97 = pneg %p15
  $region19: #{informer_forward.32} parent=0 // pred_check_branch
    %99 = sbr.rel (%p97) target = $region21
  $region20: #{informer_forward.32} parent=0 // pred_region
    %v100 = vld [vmem:[#allocation2] sm:$0xff]
    %v101 = vld [vmem:[#allocation2 + $0x8] sm:$0xff]
    %v102 = vld [vmem:[%s2] sm:$0x1]
    %v104 = vlaneseq
    %v105 = vshrl.u32 %v104, 7
    %v106 = vsub.s32 0, %v105
    %v107 = vrot.slane %v102, %v106
    %v109 = vadd.f32 %v100, %v107
    %v110 = vadd.f32 %v101, %v107
    %v111 = vpack.c.bf16 %v110, %v109
    %v113 = vunpack.c.l.b16 %v111
    %v114 = vunpack.c.h.b16 %v111
    %v115 = vpack.c.b16 %v113, %v113
    %v116 = vpack.c.b16 %v114, %v114
    %vm119 = vcmask 781312
    %120 = vst.msk [vmem:[%s3] sm:$0xf] %vm119, %v115
    %121 = vst.msk [vmem:[%s3 + $0x4] sm:$0xf] %vm119, %v116
  $region21: #{informer_forward.32} parent=0 // pred_fallthru
    _
  // Predicated region
  $region22: #{informer_forward.32} parent=0 // pred_check
    _
  $region23: #{informer_forward.32} parent=0 // pred_check_branch
    %123 = sbr.rel (0) target = $region25
  $region24: #{informer_forward.32} parent=0 // pred_region
    _
  $region25: #{informer_forward.32} parent=0 // pred_fallthru
    _
  // Predicated region
  $region26: #{informer_forward.32} parent=0 // pred_check
    _
  $region27: #{informer_forward.32} parent=0 // pred_check_branch
    %125 = sbr.rel (0) target = $region29
  $region28: #{informer_forward.32} parent=0 // pred_region
    _
  $region29: #{informer_forward.32} parent=0 // pred_fallthru
    _

// kernel: informer_forward.33
$region0: #{informer_forward.33}
  #allocation0 [shape = 'u32[]', space=smem, size = 0x4, offset = 0x4, fixed_abs, tag = 'smem constant byte address 0x4 - core index']
  #allocation1 [shape = 'u32[144,128]{1,0:T(1,128)}', space=vmem, size = 0x12000, scoped, tag = 'internal scratch']
  %s0 = inlined_call_operand.vmem [shape: bf16[2,8,96], index: 0, kind: input, shape index: {}]
  %s1 = inlined_call_operand.vmem [shape: bf16[2,8,32], index: 1, kind: output, shape index: {}]
  %s2 = sld [smem:[#allocation0]]
  $region37: #{informer_forward.33} parent=0
    _
  %s4 = ssub.s32 1, %s2
  %s5 = scalar_select 0, %s4, %s2
  loop: start=0, step=1, limit=4
  $region2: #{informer_forward.33} parent=0 // loop_pre_header
    _
  $region3: #{informer_forward.33} parent=0 // loop_header
    %s7 = sphi 0, %s11
    %p8 = scmp.ge.s32.totalorder %s7, 4
    %s17 = sphi 0, %s19
    %s20 = sphi 0, %s17
    %s21 = sphi 0, %s20
    %s37 = sphi 0, %s21
    %s43 = sphi 0, %s45
    %s46 = sphi 0, %s43
    %s47 = sphi 0, %s46
    %s63 = sphi 0, %s47
  $region4: #{informer_forward.33} parent=0 // loop_header_branch
    %10 = sbr.rel (%p8) target = $region8
  $region5: #{informer_forward.33} parent=0 // loop_body
    %s12 = ssub.s32 %s7, 1
    %s13 = ssub.s32 %s7, 2
    %s14 = sadd.s32 %s7, 1
    %s15 = ssub.s32 %s7, %s14
    %p16 = scmp.eq.s32.totalorder %s15, 0
    %s18 = sadd.s32 %s17, 1
    %s19 = scalar_select %p16, %s17, %s18
    %p22 = pneg %p16
    %p23 = scmp.eq.s32.totalorder %s7, 1
    %p24 = por %p22, %p23
    %p25 = scmp.ne.s32.totalorder %s17, %s20
    %p26 = scmp.eq.s32.totalorder %s7, 0
    %p27 = por %p25, %p26
    %p28 = scmp.ne.s32.totalorder %s17, %s20
    %p29 = scmp.eq.s32.totalorder %s12, 1
    %p30 = por %p28, %p29
    %p31 = scmp.ne.s32.totalorder %s20, %s21
    %p32 = scmp.eq.s32.totalorder %s12, 0
    %p33 = por %p31, %p32
    %p34 = scmp.ne.s32.totalorder %s20, %s21
    %p35 = scmp.eq.s32.totalorder %s13, 1
    %p36 = por %p34, %p35
    %p38 = scmp.ne.s32.totalorder %s21, %s37
    %p39 = scmp.eq.s32.totalorder %s13, 0
    %p40 = por %p38, %p39
    %s41 = ssub.s32 %s7, %s14
    %p42 = scmp.eq.s32.totalorder %s41, 0
    %s44 = sadd.s32 %s43, 1
    %s45 = scalar_select %p42, %s43, %s44
    %p48 = pneg %p42
    %p49 = scmp.eq.s32.totalorder %s7, 1
    %p50 = por %p48, %p49
    %p51 = scmp.ne.s32.totalorder %s43, %s46
    %p52 = scmp.eq.s32.totalorder %s7, 0
    %p53 = por %p51, %p52
    %p54 = scmp.ne.s32.totalorder %s43, %s46
    %p55 = scmp.eq.s32.totalorder %s12, 1
    %p56 = por %p54, %p55
    %p57 = scmp.ne.s32.totalorder %s46, %s47
    %p58 = scmp.eq.s32.totalorder %s12, 0
    %p59 = por %p57, %p58
    %p60 = scmp.ne.s32.totalorder %s46, %s47
    %p61 = scmp.eq.s32.totalorder %s13, 1
    %p62 = por %p60, %p61
    %p64 = scmp.ne.s32.totalorder %s47, %s63
    %p65 = scmp.eq.s32.totalorder %s13, 0
    %p66 = por %p64, %p65
    %p67 = scmp.le.s32.totalorder 1, %s7
    %p68 = scmp.lt.s32.totalorder %s7, 3
    %p69 = pnand %p67, %p68
    %p70 = pneg %p69
    // Predicated region
    $region9: #{informer_forward.33} parent=5 // pred_check
      _
    $region10: #{informer_forward.33} parent=5 // pred_check_branch
      %72 = sbr.rel (%p69) target = $region12
    $region11: #{informer_forward.33} parent=5 // pred_region
      %s73 = ssub.s32 %s7, 1
    $region12: #{informer_forward.33} parent=5 // pred_fallthru
      _
    %p74 = scmp.lt.s32.totalorder %s7, 2
    // Predicated region
    $region13: #{informer_forward.33} parent=5 // pred_check
      %p75 = pneg %p74
    $region14: #{informer_forward.33} parent=5 // pred_check_branch
      %77 = sbr.rel (%p75) target = $region16
    $region15: #{informer_forward.33} parent=5 // pred_region
      // Predicated region
      $region17: #{informer_forward.33} parent=15 // pred_check
        %p78 = pneg %p27
      $region18: #{informer_forward.33} parent=15 // pred_check_branch
        %80 = sbr.rel (%p78) target = $region20
      $region19: #{informer_forward.33} parent=15 // pred_region
        %p81 = scmp.lt.s32.totalorder %s7, 1
        %s82 = scalar_select %p81, %s7, 1
        %s83 = smul.addr %s82, 4
        %s84 = scalar_lea.vmem %s0, %s83
      $region20: #{informer_forward.33} parent=15 // pred_fallthru
        _
    $region16: #{informer_forward.33} parent=5 // pred_fallthru
      _
    %p85 = scmp.le.s32.totalorder 1, %s7
    %p86 = scmp.lt.s32.totalorder %s7, 3
    %p87 = pnand %p85, %p86
    %p88 = pneg %p87
    // Predicated region
    $region21: #{informer_forward.33} parent=5 // pred_check
      _
    $region22: #{informer_forward.33} parent=5 // pred_check_branch
      %90 = sbr.rel (%p87) target = $region24
    $region23: #{informer_forward.33} parent=5 // pred_region
      %s91 = ssub.s32 %s7, 1
      %p92 = scmp.lt.s32.totalorder %s12, 1
      %s93 = scalar_select %p92, %s12, 1
      %s94 = smul.addr %s93, 4
      %s95 = scalar_lea.vmem %s0, %s94
      %p96 = pneg %p33
      %p97 = pneg %p30
      %p98 = pneg %p59
      %p99 = pneg %p56
      %p100 = scmp.lt.s32.totalorder %s12, 1
      %s101 = scalar_select %p100, %s12, 1
      %s102 = smul.addr %s101, 4
      %s103 = scalar_lea.vmem %s1, %s102
      %p104 = scmp.lt.s32.totalorder %s12, 1
      %s105 = scalar_select %p104, %s12, 1
      %s106 = smul.addr %s105, 4
      %s107 = scalar_lea.vmem %s0, %s106
      %p108 = scmp.lt.s32.totalorder %s12, 1
      %s109 = scalar_select %p108, %s12, 1
      %s110 = smul.addr %s109, 4
      %s111 = scalar_lea.vmem %s1, %s110
      %v113 = vld [vmem:[%s107] sm:$0xf]
      %v115 = vunpack.c.l.b16 %v113
      %v116 = vpack.c.b16 %v115, %v115
      %117 = vrot.lane.b32.xlu0 %v116, 96
      %v118 = vpop.permute.xlu0 %117
      %vm119 = vcmask 64512
      %v121 = vsel %vm119, %v113, 0
      %v124 = vsel %vm119, %v118, 0
      %126 = vmatprep.subr.bf16.mxu0 0
      %127 = vmatpush1.bf16.xpose.msra.mxu0 0
      %128 = vmatprep.subr.bf16.mxu0 0
      %129 = vmatpush1.bf16.xpose.msra.mxu0 0
      %130 = vmatprep.subr.bf16.mxu0 0
      %131 = vmatpush1.bf16.xpose.msra.mxu0 0
      %132 = vmatprep.subr.bf16.mxu0 0
      %133 = vmatpush1.bf16.xpose.msra.mxu0 0
      %134 = vmatprep.subr.bf16.mxu0 0
      %135 = vmatpush1.bf16.xpose.msra.mxu0 0
      %136 = vmatprep.subr.bf16.mxu0 0
      %137 = vmatpush1.bf16.xpose.msra.mxu0 0
      %138 = vmatprep.subr.bf16.mxu0 0
      %139 = vmatpush1.bf16.xpose.msra.mxu0 0
      %140 = vmatprep.subr.bf16.mxu0 0
      %141 = vmatpush1.bf16.xpose.msra.mxu0 %v124
      %142 = vmatprep.subr.bf16.mxu0 0
      %143 = vmatpush2.bf16.xpose.msra.mxu0 0
      %144 = vmatprep.subr.bf16.mxu0 0
      %145 = vmatpush2.bf16.xpose.msra.mxu0 0
      %146 = vmatprep.subr.bf16.mxu0 0
      %147 = vmatpush2.bf16.xpose.msra.mxu0 0
      %148 = vmatprep.subr.bf16.mxu0 0
      %149 = vmatpush2.bf16.xpose.msra.mxu0 0
      %150 = vmatprep.subr.bf16.mxu0 0
      %151 = vmatpush2.bf16.xpose.msra.mxu0 0
      %152 = vmatprep.subr.bf16.mxu0 0
      %153 = vmatpush2.bf16.xpose.msra.mxu0 0
      %154 = vmatprep.subr.bf16.mxu0 0
      %155 = vmatpush2.bf16.xpose.msra.mxu0 0
      %156 = vmatprep.subr.bf16.mxu0 0
      %157 = vmatpush2.bf16.xpose.msra.mxu0 0
      %158 = vmatprep.mubr.bf16.mxu0 0
      %159 = vmatmul.mubr.bf16.gmra.mxu0 %v121
      %v160 = vpop.f32.mrf.mxu0
      %v161 = vadd.f32 0.0, %v160
      %v162 = vpop.f32.mrf.mxu0
      %v163 = vpop.f32.mrf.mxu0
      %v164 = vpop.f32.mrf.mxu0
      %165 = vdwg.mxu0
      %v166 = vsel %vm119, %v161, -inf
      %167 = vmax.xlane.f32.xlu0 %v166
      %v168 = vpop.xlane.xlu0 %167
      %v169 = vsub.f32 %v161, %v168
      %v170 = vmul.f32 %v169, 1.442695
      %v171 = vpow.pop %v170
      %v172 = vsel %vm119, %v171, 0.0
      %173 = vadd.xlane.f32.xlu0 %v172
      %v174 = vpop.xlane.xlu0 %173
      %v175 = vrcp.pop %v174
      %v176 = vmul.f32 %v171, %v175
      %v177 = vpack.c.bf16 %v176, %v176
      %178 = vrot.lane.b32.xlu0 %v116, 64
      %v179 = vpop.permute.xlu0 %178
      %v181 = vsel %vm119, %v177, 0
      %vm183 = vcmask 1043456
      %v185 = vsel %vm183, %v179, 0
      %187 = vmatprep.subr.bf16.mxu0 0
      %188 = vmatpush1.bf16.msra.mxu0 0
      %189 = vmatprep.subr.bf16.mxu0 0
      %190 = vmatpush1.bf16.msra.mxu0 0
      %191 = vmatprep.subr.bf16.mxu0 0
      %192 = vmatpush1.bf16.msra.mxu0 0
      %193 = vmatprep.subr.bf16.mxu0 0
      %194 = vmatpush1.bf16.msra.mxu0 0
      %195 = vmatprep.subr.bf16.mxu0 0
      %196 = vmatpush1.bf16.msra.mxu0 0
      %197 = vmatprep.subr.bf16.mxu0 0
      %198 = vmatpush1.bf16.msra.mxu0 0
      %199 = vmatprep.subr.bf16.mxu0 0
      %200 = vmatpush1.bf16.msra.mxu0 0
      %201 = vmatprep.subr.bf16.mxu0 0
      %202 = vmatpush1.bf16.msra.mxu0 %v185
      %203 = vmatprep.subr.bf16.mxu0 0
      %204 = vmatpush2.bf16.msra.mxu0 0
      %205 = vmatprep.subr.bf16.mxu0 0
      %206 = vmatpush2.bf16.msra.mxu0 0
      %207 = vmatprep.subr.bf16.mxu0 0
      %208 = vmatpush2.bf16.msra.mxu0 0
      %209 = vmatprep.subr.bf16.mxu0 0
      %210 = vmatpush2.bf16.msra.mxu0 0
      %211 = vmatprep.subr.bf16.mxu0 0
      %212 = vmatpush2.bf16.msra.mxu0 0
      %213 = vmatprep.subr.bf16.mxu0 0
      %214 = vmatpush2.bf16.msra.mxu0 0
      %215 = vmatprep.subr.bf16.mxu0 0
      %216 = vmatpush2.bf16.msra.mxu0 0
      %217 = vmatprep.subr.bf16.mxu0 0
      %218 = vmatpush2.bf16.msra.mxu0 0
      %219 = vmatprep.mubr.bf16.mxu0 0
      %220 = vmatmul.mubr.bf16.gmra.mxu0 %v181
      %v221 = vpop.f32.mrf.mxu0
      %v222 = vadd.f32 0.0, %v221
      %v223 = vpop.f32.mrf.mxu0
      %v224 = vpop.f32.mrf.mxu0
      %v225 = vpop.f32.mrf.mxu0
      %226 = vdwg.mxu0
      %v227 = vpack.c.bf16 %v222, %v222
      %228 = vrot.lane.b32.xlu0 %v116, 120
      %v229 = vpop.permute.xlu0 %228
      %230 = vrot.lane.b32.xlu0 %v116, 88
      %v231 = vpop.permute.xlu0 %230
      %v233 = vsel %vm119, %v229, 0
      %v236 = vsel %vm119, %v231, 0
      %238 = vmatprep.subr.bf16.mxu0 0
      %239 = vmatpush1.bf16.xpose.msra.mxu0 0
      %240 = vmatprep.subr.bf16.mxu0 0
      %241 = vmatpush1.bf16.xpose.msra.mxu0 0
      %242 = vmatprep.subr.bf16.mxu0 0
      %243 = vmatpush1.bf16.xpose.msra.mxu0 0
      %244 = vmatprep.subr.bf16.mxu0 0
      %245 = vmatpush1.bf16.xpose.msra.mxu0 0
      %246 = vmatprep.subr.bf16.mxu0 0
      %247 = vmatpush1.bf16.xpose.msra.mxu0 0
      %248 = vmatprep.subr.bf16.mxu0 0
      %249 = vmatpush1.bf16.xpose.msra.mxu0 0
      %250 = vmatprep.subr.bf16.mxu0 0
      %251 = vmatpush1.bf16.xpose.msra.mxu0 0
      %252 = vmatprep.subr.bf16.mxu0 0
      %253 = vmatpush1.bf16.xpose.msra.mxu0 %v236
      %254 = vmatprep.subr.bf16.mxu0 0
      %255 = vmatpush2.bf16.xpose.msra.mxu0 0
      %256 = vmatprep.subr.bf16.mxu0 0
      %257 = vmatpush2.bf16.xpose.msra.mxu0 0
      %258 = vmatprep.subr.bf16.mxu0 0
      %259 = vmatpush2.bf16.xpose.msra.mxu0 0
      %260 = vmatprep.subr.bf16.mxu0 0
      %261 = vmatpush2.bf16.xpose.msra.mxu0 0
      %262 = vmatprep.subr.bf16.mxu0 0
      %263 = vmatpush2.bf16.xpose.msra.mxu0 0
      %264 = vmatprep.subr.bf16.mxu0 0
      %265 = vmatpush2.bf16.xpose.msra.mxu0 0
      %266 = vmatprep.subr.bf16.mxu0 0
      %267 = vmatpush2.bf16.xpose.msra.mxu0 0
      %268 = vmatprep.subr.bf16.mxu0 0
      %269 = vmatpush2.bf16.xpose.msra.mxu0 0
      %270 = vmatprep.mubr.bf16.mxu0 0
      %271 = vmatmul.mubr.bf16.gmra.mxu0 %v233
      %v272 = vpop.f32.mrf.mxu0
      %v273 = vadd.f32 0.0, %v272
      %v274 = vpop.f32.mrf.mxu0
      %v275 = vpop.f32.mrf.mxu0
      %v276 = vpop.f32.mrf.mxu0
      %277 = vdwg.mxu0
      %v278 = vsel %vm119, %v273, -inf
      %279 = vmax.xlane.f32.xlu0 %v278
      %v280 = vpop.xlane.xlu0 %279
      %v281 = vsub.f32 %v273, %v280
      %v282 = vmul.f32 %v281, 1.442695
      %v283 = vpow.pop %v282
      %v284 = vsel %vm119, %v283, 0.0
      %285 = vadd.xlane.f32.xlu0 %v284
      %v286 = vpop.xlane.xlu0 %285
      %v287 = vrcp.pop %v286
      %v288 = vmul.f32 %v283, %v287
      %v289 = vpack.c.bf16 %v288, %v288
      %290 = vrot.lane.b32.xlu0 %v116, 56
      %v291 = vpop.permute.xlu0 %290
      %v293 = vsel %vm119, %v289, 0
      %v296 = vsel %vm183, %v291, 0
      %298 = vmatprep.subr.bf16.mxu0 0
      %299 = vmatpush1.bf16.msra.mxu0 0
      %300 = vmatprep.subr.bf16.mxu0 0
      %301 = vmatpush1.bf16.msra.mxu0 0
      %302 = vmatprep.subr.bf16.mxu0 0
      %303 = vmatpush1.bf16.msra.mxu0 0
      %304 = vmatprep.subr.bf16.mxu0 0
      %305 = vmatpush1.bf16.msra.mxu0 0
      %306 = vmatprep.subr.bf16.mxu0 0
      %307 = vmatpush1.bf16.msra.mxu0 0
      %308 = vmatprep.subr.bf16.mxu0 0
      %309 = vmatpush1.bf16.msra.mxu0 0
      %310 = vmatprep.subr.bf16.mxu0 0
      %311 = vmatpush1.bf16.msra.mxu0 0
      %312 = vmatprep.subr.bf16.mxu0 0
      %313 = vmatpush1.bf16.msra.mxu0 %v296
      %314 = vmatprep.subr.bf16.mxu0 0
      %315 = vmatpush2.bf16.msra.mxu0 0
      %316 = vmatprep.subr.bf16.mxu0 0
      %317 = vmatpush2.bf16.msra.mxu0 0
      %318 = vmatprep.subr.bf16.mxu0 0
      %319 = vmatpush2.bf16.msra.mxu0 0
      %320 = vmatprep.subr.bf16.mxu0 0
      %321 = vmatpush2.bf16.msra.mxu0 0
      %322 = vmatprep.subr.bf16.mxu0 0
      %323 = vmatpush2.bf16.msra.mxu0 0
      %324 = vmatprep.subr.bf16.mxu0 0
      %325 = vmatpush2.bf16.msra.mxu0 0
      %326 = vmatprep.subr.bf16.mxu0 0
      %327 = vmatpush2.bf16.msra.mxu0 0
      %328 = vmatprep.subr.bf16.mxu0 0
      %329 = vmatpush2.bf16.msra.mxu0 0
      %330 = vmatprep.mubr.bf16.mxu0 0
      %331 = vmatmul.mubr.bf16.gmra.mxu0 %v293
      %v332 = vpop.f32.mrf.mxu0
      %v333 = vadd.f32 0.0, %v332
      %v334 = vpop.f32.mrf.mxu0
      %v335 = vpop.f32.mrf.mxu0
      %v336 = vpop.f32.mrf.mxu0
      %337 = vdwg.mxu0
      %v338 = vpack.c.bf16 %v333, %v333
      %339 = vrot.lane.b32.xlu0 %v116, 112
      %v340 = vpop.permute.xlu0 %339
      %341 = vrot.lane.b32.xlu0 %v116, 80
      %v342 = vpop.permute.xlu0 %341
      %v344 = vsel %vm119, %v340, 0
      %v347 = vsel %vm119, %v342, 0
      %349 = vmatprep.subr.bf16.mxu0 0
      %350 = vmatpush1.bf16.xpose.msra.mxu0 0
      %351 = vmatprep.subr.bf16.mxu0 0
      %352 = vmatpush1.bf16.xpose.msra.mxu0 0
      %353 = vmatprep.subr.bf16.mxu0 0
      %354 = vmatpush1.bf16.xpose.msra.mxu0 0
      %355 = vmatprep.subr.bf16.mxu0 0
      %356 = vmatpush1.bf16.xpose.msra.mxu0 0
      %357 = vmatprep.subr.bf16.mxu0 0
      %358 = vmatpush1.bf16.xpose.msra.mxu0 0
      %359 = vmatprep.subr.bf16.mxu0 0
      %360 = vmatpush1.bf16.xpose.msra.mxu0 0
      %361 = vmatprep.subr.bf16.mxu0 0
      %362 = vmatpush1.bf16.xpose.msra.mxu0 0
      %363 = vmatprep.subr.bf16.mxu0 0
      %364 = vmatpush1.bf16.xpose.msra.mxu0 %v347
      %365 = vmatprep.subr.bf16.mxu0 0
      %366 = vmatpush2.bf16.xpose.msra.mxu0 0
      %367 = vmatprep.subr.bf16.mxu0 0
      %368 = vmatpush2.bf16.xpose.msra.mxu0 0
      %369 = vmatprep.subr.bf16.mxu0 0
      %370 = vmatpush2.bf16.xpose.msra.mxu0 0
      %371 = vmatprep.subr.bf16.mxu0 0
      %372 = vmatpush2.bf16.xpose.msra.mxu0 0
      %373 = vmatprep.subr.bf16.mxu0 0
      %374 = vmatpush2.bf16.xpose.msra.mxu0 0
      %375 = vmatprep.subr.bf16.mxu0 0
      %376 = vmatpush2.bf16.xpose.msra.mxu0 0
      %377 = vmatprep.subr.bf16.mxu0 0
      %378 = vmatpush2.bf16.xpose.msra.mxu0 0
      %379 = vmatprep.subr.bf16.mxu0 0
      %380 = vmatpush2.bf16.xpose.msra.mxu0 0
      %381 = vmatprep.mubr.bf16.mxu0 0
      %382 = vmatmul.mubr.bf16.gmra.mxu0 %v344
      %v383 = vpop.f32.mrf.mxu0
      %v384 = vadd.f32 0.0, %v383
      %v385 = vpop.f32.mrf.mxu0
      %v386 = vpop.f32.mrf.mxu0
      %v387 = vpop.f32.mrf.mxu0
      %388 = vdwg.mxu0
      %v389 = vsel %vm119, %v384, -inf
      %390 = vmax.xlane.f32.xlu0 %v389
      %v391 = vpop.xlane.xlu0 %390
      %v392 = vsub.f32 %v384, %v391
      %v393 = vmul.f32 %v392, 1.442695
      %v394 = vpow.pop %v393
      %v395 = vsel %vm119, %v394, 0.0
      %396 = vadd.xlane.f32.xlu0 %v395
      %v397 = vpop.xlane.xlu0 %396
      %v398 = vrcp.pop %v397
      %v399 = vmul.f32 %v394, %v398
      %v400 = vpack.c.bf16 %v399, %v399
      %401 = vrot.lane.b32.xlu0 %v116, 48
      %v402 = vpop.permute.xlu0 %401
      %v404 = vsel %vm119, %v400, 0
      %v407 = vsel %vm183, %v402, 0
      %409 = vmatprep.subr.bf16.mxu0 0
      %410 = vmatpush1.bf16.msra.mxu0 0
      %411 = vmatprep.subr.bf16.mxu0 0
      %412 = vmatpush1.bf16.msra.mxu0 0
      %413 = vmatprep.subr.bf16.mxu0 0
      %414 = vmatpush1.bf16.msra.mxu0 0
      %415 = vmatprep.subr.bf16.mxu0 0
      %416 = vmatpush1.bf16.msra.mxu0 0
      %417 = vmatprep.subr.bf16.mxu0 0
      %418 = vmatpush1.bf16.msra.mxu0 0
      %419 = vmatprep.subr.bf16.mxu0 0
      %420 = vmatpush1.bf16.msra.mxu0 0
      %421 = vmatprep.subr.bf16.mxu0 0
      %422 = vmatpush1.bf16.msra.mxu0 0
      %423 = vmatprep.subr.bf16.mxu0 0
      %424 = vmatpush1.bf16.msra.mxu0 %v407
      %425 = vmatprep.subr.bf16.mxu0 0
      %426 = vmatpush2.bf16.msra.mxu0 0
      %427 = vmatprep.subr.bf16.mxu0 0
      %428 = vmatpush2.bf16.msra.mxu0 0
      %429 = vmatprep.subr.bf16.mxu0 0
      %430 = vmatpush2.bf16.msra.mxu0 0
      %431 = vmatprep.subr.bf16.mxu0 0
      %432 = vmatpush2.bf16.msra.mxu0 0
      %433 = vmatprep.subr.bf16.mxu0 0
      %434 = vmatpush2.bf16.msra.mxu0 0
      %435 = vmatprep.subr.bf16.mxu0 0
      %436 = vmatpush2.bf16.msra.mxu0 0
      %437 = vmatprep.subr.bf16.mxu0 0
      %438 = vmatpush2.bf16.msra.mxu0 0
      %439 = vmatprep.subr.bf16.mxu0 0
      %440 = vmatpush2.bf16.msra.mxu0 0
      %441 = vmatprep.mubr.bf16.mxu0 0
      %442 = vmatmul.mubr.bf16.gmra.mxu0 %v404
      %v443 = vpop.f32.mrf.mxu0
      %v444 = vadd.f32 0.0, %v443
      %v445 = vpop.f32.mrf.mxu0
      %v446 = vpop.f32.mrf.mxu0
      %v447 = vpop.f32.mrf.mxu0
      %448 = vdwg.mxu0
      %v449 = vpack.c.bf16 %v444, %v444
      %450 = vrot.lane.b32.xlu0 %v116, 104
      %v451 = vpop.permute.xlu0 %450
      %452 = vrot.lane.b32.xlu0 %v116, 72
      %v453 = vpop.permute.xlu0 %452
      %v455 = vsel %vm119, %v451, 0
      %v458 = vsel %vm119, %v453, 0
      %460 = vmatprep.subr.bf16.mxu0 0
      %461 = vmatpush1.bf16.xpose.msra.mxu0 0
      %462 = vmatprep.subr.bf16.mxu0 0
      %463 = vmatpush1.bf16.xpose.msra.mxu0 0
      %464 = vmatprep.subr.bf16.mxu0 0
      %465 = vmatpush1.bf16.xpose.msra.mxu0 0
      %466 = vmatprep.subr.bf16.mxu0 0
      %467 = vmatpush1.bf16.xpose.msra.mxu0 0
      %468 = vmatprep.subr.bf16.mxu0 0
      %469 = vmatpush1.bf16.xpose.msra.mxu0 0
      %470 = vmatprep.subr.bf16.mxu0 0
      %471 = vmatpush1.bf16.xpose.msra.mxu0 0
      %472 = vmatprep.subr.bf16.mxu0 0
      %473 = vmatpush1.bf16.xpose.msra.mxu0 0
      %474 = vmatprep.subr.bf16.mxu0 0
      %475 = vmatpush1.bf16.xpose.msra.mxu0 %v458
      %476 = vmatprep.subr.bf16.mxu0 0
      %477 = vmatpush2.bf16.xpose.msra.mxu0 0
      %478 = vmatprep.subr.bf16.mxu0 0
      %479 = vmatpush2.bf16.xpose.msra.mxu0 0
      %480 = vmatprep.subr.bf16.mxu0 0
      %481 = vmatpush2.bf16.xpose.msra.mxu0 0
      %482 = vmatprep.subr.bf16.mxu0 0
      %483 = vmatpush2.bf16.xpose.msra.mxu0 0
      %484 = vmatprep.subr.bf16.mxu0 0
      %485 = vmatpush2.bf16.xpose.msra.mxu0 0
      %486 = vmatprep.subr.bf16.mxu0 0
      %487 = vmatpush2.bf16.xpose.msra.mxu0 0
      %488 = vmatprep.subr.bf16.mxu0 0
      %489 = vmatpush2.bf16.xpose.msra.mxu0 0
      %490 = vmatprep.subr.bf16.mxu0 0
      %491 = vmatpush2.bf16.xpose.msra.mxu0 0
      %492 = vmatprep.mubr.bf16.mxu0 0
      %493 = vmatmul.mubr.bf16.gmra.mxu0 %v455
      %v494 = vpop.f32.mrf.mxu0
      %v495 = vadd.f32 0.0, %v494
      %v496 = vpop.f32.mrf.mxu0
      %v497 = vpop.f32.mrf.mxu0
      %v498 = vpop.f32.mrf.mxu0
      %499 = vdwg.mxu0
      %v500 = vsel %vm119, %v495, -inf
      %501 = vmax.xlane.f32.xlu0 %v500
      %v502 = vpop.xlane.xlu0 %501
      %v503 = vsub.f32 %v495, %v502
      %v504 = vmul.f32 %v503, 1.442695
      %v505 = vpow.pop %v504
      %v506 = vsel %vm119, %v505, 0.0
      %507 = vadd.xlane.f32.xlu0 %v506
      %v508 = vpop.xlane.xlu0 %507
      %v509 = vrcp.pop %v508
      %v510 = vmul.f32 %v505, %v509
      %v511 = vpack.c.bf16 %v510, %v510
      %512 = vrot.lane.b32.xlu0 %v116, 40
      %v513 = vpop.permute.xlu0 %512
      %v515 = vsel %vm119, %v511, 0
      %v518 = vsel %vm183, %v513, 0
      %520 = vmatprep.subr.bf16.mxu0 0
      %521 = vmatpush1.bf16.msra.mxu0 0
      %522 = vmatprep.subr.bf16.mxu0 0
      %523 = vmatpush1.bf16.msra.mxu0 0
      %524 = vmatprep.subr.bf16.mxu0 0
      %525 = vmatpush1.bf16.msra.mxu0 0
      %526 = vmatprep.subr.bf16.mxu0 0
      %527 = vmatpush1.bf16.msra.mxu0 0
      %528 = vmatprep.subr.bf16.mxu0 0
      %529 = vmatpush1.bf16.msra.mxu0 0
      %530 = vmatprep.subr.bf16.mxu0 0
      %531 = vmatpush1.bf16.msra.mxu0 0
      %532 = vmatprep.subr.bf16.mxu0 0
      %533 = vmatpush1.bf16.msra.mxu0 0
      %534 = vmatprep.subr.bf16.mxu0 0
      %535 = vmatpush1.bf16.msra.mxu0 %v518
      %536 = vmatprep.subr.bf16.mxu0 0
      %537 = vmatpush2.bf16.msra.mxu0 0
      %538 = vmatprep.subr.bf16.mxu0 0
      %539 = vmatpush2.bf16.msra.mxu0 0
      %540 = vmatprep.subr.bf16.mxu0 0
      %541 = vmatpush2.bf16.msra.mxu0 0
      %542 = vmatprep.subr.bf16.mxu0 0
      %543 = vmatpush2.bf16.msra.mxu0 0
      %544 = vmatprep.subr.bf16.mxu0 0
      %545 = vmatpush2.bf16.msra.mxu0 0
      %546 = vmatprep.subr.bf16.mxu0 0
      %547 = vmatpush2.bf16.msra.mxu0 0
      %548 = vmatprep.subr.bf16.mxu0 0
      %549 = vmatpush2.bf16.msra.mxu0 0
      %550 = vmatprep.subr.bf16.mxu0 0
      %551 = vmatpush2.bf16.msra.mxu0 0
      %552 = vmatprep.mubr.bf16.mxu0 0
      %553 = vmatmul.mubr.bf16.gmra.mxu0 %v515
      %v554 = vpop.f32.mrf.mxu0
      %v555 = vadd.f32 0.0, %v554
      %v556 = vpop.f32.mrf.mxu0
      %v557 = vpop.f32.mrf.mxu0
      %v558 = vpop.f32.mrf.mxu0
      %559 = vdwg.mxu0
      %v560 = vpack.c.bf16 %v555, %v555
      %562 = vrot.lane.b32.xlu0 %v338, 8
      %v563 = vpop.permute.xlu0 %562
      %565 = vrot.lane.b32.xlu0 %v449, 16
      %v566 = vpop.permute.xlu0 %565
      %568 = vrot.lane.b32.xlu0 %v560, 24
      %v569 = vpop.permute.xlu0 %568
      %v572 = vsel %vm119, %v227, %v563
      %vm573 = vcmask 130048
      %v575 = vsel %vm573, %v572, %v566
      %vm576 = vcmask 195584
      %v578 = vsel %vm576, %v575, %v569
      %vm580 = vcmask 257024
      %581 = vst.msk [vmem:[%s111] sm:$0xf] %vm580, %v578
      %p582 = scmp.lt.s32.totalorder %s12, 1
      %s583 = scalar_select %p582, %s12, 1
      %s584 = smul.addr %s583, 4
      %s585 = scalar_lea.vmem %s1, %s584
      // Predicated region
      $region25: #{informer_forward.33} parent=23 // pred_check
        %p586 = pneg %p56
      $region26: #{informer_forward.33} parent=23 // pred_check_branch
        %588 = sbr.rel (%p586) target = $region28
      $region27: #{informer_forward.33} parent=23 // pred_region
        _
      $region28: #{informer_forward.33} parent=23 // pred_fallthru
        _
    $region24: #{informer_forward.33} parent=5 // pred_fallthru
      _
    %p589 = scmp.le.s32.totalorder 2, %s7
    // Predicated region
    $region29: #{informer_forward.33} parent=5 // pred_check
      %p590 = pneg %p589
    $region30: #{informer_forward.33} parent=5 // pred_check_branch
      %592 = sbr.rel (%p590) target = $region32
    $region31: #{informer_forward.33} parent=5 // pred_region
      %s593 = ssub.s32 %s7, 2
      // Predicated region
      $region33: #{informer_forward.33} parent=31 // pred_check
        %p594 = pneg %p62
      $region34: #{informer_forward.33} parent=31 // pred_check_branch
        %596 = sbr.rel (%p594) target = $region36
      $region35: #{informer_forward.33} parent=31 // pred_region
        %p597 = scmp.lt.s32.totalorder %s13, 1
        %s598 = scalar_select %p597, %s13, 1
        %s599 = smul.addr %s598, 4
        %s600 = scalar_lea.vmem %s1, %s599
      $region36: #{informer_forward.33} parent=31 // pred_fallthru
        _
    $region32: #{informer_forward.33} parent=5 // pred_fallthru
      _
  $region6: #{informer_forward.33} parent=0 // loop_footer
    %s11 = sadd.s32 1, %s7
  $region7: #{informer_forward.33} parent=0 // loop_footer_branch
    %6 = sbr.rel target = $region3
  $region8: #{informer_forward.33} parent=0 // loop_exit
    _

// kernel: informer_forward.35
$region0: #{informer_forward.35}
  #allocation0 [shape = 'u32[]', space=smem, size = 0x4, offset = 0x4, fixed_abs, tag = 'smem constant byte address 0x4 - core index']
  #allocation1 [shape = 'u32[144,128]{1,0:T(1,128)}', space=vmem, size = 0x12000, scoped, tag = 'internal scratch']
  #allocation2 [shape = 'f32[16,32]{1,0:T(8,128)}', space=vmem, size = 0x2000, scoped, tag = 'scratch operand']
  %s0 = inlined_call_operand.vmem [shape: bf16[16,32], index: 0, kind: input, shape index: {}]
  %s1 = inlined_call_operand.vmem [shape: bf16[32,32], index: 1, kind: input, shape index: {}]
  %s2 = inlined_call_operand.vmem [shape: f32[1,32], index: 2, kind: input, shape index: {}]
  %s3 = inlined_call_operand.vmem [shape: bf16[16,32], index: 3, kind: output, shape index: {}]
  %s4 = sld [smem:[#allocation0]]
  $region30: #{informer_forward.35} parent=0
    _
  %s6 = ssub.s32 1, %s4
  %s7 = scalar_select 0, %s6, %s4
  // Predicated region
  $region2: #{informer_forward.35} parent=0 // pred_check
    _
  $region3: #{informer_forward.35} parent=0 // pred_check_branch
    %9 = sbr.rel (0) target = $region5
  $region4: #{informer_forward.35} parent=0 // pred_region
    _
  $region5: #{informer_forward.35} parent=0 // pred_fallthru
    _
  // Predicated region
  $region6: #{informer_forward.35} parent=0 // pred_check
    _
  $region7: #{informer_forward.35} parent=0 // pred_check_branch
    %11 = sbr.rel (0) target = $region9
  $region8: #{informer_forward.35} parent=0 // pred_region
    _
  $region9: #{informer_forward.35} parent=0 // pred_fallthru
    _
  // Predicated region
  $region10: #{informer_forward.35} parent=0 // pred_check
    _
  $region11: #{informer_forward.35} parent=0 // pred_check_branch
    %13 = sbr.rel (0) target = $region13
  $region12: #{informer_forward.35} parent=0 // pred_region
    _
  $region13: #{informer_forward.35} parent=0 // pred_fallthru
    _
  %p15 = scmp.eq.s32.totalorder 0, 0
  // Predicated region
  $region14: #{informer_forward.35} parent=0 // pred_check
    %p16 = pneg %p15
  $region15: #{informer_forward.35} parent=0 // pred_check_branch
    %18 = sbr.rel (%p16) target = $region17
  $region16: #{informer_forward.35} parent=0 // pred_region
    %vm19 = vcmask 261120
    %20 = vst.msk [vmem:[#allocation2] sm:$0xff] %vm19, 0.0
    %21 = vst.msk [vmem:[#allocation2 + $0x8] sm:$0xff] %vm19, 0.0
  $region17: #{informer_forward.35} parent=0 // pred_fallthru
    _
  %v22 = vld [vmem:[#allocation2] sm:$0xff]
  %v23 = vld [vmem:[#allocation2 + $0x8] sm:$0xff]
  %v24 = vld [vmem:[%s0] sm:$0xf]
  %v25 = vld [vmem:[%s0 + $0x4] sm:$0xf]
  %v26 = vld [vmem:[%s1] sm:$0xf]
  %v27 = vld [vmem:[%s1 + $0x4] sm:$0xf]
  %v28 = vld [vmem:[%s1 + $0x8] sm:$0xf]
  %v29 = vld [vmem:[%s1 + $0xc] sm:$0xf]
  %v32 = vunpack.c.l.b16 %v24
  %v33 = vunpack.c.l.b16 %v25
  %v34 = vpack.c.b16 %v33, %v32
  %v39 = vunpack.c.l.b16 %v26
  %v40 = vunpack.c.l.b16 %v27
  %v41 = vunpack.c.l.b16 %v28
  %v42 = vunpack.c.l.b16 %v29
  %v43 = vpack.c.b16 %v40, %v39
  %v44 = vpack.c.b16 %v42, %v41
  %vm47 = vcmask 261120
  %v49 = vsel %vm47, %v34, 0
  %51 = vmatprep.subr.bf16.mxu0 0
  %52 = vmatpush1.bf16.msra.mxu0 0
  %53 = vmatprep.subr.bf16.mxu0 0
  %54 = vmatpush1.bf16.msra.mxu0 0
  %55 = vmatprep.subr.bf16.mxu0 0
  %56 = vmatpush1.bf16.msra.mxu0 0
  %57 = vmatprep.subr.bf16.mxu0 0
  %58 = vmatpush1.bf16.msra.mxu0 0
  %59 = vmatprep.subr.bf16.mxu0 0
  %60 = vmatpush1.bf16.msra.mxu0 0
  %61 = vmatprep.subr.bf16.mxu0 0
  %62 = vmatpush1.bf16.msra.mxu0 0
  %63 = vmatprep.subr.bf16.mxu0 0
  %64 = vmatpush1.bf16.msra.mxu0 %v44
  %65 = vmatprep.subr.bf16.mxu0 0
  %66 = vmatpush1.bf16.msra.mxu0 %v43
  %67 = vmatprep.subr.bf16.mxu0 0
  %68 = vmatpush2.bf16.msra.mxu0 0
  %69 = vmatprep.subr.bf16.mxu0 0
  %70 = vmatpush2.bf16.msra.mxu0 0
  %71 = vmatprep.subr.bf16.mxu0 0
  %72 = vmatpush2.bf16.msra.mxu0 0
  %73 = vmatprep.subr.bf16.mxu0 0
  %74 = vmatpush2.bf16.msra.mxu0 0
  %75 = vmatprep.subr.bf16.mxu0 0
  %76 = vmatpush2.bf16.msra.mxu0 0
  %77 = vmatprep.subr.bf16.mxu0 0
  %78 = vmatpush2.bf16.msra.mxu0 0
  %79 = vmatprep.subr.bf16.mxu0 0
  %80 = vmatpush2.bf16.msra.mxu0 0
  %81 = vmatprep.subr.bf16.mxu0 0
  %82 = vmatpush2.bf16.msra.mxu0 0
  %83 = vmatprep.mubr.bf16.mxu0 0
  %84 = vmatmul.mubr.bf16.gmra.mxu0 %v49
  %v85 = vpop.f32.mrf.mxu0
  %v86 = vadd.f32 0.0, %v85
  %v87 = vpop.f32.mrf.mxu0
  %v88 = vpop.f32.mrf.mxu0
  %v89 = vadd.f32 0.0, %v88
  %v90 = vpop.f32.mrf.mxu0
  %91 = vdwg.mxu0
  %v92 = vadd.f32 %v22, %v86
  %v93 = vadd.f32 %v23, %v89
  %94 = vst.msk [vmem:[#allocation2] sm:$0xff] %vm47, %v92
  %95 = vst.msk [vmem:[#allocation2 + $0x8] sm:$0xff] %vm47, %v93
  // Predicated region
  $region18: #{informer_forward.35} parent=0 // pred_check
    %p96 = pneg %p15
  $region19: #{informer_forward.35} parent=0 // pred_check_branch
    %98 = sbr.rel (%p96) target = $region21
  $region20: #{informer_forward.35} parent=0 // pred_region
    %v99 = vld [vmem:[#allocation2] sm:$0xff]
    %v100 = vld [vmem:[#allocation2 + $0x8] sm:$0xff]
    %v101 = vld [vmem:[%s2] sm:$0x1]
    %v103 = vlaneseq
    %v104 = vshrl.u32 %v103, 7
    %v105 = vsub.s32 0, %v104
    %v106 = vrot.slane %v101, %v105
    %v108 = vadd.f32 %v99, %v106
    %v109 = vadd.f32 %v100, %v106
    %v110 = vmul.f32 %v108, 0.5
    %v111 = vmul.f32 %v109, 0.5
    %v112 = vmul.f32 %v108, 0.70710677
    %v113 = vmul.f32 %v109, 0.70710677
    %v114 = vand.u32 2147483647, %v112
    %v115 = vand.u32 2147483647, %v113
    %v116 = vmul.f32 %v114, 0.3275911
    %v117 = vmul.f32 %v115, 0.3275911
    %v118 = vadd.f32 %v116, 1.0
    %v119 = vadd.f32 %v117, 1.0
    %v120 = vrcp.pop %v118
    %v121 = vmul.f32 1.0, %v120
    %v122 = vrcp.pop %v119
    %v123 = vmul.f32 1.0, %v122
    %v124 = vmul.f32 %v121, 1.0614054
    %v125 = vmul.f32 %v123, 1.0614054
    %v126 = vadd.f32 %v124, -1.4531521
    %v127 = vadd.f32 %v125, -1.4531521
    %v128 = vmul.f32 %v126, %v121
    %v129 = vmul.f32 %v127, %v123
    %v130 = vadd.f32 %v128, 1.4214138
    %v131 = vadd.f32 %v129, 1.4214138
    %v132 = vmul.f32 %v130, %v121
    %v133 = vmul.f32 %v131, %v123
    %v134 = vadd.f32 %v132, -0.28449672
    %v135 = vadd.f32 %v133, -0.28449672
    %v136 = vmul.f32 %v134, %v121
    %v137 = vmul.f32 %v135, %v123
    %v138 = vadd.f32 %v136, 0.2548296
    %v139 = vadd.f32 %v137, 0.2548296
    %v140 = vmul.f32 %v138, %v121
    %v141 = vmul.f32 %v139, %v123
    %v142 = vsub.f32 0.0, %v114
    %v143 = vsub.f32 0.0, %v115
    %v144 = vmul.f32 %v142, %v114
    %v145 = vmul.f32 %v143, %v115
    %v146 = vmul.f32 %v144, 1.442695
    %v147 = vpow.pop %v146
    %v148 = vmul.f32 %v145, 1.442695
    %v149 = vpow.pop %v148
    %v150 = vmul.f32 %v140, %v147
    %v151 = vmul.f32 %v141, %v149
    %v152 = vsub.f32 1.0, %v150
    %v153 = vsub.f32 1.0, %v151
    %vm154 = vcmp.ge.f32.partialorder %v112, 0.0
    %vm155 = vcmp.ge.f32.partialorder %v113, 0.0
    %v156 = vsub.f32 0.0, %v152
    %v157 = vsub.f32 0.0, %v153
    %v158 = vsel %vm154, %v152, %v156
    %v159 = vsel %vm155, %v153, %v157
    %v160 = vadd.f32 %v158, 1.0
    %v161 = vadd.f32 %v159, 1.0
    %v162 = vmul.f32 %v110, %v160
    %v163 = vmul.f32 %v111, %v161
    %v164 = vpack.c.bf16 %v163, %v162
    %v166 = vunpack.c.l.b16 %v164
    %v167 = vunpack.c.h.b16 %v164
    %v168 = vpack.c.b16 %v166, %v166
    %v169 = vpack.c.b16 %v167, %v167
    %vm172 = vcmask 257024
    %173 = vst.msk [vmem:[%s3] sm:$0xf] %vm172, %v168
    %174 = vst.msk [vmem:[%s3 + $0x4] sm:$0xf] %vm172, %v169
  $region21: #{informer_forward.35} parent=0 // pred_fallthru
    _
  // Predicated region
  $region22: #{informer_forward.35} parent=0 // pred_check
    _
  $region23: #{informer_forward.35} parent=0 // pred_check_branch
    %176 = sbr.rel (0) target = $region25
  $region24: #{informer_forward.35} parent=0 // pred_region
    _
  $region25: #{informer_forward.35} parent=0 // pred_fallthru
    _
  // Predicated region
  $region26: #{informer_forward.35} parent=0 // pred_check
    _
  $region27: #{informer_forward.35} parent=0 // pred_check_branch
    %178 = sbr.rel (0) target = $region29
  $region28: #{informer_forward.35} parent=0 // pred_region
    _
  $region29: #{informer_forward.35} parent=0 // pred_fallthru
    _

// kernel: informer_forward.34
$region0: #{informer_forward.34}
  #allocation0 [shape = 'u32[]', space=smem, size = 0x4, offset = 0x4, fixed_abs, tag = 'smem constant byte address 0x4 - core index']
  #allocation1 [shape = 'u32[144,128]{1,0:T(1,128)}', space=vmem, size = 0x12000, scoped, tag = 'internal scratch']
  #allocation2 [shape = 'f32[16,32]{1,0:T(8,128)}', space=vmem, size = 0x2000, scoped, tag = 'scratch operand']
  %s0 = inlined_call_operand.vmem [shape: bf16[16,32], index: 0, kind: input, shape index: {}]
  %s1 = inlined_call_operand.vmem [shape: bf16[32,32], index: 1, kind: input, shape index: {}]
  %s2 = inlined_call_operand.vmem [shape: f32[1,32], index: 2, kind: input, shape index: {}]
  %s3 = inlined_call_operand.vmem [shape: bf16[16,32], index: 3, kind: input, shape index: {}]
  %s4 = inlined_call_operand.vmem [shape: f32[1,32], index: 4, kind: input, shape index: {}]
  %s5 = inlined_call_operand.vmem [shape: f32[1,32], index: 5, kind: input, shape index: {}]
  %s6 = inlined_call_operand.vmem [shape: bf16[16,32], index: 6, kind: output, shape index: {}]
  %s7 = sld [smem:[#allocation0]]
  $region42: #{informer_forward.34} parent=0
    _
  %s9 = ssub.s32 1, %s7
  %s10 = scalar_select 0, %s9, %s7
  // Predicated region
  $region2: #{informer_forward.34} parent=0 // pred_check
    _
  $region3: #{informer_forward.34} parent=0 // pred_check_branch
    %12 = sbr.rel (0) target = $region5
  $region4: #{informer_forward.34} parent=0 // pred_region
    _
  $region5: #{informer_forward.34} parent=0 // pred_fallthru
    _
  // Predicated region
  $region6: #{informer_forward.34} parent=0 // pred_check
    _
  $region7: #{informer_forward.34} parent=0 // pred_check_branch
    %14 = sbr.rel (0) target = $region9
  $region8: #{informer_forward.34} parent=0 // pred_region
    _
  $region9: #{informer_forward.34} parent=0 // pred_fallthru
    _
  // Predicated region
  $region10: #{informer_forward.34} parent=0 // pred_check
    _
  $region11: #{informer_forward.34} parent=0 // pred_check_branch
    %16 = sbr.rel (0) target = $region13
  $region12: #{informer_forward.34} parent=0 // pred_region
    _
  $region13: #{informer_forward.34} parent=0 // pred_fallthru
    _
  // Predicated region
  $region14: #{informer_forward.34} parent=0 // pred_check
    _
  $region15: #{informer_forward.34} parent=0 // pred_check_branch
    %18 = sbr.rel (0) target = $region17
  $region16: #{informer_forward.34} parent=0 // pred_region
    _
  $region17: #{informer_forward.34} parent=0 // pred_fallthru
    _
  // Predicated region
  $region18: #{informer_forward.34} parent=0 // pred_check
    _
  $region19: #{informer_forward.34} parent=0 // pred_check_branch
    %20 = sbr.rel (0) target = $region21
  $region20: #{informer_forward.34} parent=0 // pred_region
    _
  $region21: #{informer_forward.34} parent=0 // pred_fallthru
    _
  // Predicated region
  $region22: #{informer_forward.34} parent=0 // pred_check
    _
  $region23: #{informer_forward.34} parent=0 // pred_check_branch
    %22 = sbr.rel (0) target = $region25
  $region24: #{informer_forward.34} parent=0 // pred_region
    _
  $region25: #{informer_forward.34} parent=0 // pred_fallthru
    _
  %p24 = scmp.eq.s32.totalorder 0, 0
  // Predicated region
  $region26: #{informer_forward.34} parent=0 // pred_check
    %p25 = pneg %p24
  $region27: #{informer_forward.34} parent=0 // pred_check_branch
    %27 = sbr.rel (%p25) target = $region29
  $region28: #{informer_forward.34} parent=0 // pred_region
    %vm28 = vcmask 261120
    %29 = vst.msk [vmem:[#allocation2] sm:$0xff] %vm28, 0.0
    %30 = vst.msk [vmem:[#allocation2 + $0x8] sm:$0xff] %vm28, 0.0
  $region29: #{informer_forward.34} parent=0 // pred_fallthru
    _
  %v31 = vld [vmem:[#allocation2] sm:$0xff]
  %v32 = vld [vmem:[#allocation2 + $0x8] sm:$0xff]
  %v33 = vld [vmem:[%s0] sm:$0xf]
  %v34 = vld [vmem:[%s0 + $0x4] sm:$0xf]
  %v35 = vld [vmem:[%s1] sm:$0xf]
  %v36 = vld [vmem:[%s1 + $0x4] sm:$0xf]
  %v37 = vld [vmem:[%s1 + $0x8] sm:$0xf]
  %v38 = vld [vmem:[%s1 + $0xc] sm:$0xf]
  %v41 = vunpack.c.l.b16 %v33
  %v42 = vunpack.c.l.b16 %v34
  %v43 = vpack.c.b16 %v42, %v41
  %v48 = vunpack.c.l.b16 %v35
  %v49 = vunpack.c.l.b16 %v36
  %v50 = vunpack.c.l.b16 %v37
  %v51 = vunpack.c.l.b16 %v38
  %v52 = vpack.c.b16 %v49, %v48
  %v53 = vpack.c.b16 %v51, %v50
  %vm56 = vcmask 261120
  %v58 = vsel %vm56, %v43, 0
  %60 = vmatprep.subr.bf16.mxu0 0
  %61 = vmatpush1.bf16.msra.mxu0 0
  %62 = vmatprep.subr.bf16.mxu0 0
  %63 = vmatpush1.bf16.msra.mxu0 0
  %64 = vmatprep.subr.bf16.mxu0 0
  %65 = vmatpush1.bf16.msra.mxu0 0
  %66 = vmatprep.subr.bf16.mxu0 0
  %67 = vmatpush1.bf16.msra.mxu0 0
  %68 = vmatprep.subr.bf16.mxu0 0
  %69 = vmatpush1.bf16.msra.mxu0 0
  %70 = vmatprep.subr.bf16.mxu0 0
  %71 = vmatpush1.bf16.msra.mxu0 0
  %72 = vmatprep.subr.bf16.mxu0 0
  %73 = vmatpush1.bf16.msra.mxu0 %v53
  %74 = vmatprep.subr.bf16.mxu0 0
  %75 = vmatpush1.bf16.msra.mxu0 %v52
  %76 = vmatprep.subr.bf16.mxu0 0
  %77 = vmatpush2.bf16.msra.mxu0 0
  %78 = vmatprep.subr.bf16.mxu0 0
  %79 = vmatpush2.bf16.msra.mxu0 0
  %80 = vmatprep.subr.bf16.mxu0 0
  %81 = vmatpush2.bf16.msra.mxu0 0
  %82 = vmatprep.subr.bf16.mxu0 0
  %83 = vmatpush2.bf16.msra.mxu0 0
  %84 = vmatprep.subr.bf16.mxu0 0
  %85 = vmatpush2.bf16.msra.mxu0 0
  %86 = vmatprep.subr.bf16.mxu0 0
  %87 = vmatpush2.bf16.msra.mxu0 0
  %88 = vmatprep.subr.bf16.mxu0 0
  %89 = vmatpush2.bf16.msra.mxu0 0
  %90 = vmatprep.subr.bf16.mxu0 0
  %91 = vmatpush2.bf16.msra.mxu0 0
  %92 = vmatprep.mubr.bf16.mxu0 0
  %93 = vmatmul.mubr.bf16.gmra.mxu0 %v58
  %v94 = vpop.f32.mrf.mxu0
  %v95 = vadd.f32 0.0, %v94
  %v96 = vpop.f32.mrf.mxu0
  %v97 = vpop.f32.mrf.mxu0
  %v98 = vadd.f32 0.0, %v97
  %v99 = vpop.f32.mrf.mxu0
  %100 = vdwg.mxu0
  %v101 = vadd.f32 %v31, %v95
  %v102 = vadd.f32 %v32, %v98
  %103 = vst.msk [vmem:[#allocation2] sm:$0xff] %vm56, %v101
  %104 = vst.msk [vmem:[#allocation2 + $0x8] sm:$0xff] %vm56, %v102
  // Predicated region
  $region30: #{informer_forward.34} parent=0 // pred_check
    %p105 = pneg %p24
  $region31: #{informer_forward.34} parent=0 // pred_check_branch
    %107 = sbr.rel (%p105) target = $region33
  $region32: #{informer_forward.34} parent=0 // pred_region
    %v108 = vld [vmem:[#allocation2] sm:$0xff]
    %v109 = vld [vmem:[#allocation2 + $0x8] sm:$0xff]
    %v110 = vld [vmem:[%s2] sm:$0x1]
    %v112 = vlaneseq
    %v113 = vshrl.u32 %v112, 7
    %v114 = vsub.s32 0, %v113
    %v115 = vrot.slane %v110, %v114
    %v117 = vadd.f32 %v108, %v115
    %v118 = vadd.f32 %v109, %v115
    %v119 = vld [vmem:[%s3] sm:$0xf]
    %v120 = vld [vmem:[%s3 + $0x4] sm:$0xf]
    %v121 = vunpack.c.l.bf16 %v119
    %v122 = vunpack.c.l.bf16 %v120
    %v123 = vadd.f32 %v117, %v121
    %v124 = vadd.f32 %v118, %v122
    %v125 = vsel %vm56, %v123, 0.0
    %126 = vadd.xlane.f32.xlu0 %v125
    %v127 = vpop.xlane.xlu0 %126
    %v128 = vsel %vm56, %v124, 0.0
    %129 = vadd.xlane.f32.xlu0 %v128
    %v130 = vpop.xlane.xlu0 %129
    %v131 = vrcp.pop 32.0
    %v132 = vmul.f32 %v127, %v131
    %v133 = vmul.f32 %v130, %v131
    %v134 = vsub.f32 %v123, %v132
    %v135 = vsub.f32 %v124, %v133
    %v136 = vmul.f32 %v134, %v134
    %v137 = vmul.f32 %v135, %v135
    %v138 = vsel %vm56, %v136, 0.0
    %139 = vadd.xlane.f32.xlu0 %v138
    %v140 = vpop.xlane.xlu0 %139
    %v141 = vsel %vm56, %v137, 0.0
    %142 = vadd.xlane.f32.xlu0 %v141
    %v143 = vpop.xlane.xlu0 %142
    %v144 = vmul.f32 %v140, %v131
    %v145 = vmul.f32 %v143, %v131
    %v146 = vadd.f32 %v144, 1e-05
    %v147 = vadd.f32 %v145, 1e-05
    %v148 = vrsqrt.pop %v146
    %v149 = vrsqrt.pop %v147
    %v150 = vmul.f32 %v134, %v148
    %v151 = vmul.f32 %v135, %v149
    %v152 = vld [vmem:[%s4] sm:$0x1]
    %v154 = vlaneseq
    %v155 = vshrl.u32 %v154, 7
    %v156 = vsub.s32 0, %v155
    %v157 = vrot.slane %v152, %v156
    %v159 = vmul.f32 %v150, %v157
    %v160 = vmul.f32 %v151, %v157
    %v161 = vld [vmem:[%s5] sm:$0x1]
    %v163 = vlaneseq
    %v164 = vshrl.u32 %v163, 7
    %v165 = vsub.s32 0, %v164
    %v166 = vrot.slane %v161, %v165
    %v168 = vadd.f32 %v159, %v166
    %v169 = vadd.f32 %v160, %v166
    %v170 = vpack.c.bf16 %v169, %v168
    %v172 = vunpack.c.l.b16 %v170
    %v173 = vunpack.c.h.b16 %v170
    %v174 = vpack.c.b16 %v172, %v172
    %v175 = vpack.c.b16 %v173, %v173
    %vm178 = vcmask 257024
    %179 = vst.msk [vmem:[%s6] sm:$0xf] %vm178, %v174
    %180 = vst.msk [vmem:[%s6 + $0x4] sm:$0xf] %vm178, %v175
  $region33: #{informer_forward.34} parent=0 // pred_fallthru
    _
  // Predicated region
  $region34: #{informer_forward.34} parent=0 // pred_check
    _
  $region35: #{informer_forward.34} parent=0 // pred_check_branch
    %182 = sbr.rel (0) target = $region37
  $region36: #{informer_forward.34} parent=0 // pred_region
    _
  $region37: #{informer_forward.34} parent=0 // pred_fallthru
    _
  // Predicated region
  $region38: #{informer_forward.34} parent=0 // pred_check
    _
  $region39: #{informer_forward.34} parent=0 // pred_check_branch
    %184 = sbr.rel (0) target = $region41
  $region40: #{informer_forward.34} parent=0 // pred_region
    _
  $region41: #{informer_forward.34} parent=0 // pred_fallthru
    _

// kernel: informer_forward.37
$region0: #{informer_forward.37}
  #allocation0 [shape = 'u32[]', space=smem, size = 0x4, offset = 0x4, fixed_abs, tag = 'smem constant byte address 0x4 - core index']
  #allocation1 [shape = 'u32[144,128]{1,0:T(1,128)}', space=vmem, size = 0x12000, scoped, tag = 'internal scratch']
  %s0 = inlined_call_operand.vmem [shape: bf16[16,32], index: 0, kind: input, shape index: {}]
  %s1 = inlined_call_operand.vmem [shape: f32[1,32], index: 1, kind: input, shape index: {}]
  %s2 = inlined_call_operand.vmem [shape: f32[1,32], index: 2, kind: input, shape index: {}]
  %s3 = inlined_call_operand.vmem [shape: bf16[16,32], index: 3, kind: output, shape index: {}]
  %s4 = sld [smem:[#allocation0]]
  $region22: #{informer_forward.37} parent=0
    _
  %s6 = ssub.s32 1, %s4
  %s7 = scalar_select 0, %s6, %s4
  // Predicated region
  $region2: #{informer_forward.37} parent=0 // pred_check
    _
  $region3: #{informer_forward.37} parent=0 // pred_check_branch
    %9 = sbr.rel (0) target = $region5
  $region4: #{informer_forward.37} parent=0 // pred_region
    _
  $region5: #{informer_forward.37} parent=0 // pred_fallthru
    _
  // Predicated region
  $region6: #{informer_forward.37} parent=0 // pred_check
    _
  $region7: #{informer_forward.37} parent=0 // pred_check_branch
    %11 = sbr.rel (0) target = $region9
  $region8: #{informer_forward.37} parent=0 // pred_region
    _
  $region9: #{informer_forward.37} parent=0 // pred_fallthru
    _
  // Predicated region
  $region10: #{informer_forward.37} parent=0 // pred_check
    _
  $region11: #{informer_forward.37} parent=0 // pred_check_branch
    %13 = sbr.rel (0) target = $region13
  $region12: #{informer_forward.37} parent=0 // pred_region
    _
  $region13: #{informer_forward.37} parent=0 // pred_fallthru
    _
  %v14 = vld [vmem:[%s0] sm:$0xf]
  %v15 = vld [vmem:[%s0 + $0x4] sm:$0xf]
  %v16 = vunpack.c.l.bf16 %v14
  %v17 = vunpack.c.l.bf16 %v15
  %vm18 = vcmask 261120
  %v19 = vsel %vm18, %v16, 0.0
  %20 = vadd.xlane.f32.xlu0 %v19
  %v21 = vpop.xlane.xlu0 %20
  %v22 = vsel %vm18, %v17, 0.0
  %23 = vadd.xlane.f32.xlu0 %v22
  %v24 = vpop.xlane.xlu0 %23
  %v25 = vrcp.pop 32.0
  %v26 = vmul.f32 %v21, %v25
  %v27 = vmul.f32 %v24, %v25
  %v28 = vsub.f32 %v16, %v26
  %v29 = vsub.f32 %v17, %v27
  %v30 = vmul.f32 %v28, %v28
  %v31 = vmul.f32 %v29, %v29
  %v32 = vsel %vm18, %v30, 0.0
  %33 = vadd.xlane.f32.xlu0 %v32
  %v34 = vpop.xlane.xlu0 %33
  %v35 = vsel %vm18, %v31, 0.0
  %36 = vadd.xlane.f32.xlu0 %v35
  %v37 = vpop.xlane.xlu0 %36
  %v38 = vmul.f32 %v34, %v25
  %v39 = vmul.f32 %v37, %v25
  %v40 = vadd.f32 %v38, 1e-05
  %v41 = vadd.f32 %v39, 1e-05
  %v42 = vrsqrt.pop %v40
  %v43 = vrsqrt.pop %v41
  %v44 = vmul.f32 %v28, %v42
  %v45 = vmul.f32 %v29, %v43
  %v46 = vld [vmem:[%s1] sm:$0x1]
  %v48 = vlaneseq
  %v49 = vshrl.u32 %v48, 7
  %v50 = vsub.s32 0, %v49
  %v51 = vrot.slane %v46, %v50
  %v53 = vmul.f32 %v44, %v51
  %v54 = vmul.f32 %v45, %v51
  %v55 = vld [vmem:[%s2] sm:$0x1]
  %v57 = vlaneseq
  %v58 = vshrl.u32 %v57, 7
  %v59 = vsub.s32 0, %v58
  %v60 = vrot.slane %v55, %v59
  %v62 = vadd.f32 %v53, %v60
  %v63 = vadd.f32 %v54, %v60
  %v64 = vpack.c.bf16 %v63, %v62
  %v66 = vunpack.c.l.b16 %v64
  %v67 = vunpack.c.h.b16 %v64
  %v68 = vpack.c.b16 %v66, %v66
  %v69 = vpack.c.b16 %v67, %v67
  %vm72 = vcmask 257024
  %73 = vst.msk [vmem:[%s3] sm:$0xf] %vm72, %v68
  %74 = vst.msk [vmem:[%s3 + $0x4] sm:$0xf] %vm72, %v69
  // Predicated region
  $region14: #{informer_forward.37} parent=0 // pred_check
    _
  $region15: #{informer_forward.37} parent=0 // pred_check_branch
    %76 = sbr.rel (0) target = $region17
  $region16: #{informer_forward.37} parent=0 // pred_region
    _
  $region17: #{informer_forward.37} parent=0 // pred_fallthru
    _
  // Predicated region
  $region18: #{informer_forward.37} parent=0 // pred_check
    _
  $region19: #{informer_forward.37} parent=0 // pred_check_branch
    %78 = sbr.rel (0) target = $region21
  $region20: #{informer_forward.37} parent=0 // pred_region
    _
  $region21: #{informer_forward.37} parent=0 // pred_fallthru
    _

// kernel: informer_forward.43
$region0: #{informer_forward.43}
  #allocation0 [shape = 'u32[]', space=smem, size = 0x4, offset = 0x4, fixed_abs, tag = 'smem constant byte address 0x4 - core index']
  #allocation1 [shape = 'u32[144,128]{1,0:T(1,128)}', space=vmem, size = 0x12000, scoped, tag = 'internal scratch']
  #allocation2 [shape = 'f32[16,64]{1,0:T(8,128)}', space=vmem, size = 0x2000, scoped, tag = 'scratch operand']
  %s0 = inlined_call_operand.vmem [shape: bf16[16,32], index: 0, kind: input, shape index: {}]
  %s1 = inlined_call_operand.vmem [shape: bf16[32,64], index: 1, kind: input, shape index: {}]
  %s2 = inlined_call_operand.vmem [shape: f32[1,64], index: 2, kind: input, shape index: {}]
  %s3 = inlined_call_operand.vmem [shape: bf16[16,64], index: 3, kind: output, shape index: {}]
  %s4 = sld [smem:[#allocation0]]
  $region30: #{informer_forward.43} parent=0
    _
  %s6 = ssub.s32 1, %s4
  %s7 = scalar_select 0, %s6, %s4
  // Predicated region
  $region2: #{informer_forward.43} parent=0 // pred_check
    _
  $region3: #{informer_forward.43} parent=0 // pred_check_branch
    %9 = sbr.rel (0) target = $region5
  $region4: #{informer_forward.43} parent=0 // pred_region
    _
  $region5: #{informer_forward.43} parent=0 // pred_fallthru
    _
  // Predicated region
  $region6: #{informer_forward.43} parent=0 // pred_check
    _
  $region7: #{informer_forward.43} parent=0 // pred_check_branch
    %11 = sbr.rel (0) target = $region9
  $region8: #{informer_forward.43} parent=0 // pred_region
    _
  $region9: #{informer_forward.43} parent=0 // pred_fallthru
    _
  // Predicated region
  $region10: #{informer_forward.43} parent=0 // pred_check
    _
  $region11: #{informer_forward.43} parent=0 // pred_check_branch
    %13 = sbr.rel (0) target = $region13
  $region12: #{informer_forward.43} parent=0 // pred_region
    _
  $region13: #{informer_forward.43} parent=0 // pred_fallthru
    _
  %p15 = scmp.eq.s32.totalorder 0, 0
  // Predicated region
  $region14: #{informer_forward.43} parent=0 // pred_check
    %p16 = pneg %p15
  $region15: #{informer_forward.43} parent=0 // pred_check_branch
    %18 = sbr.rel (%p16) target = $region17
  $region16: #{informer_forward.43} parent=0 // pred_region
    %vm19 = vcmask 523264
    %20 = vst.msk [vmem:[#allocation2] sm:$0xff] %vm19, 0.0
    %21 = vst.msk [vmem:[#allocation2 + $0x8] sm:$0xff] %vm19, 0.0
  $region17: #{informer_forward.43} parent=0 // pred_fallthru
    _
  %v22 = vld [vmem:[#allocation2] sm:$0xff]
  %v23 = vld [vmem:[#allocation2 + $0x8] sm:$0xff]
  %v24 = vld [vmem:[%s0] sm:$0xf]
  %v25 = vld [vmem:[%s0 + $0x4] sm:$0xf]
  %v26 = vld [vmem:[%s1] sm:$0xf]
  %v27 = vld [vmem:[%s1 + $0x4] sm:$0xf]
  %v28 = vld [vmem:[%s1 + $0x8] sm:$0xf]
  %v29 = vld [vmem:[%s1 + $0xc] sm:$0xf]
  %v32 = vunpack.c.l.b16 %v24
  %v33 = vunpack.c.l.b16 %v25
  %v34 = vpack.c.b16 %v33, %v32
  %v39 = vunpack.c.l.b16 %v26
  %v40 = vunpack.c.l.b16 %v27
  %v41 = vunpack.c.l.b16 %v28
  %v42 = vunpack.c.l.b16 %v29
  %v43 = vpack.c.b16 %v40, %v39
  %v44 = vpack.c.b16 %v42, %v41
  %vm47 = vcmask 261120
  %v49 = vsel %vm47, %v34, 0
  %51 = vmatprep.subr.bf16.mxu0 0
  %52 = vmatpush1.bf16.msra.mxu0 0
  %53 = vmatprep.subr.bf16.mxu0 0
  %54 = vmatpush1.bf16.msra.mxu0 0
  %55 = vmatprep.subr.bf16.mxu0 0
  %56 = vmatpush1.bf16.msra.mxu0 0
  %57 = vmatprep.subr.bf16.mxu0 0
  %58 = vmatpush1.bf16.msra.mxu0 0
  %59 = vmatprep.subr.bf16.mxu0 0
  %60 = vmatpush1.bf16.msra.mxu0 0
  %61 = vmatprep.subr.bf16.mxu0 0
  %62 = vmatpush1.bf16.msra.mxu0 0
  %63 = vmatprep.subr.bf16.mxu0 0
  %64 = vmatpush1.bf16.msra.mxu0 %v44
  %65 = vmatprep.subr.bf16.mxu0 0
  %66 = vmatpush1.bf16.msra.mxu0 %v43
  %67 = vmatprep.subr.bf16.mxu0 0
  %68 = vmatpush2.bf16.msra.mxu0 0
  %69 = vmatprep.subr.bf16.mxu0 0
  %70 = vmatpush2.bf16.msra.mxu0 0
  %71 = vmatprep.subr.bf16.mxu0 0
  %72 = vmatpush2.bf16.msra.mxu0 0
  %73 = vmatprep.subr.bf16.mxu0 0
  %74 = vmatpush2.bf16.msra.mxu0 0
  %75 = vmatprep.subr.bf16.mxu0 0
  %76 = vmatpush2.bf16.msra.mxu0 0
  %77 = vmatprep.subr.bf16.mxu0 0
  %78 = vmatpush2.bf16.msra.mxu0 0
  %79 = vmatprep.subr.bf16.mxu0 0
  %80 = vmatpush2.bf16.msra.mxu0 0
  %81 = vmatprep.subr.bf16.mxu0 0
  %82 = vmatpush2.bf16.msra.mxu0 0
  %83 = vmatprep.mubr.bf16.mxu0 0
  %84 = vmatmul.mubr.bf16.gmra.mxu0 %v49
  %v85 = vpop.f32.mrf.mxu0
  %v86 = vadd.f32 0.0, %v85
  %v87 = vpop.f32.mrf.mxu0
  %v88 = vpop.f32.mrf.mxu0
  %v89 = vadd.f32 0.0, %v88
  %v90 = vpop.f32.mrf.mxu0
  %91 = vdwg.mxu0
  %v92 = vadd.f32 %v22, %v86
  %v93 = vadd.f32 %v23, %v89
  %vm94 = vcmask 523264
  %95 = vst.msk [vmem:[#allocation2] sm:$0xff] %vm94, %v92
  %96 = vst.msk [vmem:[#allocation2 + $0x8] sm:$0xff] %vm94, %v93
  // Predicated region
  $region18: #{informer_forward.43} parent=0 // pred_check
    %p97 = pneg %p15
  $region19: #{informer_forward.43} parent=0 // pred_check_branch
    %99 = sbr.rel (%p97) target = $region21
  $region20: #{informer_forward.43} parent=0 // pred_region
    %v100 = vld [vmem:[#allocation2] sm:$0xff]
    %v101 = vld [vmem:[#allocation2 + $0x8] sm:$0xff]
    %v102 = vld [vmem:[%s2] sm:$0x1]
    %v104 = vlaneseq
    %v105 = vshrl.u32 %v104, 7
    %v106 = vsub.s32 0, %v105
    %v107 = vrot.slane %v102, %v106
    %v109 = vadd.f32 %v100, %v107
    %v110 = vadd.f32 %v101, %v107
    %v111 = vpack.c.bf16 %v110, %v109
    %v113 = vunpack.c.l.b16 %v111
    %v114 = vunpack.c.h.b16 %v111
    %v115 = vpack.c.b16 %v113, %v113
    %v116 = vpack.c.b16 %v114, %v114
    %vm119 = vcmask 519168
    %120 = vst.msk [vmem:[%s3] sm:$0xf] %vm119, %v115
    %121 = vst.msk [vmem:[%s3 + $0x4] sm:$0xf] %vm119, %v116
  $region21: #{informer_forward.43} parent=0 // pred_fallthru
    _
  // Predicated region
  $region22: #{informer_forward.43} parent=0 // pred_check
    _
  $region23: #{informer_forward.43} parent=0 // pred_check_branch
    %123 = sbr.rel (0) target = $region25
  $region24: #{informer_forward.43} parent=0 // pred_region
    _
  $region25: #{informer_forward.43} parent=0 // pred_fallthru
    _
  // Predicated region
  $region26: #{informer_forward.43} parent=0 // pred_check
    _
  $region27: #{informer_forward.43} parent=0 // pred_check_branch
    %125 = sbr.rel (0) target = $region29
  $region28: #{informer_forward.43} parent=0 // pred_region
    _
  $region29: #{informer_forward.43} parent=0 // pred_fallthru
    _

// kernel: informer_forward.42
$region0: #{informer_forward.42}
  #allocation0 [shape = 'u32[]', space=smem, size = 0x4, offset = 0x4, fixed_abs, tag = 'smem constant byte address 0x4 - core index']
  #allocation1 [shape = 'u32[144,128]{1,0:T(1,128)}', space=vmem, size = 0x12000, scoped, tag = 'internal scratch']
  #allocation2 [shape = 'f32[32,32]{1,0:T(8,128)}', space=vmem, size = 0x4000, scoped, tag = 'scratch operand']
  %s0 = inlined_call_operand.vmem [shape: bf16[32,32], index: 0, kind: input, shape index: {}]
  %s1 = inlined_call_operand.vmem [shape: bf16[32,32], index: 1, kind: input, shape index: {}]
  %s2 = inlined_call_operand.vmem [shape: f32[1,32], index: 2, kind: input, shape index: {}]
  %s3 = inlined_call_operand.vmem [shape: bf16[32,32], index: 3, kind: output, shape index: {}]
  %s4 = sld [smem:[#allocation0]]
  $region30: #{informer_forward.42} parent=0
    _
  %s6 = ssub.s32 1, %s4
  %s7 = scalar_select 0, %s6, %s4
  // Predicated region
  $region2: #{informer_forward.42} parent=0 // pred_check
    _
  $region3: #{informer_forward.42} parent=0 // pred_check_branch
    %9 = sbr.rel (0) target = $region5
  $region4: #{informer_forward.42} parent=0 // pred_region
    _
  $region5: #{informer_forward.42} parent=0 // pred_fallthru
    _
  // Predicated region
  $region6: #{informer_forward.42} parent=0 // pred_check
    _
  $region7: #{informer_forward.42} parent=0 // pred_check_branch
    %11 = sbr.rel (0) target = $region9
  $region8: #{informer_forward.42} parent=0 // pred_region
    _
  $region9: #{informer_forward.42} parent=0 // pred_fallthru
    _
  // Predicated region
  $region10: #{informer_forward.42} parent=0 // pred_check
    _
  $region11: #{informer_forward.42} parent=0 // pred_check_branch
    %13 = sbr.rel (0) target = $region13
  $region12: #{informer_forward.42} parent=0 // pred_region
    _
  $region13: #{informer_forward.42} parent=0 // pred_fallthru
    _
  %p15 = scmp.eq.s32.totalorder 0, 0
  // Predicated region
  $region14: #{informer_forward.42} parent=0 // pred_check
    %p16 = pneg %p15
  $region15: #{informer_forward.42} parent=0 // pred_check_branch
    %18 = sbr.rel (%p16) target = $region17
  $region16: #{informer_forward.42} parent=0 // pred_region
    %vm19 = vcmask 261120
    %20 = vst.msk [vmem:[#allocation2] sm:$0xff] %vm19, 0.0
    %21 = vst.msk [vmem:[#allocation2 + $0x8] sm:$0xff] %vm19, 0.0
    %22 = vst.msk [vmem:[#allocation2 + $0x10] sm:$0xff] %vm19, 0.0
    %23 = vst.msk [vmem:[#allocation2 + $0x18] sm:$0xff] %vm19, 0.0
  $region17: #{informer_forward.42} parent=0 // pred_fallthru
    _
  %v24 = vld [vmem:[#allocation2] sm:$0xff]
  %v25 = vld [vmem:[#allocation2 + $0x8] sm:$0xff]
  %v26 = vld [vmem:[#allocation2 + $0x10] sm:$0xff]
  %v27 = vld [vmem:[#allocation2 + $0x18] sm:$0xff]
  %v28 = vld [vmem:[%s0] sm:$0xf]
  %v29 = vld [vmem:[%s0 + $0x4] sm:$0xf]
  %v30 = vld [vmem:[%s0 + $0x8] sm:$0xf]
  %v31 = vld [vmem:[%s0 + $0xc] sm:$0xf]
  %v32 = vld [vmem:[%s1] sm:$0xf]
  %v33 = vld [vmem:[%s1 + $0x4] sm:$0xf]
  %v34 = vld [vmem:[%s1 + $0x8] sm:$0xf]
  %v35 = vld [vmem:[%s1 + $0xc] sm:$0xf]
  %v40 = vunpack.c.l.b16 %v28
  %v41 = vunpack.c.l.b16 %v29
  %v42 = vunpack.c.l.b16 %v30
  %v43 = vunpack.c.l.b16 %v31
  %v44 = vpack.c.b16 %v41, %v40
  %v45 = vpack.c.b16 %v43, %v42
  %v50 = vunpack.c.l.b16 %v32
  %v51 = vunpack.c.l.b16 %v33
  %v52 = vunpack.c.l.b16 %v34
  %v53 = vunpack.c.l.b16 %v35
  %v54 = vpack.c.b16 %v51, %v50
  %v55 = vpack.c.b16 %v53, %v52
  %vm58 = vcmask 261120
  %v60 = vsel %vm58, %v44, 0
  %v63 = vsel %vm58, %v45, 0
  %65 = vmatprep.subr.bf16.mxu0 0
  %66 = vmatpush1.bf16.msra.mxu0 0
  %67 = vmatprep.subr.bf16.mxu0 0
  %68 = vmatpush1.bf16.msra.mxu0 0
  %69 = vmatprep.subr.bf16.mxu0 0
  %70 = vmatpush1.bf16.msra.mxu0 0
  %71 = vmatprep.subr.bf16.mxu0 0
  %72 = vmatpush1.bf16.msra.mxu0 0
  %73 = vmatprep.subr.bf16.mxu0 0
  %74 = vmatpush1.bf16.msra.mxu0 0
  %75 = vmatprep.subr.bf16.mxu0 0
  %76 = vmatpush1.bf16.msra.mxu0 0
  %77 = vmatprep.subr.bf16.mxu0 0
  %78 = vmatpush1.bf16.msra.mxu0 %v55
  %79 = vmatprep.subr.bf16.mxu0 0
  %80 = vmatpush1.bf16.msra.mxu0 %v54
  %81 = vmatprep.subr.bf16.mxu0 0
  %82 = vmatpush2.bf16.msra.mxu0 0
  %83 = vmatprep.subr.bf16.mxu0 0
  %84 = vmatpush2.bf16.msra.mxu0 0
  %85 = vmatprep.subr.bf16.mxu0 0
  %86 = vmatpush2.bf16.msra.mxu0 0
  %87 = vmatprep.subr.bf16.mxu0 0
  %88 = vmatpush2.bf16.msra.mxu0 0
  %89 = vmatprep.subr.bf16.mxu0 0
  %90 = vmatpush2.bf16.msra.mxu0 0
  %91 = vmatprep.subr.bf16.mxu0 0
  %92 = vmatpush2.bf16.msra.mxu0 0
  %93 = vmatprep.subr.bf16.mxu0 0
  %94 = vmatpush2.bf16.msra.mxu0 0
  %95 = vmatprep.subr.bf16.mxu0 0
  %96 = vmatpush2.bf16.msra.mxu0 0
  %97 = vmatprep.mubr.bf16.mxu0 0
  %98 = vmatmul.mubr.bf16.gmra.mxu0 %v60
  %v99 = vpop.f32.mrf.mxu0
  %v100 = vadd.f32 0.0, %v99
  %v101 = vpop.f32.mrf.mxu0
  %v102 = vpop.f32.mrf.mxu0
  %v103 = vadd.f32 0.0, %v102
  %v104 = vpop.f32.mrf.mxu0
  %105 = vmatprep.mubr.bf16.mxu0 0
  %106 = vmatmul.mubr.bf16.gmra.mxu0 %v63
  %v107 = vpop.f32.mrf.mxu0
  %v108 = vadd.f32 0.0, %v107
  %v109 = vpop.f32.mrf.mxu0
  %v110 = vpop.f32.mrf.mxu0
  %v111 = vadd.f32 0.0, %v110
  %v112 = vpop.f32.mrf.mxu0
  %113 = vdwg.mxu0
  %v114 = vadd.f32 %v24, %v100
  %v115 = vadd.f32 %v25, %v103
  %v116 = vadd.f32 %v26, %v108
  %v117 = vadd.f32 %v27, %v111
  %118 = vst.msk [vmem:[#allocation2] sm:$0xff] %vm58, %v114
  %119 = vst.msk [vmem:[#allocation2 + $0x8] sm:$0xff] %vm58, %v115
  %120 = vst.msk [vmem:[#allocation2 + $0x10] sm:$0xff] %vm58, %v116
  %121 = vst.msk [vmem:[#allocation2 + $0x18] sm:$0xff] %vm58, %v117
  // Predicated region
  $region18: #{informer_forward.42} parent=0 // pred_check
    %p122 = pneg %p15
  $region19: #{informer_forward.42} parent=0 // pred_check_branch
    %124 = sbr.rel (%p122) target = $region21
  $region20: #{informer_forward.42} parent=0 // pred_region
    %v125 = vld [vmem:[#allocation2] sm:$0xff]
    %v126 = vld [vmem:[#allocation2 + $0x8] sm:$0xff]
    %v127 = vld [vmem:[#allocation2 + $0x10] sm:$0xff]
    %v128 = vld [vmem:[#allocation2 + $0x18] sm:$0xff]
    %v129 = vld [vmem:[%s2] sm:$0x1]
    %v131 = vlaneseq
    %v132 = vshrl.u32 %v131, 7
    %v133 = vsub.s32 0, %v132
    %v134 = vrot.slane %v129, %v133
    %v136 = vadd.f32 %v125, %v134
    %v137 = vadd.f32 %v126, %v134
    %v138 = vadd.f32 %v127, %v134
    %v139 = vadd.f32 %v128, %v134
    %v140 = vpack.c.bf16 %v137, %v136
    %v141 = vpack.c.bf16 %v139, %v138
    %v144 = vunpack.c.l.b16 %v140
    %v145 = vunpack.c.h.b16 %v140
    %v146 = vunpack.c.l.b16 %v141
    %v147 = vunpack.c.h.b16 %v141
    %v148 = vpack.c.b16 %v144, %v144
    %v149 = vpack.c.b16 %v145, %v145
    %v150 = vpack.c.b16 %v146, %v146
    %v151 = vpack.c.b16 %v147, %v147
    %vm156 = vcmask 257024
    %157 = vst.msk [vmem:[%s3] sm:$0xf] %vm156, %v148
    %158 = vst.msk [vmem:[%s3 + $0x4] sm:$0xf] %vm156, %v149
    %159 = vst.msk [vmem:[%s3 + $0x8] sm:$0xf] %vm156, %v150
    %160 = vst.msk [vmem:[%s3 + $0xc] sm:$0xf] %vm156, %v151
  $region21: #{informer_forward.42} parent=0 // pred_fallthru
    _
  // Predicated region
  $region22: #{informer_forward.42} parent=0 // pred_check
    _
  $region23: #{informer_forward.42} parent=0 // pred_check_branch
    %162 = sbr.rel (0) target = $region25
  $region24: #{informer_forward.42} parent=0 // pred_region
    _
  $region25: #{informer_forward.42} parent=0 // pred_fallthru
    _
  // Predicated region
  $region26: #{informer_forward.42} parent=0 // pred_check
    _
  $region27: #{informer_forward.42} parent=0 // pred_check_branch
    %164 = sbr.rel (0) target = $region29
  $region28: #{informer_forward.42} parent=0 // pred_region
    _
  $region29: #{informer_forward.42} parent=0 // pred_fallthru
    _

// kernel: informer_forward.48
$region0: #{informer_forward.48}
  #allocation0 [shape = 'u32[]', space=smem, size = 0x4, offset = 0x4, fixed_abs, tag = 'smem constant byte address 0x4 - core index']
  #allocation1 [shape = 'u32[144,128]{1,0:T(1,128)}', space=vmem, size = 0x12000, scoped, tag = 'internal scratch']
  %s0 = inlined_call_operand.vmem [shape: bf16[32,32], index: 0, kind: input, shape index: {}]
  %s1 = inlined_call_operand.vmem [shape: f32[1,32], index: 1, kind: input, shape index: {}]
  %s2 = inlined_call_operand.vmem [shape: f32[1,32], index: 2, kind: input, shape index: {}]
  %s3 = inlined_call_operand.vmem [shape: bf16[32,32], index: 3, kind: output, shape index: {}]
  %s4 = sld [smem:[#allocation0]]
  $region22: #{informer_forward.48} parent=0
    _
  %s6 = ssub.s32 1, %s4
  %s7 = scalar_select 0, %s6, %s4
  // Predicated region
  $region2: #{informer_forward.48} parent=0 // pred_check
    _
  $region3: #{informer_forward.48} parent=0 // pred_check_branch
    %9 = sbr.rel (0) target = $region5
  $region4: #{informer_forward.48} parent=0 // pred_region
    _
  $region5: #{informer_forward.48} parent=0 // pred_fallthru
    _
  // Predicated region
  $region6: #{informer_forward.48} parent=0 // pred_check
    _
  $region7: #{informer_forward.48} parent=0 // pred_check_branch
    %11 = sbr.rel (0) target = $region9
  $region8: #{informer_forward.48} parent=0 // pred_region
    _
  $region9: #{informer_forward.48} parent=0 // pred_fallthru
    _
  // Predicated region
  $region10: #{informer_forward.48} parent=0 // pred_check
    _
  $region11: #{informer_forward.48} parent=0 // pred_check_branch
    %13 = sbr.rel (0) target = $region13
  $region12: #{informer_forward.48} parent=0 // pred_region
    _
  $region13: #{informer_forward.48} parent=0 // pred_fallthru
    _
  %v14 = vld [vmem:[%s0] sm:$0xf]
  %v15 = vld [vmem:[%s0 + $0x4] sm:$0xf]
  %v16 = vld [vmem:[%s0 + $0x8] sm:$0xf]
  %v17 = vld [vmem:[%s0 + $0xc] sm:$0xf]
  %v18 = vunpack.c.l.bf16 %v14
  %v19 = vunpack.c.l.bf16 %v15
  %v20 = vunpack.c.l.bf16 %v16
  %v21 = vunpack.c.l.bf16 %v17
  %vm22 = vcmask 261120
  %v23 = vsel %vm22, %v18, 0.0
  %24 = vadd.xlane.f32.xlu0 %v23
  %v25 = vpop.xlane.xlu0 %24
  %v26 = vsel %vm22, %v19, 0.0
  %27 = vadd.xlane.f32.xlu0 %v26
  %v28 = vpop.xlane.xlu0 %27
  %v29 = vsel %vm22, %v20, 0.0
  %30 = vadd.xlane.f32.xlu0 %v29
  %v31 = vpop.xlane.xlu0 %30
  %v32 = vsel %vm22, %v21, 0.0
  %33 = vadd.xlane.f32.xlu0 %v32
  %v34 = vpop.xlane.xlu0 %33
  %v35 = vrcp.pop 32.0
  %v36 = vmul.f32 %v25, %v35
  %v37 = vmul.f32 %v28, %v35
  %v38 = vmul.f32 %v31, %v35
  %v39 = vmul.f32 %v34, %v35
  %v40 = vsub.f32 %v18, %v36
  %v41 = vsub.f32 %v19, %v37
  %v42 = vsub.f32 %v20, %v38
  %v43 = vsub.f32 %v21, %v39
  %v44 = vmul.f32 %v40, %v40
  %v45 = vmul.f32 %v41, %v41
  %v46 = vmul.f32 %v42, %v42
  %v47 = vmul.f32 %v43, %v43
  %v48 = vsel %vm22, %v44, 0.0
  %49 = vadd.xlane.f32.xlu0 %v48
  %v50 = vpop.xlane.xlu0 %49
  %v51 = vsel %vm22, %v45, 0.0
  %52 = vadd.xlane.f32.xlu0 %v51
  %v53 = vpop.xlane.xlu0 %52
  %v54 = vsel %vm22, %v46, 0.0
  %55 = vadd.xlane.f32.xlu0 %v54
  %v56 = vpop.xlane.xlu0 %55
  %v57 = vsel %vm22, %v47, 0.0
  %58 = vadd.xlane.f32.xlu0 %v57
  %v59 = vpop.xlane.xlu0 %58
  %v60 = vmul.f32 %v50, %v35
  %v61 = vmul.f32 %v53, %v35
  %v62 = vmul.f32 %v56, %v35
  %v63 = vmul.f32 %v59, %v35
  %v64 = vadd.f32 %v60, 1e-05
  %v65 = vadd.f32 %v61, 1e-05
  %v66 = vadd.f32 %v62, 1e-05
  %v67 = vadd.f32 %v63, 1e-05
  %v68 = vrsqrt.pop %v64
  %v69 = vrsqrt.pop %v65
  %v70 = vrsqrt.pop %v66
  %v71 = vrsqrt.pop %v67
  %v72 = vmul.f32 %v40, %v68
  %v73 = vmul.f32 %v41, %v69
  %v74 = vmul.f32 %v42, %v70
  %v75 = vmul.f32 %v43, %v71
  %v76 = vld [vmem:[%s1] sm:$0x1]
  %v78 = vlaneseq
  %v79 = vshrl.u32 %v78, 7
  %v80 = vsub.s32 0, %v79
  %v81 = vrot.slane %v76, %v80
  %v83 = vmul.f32 %v72, %v81
  %v84 = vmul.f32 %v73, %v81
  %v85 = vmul.f32 %v74, %v81
  %v86 = vmul.f32 %v75, %v81
  %v87 = vld [vmem:[%s2] sm:$0x1]
  %v89 = vlaneseq
  %v90 = vshrl.u32 %v89, 7
  %v91 = vsub.s32 0, %v90
  %v92 = vrot.slane %v87, %v91
  %v94 = vadd.f32 %v83, %v92
  %v95 = vadd.f32 %v84, %v92
  %v96 = vadd.f32 %v85, %v92
  %v97 = vadd.f32 %v86, %v92
  %v98 = vpack.c.bf16 %v95, %v94
  %v99 = vpack.c.bf16 %v97, %v96
  %v102 = vunpack.c.l.b16 %v98
  %v103 = vunpack.c.h.b16 %v98
  %v104 = vunpack.c.l.b16 %v99
  %v105 = vunpack.c.h.b16 %v99
  %v106 = vpack.c.b16 %v102, %v102
  %v107 = vpack.c.b16 %v103, %v103
  %v108 = vpack.c.b16 %v104, %v104
  %v109 = vpack.c.b16 %v105, %v105
  %vm114 = vcmask 257024
  %115 = vst.msk [vmem:[%s3] sm:$0xf] %vm114, %v106
  %116 = vst.msk [vmem:[%s3 + $0x4] sm:$0xf] %vm114, %v107
  %117 = vst.msk [vmem:[%s3 + $0x8] sm:$0xf] %vm114, %v108
  %118 = vst.msk [vmem:[%s3 + $0xc] sm:$0xf] %vm114, %v109
  // Predicated region
  $region14: #{informer_forward.48} parent=0 // pred_check
    _
  $region15: #{informer_forward.48} parent=0 // pred_check_branch
    %120 = sbr.rel (0) target = $region17
  $region16: #{informer_forward.48} parent=0 // pred_region
    _
  $region17: #{informer_forward.48} parent=0 // pred_fallthru
    _
  // Predicated region
  $region18: #{informer_forward.48} parent=0 // pred_check
    _
  $region19: #{informer_forward.48} parent=0 // pred_check_branch
    %122 = sbr.rel (0) target = $region21
  $region20: #{informer_forward.48} parent=0 // pred_region
    _
  $region21: #{informer_forward.48} parent=0 // pred_fallthru
    _

// kernel: informer_forward.40
$region0: #{informer_forward.40}
  #allocation0 [shape = 'u32[]', space=smem, size = 0x4, offset = 0x4, fixed_abs, tag = 'smem constant byte address 0x4 - core index']
  #allocation1 [shape = 'u32[144,128]{1,0:T(1,128)}', space=vmem, size = 0x12000, scoped, tag = 'internal scratch']
  %s0 = inlined_call_operand.vmem [shape: bf16[2,16,96], index: 0, kind: input, shape index: {}]
  %s1 = inlined_call_operand.vmem [shape: bf16[2,16,32], index: 1, kind: output, shape index: {}]
  %s2 = sld [smem:[#allocation0]]
  $region37: #{informer_forward.40} parent=0
    _
  %s4 = ssub.s32 1, %s2
  %s5 = scalar_select 0, %s4, %s2
  loop: start=0, step=1, limit=4
  $region2: #{informer_forward.40} parent=0 // loop_pre_header
    _
  $region3: #{informer_forward.40} parent=0 // loop_header
    %s7 = sphi 0, %s11
    %p8 = scmp.ge.s32.totalorder %s7, 4
    %s17 = sphi 0, %s19
    %s20 = sphi 0, %s17
    %s21 = sphi 0, %s20
    %s37 = sphi 0, %s21
    %s43 = sphi 0, %s45
    %s46 = sphi 0, %s43
    %s47 = sphi 0, %s46
    %s63 = sphi 0, %s47
  $region4: #{informer_forward.40} parent=0 // loop_header_branch
    %10 = sbr.rel (%p8) target = $region8
  $region5: #{informer_forward.40} parent=0 // loop_body
    %s12 = ssub.s32 %s7, 1
    %s13 = ssub.s32 %s7, 2
    %s14 = sadd.s32 %s7, 1
    %s15 = ssub.s32 %s7, %s14
    %p16 = scmp.eq.s32.totalorder %s15, 0
    %s18 = sadd.s32 %s17, 1
    %s19 = scalar_select %p16, %s17, %s18
    %p22 = pneg %p16
    %p23 = scmp.eq.s32.totalorder %s7, 1
    %p24 = por %p22, %p23
    %p25 = scmp.ne.s32.totalorder %s17, %s20
    %p26 = scmp.eq.s32.totalorder %s7, 0
    %p27 = por %p25, %p26
    %p28 = scmp.ne.s32.totalorder %s17, %s20
    %p29 = scmp.eq.s32.totalorder %s12, 1
    %p30 = por %p28, %p29
    %p31 = scmp.ne.s32.totalorder %s20, %s21
    %p32 = scmp.eq.s32.totalorder %s12, 0
    %p33 = por %p31, %p32
    %p34 = scmp.ne.s32.totalorder %s20, %s21
    %p35 = scmp.eq.s32.totalorder %s13, 1
    %p36 = por %p34, %p35
    %p38 = scmp.ne.s32.totalorder %s21, %s37
    %p39 = scmp.eq.s32.totalorder %s13, 0
    %p40 = por %p38, %p39
    %s41 = ssub.s32 %s7, %s14
    %p42 = scmp.eq.s32.totalorder %s41, 0
    %s44 = sadd.s32 %s43, 1
    %s45 = scalar_select %p42, %s43, %s44
    %p48 = pneg %p42
    %p49 = scmp.eq.s32.totalorder %s7, 1
    %p50 = por %p48, %p49
    %p51 = scmp.ne.s32.totalorder %s43, %s46
    %p52 = scmp.eq.s32.totalorder %s7, 0
    %p53 = por %p51, %p52
    %p54 = scmp.ne.s32.totalorder %s43, %s46
    %p55 = scmp.eq.s32.totalorder %s12, 1
    %p56 = por %p54, %p55
    %p57 = scmp.ne.s32.totalorder %s46, %s47
    %p58 = scmp.eq.s32.totalorder %s12, 0
    %p59 = por %p57, %p58
    %p60 = scmp.ne.s32.totalorder %s46, %s47
    %p61 = scmp.eq.s32.totalorder %s13, 1
    %p62 = por %p60, %p61
    %p64 = scmp.ne.s32.totalorder %s47, %s63
    %p65 = scmp.eq.s32.totalorder %s13, 0
    %p66 = por %p64, %p65
    %p67 = scmp.le.s32.totalorder 1, %s7
    %p68 = scmp.lt.s32.totalorder %s7, 3
    %p69 = pnand %p67, %p68
    %p70 = pneg %p69
    // Predicated region
    $region9: #{informer_forward.40} parent=5 // pred_check
      _
    $region10: #{informer_forward.40} parent=5 // pred_check_branch
      %72 = sbr.rel (%p69) target = $region12
    $region11: #{informer_forward.40} parent=5 // pred_region
      %s73 = ssub.s32 %s7, 1
    $region12: #{informer_forward.40} parent=5 // pred_fallthru
      _
    %p74 = scmp.lt.s32.totalorder %s7, 2
    // Predicated region
    $region13: #{informer_forward.40} parent=5 // pred_check
      %p75 = pneg %p74
    $region14: #{informer_forward.40} parent=5 // pred_check_branch
      %77 = sbr.rel (%p75) target = $region16
    $region15: #{informer_forward.40} parent=5 // pred_region
      // Predicated region
      $region17: #{informer_forward.40} parent=15 // pred_check
        %p78 = pneg %p27
      $region18: #{informer_forward.40} parent=15 // pred_check_branch
        %80 = sbr.rel (%p78) target = $region20
      $region19: #{informer_forward.40} parent=15 // pred_region
        %p81 = scmp.lt.s32.totalorder %s7, 1
        %s82 = scalar_select %p81, %s7, 1
        %s83 = smul.addr %s82, 2
        %s84 = smul.addr %s83, 4
        %s85 = scalar_lea.vmem %s0, %s84
      $region20: #{informer_forward.40} parent=15 // pred_fallthru
        _
    $region16: #{informer_forward.40} parent=5 // pred_fallthru
      _
    %p86 = scmp.le.s32.totalorder 1, %s7
    %p87 = scmp.lt.s32.totalorder %s7, 3
    %p88 = pnand %p86, %p87
    %p89 = pneg %p88
    // Predicated region
    $region21: #{informer_forward.40} parent=5 // pred_check
      _
    $region22: #{informer_forward.40} parent=5 // pred_check_branch
      %91 = sbr.rel (%p88) target = $region24
    $region23: #{informer_forward.40} parent=5 // pred_region
      %s92 = ssub.s32 %s7, 1
      %p93 = scmp.lt.s32.totalorder %s12, 1
      %s94 = scalar_select %p93, %s12, 1
      %s95 = smul.addr %s94, 2
      %s96 = smul.addr %s95, 4
      %s97 = scalar_lea.vmem %s0, %s96
      %p98 = pneg %p33
      %p99 = pneg %p30
      %p100 = pneg %p59
      %p101 = pneg %p56
      %p102 = scmp.lt.s32.totalorder %s12, 1
      %s103 = scalar_select %p102, %s12, 1
      %s104 = smul.addr %s103, 2
      %s105 = smul.addr %s104, 4
      %s106 = scalar_lea.vmem %s1, %s105
      %p107 = scmp.lt.s32.totalorder %s12, 1
      %s108 = scalar_select %p107, %s12, 1
      %s109 = smul.addr %s108, 2
      %s110 = smul.addr %s109, 4
      %s111 = scalar_lea.vmem %s0, %s110
      %p112 = scmp.lt.s32.totalorder %s12, 1
      %s113 = scalar_select %p112, %s12, 1
      %s114 = smul.addr %s113, 2
      %s115 = smul.addr %s114, 4
      %s116 = scalar_lea.vmem %s1, %s115
      %v118 = vld [vmem:[%s111] sm:$0xf]
      %v119 = vld [vmem:[%s111 + $0x4] sm:$0xf]
      %v120 = vlaneseq
      %v121 = vshrl.u32 %v120, 7
      %v122 = vadd.s32 %v121, 8
      %v123 = vlaneseq
      %v124 = vand.u32 %v123, 127
      %vm125 = vcmp.gt.s32.totalorder %v124, %v121
      %vm126 = vcmp.gt.s32.totalorder %v124, %v122
      %v127 = vsel %vm125, -inf, 0.0
      %v128 = vsel %vm126, -inf, 0.0
      %v131 = vunpack.c.l.b16 %v118
      %v132 = vunpack.c.l.b16 %v119
      %v133 = vpack.c.b16 %v132, %v131
      %134 = vrot.lane.b32.xlu0 %v133, 96
      %v135 = vpop.permute.xlu0 %134
      %vm136 = vcmask 64512
      %v138 = vsel %vm136, %v133, 0
      %v141 = vsel %vm136, %v135, 0
      %143 = vmatprep.subr.bf16.mxu0 0
      %144 = vmatpush1.bf16.xpose.msra.mxu0 0
      %145 = vmatprep.subr.bf16.mxu0 0
      %146 = vmatpush1.bf16.xpose.msra.mxu0 0
      %147 = vmatprep.subr.bf16.mxu0 0
      %148 = vmatpush1.bf16.xpose.msra.mxu0 0
      %149 = vmatprep.subr.bf16.mxu0 0
      %150 = vmatpush1.bf16.xpose.msra.mxu0 0
      %151 = vmatprep.subr.bf16.mxu0 0
      %152 = vmatpush1.bf16.xpose.msra.mxu0 0
      %153 = vmatprep.subr.bf16.mxu0 0
      %154 = vmatpush1.bf16.xpose.msra.mxu0 0
      %155 = vmatprep.subr.bf16.mxu0 0
      %156 = vmatpush1.bf16.xpose.msra.mxu0 0
      %157 = vmatprep.subr.bf16.mxu0 0
      %158 = vmatpush1.bf16.xpose.msra.mxu0 %v141
      %159 = vmatprep.subr.bf16.mxu0 0
      %160 = vmatpush2.bf16.xpose.msra.mxu0 0
      %161 = vmatprep.subr.bf16.mxu0 0
      %162 = vmatpush2.bf16.xpose.msra.mxu0 0
      %163 = vmatprep.subr.bf16.mxu0 0
      %164 = vmatpush2.bf16.xpose.msra.mxu0 0
      %165 = vmatprep.subr.bf16.mxu0 0
      %166 = vmatpush2.bf16.xpose.msra.mxu0 0
      %167 = vmatprep.subr.bf16.mxu0 0
      %168 = vmatpush2.bf16.xpose.msra.mxu0 0
      %169 = vmatprep.subr.bf16.mxu0 0
      %170 = vmatpush2.bf16.xpose.msra.mxu0 0
      %171 = vmatprep.subr.bf16.mxu0 0
      %172 = vmatpush2.bf16.xpose.msra.mxu0 0
      %173 = vmatprep.subr.bf16.mxu0 0
      %174 = vmatpush2.bf16.xpose.msra.mxu0 0
      %175 = vmatprep.mubr.bf16.mxu0 0
      %176 = vmatmul.mubr.bf16.gmra.mxu0 %v138
      %v177 = vpop.f32.mrf.mxu0
      %v178 = vadd.f32 %v127, %v177
      %v179 = vpop.f32.mrf.mxu0
      %v180 = vpop.f32.mrf.mxu0
      %v181 = vadd.f32 %v128, %v180
      %v182 = vpop.f32.mrf.mxu0
      %183 = vdwg.mxu0
      %vm184 = vcmask 130048
      %v185 = vsel %vm184, %v178, -inf
      %186 = vmax.xlane.f32.xlu0 %v185
      %v187 = vpop.xlane.xlu0 %186
      %v188 = vsel %vm184, %v181, -inf
      %189 = vmax.xlane.f32.xlu0 %v188
      %v190 = vpop.xlane.xlu0 %189
      %v191 = vsub.f32 %v178, %v187
      %v192 = vsub.f32 %v181, %v190
      %v193 = vmul.f32 %v191, 1.442695
      %v194 = vpow.pop %v193
      %v195 = vmul.f32 %v192, 1.442695
      %v196 = vpow.pop %v195
      %v197 = vsel %vm184, %v194, 0.0
      %198 = vadd.xlane.f32.xlu0 %v197
      %v199 = vpop.xlane.xlu0 %198
      %v200 = vsel %vm184, %v196, 0.0
      %201 = vadd.xlane.f32.xlu0 %v200
      %v202 = vpop.xlane.xlu0 %201
      %v203 = vrcp.pop %v199
      %v204 = vrcp.pop %v202
      %v205 = vmul.f32 %v194, %v203
      %v206 = vmul.f32 %v196, %v204
      %v207 = vpack.c.bf16 %v206, %v205
      %208 = vrot.lane.b32.xlu0 %v133, 64
      %v209 = vpop.permute.xlu0 %208
      %v212 = vsel %vm184, %v207, 0
      %214 = vmatprep.subr.bf16.mxu0 0
      %215 = vmatpush1.bf16.msra.mxu0 0
      %216 = vmatprep.subr.bf16.mxu0 0
      %217 = vmatpush1.bf16.msra.mxu0 0
      %218 = vmatprep.subr.bf16.mxu0 0
      %219 = vmatpush1.bf16.msra.mxu0 0
      %220 = vmatprep.subr.bf16.mxu0 0
      %221 = vmatpush1.bf16.msra.mxu0 0
      %222 = vmatprep.subr.bf16.mxu0 0
      %223 = vmatpush1.bf16.msra.mxu0 0
      %224 = vmatprep.subr.bf16.mxu0 0
      %225 = vmatpush1.bf16.msra.mxu0 0
      %226 = vmatprep.subr.bf16.mxu0 0
      %227 = vmatpush1.bf16.msra.mxu0 0
      %228 = vmatprep.subr.bf16.mxu0 0
      %229 = vmatpush1.bf16.msra.mxu0 %v209
      %230 = vmatprep.subr.bf16.mxu0 0
      %231 = vmatpush2.bf16.msra.mxu0 0
      %232 = vmatprep.subr.bf16.mxu0 0
      %233 = vmatpush2.bf16.msra.mxu0 0
      %234 = vmatprep.subr.bf16.mxu0 0
      %235 = vmatpush2.bf16.msra.mxu0 0
      %236 = vmatprep.subr.bf16.mxu0 0
      %237 = vmatpush2.bf16.msra.mxu0 0
      %238 = vmatprep.subr.bf16.mxu0 0
      %239 = vmatpush2.bf16.msra.mxu0 0
      %240 = vmatprep.subr.bf16.mxu0 0
      %241 = vmatpush2.bf16.msra.mxu0 0
      %242 = vmatprep.subr.bf16.mxu0 0
      %243 = vmatpush2.bf16.msra.mxu0 0
      %244 = vmatprep.subr.bf16.mxu0 0
      %245 = vmatpush2.bf16.msra.mxu0 0
      %246 = vmatprep.mubr.bf16.mxu0 0
      %247 = vmatmul.mubr.bf16.gmra.mxu0 %v212
      %v248 = vpop.f32.mrf.mxu0
      %v249 = vadd.f32 0.0, %v248
      %v250 = vpop.f32.mrf.mxu0
      %v251 = vpop.f32.mrf.mxu0
      %v252 = vadd.f32 0.0, %v251
      %v253 = vpop.f32.mrf.mxu0
      %254 = vdwg.mxu0
      %v255 = vpack.c.bf16 %v252, %v249
      %256 = vrot.lane.b32.xlu0 %v133, 120
      %v257 = vpop.permute.xlu0 %256
      %258 = vrot.lane.b32.xlu0 %v133, 88
      %v259 = vpop.permute.xlu0 %258
      %v261 = vsel %vm136, %v257, 0
      %v264 = vsel %vm136, %v259, 0
      %266 = vmatprep.subr.bf16.mxu0 0
      %267 = vmatpush1.bf16.xpose.msra.mxu0 0
      %268 = vmatprep.subr.bf16.mxu0 0
      %269 = vmatpush1.bf16.xpose.msra.mxu0 0
      %270 = vmatprep.subr.bf16.mxu0 0
      %271 = vmatpush1.bf16.xpose.msra.mxu0 0
      %272 = vmatprep.subr.bf16.mxu0 0
      %273 = vmatpush1.bf16.xpose.msra.mxu0 0
      %274 = vmatprep.subr.bf16.mxu0 0
      %275 = vmatpush1.bf16.xpose.msra.mxu0 0
      %276 = vmatprep.subr.bf16.mxu0 0
      %277 = vmatpush1.bf16.xpose.msra.mxu0 0
      %278 = vmatprep.subr.bf16.mxu0 0
      %279 = vmatpush1.bf16.xpose.msra.mxu0 0
      %280 = vmatprep.subr.bf16.mxu0 0
      %281 = vmatpush1.bf16.xpose.msra.mxu0 %v264
      %282 = vmatprep.subr.bf16.mxu0 0
      %283 = vmatpush2.bf16.xpose.msra.mxu0 0
      %284 = vmatprep.subr.bf16.mxu0 0
      %285 = vmatpush2.bf16.xpose.msra.mxu0 0
      %286 = vmatprep.subr.bf16.mxu0 0
      %287 = vmatpush2.bf16.xpose.msra.mxu0 0
      %288 = vmatprep.subr.bf16.mxu0 0
      %289 = vmatpush2.bf16.xpose.msra.mxu0 0
      %290 = vmatprep.subr.bf16.mxu0 0
      %291 = vmatpush2.bf16.xpose.msra.mxu0 0
      %292 = vmatprep.subr.bf16.mxu0 0
      %293 = vmatpush2.bf16.xpose.msra.mxu0 0
      %294 = vmatprep.subr.bf16.mxu0 0
      %295 = vmatpush2.bf16.xpose.msra.mxu0 0
      %296 = vmatprep.subr.bf16.mxu0 0
      %297 = vmatpush2.bf16.xpose.msra.mxu0 0
      %298 = vmatprep.mubr.bf16.mxu0 0
      %299 = vmatmul.mubr.bf16.gmra.mxu0 %v261
      %v300 = vpop.f32.mrf.mxu0
      %v301 = vadd.f32 %v127, %v300
      %v302 = vpop.f32.mrf.mxu0
      %v303 = vpop.f32.mrf.mxu0
      %v304 = vadd.f32 %v128, %v303
      %v305 = vpop.f32.mrf.mxu0
      %306 = vdwg.mxu0
      %v307 = vsel %vm184, %v301, -inf
      %308 = vmax.xlane.f32.xlu0 %v307
      %v309 = vpop.xlane.xlu0 %308
      %v310 = vsel %vm184, %v304, -inf
      %311 = vmax.xlane.f32.xlu0 %v310
      %v312 = vpop.xlane.xlu0 %311
      %v313 = vsub.f32 %v301, %v309
      %v314 = vsub.f32 %v304, %v312
      %v315 = vmul.f32 %v313, 1.442695
      %v316 = vpow.pop %v315
      %v317 = vmul.f32 %v314, 1.442695
      %v318 = vpow.pop %v317
      %v319 = vsel %vm184, %v316, 0.0
      %320 = vadd.xlane.f32.xlu0 %v319
      %v321 = vpop.xlane.xlu0 %320
      %v322 = vsel %vm184, %v318, 0.0
      %323 = vadd.xlane.f32.xlu0 %v322
      %v324 = vpop.xlane.xlu0 %323
      %v325 = vrcp.pop %v321
      %v326 = vrcp.pop %v324
      %v327 = vmul.f32 %v316, %v325
      %v328 = vmul.f32 %v318, %v326
      %v329 = vpack.c.bf16 %v328, %v327
      %330 = vrot.lane.b32.xlu0 %v133, 56
      %v331 = vpop.permute.xlu0 %330
      %v334 = vsel %vm184, %v329, 0
      %336 = vmatprep.subr.bf16.mxu0 0
      %337 = vmatpush1.bf16.msra.mxu0 0
      %338 = vmatprep.subr.bf16.mxu0 0
      %339 = vmatpush1.bf16.msra.mxu0 0
      %340 = vmatprep.subr.bf16.mxu0 0
      %341 = vmatpush1.bf16.msra.mxu0 0
      %342 = vmatprep.subr.bf16.mxu0 0
      %343 = vmatpush1.bf16.msra.mxu0 0
      %344 = vmatprep.subr.bf16.mxu0 0
      %345 = vmatpush1.bf16.msra.mxu0 0
      %346 = vmatprep.subr.bf16.mxu0 0
      %347 = vmatpush1.bf16.msra.mxu0 0
      %348 = vmatprep.subr.bf16.mxu0 0
      %349 = vmatpush1.bf16.msra.mxu0 0
      %350 = vmatprep.subr.bf16.mxu0 0
      %351 = vmatpush1.bf16.msra.mxu0 %v331
      %352 = vmatprep.subr.bf16.mxu0 0
      %353 = vmatpush2.bf16.msra.mxu0 0
      %354 = vmatprep.subr.bf16.mxu0 0
      %355 = vmatpush2.bf16.msra.mxu0 0
      %356 = vmatprep.subr.bf16.mxu0 0
      %357 = vmatpush2.bf16.msra.mxu0 0
      %358 = vmatprep.subr.bf16.mxu0 0
      %359 = vmatpush2.bf16.msra.mxu0 0
      %360 = vmatprep.subr.bf16.mxu0 0
      %361 = vmatpush2.bf16.msra.mxu0 0
      %362 = vmatprep.subr.bf16.mxu0 0
      %363 = vmatpush2.bf16.msra.mxu0 0
      %364 = vmatprep.subr.bf16.mxu0 0
      %365 = vmatpush2.bf16.msra.mxu0 0
      %366 = vmatprep.subr.bf16.mxu0 0
      %367 = vmatpush2.bf16.msra.mxu0 0
      %368 = vmatprep.mubr.bf16.mxu0 0
      %369 = vmatmul.mubr.bf16.gmra.mxu0 %v334
      %v370 = vpop.f32.mrf.mxu0
      %v371 = vadd.f32 0.0, %v370
      %v372 = vpop.f32.mrf.mxu0
      %v373 = vpop.f32.mrf.mxu0
      %v374 = vadd.f32 0.0, %v373
      %v375 = vpop.f32.mrf.mxu0
      %376 = vdwg.mxu0
      %v377 = vpack.c.bf16 %v374, %v371
      %378 = vrot.lane.b32.xlu0 %v133, 112
      %v379 = vpop.permute.xlu0 %378
      %380 = vrot.lane.b32.xlu0 %v133, 80
      %v381 = vpop.permute.xlu0 %380
      %v383 = vsel %vm136, %v379, 0
      %v386 = vsel %vm136, %v381, 0
      %388 = vmatprep.subr.bf16.mxu0 0
      %389 = vmatpush1.bf16.xpose.msra.mxu0 0
      %390 = vmatprep.subr.bf16.mxu0 0
      %391 = vmatpush1.bf16.xpose.msra.mxu0 0
      %392 = vmatprep.subr.bf16.mxu0 0
      %393 = vmatpush1.bf16.xpose.msra.mxu0 0
      %394 = vmatprep.subr.bf16.mxu0 0
      %395 = vmatpush1.bf16.xpose.msra.mxu0 0
      %396 = vmatprep.subr.bf16.mxu0 0
      %397 = vmatpush1.bf16.xpose.msra.mxu0 0
      %398 = vmatprep.subr.bf16.mxu0 0
      %399 = vmatpush1.bf16.xpose.msra.mxu0 0
      %400 = vmatprep.subr.bf16.mxu0 0
      %401 = vmatpush1.bf16.xpose.msra.mxu0 0
      %402 = vmatprep.subr.bf16.mxu0 0
      %403 = vmatpush1.bf16.xpose.msra.mxu0 %v386
      %404 = vmatprep.subr.bf16.mxu0 0
      %405 = vmatpush2.bf16.xpose.msra.mxu0 0
      %406 = vmatprep.subr.bf16.mxu0 0
      %407 = vmatpush2.bf16.xpose.msra.mxu0 0
      %408 = vmatprep.subr.bf16.mxu0 0
      %409 = vmatpush2.bf16.xpose.msra.mxu0 0
      %410 = vmatprep.subr.bf16.mxu0 0
      %411 = vmatpush2.bf16.xpose.msra.mxu0 0
      %412 = vmatprep.subr.bf16.mxu0 0
      %413 = vmatpush2.bf16.xpose.msra.mxu0 0
      %414 = vmatprep.subr.bf16.mxu0 0
      %415 = vmatpush2.bf16.xpose.msra.mxu0 0
      %416 = vmatprep.subr.bf16.mxu0 0
      %417 = vmatpush2.bf16.xpose.msra.mxu0 0
      %418 = vmatprep.subr.bf16.mxu0 0
      %419 = vmatpush2.bf16.xpose.msra.mxu0 0
      %420 = vmatprep.mubr.bf16.mxu0 0
      %421 = vmatmul.mubr.bf16.gmra.mxu0 %v383
      %v422 = vpop.f32.mrf.mxu0
      %v423 = vadd.f32 %v127, %v422
      %v424 = vpop.f32.mrf.mxu0
      %v425 = vpop.f32.mrf.mxu0
      %v426 = vadd.f32 %v128, %v425
      %v427 = vpop.f32.mrf.mxu0
      %428 = vdwg.mxu0
      %v429 = vsel %vm184, %v423, -inf
      %430 = vmax.xlane.f32.xlu0 %v429
      %v431 = vpop.xlane.xlu0 %430
      %v432 = vsel %vm184, %v426, -inf
      %433 = vmax.xlane.f32.xlu0 %v432
      %v434 = vpop.xlane.xlu0 %433
      %v435 = vsub.f32 %v423, %v431
      %v436 = vsub.f32 %v426, %v434
      %v437 = vmul.f32 %v435, 1.442695
      %v438 = vpow.pop %v437
      %v439 = vmul.f32 %v436, 1.442695
      %v440 = vpow.pop %v439
      %v441 = vsel %vm184, %v438, 0.0
      %442 = vadd.xlane.f32.xlu0 %v441
      %v443 = vpop.xlane.xlu0 %442
      %v444 = vsel %vm184, %v440, 0.0
      %445 = vadd.xlane.f32.xlu0 %v444
      %v446 = vpop.xlane.xlu0 %445
      %v447 = vrcp.pop %v443
      %v448 = vrcp.pop %v446
      %v449 = vmul.f32 %v438, %v447
      %v450 = vmul.f32 %v440, %v448
      %v451 = vpack.c.bf16 %v450, %v449
      %452 = vrot.lane.b32.xlu0 %v133, 48
      %v453 = vpop.permute.xlu0 %452
      %v456 = vsel %vm184, %v451, 0
      %458 = vmatprep.subr.bf16.mxu0 0
      %459 = vmatpush1.bf16.msra.mxu0 0
      %460 = vmatprep.subr.bf16.mxu0 0
      %461 = vmatpush1.bf16.msra.mxu0 0
      %462 = vmatprep.subr.bf16.mxu0 0
      %463 = vmatpush1.bf16.msra.mxu0 0
      %464 = vmatprep.subr.bf16.mxu0 0
      %465 = vmatpush1.bf16.msra.mxu0 0
      %466 = vmatprep.subr.bf16.mxu0 0
      %467 = vmatpush1.bf16.msra.mxu0 0
      %468 = vmatprep.subr.bf16.mxu0 0
      %469 = vmatpush1.bf16.msra.mxu0 0
      %470 = vmatprep.subr.bf16.mxu0 0
      %471 = vmatpush1.bf16.msra.mxu0 0
      %472 = vmatprep.subr.bf16.mxu0 0
      %473 = vmatpush1.bf16.msra.mxu0 %v453
      %474 = vmatprep.subr.bf16.mxu0 0
      %475 = vmatpush2.bf16.msra.mxu0 0
      %476 = vmatprep.subr.bf16.mxu0 0
      %477 = vmatpush2.bf16.msra.mxu0 0
      %478 = vmatprep.subr.bf16.mxu0 0
      %479 = vmatpush2.bf16.msra.mxu0 0
      %480 = vmatprep.subr.bf16.mxu0 0
      %481 = vmatpush2.bf16.msra.mxu0 0
      %482 = vmatprep.subr.bf16.mxu0 0
      %483 = vmatpush2.bf16.msra.mxu0 0
      %484 = vmatprep.subr.bf16.mxu0 0
      %485 = vmatpush2.bf16.msra.mxu0 0
      %486 = vmatprep.subr.bf16.mxu0 0
      %487 = vmatpush2.bf16.msra.mxu0 0
      %488 = vmatprep.subr.bf16.mxu0 0
      %489 = vmatpush2.bf16.msra.mxu0 0
      %490 = vmatprep.mubr.bf16.mxu0 0
      %491 = vmatmul.mubr.bf16.gmra.mxu0 %v456
      %v492 = vpop.f32.mrf.mxu0
      %v493 = vadd.f32 0.0, %v492
      %v494 = vpop.f32.mrf.mxu0
      %v495 = vpop.f32.mrf.mxu0
      %v496 = vadd.f32 0.0, %v495
      %v497 = vpop.f32.mrf.mxu0
      %498 = vdwg.mxu0
      %v499 = vpack.c.bf16 %v496, %v493
      %500 = vrot.lane.b32.xlu0 %v133, 104
      %v501 = vpop.permute.xlu0 %500
      %502 = vrot.lane.b32.xlu0 %v133, 72
      %v503 = vpop.permute.xlu0 %502
      %v505 = vsel %vm136, %v501, 0
      %v508 = vsel %vm136, %v503, 0
      %510 = vmatprep.subr.bf16.mxu0 0
      %511 = vmatpush1.bf16.xpose.msra.mxu0 0
      %512 = vmatprep.subr.bf16.mxu0 0
      %513 = vmatpush1.bf16.xpose.msra.mxu0 0
      %514 = vmatprep.subr.bf16.mxu0 0
      %515 = vmatpush1.bf16.xpose.msra.mxu0 0
      %516 = vmatprep.subr.bf16.mxu0 0
      %517 = vmatpush1.bf16.xpose.msra.mxu0 0
      %518 = vmatprep.subr.bf16.mxu0 0
      %519 = vmatpush1.bf16.xpose.msra.mxu0 0
      %520 = vmatprep.subr.bf16.mxu0 0
      %521 = vmatpush1.bf16.xpose.msra.mxu0 0
      %522 = vmatprep.subr.bf16.mxu0 0
      %523 = vmatpush1.bf16.xpose.msra.mxu0 0
      %524 = vmatprep.subr.bf16.mxu0 0
      %525 = vmatpush1.bf16.xpose.msra.mxu0 %v508
      %526 = vmatprep.subr.bf16.mxu0 0
      %527 = vmatpush2.bf16.xpose.msra.mxu0 0
      %528 = vmatprep.subr.bf16.mxu0 0
      %529 = vmatpush2.bf16.xpose.msra.mxu0 0
      %530 = vmatprep.subr.bf16.mxu0 0
      %531 = vmatpush2.bf16.xpose.msra.mxu0 0
      %532 = vmatprep.subr.bf16.mxu0 0
      %533 = vmatpush2.bf16.xpose.msra.mxu0 0
      %534 = vmatprep.subr.bf16.mxu0 0
      %535 = vmatpush2.bf16.xpose.msra.mxu0 0
      %536 = vmatprep.subr.bf16.mxu0 0
      %537 = vmatpush2.bf16.xpose.msra.mxu0 0
      %538 = vmatprep.subr.bf16.mxu0 0
      %539 = vmatpush2.bf16.xpose.msra.mxu0 0
      %540 = vmatprep.subr.bf16.mxu0 0
      %541 = vmatpush2.bf16.xpose.msra.mxu0 0
      %542 = vmatprep.mubr.bf16.mxu0 0
      %543 = vmatmul.mubr.bf16.gmra.mxu0 %v505
      %v544 = vpop.f32.mrf.mxu0
      %v545 = vadd.f32 %v127, %v544
      %v546 = vpop.f32.mrf.mxu0
      %v547 = vpop.f32.mrf.mxu0
      %v548 = vadd.f32 %v128, %v547
      %v549 = vpop.f32.mrf.mxu0
      %550 = vdwg.mxu0
      %v551 = vsel %vm184, %v545, -inf
      %552 = vmax.xlane.f32.xlu0 %v551
      %v553 = vpop.xlane.xlu0 %552
      %v554 = vsel %vm184, %v548, -inf
      %555 = vmax.xlane.f32.xlu0 %v554
      %v556 = vpop.xlane.xlu0 %555
      %v557 = vsub.f32 %v545, %v553
      %v558 = vsub.f32 %v548, %v556
      %v559 = vmul.f32 %v557, 1.442695
      %v560 = vpow.pop %v559
      %v561 = vmul.f32 %v558, 1.442695
      %v562 = vpow.pop %v561
      %v563 = vsel %vm184, %v560, 0.0
      %564 = vadd.xlane.f32.xlu0 %v563
      %v565 = vpop.xlane.xlu0 %564
      %v566 = vsel %vm184, %v562, 0.0
      %567 = vadd.xlane.f32.xlu0 %v566
      %v568 = vpop.xlane.xlu0 %567
      %v569 = vrcp.pop %v565
      %v570 = vrcp.pop %v568
      %v571 = vmul.f32 %v560, %v569
      %v572 = vmul.f32 %v562, %v570
      %v573 = vpack.c.bf16 %v572, %v571
      %574 = vrot.lane.b32.xlu0 %v133, 40
      %v575 = vpop.permute.xlu0 %574
      %v578 = vsel %vm184, %v573, 0
      %580 = vmatprep.subr.bf16.mxu0 0
      %581 = vmatpush1.bf16.msra.mxu0 0
      %582 = vmatprep.subr.bf16.mxu0 0
      %583 = vmatpush1.bf16.msra.mxu0 0
      %584 = vmatprep.subr.bf16.mxu0 0
      %585 = vmatpush1.bf16.msra.mxu0 0
      %586 = vmatprep.subr.bf16.mxu0 0
      %587 = vmatpush1.bf16.msra.mxu0 0
      %588 = vmatprep.subr.bf16.mxu0 0
      %589 = vmatpush1.bf16.msra.mxu0 0
      %590 = vmatprep.subr.bf16.mxu0 0
      %591 = vmatpush1.bf16.msra.mxu0 0
      %592 = vmatprep.subr.bf16.mxu0 0
      %593 = vmatpush1.bf16.msra.mxu0 0
      %594 = vmatprep.subr.bf16.mxu0 0
      %595 = vmatpush1.bf16.msra.mxu0 %v575
      %596 = vmatprep.subr.bf16.mxu0 0
      %597 = vmatpush2.bf16.msra.mxu0 0
      %598 = vmatprep.subr.bf16.mxu0 0
      %599 = vmatpush2.bf16.msra.mxu0 0
      %600 = vmatprep.subr.bf16.mxu0 0
      %601 = vmatpush2.bf16.msra.mxu0 0
      %602 = vmatprep.subr.bf16.mxu0 0
      %603 = vmatpush2.bf16.msra.mxu0 0
      %604 = vmatprep.subr.bf16.mxu0 0
      %605 = vmatpush2.bf16.msra.mxu0 0
      %606 = vmatprep.subr.bf16.mxu0 0
      %607 = vmatpush2.bf16.msra.mxu0 0
      %608 = vmatprep.subr.bf16.mxu0 0
      %609 = vmatpush2.bf16.msra.mxu0 0
      %610 = vmatprep.subr.bf16.mxu0 0
      %611 = vmatpush2.bf16.msra.mxu0 0
      %612 = vmatprep.mubr.bf16.mxu0 0
      %613 = vmatmul.mubr.bf16.gmra.mxu0 %v578
      %v614 = vpop.f32.mrf.mxu0
      %v615 = vadd.f32 0.0, %v614
      %v616 = vpop.f32.mrf.mxu0
      %v617 = vpop.f32.mrf.mxu0
      %v618 = vadd.f32 0.0, %v617
      %v619 = vpop.f32.mrf.mxu0
      %620 = vdwg.mxu0
      %v621 = vpack.c.bf16 %v618, %v615
      %623 = vrot.lane.b32.xlu0 %v377, 8
      %v624 = vpop.permute.xlu0 %623
      %626 = vrot.lane.b32.xlu0 %v499, 16
      %v627 = vpop.permute.xlu0 %626
      %629 = vrot.lane.b32.xlu0 %v621, 24
      %v630 = vpop.permute.xlu0 %629
      %v633 = vsel %vm136, %v255, %v624
      %v635 = vsel %vm184, %v633, %v627
      %vm636 = vcmask 195584
      %v638 = vsel %vm636, %v635, %v630
      %v640 = vunpack.c.l.b16 %v638
      %v641 = vunpack.c.h.b16 %v638
      %v642 = vpack.c.b16 %v640, %v640
      %v643 = vpack.c.b16 %v641, %v641
      %vm646 = vcmask 257024
      %647 = vst.msk [vmem:[%s116] sm:$0xf] %vm646, %v642
      %648 = vst.msk [vmem:[%s116 + $0x4] sm:$0xf] %vm646, %v643
      %p649 = scmp.lt.s32.totalorder %s12, 1
      %s650 = scalar_select %p649, %s12, 1
      %s651 = smul.addr %s650, 2
      %s652 = smul.addr %s651, 4
      %s653 = scalar_lea.vmem %s1, %s652
      // Predicated region
      $region25: #{informer_forward.40} parent=23 // pred_check
        %p654 = pneg %p56
      $region26: #{informer_forward.40} parent=23 // pred_check_branch
        %656 = sbr.rel (%p654) target = $region28
      $region27: #{informer_forward.40} parent=23 // pred_region
        _
      $region28: #{informer_forward.40} parent=23 // pred_fallthru
        _
    $region24: #{informer_forward.40} parent=5 // pred_fallthru
      _
    %p657 = scmp.le.s32.totalorder 2, %s7
    // Predicated region
    $region29: #{informer_forward.40} parent=5 // pred_check
      %p658 = pneg %p657
    $region30: #{informer_forward.40} parent=5 // pred_check_branch
      %660 = sbr.rel (%p658) target = $region32
    $region31: #{informer_forward.40} parent=5 // pred_region
      %s661 = ssub.s32 %s7, 2
      // Predicated region
      $region33: #{informer_forward.40} parent=31 // pred_check
        %p662 = pneg %p62
      $region34: #{informer_forward.40} parent=31 // pred_check_branch
        %664 = sbr.rel (%p662) target = $region36
      $region35: #{informer_forward.40} parent=31 // pred_region
        %p665 = scmp.lt.s32.totalorder %s13, 1
        %s666 = scalar_select %p665, %s13, 1
        %s667 = smul.addr %s666, 2
        %s668 = smul.addr %s667, 4
        %s669 = scalar_lea.vmem %s1, %s668
      $region36: #{informer_forward.40} parent=31 // pred_fallthru
        _
    $region32: #{informer_forward.40} parent=5 // pred_fallthru
      _
  $region6: #{informer_forward.40} parent=0 // loop_footer
    %s11 = sadd.s32 1, %s7
  $region7: #{informer_forward.40} parent=0 // loop_footer_branch
    %6 = sbr.rel target = $region3
  $region8: #{informer_forward.40} parent=0 // loop_exit
    _

// kernel: informer_forward.44
$region0: #{informer_forward.44}
  #allocation0 [shape = 'u32[]', space=smem, size = 0x4, offset = 0x4, fixed_abs, tag = 'smem constant byte address 0x4 - core index']
  #allocation1 [shape = 'u32[144,128]{1,0:T(1,128)}', space=vmem, size = 0x12000, scoped, tag = 'internal scratch']
  %s0 = inlined_call_operand.vmem [shape: bf16[2,16,32], index: 0, kind: input, shape index: {}]
  %s1 = inlined_call_operand.vmem [shape: bf16[2,8,64], index: 1, kind: input, shape index: {}]
  %s2 = inlined_call_operand.vmem [shape: bf16[2,16,32], index: 2, kind: output, shape index: {}]
  %s3 = sld [smem:[#allocation0]]
  $region41: #{informer_forward.44} parent=0
    _
  %s5 = ssub.s32 1, %s3
  %s6 = scalar_select 0, %s5, %s3
  loop: start=0, step=1, limit=4
  $region2: #{informer_forward.44} parent=0 // loop_pre_header
    _
  $region3: #{informer_forward.44} parent=0 // loop_header
    %s8 = sphi 0, %s12
    %p9 = scmp.ge.s32.totalorder %s8, 4
    %s18 = sphi 0, %s20
    %s21 = sphi 0, %s18
    %s22 = sphi 0, %s21
    %s38 = sphi 0, %s22
    %s44 = sphi 0, %s46
    %s47 = sphi 0, %s44
    %s48 = sphi 0, %s47
    %s64 = sphi 0, %s48
    %s70 = sphi 0, %s72
    %s73 = sphi 0, %s70
    %s74 = sphi 0, %s73
    %s90 = sphi 0, %s74
  $region4: #{informer_forward.44} parent=0 // loop_header_branch
    %11 = sbr.rel (%p9) target = $region8
  $region5: #{informer_forward.44} parent=0 // loop_body
    %s13 = ssub.s32 %s8, 1
    %s14 = ssub.s32 %s8, 2
    %s15 = sadd.s32 %s8, 1
    %s16 = ssub.s32 %s8, %s15
    %p17 = scmp.eq.s32.totalorder %s16, 0
    %s19 = sadd.s32 %s18, 1
    %s20 = scalar_select %p17, %s18, %s19
    %p23 = pneg %p17
    %p24 = scmp.eq.s32.totalorder %s8, 1
    %p25 = por %p23, %p24
    %p26 = scmp.ne.s32.totalorder %s18, %s21
    %p27 = scmp.eq.s32.totalorder %s8, 0
    %p28 = por %p26, %p27
    %p29 = scmp.ne.s32.totalorder %s18, %s21
    %p30 = scmp.eq.s32.totalorder %s13, 1
    %p31 = por %p29, %p30
    %p32 = scmp.ne.s32.totalorder %s21, %s22
    %p33 = scmp.eq.s32.totalorder %s13, 0
    %p34 = por %p32, %p33
    %p35 = scmp.ne.s32.totalorder %s21, %s22
    %p36 = scmp.eq.s32.totalorder %s14, 1
    %p37 = por %p35, %p36
    %p39 = scmp.ne.s32.totalorder %s22, %s38
    %p40 = scmp.eq.s32.totalorder %s14, 0
    %p41 = por %p39, %p40
    %s42 = ssub.s32 %s8, %s15
    %p43 = scmp.eq.s32.totalorder %s42, 0
    %s45 = sadd.s32 %s44, 1
    %s46 = scalar_select %p43, %s44, %s45
    %p49 = pneg %p43
    %p50 = scmp.eq.s32.totalorder %s8, 1
    %p51 = por %p49, %p50
    %p52 = scmp.ne.s32.totalorder %s44, %s47
    %p53 = scmp.eq.s32.totalorder %s8, 0
    %p54 = por %p52, %p53
    %p55 = scmp.ne.s32.totalorder %s44, %s47
    %p56 = scmp.eq.s32.totalorder %s13, 1
    %p57 = por %p55, %p56
    %p58 = scmp.ne.s32.totalorder %s47, %s48
    %p59 = scmp.eq.s32.totalorder %s13, 0
    %p60 = por %p58, %p59
    %p61 = scmp.ne.s32.totalorder %s47, %s48
    %p62 = scmp.eq.s32.totalorder %s14, 1
    %p63 = por %p61, %p62
    %p65 = scmp.ne.s32.totalorder %s48, %s64
    %p66 = scmp.eq.s32.totalorder %s14, 0
    %p67 = por %p65, %p66
    %s68 = ssub.s32 %s8, %s15
    %p69 = scmp.eq.s32.totalorder %s68, 0
    %s71 = sadd.s32 %s70, 1
    %s72 = scalar_select %p69, %s70, %s71
    %p75 = pneg %p69
    %p76 = scmp.eq.s32.totalorder %s8, 1
    %p77 = por %p75, %p76
    %p78 = scmp.ne.s32.totalorder %s70, %s73
    %p79 = scmp.eq.s32.totalorder %s8, 0
    %p80 = por %p78, %p79
    %p81 = scmp.ne.s32.totalorder %s70, %s73
    %p82 = scmp.eq.s32.totalorder %s13, 1
    %p83 = por %p81, %p82
    %p84 = scmp.ne.s32.totalorder %s73, %s74
    %p85 = scmp.eq.s32.totalorder %s13, 0
    %p86 = por %p84, %p85
    %p87 = scmp.ne.s32.totalorder %s73, %s74
    %p88 = scmp.eq.s32.totalorder %s14, 1
    %p89 = por %p87, %p88
    %p91 = scmp.ne.s32.totalorder %s74, %s90
    %p92 = scmp.eq.s32.totalorder %s14, 0
    %p93 = por %p91, %p92
    %p94 = scmp.le.s32.totalorder 1, %s8
    %p95 = scmp.lt.s32.totalorder %s8, 3
    %p96 = pnand %p94, %p95
    %p97 = pneg %p96
    // Predicated region
    $region9: #{informer_forward.44} parent=5 // pred_check
      _
    $region10: #{informer_forward.44} parent=5 // pred_check_branch
      %99 = sbr.rel (%p96) target = $region12
    $region11: #{informer_forward.44} parent=5 // pred_region
      %s100 = ssub.s32 %s8, 1
    $region12: #{informer_forward.44} parent=5 // pred_fallthru
      _
    %p101 = scmp.lt.s32.totalorder %s8, 2
    // Predicated region
    $region13: #{informer_forward.44} parent=5 // pred_check
      %p102 = pneg %p101
    $region14: #{informer_forward.44} parent=5 // pred_check_branch
      %104 = sbr.rel (%p102) target = $region16
    $region15: #{informer_forward.44} parent=5 // pred_region
      // Predicated region
      $region17: #{informer_forward.44} parent=15 // pred_check
        %p105 = pneg %p28
      $region18: #{informer_forward.44} parent=15 // pred_check_branch
        %107 = sbr.rel (%p105) target = $region20
      $region19: #{informer_forward.44} parent=15 // pred_region
        %p108 = scmp.lt.s32.totalorder %s8, 1
        %s109 = scalar_select %p108, %s8, 1
        %s110 = smul.addr %s109, 2
        %s111 = smul.addr %s110, 4
        %s112 = scalar_lea.vmem %s0, %s111
      $region20: #{informer_forward.44} parent=15 // pred_fallthru
        _
      // Predicated region
      $region21: #{informer_forward.44} parent=15 // pred_check
        %p113 = pneg %p54
      $region22: #{informer_forward.44} parent=15 // pred_check_branch
        %115 = sbr.rel (%p113) target = $region24
      $region23: #{informer_forward.44} parent=15 // pred_region
        %p116 = scmp.lt.s32.totalorder %s8, 1
        %s117 = scalar_select %p116, %s8, 1
        %s118 = smul.addr %s117, 4
        %s119 = scalar_lea.vmem %s1, %s118
      $region24: #{informer_forward.44} parent=15 // pred_fallthru
        _
    $region16: #{informer_forward.44} parent=5 // pred_fallthru
      _
    %p120 = scmp.le.s32.totalorder 1, %s8
    %p121 = scmp.lt.s32.totalorder %s8, 3
    %p122 = pnand %p120, %p121
    %p123 = pneg %p122
    // Predicated region
    $region25: #{informer_forward.44} parent=5 // pred_check
      _
    $region26: #{informer_forward.44} parent=5 // pred_check_branch
      %125 = sbr.rel (%p122) target = $region28
    $region27: #{informer_forward.44} parent=5 // pred_region
      %s126 = ssub.s32 %s8, 1
      %p127 = scmp.lt.s32.totalorder %s13, 1
      %s128 = scalar_select %p127, %s13, 1
      %s129 = smul.addr %s128, 2
      %s130 = smul.addr %s129, 4
      %s131 = scalar_lea.vmem %s0, %s130
      %p132 = pneg %p34
      %p133 = pneg %p31
      %p134 = scmp.lt.s32.totalorder %s13, 1
      %s135 = scalar_select %p134, %s13, 1
      %s136 = smul.addr %s135, 4
      %s137 = scalar_lea.vmem %s1, %s136
      %p138 = pneg %p60
      %p139 = pneg %p57
      %p140 = pneg %p86
      %p141 = pneg %p83
      %p142 = scmp.lt.s32.totalorder %s13, 1
      %s143 = scalar_select %p142, %s13, 1
      %s144 = smul.addr %s143, 2
      %s145 = smul.addr %s144, 4
      %s146 = scalar_lea.vmem %s2, %s145
      %p147 = scmp.lt.s32.totalorder %s13, 1
      %s148 = scalar_select %p147, %s13, 1
      %s149 = smul.addr %s148, 2
      %s150 = smul.addr %s149, 4
      %s151 = scalar_lea.vmem %s0, %s150
      %p152 = scmp.lt.s32.totalorder %s13, 1
      %s153 = scalar_select %p152, %s13, 1
      %s154 = smul.addr %s153, 4
      %s155 = scalar_lea.vmem %s1, %s154
      %p156 = scmp.lt.s32.totalorder %s13, 1
      %s157 = scalar_select %p156, %s13, 1
      %s158 = smul.addr %s157, 2
      %s159 = smul.addr %s158, 4
      %s160 = scalar_lea.vmem %s2, %s159
      %v162 = vld [vmem:[%s151] sm:$0xf]
      %v163 = vld [vmem:[%s151 + $0x4] sm:$0xf]
      %v164 = vld [vmem:[%s155] sm:$0xf]
      %v167 = vunpack.c.l.b16 %v162
      %v168 = vunpack.c.l.b16 %v163
      %v169 = vpack.c.b16 %v168, %v167
      %vm170 = vcmask 64512
      %v172 = vsel %vm170, %v169, 0
      %v175 = vsel %vm170, %v164, 0
      %177 = vmatprep.subr.bf16.mxu0 0
      %178 = vmatpush1.bf16.xpose.msra.mxu0 0
      %179 = vmatprep.subr.bf16.mxu0 0
      %180 = vmatpush1.bf16.xpose.msra.mxu0 0
      %181 = vmatprep.subr.bf16.mxu0 0
      %182 = vmatpush1.bf16.xpose.msra.mxu0 0
      %183 = vmatprep.subr.bf16.mxu0 0
      %184 = vmatpush1.bf16.xpose.msra.mxu0 0
      %185 = vmatprep.subr.bf16.mxu0 0
      %186 = vmatpush1.bf16.xpose.msra.mxu0 0
      %187 = vmatprep.subr.bf16.mxu0 0
      %188 = vmatpush1.bf16.xpose.msra.mxu0 0
      %189 = vmatprep.subr.bf16.mxu0 0
      %190 = vmatpush1.bf16.xpose.msra.mxu0 0
      %191 = vmatprep.subr.bf16.mxu0 0
      %192 = vmatpush1.bf16.xpose.msra.mxu0 %v175
      %193 = vmatprep.subr.bf16.mxu0 0
      %194 = vmatpush2.bf16.xpose.msra.mxu0 0
      %195 = vmatprep.subr.bf16.mxu0 0
      %196 = vmatpush2.bf16.xpose.msra.mxu0 0
      %197 = vmatprep.subr.bf16.mxu0 0
      %198 = vmatpush2.bf16.xpose.msra.mxu0 0
      %199 = vmatprep.subr.bf16.mxu0 0
      %200 = vmatpush2.bf16.xpose.msra.mxu0 0
      %201 = vmatprep.subr.bf16.mxu0 0
      %202 = vmatpush2.bf16.xpose.msra.mxu0 0
      %203 = vmatprep.subr.bf16.mxu0 0
      %204 = vmatpush2.bf16.xpose.msra.mxu0 0
      %205 = vmatprep.subr.bf16.mxu0 0
      %206 = vmatpush2.bf16.xpose.msra.mxu0 0
      %207 = vmatprep.subr.bf16.mxu0 0
      %208 = vmatpush2.bf16.xpose.msra.mxu0 0
      %209 = vmatprep.mubr.bf16.mxu0 0
      %210 = vmatmul.mubr.bf16.gmra.mxu0 %v172
      %v211 = vpop.f32.mrf.mxu0
      %v212 = vadd.f32 0.0, %v211
      %v213 = vpop.f32.mrf.mxu0
      %v214 = vpop.f32.mrf.mxu0
      %v215 = vadd.f32 0.0, %v214
      %v216 = vpop.f32.mrf.mxu0
      %217 = vdwg.mxu0
      %v218 = vsel %vm170, %v212, -inf
      %219 = vmax.xlane.f32.xlu0 %v218
      %v220 = vpop.xlane.xlu0 %219
      %v221 = vsel %vm170, %v215, -inf
      %222 = vmax.xlane.f32.xlu0 %v221
      %v223 = vpop.xlane.xlu0 %222
      %v224 = vsub.f32 %v212, %v220
      %v225 = vsub.f32 %v215, %v223
      %v226 = vmul.f32 %v224, 1.442695
      %v227 = vpow.pop %v226
      %v228 = vmul.f32 %v225, 1.442695
      %v229 = vpow.pop %v228
      %v230 = vsel %vm170, %v227, 0.0
      %231 = vadd.xlane.f32.xlu0 %v230
      %v232 = vpop.xlane.xlu0 %231
      %v233 = vsel %vm170, %v229, 0.0
      %234 = vadd.xlane.f32.xlu0 %v233
      %v235 = vpop.xlane.xlu0 %234
      %v236 = vrcp.pop %v232
      %v237 = vrcp.pop %v235
      %v238 = vmul.f32 %v227, %v236
      %v239 = vmul.f32 %v229, %v237
      %v240 = vpack.c.bf16 %v239, %v238
      %v242 = vunpack.c.l.b16 %v164
      %v243 = vpack.c.b16 %v242, %v242
      %244 = vrot.lane.b32.xlu0 %v243, 96
      %v245 = vpop.permute.xlu0 %244
      %v247 = vsel %vm170, %v240, 0
      %vm249 = vcmask 1043456
      %v251 = vsel %vm249, %v245, 0
      %253 = vmatprep.subr.bf16.mxu0 0
      %254 = vmatpush1.bf16.msra.mxu0 0
      %255 = vmatprep.subr.bf16.mxu0 0
      %256 = vmatpush1.bf16.msra.mxu0 0
      %257 = vmatprep.subr.bf16.mxu0 0
      %258 = vmatpush1.bf16.msra.mxu0 0
      %259 = vmatprep.subr.bf16.mxu0 0
      %260 = vmatpush1.bf16.msra.mxu0 0
      %261 = vmatprep.subr.bf16.mxu0 0
      %262 = vmatpush1.bf16.msra.mxu0 0
      %263 = vmatprep.subr.bf16.mxu0 0
      %264 = vmatpush1.bf16.msra.mxu0 0
      %265 = vmatprep.subr.bf16.mxu0 0
      %266 = vmatpush1.bf16.msra.mxu0 0
      %267 = vmatprep.subr.bf16.mxu0 0
      %268 = vmatpush1.bf16.msra.mxu0 %v251
      %269 = vmatprep.subr.bf16.mxu0 0
      %270 = vmatpush2.bf16.msra.mxu0 0
      %271 = vmatprep.subr.bf16.mxu0 0
      %272 = vmatpush2.bf16.msra.mxu0 0
      %273 = vmatprep.subr.bf16.mxu0 0
      %274 = vmatpush2.bf16.msra.mxu0 0
      %275 = vmatprep.subr.bf16.mxu0 0
      %276 = vmatpush2.bf16.msra.mxu0 0
      %277 = vmatprep.subr.bf16.mxu0 0
      %278 = vmatpush2.bf16.msra.mxu0 0
      %279 = vmatprep.subr.bf16.mxu0 0
      %280 = vmatpush2.bf16.msra.mxu0 0
      %281 = vmatprep.subr.bf16.mxu0 0
      %282 = vmatpush2.bf16.msra.mxu0 0
      %283 = vmatprep.subr.bf16.mxu0 0
      %284 = vmatpush2.bf16.msra.mxu0 0
      %285 = vmatprep.mubr.bf16.mxu0 0
      %286 = vmatmul.mubr.bf16.gmra.mxu0 %v247
      %v287 = vpop.f32.mrf.mxu0
      %v288 = vadd.f32 0.0, %v287
      %v289 = vpop.f32.mrf.mxu0
      %v290 = vpop.f32.mrf.mxu0
      %v291 = vadd.f32 0.0, %v290
      %v292 = vpop.f32.mrf.mxu0
      %293 = vdwg.mxu0
      %v294 = vpack.c.bf16 %v291, %v288
      %295 = vrot.lane.b32.xlu0 %v169, 120
      %v296 = vpop.permute.xlu0 %295
      %297 = vrot.lane.b32.xlu0 %v243, 120
      %v298 = vpop.permute.xlu0 %297
      %v300 = vsel %vm170, %v296, 0
      %v303 = vsel %vm170, %v298, 0
      %305 = vmatprep.subr.bf16.mxu0 0
      %306 = vmatpush1.bf16.xpose.msra.mxu0 0
      %307 = vmatprep.subr.bf16.mxu0 0
      %308 = vmatpush1.bf16.xpose.msra.mxu0 0
      %309 = vmatprep.subr.bf16.mxu0 0
      %310 = vmatpush1.bf16.xpose.msra.mxu0 0
      %311 = vmatprep.subr.bf16.mxu0 0
      %312 = vmatpush1.bf16.xpose.msra.mxu0 0
      %313 = vmatprep.subr.bf16.mxu0 0
      %314 = vmatpush1.bf16.xpose.msra.mxu0 0
      %315 = vmatprep.subr.bf16.mxu0 0
      %316 = vmatpush1.bf16.xpose.msra.mxu0 0
      %317 = vmatprep.subr.bf16.mxu0 0
      %318 = vmatpush1.bf16.xpose.msra.mxu0 0
      %319 = vmatprep.subr.bf16.mxu0 0
      %320 = vmatpush1.bf16.xpose.msra.mxu0 %v303
      %321 = vmatprep.subr.bf16.mxu0 0
      %322 = vmatpush2.bf16.xpose.msra.mxu0 0
      %323 = vmatprep.subr.bf16.mxu0 0
      %324 = vmatpush2.bf16.xpose.msra.mxu0 0
      %325 = vmatprep.subr.bf16.mxu0 0
      %326 = vmatpush2.bf16.xpose.msra.mxu0 0
      %327 = vmatprep.subr.bf16.mxu0 0
      %328 = vmatpush2.bf16.xpose.msra.mxu0 0
      %329 = vmatprep.subr.bf16.mxu0 0
      %330 = vmatpush2.bf16.xpose.msra.mxu0 0
      %331 = vmatprep.subr.bf16.mxu0 0
      %332 = vmatpush2.bf16.xpose.msra.mxu0 0
      %333 = vmatprep.subr.bf16.mxu0 0
      %334 = vmatpush2.bf16.xpose.msra.mxu0 0
      %335 = vmatprep.subr.bf16.mxu0 0
      %336 = vmatpush2.bf16.xpose.msra.mxu0 0
      %337 = vmatprep.mubr.bf16.mxu0 0
      %338 = vmatmul.mubr.bf16.gmra.mxu0 %v300
      %v339 = vpop.f32.mrf.mxu0
      %v340 = vadd.f32 0.0, %v339
      %v341 = vpop.f32.mrf.mxu0
      %v342 = vpop.f32.mrf.mxu0
      %v343 = vadd.f32 0.0, %v342
      %v344 = vpop.f32.mrf.mxu0
      %345 = vdwg.mxu0
      %v346 = vsel %vm170, %v340, -inf
      %347 = vmax.xlane.f32.xlu0 %v346
      %v348 = vpop.xlane.xlu0 %347
      %v349 = vsel %vm170, %v343, -inf
      %350 = vmax.xlane.f32.xlu0 %v349
      %v351 = vpop.xlane.xlu0 %350
      %v352 = vsub.f32 %v340, %v348
      %v353 = vsub.f32 %v343, %v351
      %v354 = vmul.f32 %v352, 1.442695
      %v355 = vpow.pop %v354
      %v356 = vmul.f32 %v353, 1.442695
      %v357 = vpow.pop %v356
      %v358 = vsel %vm170, %v355, 0.0
      %359 = vadd.xlane.f32.xlu0 %v358
      %v360 = vpop.xlane.xlu0 %359
      %v361 = vsel %vm170, %v357, 0.0
      %362 = vadd.xlane.f32.xlu0 %v361
      %v363 = vpop.xlane.xlu0 %362
      %v364 = vrcp.pop %v360
      %v365 = vrcp.pop %v363
      %v366 = vmul.f32 %v355, %v364
      %v367 = vmul.f32 %v357, %v365
      %v368 = vpack.c.bf16 %v367, %v366
      %369 = vrot.lane.b32.xlu0 %v243, 88
      %v370 = vpop.permute.xlu0 %369
      %v372 = vsel %vm170, %v368, 0
      %v375 = vsel %vm249, %v370, 0
      %377 = vmatprep.subr.bf16.mxu0 0
      %378 = vmatpush1.bf16.msra.mxu0 0
      %379 = vmatprep.subr.bf16.mxu0 0
      %380 = vmatpush1.bf16.msra.mxu0 0
      %381 = vmatprep.subr.bf16.mxu0 0
      %382 = vmatpush1.bf16.msra.mxu0 0
      %383 = vmatprep.subr.bf16.mxu0 0
      %384 = vmatpush1.bf16.msra.mxu0 0
      %385 = vmatprep.subr.bf16.mxu0 0
      %386 = vmatpush1.bf16.msra.mxu0 0
      %387 = vmatprep.subr.bf16.mxu0 0
      %388 = vmatpush1.bf16.msra.mxu0 0
      %389 = vmatprep.subr.bf16.mxu0 0
      %390 = vmatpush1.bf16.msra.mxu0 0
      %391 = vmatprep.subr.bf16.mxu0 0
      %392 = vmatpush1.bf16.msra.mxu0 %v375
      %393 = vmatprep.subr.bf16.mxu0 0
      %394 = vmatpush2.bf16.msra.mxu0 0
      %395 = vmatprep.subr.bf16.mxu0 0
      %396 = vmatpush2.bf16.msra.mxu0 0
      %397 = vmatprep.subr.bf16.mxu0 0
      %398 = vmatpush2.bf16.msra.mxu0 0
      %399 = vmatprep.subr.bf16.mxu0 0
      %400 = vmatpush2.bf16.msra.mxu0 0
      %401 = vmatprep.subr.bf16.mxu0 0
      %402 = vmatpush2.bf16.msra.mxu0 0
      %403 = vmatprep.subr.bf16.mxu0 0
      %404 = vmatpush2.bf16.msra.mxu0 0
      %405 = vmatprep.subr.bf16.mxu0 0
      %406 = vmatpush2.bf16.msra.mxu0 0
      %407 = vmatprep.subr.bf16.mxu0 0
      %408 = vmatpush2.bf16.msra.mxu0 0
      %409 = vmatprep.mubr.bf16.mxu0 0
      %410 = vmatmul.mubr.bf16.gmra.mxu0 %v372
      %v411 = vpop.f32.mrf.mxu0
      %v412 = vadd.f32 0.0, %v411
      %v413 = vpop.f32.mrf.mxu0
      %v414 = vpop.f32.mrf.mxu0
      %v415 = vadd.f32 0.0, %v414
      %v416 = vpop.f32.mrf.mxu0
      %417 = vdwg.mxu0
      %v418 = vpack.c.bf16 %v415, %v412
      %419 = vrot.lane.b32.xlu0 %v169, 112
      %v420 = vpop.permute.xlu0 %419
      %421 = vrot.lane.b32.xlu0 %v243, 112
      %v422 = vpop.permute.xlu0 %421
      %v424 = vsel %vm170, %v420, 0
      %v427 = vsel %vm170, %v422, 0
      %429 = vmatprep.subr.bf16.mxu0 0
      %430 = vmatpush1.bf16.xpose.msra.mxu0 0
      %431 = vmatprep.subr.bf16.mxu0 0
      %432 = vmatpush1.bf16.xpose.msra.mxu0 0
      %433 = vmatprep.subr.bf16.mxu0 0
      %434 = vmatpush1.bf16.xpose.msra.mxu0 0
      %435 = vmatprep.subr.bf16.mxu0 0
      %436 = vmatpush1.bf16.xpose.msra.mxu0 0
      %437 = vmatprep.subr.bf16.mxu0 0
      %438 = vmatpush1.bf16.xpose.msra.mxu0 0
      %439 = vmatprep.subr.bf16.mxu0 0
      %440 = vmatpush1.bf16.xpose.msra.mxu0 0
      %441 = vmatprep.subr.bf16.mxu0 0
      %442 = vmatpush1.bf16.xpose.msra.mxu0 0
      %443 = vmatprep.subr.bf16.mxu0 0
      %444 = vmatpush1.bf16.xpose.msra.mxu0 %v427
      %445 = vmatprep.subr.bf16.mxu0 0
      %446 = vmatpush2.bf16.xpose.msra.mxu0 0
      %447 = vmatprep.subr.bf16.mxu0 0
      %448 = vmatpush2.bf16.xpose.msra.mxu0 0
      %449 = vmatprep.subr.bf16.mxu0 0
      %450 = vmatpush2.bf16.xpose.msra.mxu0 0
      %451 = vmatprep.subr.bf16.mxu0 0
      %452 = vmatpush2.bf16.xpose.msra.mxu0 0
      %453 = vmatprep.subr.bf16.mxu0 0
      %454 = vmatpush2.bf16.xpose.msra.mxu0 0
      %455 = vmatprep.subr.bf16.mxu0 0
      %456 = vmatpush2.bf16.xpose.msra.mxu0 0
      %457 = vmatprep.subr.bf16.mxu0 0
      %458 = vmatpush2.bf16.xpose.msra.mxu0 0
      %459 = vmatprep.subr.bf16.mxu0 0
      %460 = vmatpush2.bf16.xpose.msra.mxu0 0
      %461 = vmatprep.mubr.bf16.mxu0 0
      %462 = vmatmul.mubr.bf16.gmra.mxu0 %v424
      %v463 = vpop.f32.mrf.mxu0
      %v464 = vadd.f32 0.0, %v463
      %v465 = vpop.f32.mrf.mxu0
      %v466 = vpop.f32.mrf.mxu0
      %v467 = vadd.f32 0.0, %v466
      %v468 = vpop.f32.mrf.mxu0
      %469 = vdwg.mxu0
      %v470 = vsel %vm170, %v464, -inf
      %471 = vmax.xlane.f32.xlu0 %v470
      %v472 = vpop.xlane.xlu0 %471
      %v473 = vsel %vm170, %v467, -inf
      %474 = vmax.xlane.f32.xlu0 %v473
      %v475 = vpop.xlane.xlu0 %474
      %v476 = vsub.f32 %v464, %v472
      %v477 = vsub.f32 %v467, %v475
      %v478 = vmul.f32 %v476, 1.442695
      %v479 = vpow.pop %v478
      %v480 = vmul.f32 %v477, 1.442695
      %v481 = vpow.pop %v480
      %v482 = vsel %vm170, %v479, 0.0
      %483 = vadd.xlane.f32.xlu0 %v482
      %v484 = vpop.xlane.xlu0 %483
      %v485 = vsel %vm170, %v481, 0.0
      %486 = vadd.xlane.f32.xlu0 %v485
      %v487 = vpop.xlane.xlu0 %486
      %v488 = vrcp.pop %v484
      %v489 = vrcp.pop %v487
      %v490 = vmul.f32 %v479, %v488
      %v491 = vmul.f32 %v481, %v489
      %v492 = vpack.c.bf16 %v491, %v490
      %493 = vrot.lane.b32.xlu0 %v243, 80
      %v494 = vpop.permute.xlu0 %493
      %v496 = vsel %vm170, %v492, 0
      %v499 = vsel %vm249, %v494, 0
      %501 = vmatprep.subr.bf16.mxu0 0
      %502 = vmatpush1.bf16.msra.mxu0 0
      %503 = vmatprep.subr.bf16.mxu0 0
      %504 = vmatpush1.bf16.msra.mxu0 0
      %505 = vmatprep.subr.bf16.mxu0 0
      %506 = vmatpush1.bf16.msra.mxu0 0
      %507 = vmatprep.subr.bf16.mxu0 0
      %508 = vmatpush1.bf16.msra.mxu0 0
      %509 = vmatprep.subr.bf16.mxu0 0
      %510 = vmatpush1.bf16.msra.mxu0 0
      %511 = vmatprep.subr.bf16.mxu0 0
      %512 = vmatpush1.bf16.msra.mxu0 0
      %513 = vmatprep.subr.bf16.mxu0 0
      %514 = vmatpush1.bf16.msra.mxu0 0
      %515 = vmatprep.subr.bf16.mxu0 0
      %516 = vmatpush1.bf16.msra.mxu0 %v499
      %517 = vmatprep.subr.bf16.mxu0 0
      %518 = vmatpush2.bf16.msra.mxu0 0
      %519 = vmatprep.subr.bf16.mxu0 0
      %520 = vmatpush2.bf16.msra.mxu0 0
      %521 = vmatprep.subr.bf16.mxu0 0
      %522 = vmatpush2.bf16.msra.mxu0 0
      %523 = vmatprep.subr.bf16.mxu0 0
      %524 = vmatpush2.bf16.msra.mxu0 0
      %525 = vmatprep.subr.bf16.mxu0 0
      %526 = vmatpush2.bf16.msra.mxu0 0
      %527 = vmatprep.subr.bf16.mxu0 0
      %528 = vmatpush2.bf16.msra.mxu0 0
      %529 = vmatprep.subr.bf16.mxu0 0
      %530 = vmatpush2.bf16.msra.mxu0 0
      %531 = vmatprep.subr.bf16.mxu0 0
      %532 = vmatpush2.bf16.msra.mxu0 0
      %533 = vmatprep.mubr.bf16.mxu0 0
      %534 = vmatmul.mubr.bf16.gmra.mxu0 %v496
      %v535 = vpop.f32.mrf.mxu0
      %v536 = vadd.f32 0.0, %v535
      %v537 = vpop.f32.mrf.mxu0
      %v538 = vpop.f32.mrf.mxu0
      %v539 = vadd.f32 0.0, %v538
      %v540 = vpop.f32.mrf.mxu0
      %541 = vdwg.mxu0
      %v542 = vpack.c.bf16 %v539, %v536
      %543 = vrot.lane.b32.xlu0 %v169, 104
      %v544 = vpop.permute.xlu0 %543
      %545 = vrot.lane.b32.xlu0 %v243, 104
      %v546 = vpop.permute.xlu0 %545
      %v548 = vsel %vm170, %v544, 0
      %v551 = vsel %vm170, %v546, 0
      %553 = vmatprep.subr.bf16.mxu0 0
      %554 = vmatpush1.bf16.xpose.msra.mxu0 0
      %555 = vmatprep.subr.bf16.mxu0 0
      %556 = vmatpush1.bf16.xpose.msra.mxu0 0
      %557 = vmatprep.subr.bf16.mxu0 0
      %558 = vmatpush1.bf16.xpose.msra.mxu0 0
      %559 = vmatprep.subr.bf16.mxu0 0
      %560 = vmatpush1.bf16.xpose.msra.mxu0 0
      %561 = vmatprep.subr.bf16.mxu0 0
      %562 = vmatpush1.bf16.xpose.msra.mxu0 0
      %563 = vmatprep.subr.bf16.mxu0 0
      %564 = vmatpush1.bf16.xpose.msra.mxu0 0
      %565 = vmatprep.subr.bf16.mxu0 0
      %566 = vmatpush1.bf16.xpose.msra.mxu0 0
      %567 = vmatprep.subr.bf16.mxu0 0
      %568 = vmatpush1.bf16.xpose.msra.mxu0 %v551
      %569 = vmatprep.subr.bf16.mxu0 0
      %570 = vmatpush2.bf16.xpose.msra.mxu0 0
      %571 = vmatprep.subr.bf16.mxu0 0
      %572 = vmatpush2.bf16.xpose.msra.mxu0 0
      %573 = vmatprep.subr.bf16.mxu0 0
      %574 = vmatpush2.bf16.xpose.msra.mxu0 0
      %575 = vmatprep.subr.bf16.mxu0 0
      %576 = vmatpush2.bf16.xpose.msra.mxu0 0
      %577 = vmatprep.subr.bf16.mxu0 0
      %578 = vmatpush2.bf16.xpose.msra.mxu0 0
      %579 = vmatprep.subr.bf16.mxu0 0
      %580 = vmatpush2.bf16.xpose.msra.mxu0 0
      %581 = vmatprep.subr.bf16.mxu0 0
      %582 = vmatpush2.bf16.xpose.msra.mxu0 0
      %583 = vmatprep.subr.bf16.mxu0 0
      %584 = vmatpush2.bf16.xpose.msra.mxu0 0
      %585 = vmatprep.mubr.bf16.mxu0 0
      %586 = vmatmul.mubr.bf16.gmra.mxu0 %v548
      %v587 = vpop.f32.mrf.mxu0
      %v588 = vadd.f32 0.0, %v587
      %v589 = vpop.f32.mrf.mxu0
      %v590 = vpop.f32.mrf.mxu0
      %v591 = vadd.f32 0.0, %v590
      %v592 = vpop.f32.mrf.mxu0
      %593 = vdwg.mxu0
      %v594 = vsel %vm170, %v588, -inf
      %595 = vmax.xlane.f32.xlu0 %v594
      %v596 = vpop.xlane.xlu0 %595
      %v597 = vsel %vm170, %v591, -inf
      %598 = vmax.xlane.f32.xlu0 %v597
      %v599 = vpop.xlane.xlu0 %598
      %v600 = vsub.f32 %v588, %v596
      %v601 = vsub.f32 %v591, %v599
      %v602 = vmul.f32 %v600, 1.442695
      %v603 = vpow.pop %v602
      %v604 = vmul.f32 %v601, 1.442695
      %v605 = vpow.pop %v604
      %v606 = vsel %vm170, %v603, 0.0
      %607 = vadd.xlane.f32.xlu0 %v606
      %v608 = vpop.xlane.xlu0 %607
      %v609 = vsel %vm170, %v605, 0.0
      %610 = vadd.xlane.f32.xlu0 %v609
      %v611 = vpop.xlane.xlu0 %610
      %v612 = vrcp.pop %v608
      %v613 = vrcp.pop %v611
      %v614 = vmul.f32 %v603, %v612
      %v615 = vmul.f32 %v605, %v613
      %v616 = vpack.c.bf16 %v615, %v614
      %617 = vrot.lane.b32.xlu0 %v243, 72
      %v618 = vpop.permute.xlu0 %617
      %v620 = vsel %vm170, %v616, 0
      %v623 = vsel %vm249, %v618, 0
      %625 = vmatprep.subr.bf16.mxu0 0
      %626 = vmatpush1.bf16.msra.mxu0 0
      %627 = vmatprep.subr.bf16.mxu0 0
      %628 = vmatpush1.bf16.msra.mxu0 0
      %629 = vmatprep.subr.bf16.mxu0 0
      %630 = vmatpush1.bf16.msra.mxu0 0
      %631 = vmatprep.subr.bf16.mxu0 0
      %632 = vmatpush1.bf16.msra.mxu0 0
      %633 = vmatprep.subr.bf16.mxu0 0
      %634 = vmatpush1.bf16.msra.mxu0 0
      %635 = vmatprep.subr.bf16.mxu0 0
      %636 = vmatpush1.bf16.msra.mxu0 0
      %637 = vmatprep.subr.bf16.mxu0 0
      %638 = vmatpush1.bf16.msra.mxu0 0
      %639 = vmatprep.subr.bf16.mxu0 0
      %640 = vmatpush1.bf16.msra.mxu0 %v623
      %641 = vmatprep.subr.bf16.mxu0 0
      %642 = vmatpush2.bf16.msra.mxu0 0
      %643 = vmatprep.subr.bf16.mxu0 0
      %644 = vmatpush2.bf16.msra.mxu0 0
      %645 = vmatprep.subr.bf16.mxu0 0
      %646 = vmatpush2.bf16.msra.mxu0 0
      %647 = vmatprep.subr.bf16.mxu0 0
      %648 = vmatpush2.bf16.msra.mxu0 0
      %649 = vmatprep.subr.bf16.mxu0 0
      %650 = vmatpush2.bf16.msra.mxu0 0
      %651 = vmatprep.subr.bf16.mxu0 0
      %652 = vmatpush2.bf16.msra.mxu0 0
      %653 = vmatprep.subr.bf16.mxu0 0
      %654 = vmatpush2.bf16.msra.mxu0 0
      %655 = vmatprep.subr.bf16.mxu0 0
      %656 = vmatpush2.bf16.msra.mxu0 0
      %657 = vmatprep.mubr.bf16.mxu0 0
      %658 = vmatmul.mubr.bf16.gmra.mxu0 %v620
      %v659 = vpop.f32.mrf.mxu0
      %v660 = vadd.f32 0.0, %v659
      %v661 = vpop.f32.mrf.mxu0
      %v662 = vpop.f32.mrf.mxu0
      %v663 = vadd.f32 0.0, %v662
      %v664 = vpop.f32.mrf.mxu0
      %665 = vdwg.mxu0
      %v666 = vpack.c.bf16 %v663, %v660
      %668 = vrot.lane.b32.xlu0 %v418, 8
      %v669 = vpop.permute.xlu0 %668
      %671 = vrot.lane.b32.xlu0 %v542, 16
      %v672 = vpop.permute.xlu0 %671
      %674 = vrot.lane.b32.xlu0 %v666, 24
      %v675 = vpop.permute.xlu0 %674
      %v678 = vsel %vm170, %v294, %v669
      %vm679 = vcmask 130048
      %v681 = vsel %vm679, %v678, %v672
      %vm682 = vcmask 195584
      %v684 = vsel %vm682, %v681, %v675
      %v686 = vunpack.c.l.b16 %v684
      %v687 = vunpack.c.h.b16 %v684
      %v688 = vpack.c.b16 %v686, %v686
      %v689 = vpack.c.b16 %v687, %v687
      %vm692 = vcmask 257024
      %693 = vst.msk [vmem:[%s160] sm:$0xf] %vm692, %v688
      %694 = vst.msk [vmem:[%s160 + $0x4] sm:$0xf] %vm692, %v689
      %p695 = scmp.lt.s32.totalorder %s13, 1
      %s696 = scalar_select %p695, %s13, 1
      %s697 = smul.addr %s696, 2
      %s698 = smul.addr %s697, 4
      %s699 = scalar_lea.vmem %s2, %s698
      // Predicated region
      $region29: #{informer_forward.44} parent=27 // pred_check
        %p700 = pneg %p83
      $region30: #{informer_forward.44} parent=27 // pred_check_branch
        %702 = sbr.rel (%p700) target = $region32
      $region31: #{informer_forward.44} parent=27 // pred_region
        _
      $region32: #{informer_forward.44} parent=27 // pred_fallthru
        _
    $region28: #{informer_forward.44} parent=5 // pred_fallthru
      _
    %p703 = scmp.le.s32.totalorder 2, %s8
    // Predicated region
    $region33: #{informer_forward.44} parent=5 // pred_check
      %p704 = pneg %p703
    $region34: #{informer_forward.44} parent=5 // pred_check_branch
      %706 = sbr.rel (%p704) target = $region36
    $region35: #{informer_forward.44} parent=5 // pred_region
      %s707 = ssub.s32 %s8, 2
      // Predicated region
      $region37: #{informer_forward.44} parent=35 // pred_check
        %p708 = pneg %p89
      $region38: #{informer_forward.44} parent=35 // pred_check_branch
        %710 = sbr.rel (%p708) target = $region40
      $region39: #{informer_forward.44} parent=35 // pred_region
        %p711 = scmp.lt.s32.totalorder %s14, 1
        %s712 = scalar_select %p711, %s14, 1
        %s713 = smul.addr %s712, 2
        %s714 = smul.addr %s713, 4
        %s715 = scalar_lea.vmem %s2, %s714
      $region40: #{informer_forward.44} parent=35 // pred_fallthru
        _
    $region36: #{informer_forward.44} parent=5 // pred_fallthru
      _
  $region6: #{informer_forward.44} parent=0 // loop_footer
    %s12 = sadd.s32 1, %s8
  $region7: #{informer_forward.44} parent=0 // loop_footer_branch
    %7 = sbr.rel target = $region3
  $region8: #{informer_forward.44} parent=0 // loop_exit
    _

// kernel: informer_forward.49
$region0: #{informer_forward.49}
  #allocation0 [shape = 'u32[]', space=smem, size = 0x4, offset = 0x4, fixed_abs, tag = 'smem constant byte address 0x4 - core index']
  #allocation1 [shape = 'u32[144,128]{1,0:T(1,128)}', space=vmem, size = 0x12000, scoped, tag = 'internal scratch']
  #allocation2 [shape = 'f32[32,8]{1,0:T(8,128)}', space=vmem, size = 0x4000, scoped, tag = 'scratch operand']
  %s0 = inlined_call_operand.vmem [shape: bf16[32,32], index: 0, kind: input, shape index: {}]
  %s1 = inlined_call_operand.vmem [shape: bf16[32,8], index: 1, kind: input, shape index: {}]
  %s2 = inlined_call_operand.vmem [shape: f32[1,8], index: 2, kind: input, shape index: {}]
  %s3 = inlined_call_operand.vmem [shape: f32[32,8], index: 3, kind: output, shape index: {}]
  %s4 = sld [smem:[#allocation0]]
  $region30: #{informer_forward.49} parent=0
    _
  %s6 = ssub.s32 1, %s4
  %s7 = scalar_select 0, %s6, %s4
  // Predicated region
  $region2: #{informer_forward.49} parent=0 // pred_check
    _
  $region3: #{informer_forward.49} parent=0 // pred_check_branch
    %9 = sbr.rel (0) target = $region5
  $region4: #{informer_forward.49} parent=0 // pred_region
    _
  $region5: #{informer_forward.49} parent=0 // pred_fallthru
    _
  // Predicated region
  $region6: #{informer_forward.49} parent=0 // pred_check
    _
  $region7: #{informer_forward.49} parent=0 // pred_check_branch
    %11 = sbr.rel (0) target = $region9
  $region8: #{informer_forward.49} parent=0 // pred_region
    _
  $region9: #{informer_forward.49} parent=0 // pred_fallthru
    _
  // Predicated region
  $region10: #{informer_forward.49} parent=0 // pred_check
    _
  $region11: #{informer_forward.49} parent=0 // pred_check_branch
    %13 = sbr.rel (0) target = $region13
  $region12: #{informer_forward.49} parent=0 // pred_region
    _
  $region13: #{informer_forward.49} parent=0 // pred_fallthru
    _
  %p15 = scmp.eq.s32.totalorder 0, 0
  // Predicated region
  $region14: #{informer_forward.49} parent=0 // pred_check
    %p16 = pneg %p15
  $region15: #{informer_forward.49} parent=0 // pred_check_branch
    %18 = sbr.rel (%p16) target = $region17
  $region16: #{informer_forward.49} parent=0 // pred_region
    %vm19 = vcmask 64512
    %20 = vst.msk [vmem:[#allocation2] sm:$0xff] %vm19, 0.0
    %21 = vst.msk [vmem:[#allocation2 + $0x8] sm:$0xff] %vm19, 0.0
    %22 = vst.msk [vmem:[#allocation2 + $0x10] sm:$0xff] %vm19, 0.0
    %23 = vst.msk [vmem:[#allocation2 + $0x18] sm:$0xff] %vm19, 0.0
  $region17: #{informer_forward.49} parent=0 // pred_fallthru
    _
  %v24 = vld [vmem:[#allocation2] sm:$0xff]
  %v25 = vld [vmem:[#allocation2 + $0x8] sm:$0xff]
  %v26 = vld [vmem:[#allocation2 + $0x10] sm:$0xff]
  %v27 = vld [vmem:[#allocation2 + $0x18] sm:$0xff]
  %v28 = vld [vmem:[%s0] sm:$0xf]
  %v29 = vld [vmem:[%s0 + $0x4] sm:$0xf]
  %v30 = vld [vmem:[%s0 + $0x8] sm:$0xf]
  %v31 = vld [vmem:[%s0 + $0xc] sm:$0xf]
  %v32 = vld [vmem:[%s1] sm:$0xf]
  %v33 = vld [vmem:[%s1 + $0x4] sm:$0xf]
  %v34 = vld [vmem:[%s1 + $0x8] sm:$0xf]
  %v35 = vld [vmem:[%s1 + $0xc] sm:$0xf]
  %v40 = vunpack.c.l.b16 %v28
  %v41 = vunpack.c.l.b16 %v29
  %v42 = vunpack.c.l.b16 %v30
  %v43 = vunpack.c.l.b16 %v31
  %v44 = vpack.c.b16 %v41, %v40
  %v45 = vpack.c.b16 %v43, %v42
  %v50 = vunpack.c.l.b16 %v32
  %v51 = vunpack.c.l.b16 %v33
  %v52 = vunpack.c.l.b16 %v34
  %v53 = vunpack.c.l.b16 %v35
  %v54 = vpack.c.b16 %v51, %v50
  %v55 = vpack.c.b16 %v53, %v52
  %vm58 = vcmask 261120
  %v60 = vsel %vm58, %v44, 0
  %v63 = vsel %vm58, %v45, 0
  %65 = vmatprep.subr.bf16.mxu0 0
  %66 = vmatpush1.bf16.msra.mxu0 0
  %67 = vmatprep.subr.bf16.mxu0 0
  %68 = vmatpush1.bf16.msra.mxu0 0
  %69 = vmatprep.subr.bf16.mxu0 0
  %70 = vmatpush1.bf16.msra.mxu0 0
  %71 = vmatprep.subr.bf16.mxu0 0
  %72 = vmatpush1.bf16.msra.mxu0 0
  %73 = vmatprep.subr.bf16.mxu0 0
  %74 = vmatpush1.bf16.msra.mxu0 0
  %75 = vmatprep.subr.bf16.mxu0 0
  %76 = vmatpush1.bf16.msra.mxu0 0
  %77 = vmatprep.subr.bf16.mxu0 0
  %78 = vmatpush1.bf16.msra.mxu0 %v55
  %79 = vmatprep.subr.bf16.mxu0 0
  %80 = vmatpush1.bf16.msra.mxu0 %v54
  %81 = vmatprep.subr.bf16.mxu0 0
  %82 = vmatpush2.bf16.msra.mxu0 0
  %83 = vmatprep.subr.bf16.mxu0 0
  %84 = vmatpush2.bf16.msra.mxu0 0
  %85 = vmatprep.subr.bf16.mxu0 0
  %86 = vmatpush2.bf16.msra.mxu0 0
  %87 = vmatprep.subr.bf16.mxu0 0
  %88 = vmatpush2.bf16.msra.mxu0 0
  %89 = vmatprep.subr.bf16.mxu0 0
  %90 = vmatpush2.bf16.msra.mxu0 0
  %91 = vmatprep.subr.bf16.mxu0 0
  %92 = vmatpush2.bf16.msra.mxu0 0
  %93 = vmatprep.subr.bf16.mxu0 0
  %94 = vmatpush2.bf16.msra.mxu0 0
  %95 = vmatprep.subr.bf16.mxu0 0
  %96 = vmatpush2.bf16.msra.mxu0 0
  %97 = vmatprep.mubr.bf16.mxu0 0
  %98 = vmatmul.mubr.bf16.gmra.mxu0 %v60
  %v99 = vpop.f32.mrf.mxu0
  %v100 = vadd.f32 0.0, %v99
  %v101 = vpop.f32.mrf.mxu0
  %v102 = vpop.f32.mrf.mxu0
  %v103 = vadd.f32 0.0, %v102
  %v104 = vpop.f32.mrf.mxu0
  %105 = vmatprep.mubr.bf16.mxu0 0
  %106 = vmatmul.mubr.bf16.gmra.mxu0 %v63
  %v107 = vpop.f32.mrf.mxu0
  %v108 = vadd.f32 0.0, %v107
  %v109 = vpop.f32.mrf.mxu0
  %v110 = vpop.f32.mrf.mxu0
  %v111 = vadd.f32 0.0, %v110
  %v112 = vpop.f32.mrf.mxu0
  %113 = vdwg.mxu0
  %v114 = vadd.f32 %v24, %v100
  %v115 = vadd.f32 %v25, %v103
  %v116 = vadd.f32 %v26, %v108
  %v117 = vadd.f32 %v27, %v111
  %vm118 = vcmask 64512
  %119 = vst.msk [vmem:[#allocation2] sm:$0xff] %vm118, %v114
  %120 = vst.msk [vmem:[#allocation2 + $0x8] sm:$0xff] %vm118, %v115
  %121 = vst.msk [vmem:[#allocation2 + $0x10] sm:$0xff] %vm118, %v116
  %122 = vst.msk [vmem:[#allocation2 + $0x18] sm:$0xff] %vm118, %v117
  // Predicated region
  $region18: #{informer_forward.49} parent=0 // pred_check
    %p123 = pneg %p15
  $region19: #{informer_forward.49} parent=0 // pred_check_branch
    %125 = sbr.rel (%p123) target = $region21
  $region20: #{informer_forward.49} parent=0 // pred_region
    %v126 = vld [vmem:[#allocation2] sm:$0xff]
    %v127 = vld [vmem:[#allocation2 + $0x8] sm:$0xff]
    %v128 = vld [vmem:[#allocation2 + $0x10] sm:$0xff]
    %v129 = vld [vmem:[#allocation2 + $0x18] sm:$0xff]
    %v130 = vld [vmem:[%s2] sm:$0x1]
    %v132 = vlaneseq
    %v133 = vshrl.u32 %v132, 7
    %v134 = vsub.s32 0, %v133
    %v135 = vrot.slane %v130, %v134
    %v137 = vadd.f32 %v126, %v135
    %v138 = vadd.f32 %v127, %v135
    %v139 = vadd.f32 %v128, %v135
    %v140 = vadd.f32 %v129, %v135
    %141 = vst.msk [vmem:[%s3] sm:$0xff] %vm118, %v137
    %142 = vst.msk [vmem:[%s3 + $0x8] sm:$0xff] %vm118, %v138
    %143 = vst.msk [vmem:[%s3 + $0x10] sm:$0xff] %vm118, %v139
    %144 = vst.msk [vmem:[%s3 + $0x18] sm:$0xff] %vm118, %v140
  $region21: #{informer_forward.49} parent=0 // pred_fallthru
    _
  // Predicated region
  $region22: #{informer_forward.49} parent=0 // pred_check
    _
  $region23: #{informer_forward.49} parent=0 // pred_check_branch
    %146 = sbr.rel (0) target = $region25
  $region24: #{informer_forward.49} parent=0 // pred_region
    _
  $region25: #{informer_forward.49} parent=0 // pred_fallthru
    _
  // Predicated region
  $region26: #{informer_forward.49} parent=0 // pred_check
    _
  $region27: #{informer_forward.49} parent=0 // pred_check_branch
    %148 = sbr.rel (0) target = $region29
  $region28: #{informer_forward.49} parent=0 // pred_region
    _
  $region29: #{informer_forward.49} parent=0 // pred_fallthru
    _

</llo_original>
